<compile_context>
chip_gen: v6e
topology: v6e:2x2x1
jax: 0.10.0
libtpu: 0.0.40
codegen_flags: <defaults>
</compile_context>

<pallas_src>
import jax
import jax.numpy as jnp
from jax.experimental import pallas as pl
from jax.experimental.pallas import tpu as pltpu


# ----------------------------------------------------------------------------
# Fused kernel: one image (grid step) -> (1, 10) log-probs
# ----------------------------------------------------------------------------
def _cnn_dnn_kernel(x_ref, w1t_ref, b1_ref, w2m_ref, b2_ref, w1h_ref,
                    lb1_ref, wl2_ref, lb2_ref, wl3_ref, lb3_ref,
                    o_ref, y1_ref):
    # y1_ref scratch: (padded row 0..15, col parity, channel, padded half-col)
    # holds the zero-padded conv1 output, column-parity split for conv2's stride.
    y1_ref[...] = jnp.zeros(y1_ref.shape, y1_ref.dtype)

    # ---- conv1: 1 -> 16, k=3, s=2, p=1  (VPU tap accumulation) --------------
    # x_ref: (1, 2, 15, 4, 8) = (n, row parity, half-row, col mod 4, col quarter)
    for par in range(2):                      # parity of output column j = 2u + par
        acc = jnp.zeros((14, 16, 7), jnp.float32)   # (out row, channel, u)
        for ky in range(3):
            for kx in range(3):
                m = 2 * par + kx              # padded input col = 4u + m
                mm, u0 = (m, 0) if m < 4 else (0, 1)
                tap = x_ref[0, ky % 2,
                            ky // 2:ky // 2 + 14,
                            mm:mm + 1,
                            u0:u0 + 7]                      # (14, 1, 7)
                acc = acc + tap * w1t_ref[ky * 3 + kx]      # weight: (1, 16, 1)
        acc = jnp.maximum(acc + b1_ref[...], 0.0)           # (14, 16, 7)
        pc, j0 = (1, 0) if par == 0 else (0, 1)
        y1_ref[1:15, pc, :, j0:j0 + 7] = acc

    # ---- conv2: 16 -> 32, k=3, s=2, p=1  (MXU, one GEMM per output row) -----
    row_outs = []
    for oi in range(7):
        slabs = [y1_ref[2 * oi + ky, kx % 2, :, kx // 2:kx // 2 + 7]
                 for ky in range(3) for kx in range(3)]     # 9 x (16, 7)
        patch = jnp.concatenate(slabs, axis=0)              # (144, 7)
        pre = jnp.dot(w2m_ref[...], patch,
                      preferred_element_type=jnp.float32)   # (32, 7)
        row_outs.append(jnp.maximum(pre + b2_ref[...], 0.0))
    out2 = jnp.concatenate(row_outs, axis=1)                # (32, 49)  [co, oi*7+oj]

    # ---- dense head ----------------------------------------------------------
    # Linear(1568, nf): the NCHW flatten permutation is folded into w1h
    # (shape (32, 49, nf)); accumulate 32 tiny (1,49)x(49,nf) GEMMs.
    h = lb1_ref[...]                                        # (1, nf)
    for co in range(32):
        h = h + jnp.dot(out2[co:co + 1, :], w1h_ref[co],
                        preferred_element_type=jnp.float32)
    h = jnp.maximum(h, 0.0)
    # Linear(nf, nf) + ReLU
    h = jnp.maximum(
        jnp.dot(h, wl2_ref[...], preferred_element_type=jnp.float32)
        + lb2_ref[...], 0.0)
    # Linear(nf, 10) + log_softmax over classes
    logits = (jnp.dot(h, wl3_ref[...], preferred_element_type=jnp.float32)
              + lb3_ref[...])                               # (1, 10)
    z = logits - jnp.max(logits, axis=-1, keepdims=True)
    lse = jnp.log(jnp.sum(jnp.exp(z), axis=-1, keepdims=True))
    o_ref[0] = (z - lse).astype(o_ref.dtype)


# ----------------------------------------------------------------------------
# Wrapper: host-side layout prep (tiny) + single pallas_call
# ----------------------------------------------------------------------------
def cnn_dnn_forward(x, params):
    """x: (B, 1, 28, 28) float32 -> log-probs (B, 10)."""
    (cw1, cb1, cw2, cb2, lw1, lb1, lw2, lb2, lw3, lb3) = params
    B = x.shape[0]
    nf = lw1.shape[0]

    # Pad H by (1,1), W by (1,3) -> (B, 30, 32); split rows by parity and
    # columns mod 4 so the kernel only needs static contiguous slices.
    xp = jnp.pad(x[:, 0], ((0, 0), (1, 1), (1, 3)))                 # (B, 30, 32)
    xs = xp.reshape(B, 15, 2, 8, 4).transpose(0, 2, 1, 4, 3)        # (B, 2, 15, 4, 8)

    # Conv weights in kernel-friendly layouts (host-side, trace-time).
    w1t = cw1.reshape(16, 9).T.reshape(9, 1, 16, 1)                 # tap-major conv1
    b1r = cb1.reshape(1, 16, 1)
    w2m = cw2.transpose(0, 2, 3, 1).reshape(32, 144)                # (co, (ky,kx,ci))
    b2r = cb2.reshape(32, 1)
    w1h = lw1.reshape(nf, 32, 49).transpose(1, 2, 0)                # (32, 49, nf)
    lb1r = lb1.reshape(1, nf)
    wl2 = lw2.T                                                     # (nf, nf)
    lb2r = lb2.reshape(1, nf)
    wl3 = lw3.T                                                     # (nf, 10)
    lb3r = lb3.reshape(1, 10)

    flops = B * (2 * 14 * 14 * 16 * 9          # conv1
                 + 2 * 49 * 32 * 144           # conv2
                 + 2 * (1568 * nf + nf * nf + nf * 10))
    bytes_accessed = (xs.size + w1t.size + b1r.size + w2m.size + b2r.size
                      + w1h.size + lb1r.size + wl2.size + lb2r.size
                      + wl3.size + lb3r.size + B * 10) * 4

    out = pl.pallas_call(
        _cnn_dnn_kernel,
        out_shape=jax.ShapeDtypeStruct((B, 1, 10), jnp.float32),
        grid=(B,),
        in_specs=[
            pl.BlockSpec((1, 2, 15, 4, 8), lambda b: (b, 0, 0, 0, 0)),
            pl.BlockSpec((9, 1, 16, 1), lambda b: (0, 0, 0, 0)),
            pl.BlockSpec((1, 16, 1), lambda b: (0, 0, 0)),
            pl.BlockSpec((32, 144), lambda b: (0, 0)),
            pl.BlockSpec((32, 1), lambda b: (0, 0)),
            pl.BlockSpec((32, 49, nf), lambda b: (0, 0, 0)),
            pl.BlockSpec((1, nf), lambda b: (0, 0)),
            pl.BlockSpec((nf, nf), lambda b: (0, 0)),
            pl.BlockSpec((1, nf), lambda b: (0, 0)),
            pl.BlockSpec((nf, 10), lambda b: (0, 0)),
            pl.BlockSpec((1, 10), lambda b: (0, 0)),
        ],
        out_specs=pl.BlockSpec((1, 1, 10), lambda b: (b, 0, 0)),
        scratch_shapes=[pltpu.VMEM((16, 2, 16, 8), jnp.float32)],
        compiler_params=pltpu.CompilerParams(
            dimension_semantics=("parallel",)),
        cost_estimate=pl.CostEstimate(flops=flops,
                                      transcendentals=B * 11,
                                      bytes_accessed=bytes_accessed),
    )(xs, w1t, b1r, w2m, b2r, w1h, lb1r, wl2, lb2r, wl3, lb3r)
    return out.reshape(B, 10)


# ----------------------------------------------------------------------------
# Pure-JAX reference (silent correctness check)
# ----------------------------------------------------------------------------
def cnn_dnn_reference(x, params):
    (cw1, cb1, cw2, cb2, lw1, lb1, lw2, lb2, lw3, lb3) = params
    dn = jax.lax.conv_dimension_numbers(x.shape, cw1.shape, ("NCHW", "OIHW", "NCHW"))
    y = jax.lax.conv_general_dilated(x, cw1, (2, 2), ((1, 1), (1, 1)),
                                     dimension_numbers=dn)
    y = jax.nn.relu(y + cb1[None, :, None, None])
    dn2 = jax.lax.conv_dimension_numbers(y.shape, cw2.shape, ("NCHW", "OIHW", "NCHW"))
    y = jax.lax.conv_general_dilated(y, cw2, (2, 2), ((1, 1), (1, 1)),
                                     dimension_numbers=dn2)
    y = jax.nn.relu(y + cb2[None, :, None, None])
    y = y.reshape(y.shape[0], -1)
    y = jax.nn.relu(y @ lw1.T + lb1)
    y = jax.nn.relu(y @ lw2.T + lb2)
    y = y @ lw3.T + lb3
    return jax.nn.log_softmax(y, axis=1)


def init_params(key, nf=8):
    ks = jax.random.split(key, 10)
    s = 0.05
    cw1 = jax.random.normal(ks[0], (16, 1, 3, 3), jnp.float32) * s
    cb1 = jax.random.normal(ks[1], (16,), jnp.float32) * s
    cw2 = jax.random.normal(ks[2], (32, 16, 3, 3), jnp.float32) * s
    cb2 = jax.random.normal(ks[3], (32,), jnp.float32) * s
    lw1 = jax.random.normal(ks[4], (nf, 1568), jnp.float32) * s   # PyTorch (out,in)
    lb1 = jax.random.normal(ks[5], (nf,), jnp.float32) * s
    lw2 = jax.random.normal(ks[6], (nf, nf), jnp.float32) * s
    lb2 = jax.random.normal(ks[7], (nf,), jnp.float32) * s
    lw3 = jax.random.normal(ks[8], (10, nf), jnp.float32) * s
    lb3 = jax.random.normal(ks[9], (10,), jnp.float32) * s
    return (cw1, cb1, cw2, cb2, lw1, lb1, lw2, lb2, lw3, lb3)


if __name__ == "__main__":
    key = jax.random.PRNGKey(0)
    kx_, kp = jax.random.split(key)
    # batch=2, MNIST-shaped input (Linear(1568, nf) forces 28x28 spatial).
    x = jax.random.normal(kx_, (2, 1, 28, 28), jnp.float32)
    params = init_params(kp, nf=8)

    fwd = jax.jit(cnn_dnn_forward)
    out = jax.block_until_ready(fwd(x, params))

    ref = cnn_dnn_reference(x, params)
    assert out.shape == (2, 10)
    assert jnp.allclose(out, ref, atol=1e-4, rtol=1e-4), \
        float(jnp.max(jnp.abs(out - ref)))
    print("KERNEL_OK")
</pallas_src>

<mosaic_0001>
module attributes {stable_mosaic.version = 11 : i64} {
  func.func @_cnn_dnn_kernel(%arg0: i32, %arg1: memref<1x2x15x4x8xf32, #tpu.memory_space<vmem>>, %arg2: memref<9x1x16x1xf32, #tpu.memory_space<vmem>>, %arg3: memref<1x16x1xf32, #tpu.memory_space<vmem>>, %arg4: memref<32x144xf32, #tpu.memory_space<vmem>>, %arg5: memref<32x1xf32, #tpu.memory_space<vmem>>, %arg6: memref<32x49x8xf32, #tpu.memory_space<vmem>>, %arg7: memref<1x8xf32, #tpu.memory_space<vmem>>, %arg8: memref<8x8xf32, #tpu.memory_space<vmem>>, %arg9: memref<1x8xf32, #tpu.memory_space<vmem>>, %arg10: memref<8x10xf32, #tpu.memory_space<vmem>>, %arg11: memref<1x10xf32, #tpu.memory_space<vmem>>, %arg12: memref<1x1x10xf32, #tpu.memory_space<vmem>>, %arg13: memref<16x2x16x8xf32, #tpu.memory_space<vmem>>) attributes {dimension_semantics = [#tpu.dimension_semantics<parallel>], iteration_bounds = array<i64: 2>, scalar_prefetch = 0 : i64, scratch_operands = 1 : i64, tpu.core_type = #tpu.core_type<tc>, window_params = [{transform_indices = @transform_0, window_bounds = array<i64: 1, 2, 15, 4, 8>}, {pipeline_mode = #tpu.pipeline_mode<synchronous>, transform_indices = @transform_1, window_bounds = array<i64: 9, 1, 16, 1>}, {pipeline_mode = #tpu.pipeline_mode<synchronous>, transform_indices = @transform_2, window_bounds = array<i64: 1, 16, 1>}, {pipeline_mode = #tpu.pipeline_mode<synchronous>, transform_indices = @transform_3, window_bounds = array<i64: 32, 144>}, {pipeline_mode = #tpu.pipeline_mode<synchronous>, transform_indices = @transform_4, window_bounds = array<i64: 32, 1>}, {pipeline_mode = #tpu.pipeline_mode<synchronous>, transform_indices = @transform_5, window_bounds = array<i64: 32, 49, 8>}, {pipeline_mode = #tpu.pipeline_mode<synchronous>, transform_indices = @transform_6, window_bounds = array<i64: 1, 8>}, {pipeline_mode = #tpu.pipeline_mode<synchronous>, transform_indices = @transform_7, window_bounds = array<i64: 8, 8>}, {pipeline_mode = #tpu.pipeline_mode<synchronous>, transform_indices = @transform_8, window_bounds = array<i64: 1, 8>}, {pipeline_mode = #tpu.pipeline_mode<synchronous>, transform_indices = @transform_9, window_bounds = array<i64: 8, 10>}, {pipeline_mode = #tpu.pipeline_mode<synchronous>, transform_indices = @transform_10, window_bounds = array<i64: 1, 10>}, {transform_indices = @transform_11, window_bounds = array<i64: 1, 1, 10>}]} {
    %cst = arith.constant 0.000000e+00 : f32
    %0 = vector.broadcast %cst : f32 to vector<16x2x16x8xf32>
    %c0 = arith.constant 0 : index
    %c0_0 = arith.constant 0 : index
    %c0_1 = arith.constant 0 : index
    %c0_2 = arith.constant 0 : index
    %1 = vector.load %arg13[%c0, %c0_0, %c0_1, %c0_2] : memref<16x2x16x8xf32, #tpu.memory_space<vmem>>, vector<16x2x16x8xf32>
    tpu.vector_store %arg13[%c0, %c0_0, %c0_1, %c0_2], %0 {strides = array<i32>} : memref<16x2x16x8xf32, #tpu.memory_space<vmem>>, vector<16x2x16x8xf32>,
    %cst_3 = arith.constant 0.000000e+00 : f32
    %2 = vector.broadcast %cst_3 : f32 to vector<14x16x7xf32>
    %c0_4 = arith.constant 0 : index
    %c0_5 = arith.constant 0 : index
    %c0_6 = arith.constant 0 : index
    %c0_7 = arith.constant 0 : index
    %c0_8 = arith.constant 0 : index
    %3 = vector.load %arg1[%c0_4, %c0_5, %c0_6, %c0_7, %c0_8] : memref<1x2x15x4x8xf32, #tpu.memory_space<vmem>>, vector<1x1x14x1x7xf32>
    %4 = vector.shape_cast %3 : vector<1x1x14x1x7xf32> to vector<14x1x7xf32>
    %c0_9 = arith.constant 0 : index
    %c0_10 = arith.constant 0 : index
    %c0_11 = arith.constant 0 : index
    %c0_12 = arith.constant 0 : index
    %5 = vector.load %arg2[%c0_9, %c0_10, %c0_11, %c0_12] : memref<9x1x16x1xf32, #tpu.memory_space<vmem>>, vector<1x1x16x1xf32>
    %6 = vector.shape_cast %5 : vector<1x1x16x1xf32> to vector<1x16x1xf32>
    %7 = vector.broadcast %4 : vector<14x1x7xf32> to vector<14x16x7xf32>
    %8 = vector.broadcast %6 : vector<1x16x1xf32> to vector<14x16x7xf32>
    %9 = arith.mulf %7, %8 : vector<14x16x7xf32>
    %10 = arith.addf %2, %9 : vector<14x16x7xf32>
    %c0_13 = arith.constant 0 : index
    %c0_14 = arith.constant 0 : index
    %c0_15 = arith.constant 0 : index
    %c1 = arith.constant 1 : index
    %c0_16 = arith.constant 0 : index
    %11 = vector.load %arg1[%c0_13, %c0_14, %c0_15, %c1, %c0_16] : memref<1x2x15x4x8xf32, #tpu.memory_space<vmem>>, vector<1x1x14x1x7xf32>
    %12 = vector.shape_cast %11 : vector<1x1x14x1x7xf32> to vector<14x1x7xf32>
    %c1_17 = arith.constant 1 : index
    %c0_18 = arith.constant 0 : index
    %c0_19 = arith.constant 0 : index
    %c0_20 = arith.constant 0 : index
    %13 = vector.load %arg2[%c1_17, %c0_18, %c0_19, %c0_20] : memref<9x1x16x1xf32, #tpu.memory_space<vmem>>, vector<1x1x16x1xf32>
    %14 = vector.shape_cast %13 : vector<1x1x16x1xf32> to vector<1x16x1xf32>
    %15 = vector.broadcast %12 : vector<14x1x7xf32> to vector<14x16x7xf32>
    %16 = vector.broadcast %14 : vector<1x16x1xf32> to vector<14x16x7xf32>
    %17 = arith.mulf %15, %16 : vector<14x16x7xf32>
    %18 = arith.addf %10, %17 : vector<14x16x7xf32>
    %c0_21 = arith.constant 0 : index
    %c0_22 = arith.constant 0 : index
    %c0_23 = arith.constant 0 : index
    %c2 = arith.constant 2 : index
    %c0_24 = arith.constant 0 : index
    %19 = vector.load %arg1[%c0_21, %c0_22, %c0_23, %c2, %c0_24] : memref<1x2x15x4x8xf32, #tpu.memory_space<vmem>>, vector<1x1x14x1x7xf32>
    %20 = vector.shape_cast %19 : vector<1x1x14x1x7xf32> to vector<14x1x7xf32>
    %c2_25 = arith.constant 2 : index
    %c0_26 = arith.constant 0 : index
    %c0_27 = arith.constant 0 : index
    %c0_28 = arith.constant 0 : index
    %21 = vector.load %arg2[%c2_25, %c0_26, %c0_27, %c0_28] : memref<9x1x16x1xf32, #tpu.memory_space<vmem>>, vector<1x1x16x1xf32>
    %22 = vector.shape_cast %21 : vector<1x1x16x1xf32> to vector<1x16x1xf32>
    %23 = vector.broadcast %20 : vector<14x1x7xf32> to vector<14x16x7xf32>
    %24 = vector.broadcast %22 : vector<1x16x1xf32> to vector<14x16x7xf32>
    %25 = arith.mulf %23, %24 : vector<14x16x7xf32>
    %26 = arith.addf %18, %25 : vector<14x16x7xf32>
    %c0_29 = arith.constant 0 : index
    %c1_30 = arith.constant 1 : index
    %c0_31 = arith.constant 0 : index
    %c0_32 = arith.constant 0 : index
    %c0_33 = arith.constant 0 : index
    %27 = vector.load %arg1[%c0_29, %c1_30, %c0_31, %c0_32, %c0_33] : memref<1x2x15x4x8xf32, #tpu.memory_space<vmem>>, vector<1x1x14x1x7xf32>
    %28 = vector.shape_cast %27 : vector<1x1x14x1x7xf32> to vector<14x1x7xf32>
    %c3 = arith.constant 3 : index
    %c0_34 = arith.constant 0 : index
    %c0_35 = arith.constant 0 : index
    %c0_36 = arith.constant 0 : index
    %29 = vector.load %arg2[%c3, %c0_34, %c0_35, %c0_36] : memref<9x1x16x1xf32, #tpu.memory_space<vmem>>, vector<1x1x16x1xf32>
    %30 = vector.shape_cast %29 : vector<1x1x16x1xf32> to vector<1x16x1xf32>
    %31 = vector.broadcast %28 : vector<14x1x7xf32> to vector<14x16x7xf32>
    %32 = vector.broadcast %30 : vector<1x16x1xf32> to vector<14x16x7xf32>
    %33 = arith.mulf %31, %32 : vector<14x16x7xf32>
    %34 = arith.addf %26, %33 : vector<14x16x7xf32>
    %c0_37 = arith.constant 0 : index
    %c1_38 = arith.constant 1 : index
    %c0_39 = arith.constant 0 : index
    %c1_40 = arith.constant 1 : index
    %c0_41 = arith.constant 0 : index
    %35 = vector.load %arg1[%c0_37, %c1_38, %c0_39, %c1_40, %c0_41] : memref<1x2x15x4x8xf32, #tpu.memory_space<vmem>>, vector<1x1x14x1x7xf32>
    %36 = vector.shape_cast %35 : vector<1x1x14x1x7xf32> to vector<14x1x7xf32>
    %c4 = arith.constant 4 : index
    %c0_42 = arith.constant 0 : index
    %c0_43 = arith.constant 0 : index
    %c0_44 = arith.constant 0 : index
    %37 = vector.load %arg2[%c4, %c0_42, %c0_43, %c0_44] : memref<9x1x16x1xf32, #tpu.memory_space<vmem>>, vector<1x1x16x1xf32>
    %38 = vector.shape_cast %37 : vector<1x1x16x1xf32> to vector<1x16x1xf32>
    %39 = vector.broadcast %36 : vector<14x1x7xf32> to vector<14x16x7xf32>
    %40 = vector.broadcast %38 : vector<1x16x1xf32> to vector<14x16x7xf32>
    %41 = arith.mulf %39, %40 : vector<14x16x7xf32>
    %42 = arith.addf %34, %41 : vector<14x16x7xf32>
    %c0_45 = arith.constant 0 : index
    %c1_46 = arith.constant 1 : index
    %c0_47 = arith.constant 0 : index
    %c2_48 = arith.constant 2 : index
    %c0_49 = arith.constant 0 : index
    %43 = vector.load %arg1[%c0_45, %c1_46, %c0_47, %c2_48, %c0_49] : memref<1x2x15x4x8xf32, #tpu.memory_space<vmem>>, vector<1x1x14x1x7xf32>
    %44 = vector.shape_cast %43 : vector<1x1x14x1x7xf32> to vector<14x1x7xf32>
    %c5 = arith.constant 5 : index
    %c0_50 = arith.constant 0 : index
    %c0_51 = arith.constant 0 : index
    %c0_52 = arith.constant 0 : index
    %45 = vector.load %arg2[%c5, %c0_50, %c0_51, %c0_52] : memref<9x1x16x1xf32, #tpu.memory_space<vmem>>, vector<1x1x16x1xf32>
    %46 = vector.shape_cast %45 : vector<1x1x16x1xf32> to vector<1x16x1xf32>
    %47 = vector.broadcast %44 : vector<14x1x7xf32> to vector<14x16x7xf32>
    %48 = vector.broadcast %46 : vector<1x16x1xf32> to vector<14x16x7xf32>
    %49 = arith.mulf %47, %48 : vector<14x16x7xf32>
    %50 = arith.addf %42, %49 : vector<14x16x7xf32>
    %c0_53 = arith.constant 0 : index
    %c0_54 = arith.constant 0 : index
    %c1_55 = arith.constant 1 : index
    %c0_56 = arith.constant 0 : index
    %c0_57 = arith.constant 0 : index
    %51 = vector.load %arg1[%c0_53, %c0_54, %c1_55, %c0_56, %c0_57] : memref<1x2x15x4x8xf32, #tpu.memory_space<vmem>>, vector<1x1x14x1x7xf32>
    %52 = vector.shape_cast %51 : vector<1x1x14x1x7xf32> to vector<14x1x7xf32>
    %c6 = arith.constant 6 : index
    %c0_58 = arith.constant 0 : index
    %c0_59 = arith.constant 0 : index
    %c0_60 = arith.constant 0 : index
    %53 = vector.load %arg2[%c6, %c0_58, %c0_59, %c0_60] : memref<9x1x16x1xf32, #tpu.memory_space<vmem>>, vector<1x1x16x1xf32>
    %54 = vector.shape_cast %53 : vector<1x1x16x1xf32> to vector<1x16x1xf32>
    %55 = vector.broadcast %52 : vector<14x1x7xf32> to vector<14x16x7xf32>
    %56 = vector.broadcast %54 : vector<1x16x1xf32> to vector<14x16x7xf32>
    %57 = arith.mulf %55, %56 : vector<14x16x7xf32>
    %58 = arith.addf %50, %57 : vector<14x16x7xf32>
    %c0_61 = arith.constant 0 : index
    %c0_62 = arith.constant 0 : index
    %c1_63 = arith.constant 1 : index
    %c1_64 = arith.constant 1 : index
    %c0_65 = arith.constant 0 : index
    %59 = vector.load %arg1[%c0_61, %c0_62, %c1_63, %c1_64, %c0_65] : memref<1x2x15x4x8xf32, #tpu.memory_space<vmem>>, vector<1x1x14x1x7xf32>
    %60 = vector.shape_cast %59 : vector<1x1x14x1x7xf32> to vector<14x1x7xf32>
    %c7 = arith.constant 7 : index
    %c0_66 = arith.constant 0 : index
    %c0_67 = arith.constant 0 : index
    %c0_68 = arith.constant 0 : index
    %61 = vector.load %arg2[%c7, %c0_66, %c0_67, %c0_68] : memref<9x1x16x1xf32, #tpu.memory_space<vmem>>, vector<1x1x16x1xf32>
    %62 = vector.shape_cast %61 : vector<1x1x16x1xf32> to vector<1x16x1xf32>
    %63 = vector.broadcast %60 : vector<14x1x7xf32> to vector<14x16x7xf32>
    %64 = vector.broadcast %62 : vector<1x16x1xf32> to vector<14x16x7xf32>
    %65 = arith.mulf %63, %64 : vector<14x16x7xf32>
    %66 = arith.addf %58, %65 : vector<14x16x7xf32>
    %c0_69 = arith.constant 0 : index
    %c0_70 = arith.constant 0 : index
    %c1_71 = arith.constant 1 : index
    %c2_72 = arith.constant 2 : index
    %c0_73 = arith.constant 0 : index
    %67 = vector.load %arg1[%c0_69, %c0_70, %c1_71, %c2_72, %c0_73] : memref<1x2x15x4x8xf32, #tpu.memory_space<vmem>>, vector<1x1x14x1x7xf32>
    %68 = vector.shape_cast %67 : vector<1x1x14x1x7xf32> to vector<14x1x7xf32>
    %c8 = arith.constant 8 : index
    %c0_74 = arith.constant 0 : index
    %c0_75 = arith.constant 0 : index
    %c0_76 = arith.constant 0 : index
    %69 = vector.load %arg2[%c8, %c0_74, %c0_75, %c0_76] : memref<9x1x16x1xf32, #tpu.memory_space<vmem>>, vector<1x1x16x1xf32>
    %70 = vector.shape_cast %69 : vector<1x1x16x1xf32> to vector<1x16x1xf32>
    %71 = vector.broadcast %68 : vector<14x1x7xf32> to vector<14x16x7xf32>
    %72 = vector.broadcast %70 : vector<1x16x1xf32> to vector<14x16x7xf32>
    %73 = arith.mulf %71, %72 : vector<14x16x7xf32>
    %74 = arith.addf %66, %73 : vector<14x16x7xf32>
    %c0_77 = arith.constant 0 : index
    %c0_78 = arith.constant 0 : index
    %c0_79 = arith.constant 0 : index
    %75 = vector.load %arg3[%c0_77, %c0_78, %c0_79] : memref<1x16x1xf32, #tpu.memory_space<vmem>>, vector<1x16x1xf32>
    %76 = vector.broadcast %75 : vector<1x16x1xf32> to vector<14x16x7xf32>
    %77 = arith.addf %74, %76 : vector<14x16x7xf32>
    %cst_80 = arith.constant 0.000000e+00 : f32
    %78 = vector.broadcast %cst_80 : f32 to vector<14x16x7xf32>
    %79 = arith.maximumf %77, %78 : vector<14x16x7xf32>
    %c1_81 = arith.constant 1 : index
    %c1_82 = arith.constant 1 : index
    %c0_83 = arith.constant 0 : index
    %c0_84 = arith.constant 0 : index
    %80 = vector.load %arg13[%c1_81, %c1_82, %c0_83, %c0_84] : memref<16x2x16x8xf32, #tpu.memory_space<vmem>>, vector<14x1x16x7xf32>
    %81 = vector.shape_cast %80 : vector<14x1x16x7xf32> to vector<14x16x7xf32>
    %82 = vector.shape_cast %79 : vector<14x16x7xf32> to vector<14x1x16x7xf32>
    tpu.vector_store %arg13[%c1_81, %c1_82, %c0_83, %c0_84], %82 {strides = array<i32>} : memref<16x2x16x8xf32, #tpu.memory_space<vmem>>, vector<14x1x16x7xf32>,
    %cst_85 = arith.constant 0.000000e+00 : f32
    %83 = vector.broadcast %cst_85 : f32 to vector<14x16x7xf32>
    %c0_86 = arith.constant 0 : index
    %c0_87 = arith.constant 0 : index
    %c0_88 = arith.constant 0 : index
    %c2_89 = arith.constant 2 : index
    %c0_90 = arith.constant 0 : index
    %84 = vector.load %arg1[%c0_86, %c0_87, %c0_88, %c2_89, %c0_90] : memref<1x2x15x4x8xf32, #tpu.memory_space<vmem>>, vector<1x1x14x1x7xf32>
    %85 = vector.shape_cast %84 : vector<1x1x14x1x7xf32> to vector<14x1x7xf32>
    %c0_91 = arith.constant 0 : index
    %c0_92 = arith.constant 0 : index
    %c0_93 = arith.constant 0 : index
    %c0_94 = arith.constant 0 : index
    %86 = vector.load %arg2[%c0_91, %c0_92, %c0_93, %c0_94] : memref<9x1x16x1xf32, #tpu.memory_space<vmem>>, vector<1x1x16x1xf32>
    %87 = vector.shape_cast %86 : vector<1x1x16x1xf32> to vector<1x16x1xf32>
    %88 = vector.broadcast %85 : vector<14x1x7xf32> to vector<14x16x7xf32>
    %89 = vector.broadcast %87 : vector<1x16x1xf32> to vector<14x16x7xf32>
    %90 = arith.mulf %88, %89 : vector<14x16x7xf32>
    %91 = arith.addf %83, %90 : vector<14x16x7xf32>
    %c0_95 = arith.constant 0 : index
    %c0_96 = arith.constant 0 : index
    %c0_97 = arith.constant 0 : index
    %c3_98 = arith.constant 3 : index
    %c0_99 = arith.constant 0 : index
    %92 = vector.load %arg1[%c0_95, %c0_96, %c0_97, %c3_98, %c0_99] : memref<1x2x15x4x8xf32, #tpu.memory_space<vmem>>, vector<1x1x14x1x7xf32>
    %93 = vector.shape_cast %92 : vector<1x1x14x1x7xf32> to vector<14x1x7xf32>
    %c1_100 = arith.constant 1 : index
    %c0_101 = arith.constant 0 : index
    %c0_102 = arith.constant 0 : index
    %c0_103 = arith.constant 0 : index
    %94 = vector.load %arg2[%c1_100, %c0_101, %c0_102, %c0_103] : memref<9x1x16x1xf32, #tpu.memory_space<vmem>>, vector<1x1x16x1xf32>
    %95 = vector.shape_cast %94 : vector<1x1x16x1xf32> to vector<1x16x1xf32>
    %96 = vector.broadcast %93 : vector<14x1x7xf32> to vector<14x16x7xf32>
    %97 = vector.broadcast %95 : vector<1x16x1xf32> to vector<14x16x7xf32>
    %98 = arith.mulf %96, %97 : vector<14x16x7xf32>
    %99 = arith.addf %91, %98 : vector<14x16x7xf32>
    %c0_104 = arith.constant 0 : index
    %c0_105 = arith.constant 0 : index
    %c0_106 = arith.constant 0 : index
    %c0_107 = arith.constant 0 : index
    %c1_108 = arith.constant 1 : index
    %100 = vector.load %arg1[%c0_104, %c0_105, %c0_106, %c0_107, %c1_108] : memref<1x2x15x4x8xf32, #tpu.memory_space<vmem>>, vector<1x1x14x1x7xf32>
    %101 = vector.shape_cast %100 : vector<1x1x14x1x7xf32> to vector<14x1x7xf32>
    %c2_109 = arith.constant 2 : index
    %c0_110 = arith.constant 0 : index
    %c0_111 = arith.constant 0 : index
    %c0_112 = arith.constant 0 : index
    %102 = vector.load %arg2[%c2_109, %c0_110, %c0_111, %c0_112] : memref<9x1x16x1xf32, #tpu.memory_space<vmem>>, vector<1x1x16x1xf32>
    %103 = vector.shape_cast %102 : vector<1x1x16x1xf32> to vector<1x16x1xf32>
    %104 = vector.broadcast %101 : vector<14x1x7xf32> to vector<14x16x7xf32>
    %105 = vector.broadcast %103 : vector<1x16x1xf32> to vector<14x16x7xf32>
    %106 = arith.mulf %104, %105 : vector<14x16x7xf32>
    %107 = arith.addf %99, %106 : vector<14x16x7xf32>
    %c0_113 = arith.constant 0 : index
    %c1_114 = arith.constant 1 : index
    %c0_115 = arith.constant 0 : index
    %c2_116 = arith.constant 2 : index
    %c0_117 = arith.constant 0 : index
    %108 = vector.load %arg1[%c0_113, %c1_114, %c0_115, %c2_116, %c0_117] : memref<1x2x15x4x8xf32, #tpu.memory_space<vmem>>, vector<1x1x14x1x7xf32>
    %109 = vector.shape_cast %108 : vector<1x1x14x1x7xf32> to vector<14x1x7xf32>
    %c3_118 = arith.constant 3 : index
    %c0_119 = arith.constant 0 : index
    %c0_120 = arith.constant 0 : index
    %c0_121 = arith.constant 0 : index
    %110 = vector.load %arg2[%c3_118, %c0_119, %c0_120, %c0_121] : memref<9x1x16x1xf32, #tpu.memory_space<vmem>>, vector<1x1x16x1xf32>
    %111 = vector.shape_cast %110 : vector<1x1x16x1xf32> to vector<1x16x1xf32>
    %112 = vector.broadcast %109 : vector<14x1x7xf32> to vector<14x16x7xf32>
    %113 = vector.broadcast %111 : vector<1x16x1xf32> to vector<14x16x7xf32>
    %114 = arith.mulf %112, %113 : vector<14x16x7xf32>
    %115 = arith.addf %107, %114 : vector<14x16x7xf32>
    %c0_122 = arith.constant 0 : index
    %c1_123 = arith.constant 1 : index
    %c0_124 = arith.constant 0 : index
    %c3_125 = arith.constant 3 : index
    %c0_126 = arith.constant 0 : index
    %116 = vector.load %arg1[%c0_122, %c1_123, %c0_124, %c3_125, %c0_126] : memref<1x2x15x4x8xf32, #tpu.memory_space<vmem>>, vector<1x1x14x1x7xf32>
    %117 = vector.shape_cast %116 : vector<1x1x14x1x7xf32> to vector<14x1x7xf32>
    %c4_127 = arith.constant 4 : index
    %c0_128 = arith.constant 0 : index
    %c0_129 = arith.constant 0 : index
    %c0_130 = arith.constant 0 : index
    %118 = vector.load %arg2[%c4_127, %c0_128, %c0_129, %c0_130] : memref<9x1x16x1xf32, #tpu.memory_space<vmem>>, vector<1x1x16x1xf32>
    %119 = vector.shape_cast %118 : vector<1x1x16x1xf32> to vector<1x16x1xf32>
    %120 = vector.broadcast %117 : vector<14x1x7xf32> to vector<14x16x7xf32>
    %121 = vector.broadcast %119 : vector<1x16x1xf32> to vector<14x16x7xf32>
    %122 = arith.mulf %120, %121 : vector<14x16x7xf32>
    %123 = arith.addf %115, %122 : vector<14x16x7xf32>
    %c0_131 = arith.constant 0 : index
    %c1_132 = arith.constant 1 : index
    %c0_133 = arith.constant 0 : index
    %c0_134 = arith.constant 0 : index
    %c1_135 = arith.constant 1 : index
    %124 = vector.load %arg1[%c0_131, %c1_132, %c0_133, %c0_134, %c1_135] : memref<1x2x15x4x8xf32, #tpu.memory_space<vmem>>, vector<1x1x14x1x7xf32>
    %125 = vector.shape_cast %124 : vector<1x1x14x1x7xf32> to vector<14x1x7xf32>
    %c5_136 = arith.constant 5 : index
    %c0_137 = arith.constant 0 : index
    %c0_138 = arith.constant 0 : index
    %c0_139 = arith.constant 0 : index
    %126 = vector.load %arg2[%c5_136, %c0_137, %c0_138, %c0_139] : memref<9x1x16x1xf32, #tpu.memory_space<vmem>>, vector<1x1x16x1xf32>
    %127 = vector.shape_cast %126 : vector<1x1x16x1xf32> to vector<1x16x1xf32>
    %128 = vector.broadcast %125 : vector<14x1x7xf32> to vector<14x16x7xf32>
    %129 = vector.broadcast %127 : vector<1x16x1xf32> to vector<14x16x7xf32>
    %130 = arith.mulf %128, %129 : vector<14x16x7xf32>
    %131 = arith.addf %123, %130 : vector<14x16x7xf32>
    %c0_140 = arith.constant 0 : index
    %c0_141 = arith.constant 0 : index
    %c1_142 = arith.constant 1 : index
    %c2_143 = arith.constant 2 : index
    %c0_144 = arith.constant 0 : index
    %132 = vector.load %arg1[%c0_140, %c0_141, %c1_142, %c2_143, %c0_144] : memref<1x2x15x4x8xf32, #tpu.memory_space<vmem>>, vector<1x1x14x1x7xf32>
    %133 = vector.shape_cast %132 : vector<1x1x14x1x7xf32> to vector<14x1x7xf32>
    %c6_145 = arith.constant 6 : index
    %c0_146 = arith.constant 0 : index
    %c0_147 = arith.constant 0 : index
    %c0_148 = arith.constant 0 : index
    %134 = vector.load %arg2[%c6_145, %c0_146, %c0_147, %c0_148] : memref<9x1x16x1xf32, #tpu.memory_space<vmem>>, vector<1x1x16x1xf32>
    %135 = vector.shape_cast %134 : vector<1x1x16x1xf32> to vector<1x16x1xf32>
    %136 = vector.broadcast %133 : vector<14x1x7xf32> to vector<14x16x7xf32>
    %137 = vector.broadcast %135 : vector<1x16x1xf32> to vector<14x16x7xf32>
    %138 = arith.mulf %136, %137 : vector<14x16x7xf32>
    %139 = arith.addf %131, %138 : vector<14x16x7xf32>
    %c0_149 = arith.constant 0 : index
    %c0_150 = arith.constant 0 : index
    %c1_151 = arith.constant 1 : index
    %c3_152 = arith.constant 3 : index
    %c0_153 = arith.constant 0 : index
    %140 = vector.load %arg1[%c0_149, %c0_150, %c1_151, %c3_152, %c0_153] : memref<1x2x15x4x8xf32, #tpu.memory_space<vmem>>, vector<1x1x14x1x7xf32>
    %141 = vector.shape_cast %140 : vector<1x1x14x1x7xf32> to vector<14x1x7xf32>
    %c7_154 = arith.constant 7 : index
    %c0_155 = arith.constant 0 : index
    %c0_156 = arith.constant 0 : index
    %c0_157 = arith.constant 0 : index
    %142 = vector.load %arg2[%c7_154, %c0_155, %c0_156, %c0_157] : memref<9x1x16x1xf32, #tpu.memory_space<vmem>>, vector<1x1x16x1xf32>
    %143 = vector.shape_cast %142 : vector<1x1x16x1xf32> to vector<1x16x1xf32>
    %144 = vector.broadcast %141 : vector<14x1x7xf32> to vector<14x16x7xf32>
    %145 = vector.broadcast %143 : vector<1x16x1xf32> to vector<14x16x7xf32>
    %146 = arith.mulf %144, %145 : vector<14x16x7xf32>
    %147 = arith.addf %139, %146 : vector<14x16x7xf32>
    %c0_158 = arith.constant 0 : index
    %c0_159 = arith.constant 0 : index
    %c1_160 = arith.constant 1 : index
    %c0_161 = arith.constant 0 : index
    %c1_162 = arith.constant 1 : index
    %148 = vector.load %arg1[%c0_158, %c0_159, %c1_160, %c0_161, %c1_162] : memref<1x2x15x4x8xf32, #tpu.memory_space<vmem>>, vector<1x1x14x1x7xf32>
    %149 = vector.shape_cast %148 : vector<1x1x14x1x7xf32> to vector<14x1x7xf32>
    %c8_163 = arith.constant 8 : index
    %c0_164 = arith.constant 0 : index
    %c0_165 = arith.constant 0 : index
    %c0_166 = arith.constant 0 : index
    %150 = vector.load %arg2[%c8_163, %c0_164, %c0_165, %c0_166] : memref<9x1x16x1xf32, #tpu.memory_space<vmem>>, vector<1x1x16x1xf32>
    %151 = vector.shape_cast %150 : vector<1x1x16x1xf32> to vector<1x16x1xf32>
    %152 = vector.broadcast %149 : vector<14x1x7xf32> to vector<14x16x7xf32>
    %153 = vector.broadcast %151 : vector<1x16x1xf32> to vector<14x16x7xf32>
    %154 = arith.mulf %152, %153 : vector<14x16x7xf32>
    %155 = arith.addf %147, %154 : vector<14x16x7xf32>
    %c0_167 = arith.constant 0 : index
    %c0_168 = arith.constant 0 : index
    %c0_169 = arith.constant 0 : index
    %156 = vector.load %arg3[%c0_167, %c0_168, %c0_169] : memref<1x16x1xf32, #tpu.memory_space<vmem>>, vector<1x16x1xf32>
    %157 = vector.broadcast %156 : vector<1x16x1xf32> to vector<14x16x7xf32>
    %158 = arith.addf %155, %157 : vector<14x16x7xf32>
    %cst_170 = arith.constant 0.000000e+00 : f32
    %159 = vector.broadcast %cst_170 : f32 to vector<14x16x7xf32>
    %160 = arith.maximumf %158, %159 : vector<14x16x7xf32>
    %c1_171 = arith.constant 1 : index
    %c0_172 = arith.constant 0 : index
    %c0_173 = arith.constant 0 : index
    %c1_174 = arith.constant 1 : index
    %161 = vector.load %arg13[%c1_171, %c0_172, %c0_173, %c1_174] : memref<16x2x16x8xf32, #tpu.memory_space<vmem>>, vector<14x1x16x7xf32>
    %162 = vector.shape_cast %161 : vector<14x1x16x7xf32> to vector<14x16x7xf32>
    %163 = vector.shape_cast %160 : vector<14x16x7xf32> to vector<14x1x16x7xf32>
    tpu.vector_store %arg13[%c1_171, %c0_172, %c0_173, %c1_174], %163 {strides = array<i32>} : memref<16x2x16x8xf32, #tpu.memory_space<vmem>>, vector<14x1x16x7xf32>,
    %c0_175 = arith.constant 0 : index
    %c0_176 = arith.constant 0 : index
    %c0_177 = arith.constant 0 : index
    %c0_178 = arith.constant 0 : index
    %164 = vector.load %arg13[%c0_175, %c0_176, %c0_177, %c0_178] : memref<16x2x16x8xf32, #tpu.memory_space<vmem>>, vector<1x1x16x7xf32>
    %165 = vector.shape_cast %164 : vector<1x1x16x7xf32> to vector<16x7xf32>
    %c0_179 = arith.constant 0 : index
    %c1_180 = arith.constant 1 : index
    %c0_181 = arith.constant 0 : index
    %c0_182 = arith.constant 0 : index
    %166 = vector.load %arg13[%c0_179, %c1_180, %c0_181, %c0_182] : memref<16x2x16x8xf32, #tpu.memory_space<vmem>>, vector<1x1x16x7xf32>
    %167 = vector.shape_cast %166 : vector<1x1x16x7xf32> to vector<16x7xf32>
    %c0_183 = arith.constant 0 : index
    %c0_184 = arith.constant 0 : index
    %c0_185 = arith.constant 0 : index
    %c1_186 = arith.constant 1 : index
    %168 = vector.load %arg13[%c0_183, %c0_184, %c0_185, %c1_186] : memref<16x2x16x8xf32, #tpu.memory_space<vmem>>, vector<1x1x16x7xf32>
    %169 = vector.shape_cast %168 : vector<1x1x16x7xf32> to vector<16x7xf32>
    %c1_187 = arith.constant 1 : index
    %c0_188 = arith.constant 0 : index
    %c0_189 = arith.constant 0 : index
    %c0_190 = arith.constant 0 : index
    %170 = vector.load %arg13[%c1_187, %c0_188, %c0_189, %c0_190] : memref<16x2x16x8xf32, #tpu.memory_space<vmem>>, vector<1x1x16x7xf32>
    %171 = vector.shape_cast %170 : vector<1x1x16x7xf32> to vector<16x7xf32>
    %c1_191 = arith.constant 1 : index
    %c1_192 = arith.constant 1 : index
    %c0_193 = arith.constant 0 : index
    %c0_194 = arith.constant 0 : index
    %172 = vector.load %arg13[%c1_191, %c1_192, %c0_193, %c0_194] : memref<16x2x16x8xf32, #tpu.memory_space<vmem>>, vector<1x1x16x7xf32>
    %173 = vector.shape_cast %172 : vector<1x1x16x7xf32> to vector<16x7xf32>
    %c1_195 = arith.constant 1 : index
    %c0_196 = arith.constant 0 : index
    %c0_197 = arith.constant 0 : index
    %c1_198 = arith.constant 1 : index
    %174 = vector.load %arg13[%c1_195, %c0_196, %c0_197, %c1_198] : memref<16x2x16x8xf32, #tpu.memory_space<vmem>>, vector<1x1x16x7xf32>
    %175 = vector.shape_cast %174 : vector<1x1x16x7xf32> to vector<16x7xf32>
    %c2_199 = arith.constant 2 : index
    %c0_200 = arith.constant 0 : index
    %c0_201 = arith.constant 0 : index
    %c0_202 = arith.constant 0 : index
    %176 = vector.load %arg13[%c2_199, %c0_200, %c0_201, %c0_202] : memref<16x2x16x8xf32, #tpu.memory_space<vmem>>, vector<1x1x16x7xf32>
    %177 = vector.shape_cast %176 : vector<1x1x16x7xf32> to vector<16x7xf32>
    %c2_203 = arith.constant 2 : index
    %c1_204 = arith.constant 1 : index
    %c0_205 = arith.constant 0 : index
    %c0_206 = arith.constant 0 : index
    %178 = vector.load %arg13[%c2_203, %c1_204, %c0_205, %c0_206] : memref<16x2x16x8xf32, #tpu.memory_space<vmem>>, vector<1x1x16x7xf32>
    %179 = vector.shape_cast %178 : vector<1x1x16x7xf32> to vector<16x7xf32>
    %c2_207 = arith.constant 2 : index
    %c0_208 = arith.constant 0 : index
    %c0_209 = arith.constant 0 : index
    %c1_210 = arith.constant 1 : index
    %180 = vector.load %arg13[%c2_207, %c0_208, %c0_209, %c1_210] : memref<16x2x16x8xf32, #tpu.memory_space<vmem>>, vector<1x1x16x7xf32>
    %181 = vector.shape_cast %180 : vector<1x1x16x7xf32> to vector<16x7xf32>
    %182 = tpu.concatenate %165, %167, %169, %171, %173, %175, %177, %179, %181 in 0 : vector<16x7xf32>, vector<16x7xf32>, vector<16x7xf32>, vector<16x7xf32>, vector<16x7xf32>, vector<16x7xf32>, vector<16x7xf32>, vector<16x7xf32>, vector<16x7xf32> -> vector<144x7xf32>
    %c0_211 = arith.constant 0 : index
    %c0_212 = arith.constant 0 : index
    %183 = vector.load %arg4[%c0_211, %c0_212] : memref<32x144xf32, #tpu.memory_space<vmem>>, vector<32x144xf32>
    %cst_213 = arith.constant dense<0.000000e+00> : vector<32x7xf32>
    %184 = tpu.matmul %183, %182, %cst_213 {dimension_numbers = #tpu.dot_dimension_numbers<[1], [0], [0], [1], [0, 0, 1, 1], [], []>} : vector<32x144xf32>, vector<144x7xf32>, vector<32x7xf32> -> vector<32x7xf32>
    %c0_214 = arith.constant 0 : index
    %c0_215 = arith.constant 0 : index
    %185 = vector.load %arg5[%c0_214, %c0_215] : memref<32x1xf32, #tpu.memory_space<vmem>>, vector<32x1xf32>
    %186 = vector.broadcast %185 : vector<32x1xf32> to vector<32x7xf32>
    %187 = arith.addf %184, %186 : vector<32x7xf32>
    %cst_216 = arith.constant 0.000000e+00 : f32
    %188 = vector.broadcast %cst_216 : f32 to vector<32x7xf32>
    %189 = arith.maximumf %187, %188 : vector<32x7xf32>
    %c2_217 = arith.constant 2 : index
    %c0_218 = arith.constant 0 : index
    %c0_219 = arith.constant 0 : index
    %c0_220 = arith.constant 0 : index
    %190 = vector.load %arg13[%c2_217, %c0_218, %c0_219, %c0_220] : memref<16x2x16x8xf32, #tpu.memory_space<vmem>>, vector<1x1x16x7xf32>
    %191 = vector.shape_cast %190 : vector<1x1x16x7xf32> to vector<16x7xf32>
    %c2_221 = arith.constant 2 : index
    %c1_222 = arith.constant 1 : index
    %c0_223 = arith.constant 0 : index
    %c0_224 = arith.constant 0 : index
    %192 = vector.load %arg13[%c2_221, %c1_222, %c0_223, %c0_224] : memref<16x2x16x8xf32, #tpu.memory_space<vmem>>, vector<1x1x16x7xf32>
    %193 = vector.shape_cast %192 : vector<1x1x16x7xf32> to vector<16x7xf32>
    %c2_225 = arith.constant 2 : index
    %c0_226 = arith.constant 0 : index
    %c0_227 = arith.constant 0 : index
    %c1_228 = arith.constant 1 : index
    %194 = vector.load %arg13[%c2_225, %c0_226, %c0_227, %c1_228] : memref<16x2x16x8xf32, #tpu.memory_space<vmem>>, vector<1x1x16x7xf32>
    %195 = vector.shape_cast %194 : vector<1x1x16x7xf32> to vector<16x7xf32>
    %c3_229 = arith.constant 3 : index
    %c0_230 = arith.constant 0 : index
    %c0_231 = arith.constant 0 : index
    %c0_232 = arith.constant 0 : index
    %196 = vector.load %arg13[%c3_229, %c0_230, %c0_231, %c0_232] : memref<16x2x16x8xf32, #tpu.memory_space<vmem>>, vector<1x1x16x7xf32>
    %197 = vector.shape_cast %196 : vector<1x1x16x7xf32> to vector<16x7xf32>
    %c3_233 = arith.constant 3 : index
    %c1_234 = arith.constant 1 : index
    %c0_235 = arith.constant 0 : index
    %c0_236 = arith.constant 0 : index
    %198 = vector.load %arg13[%c3_233, %c1_234, %c0_235, %c0_236] : memref<16x2x16x8xf32, #tpu.memory_space<vmem>>, vector<1x1x16x7xf32>
    %199 = vector.shape_cast %198 : vector<1x1x16x7xf32> to vector<16x7xf32>
    %c3_237 = arith.constant 3 : index
    %c0_238 = arith.constant 0 : index
    %c0_239 = arith.constant 0 : index
    %c1_240 = arith.constant 1 : index
    %200 = vector.load %arg13[%c3_237, %c0_238, %c0_239, %c1_240] : memref<16x2x16x8xf32, #tpu.memory_space<vmem>>, vector<1x1x16x7xf32>
    %201 = vector.shape_cast %200 : vector<1x1x16x7xf32> to vector<16x7xf32>
    %c4_241 = arith.constant 4 : index
    %c0_242 = arith.constant 0 : index
    %c0_243 = arith.constant 0 : index
    %c0_244 = arith.constant 0 : index
    %202 = vector.load %arg13[%c4_241, %c0_242, %c0_243, %c0_244] : memref<16x2x16x8xf32, #tpu.memory_space<vmem>>, vector<1x1x16x7xf32>
    %203 = vector.shape_cast %202 : vector<1x1x16x7xf32> to vector<16x7xf32>
    %c4_245 = arith.constant 4 : index
    %c1_246 = arith.constant 1 : index
    %c0_247 = arith.constant 0 : index
    %c0_248 = arith.constant 0 : index
    %204 = vector.load %arg13[%c4_245, %c1_246, %c0_247, %c0_248] : memref<16x2x16x8xf32, #tpu.memory_space<vmem>>, vector<1x1x16x7xf32>
    %205 = vector.shape_cast %204 : vector<1x1x16x7xf32> to vector<16x7xf32>
    %c4_249 = arith.constant 4 : index
    %c0_250 = arith.constant 0 : index
    %c0_251 = arith.constant 0 : index
    %c1_252 = arith.constant 1 : index
    %206 = vector.load %arg13[%c4_249, %c0_250, %c0_251, %c1_252] : memref<16x2x16x8xf32, #tpu.memory_space<vmem>>, vector<1x1x16x7xf32>
    %207 = vector.shape_cast %206 : vector<1x1x16x7xf32> to vector<16x7xf32>
    %208 = tpu.concatenate %191, %193, %195, %197, %199, %201, %203, %205, %207 in 0 : vector<16x7xf32>, vector<16x7xf32>, vector<16x7xf32>, vector<16x7xf32>, vector<16x7xf32>, vector<16x7xf32>, vector<16x7xf32>, vector<16x7xf32>, vector<16x7xf32> -> vector<144x7xf32>
    %c0_253 = arith.constant 0 : index
    %c0_254 = arith.constant 0 : index
    %209 = vector.load %arg4[%c0_253, %c0_254] : memref<32x144xf32, #tpu.memory_space<vmem>>, vector<32x144xf32>
    %cst_255 = arith.constant dense<0.000000e+00> : vector<32x7xf32>
    %210 = tpu.matmul %209, %208, %cst_255 {dimension_numbers = #tpu.dot_dimension_numbers<[1], [0], [0], [1], [0, 0, 1, 1], [], []>} : vector<32x144xf32>, vector<144x7xf32>, vector<32x7xf32> -> vector<32x7xf32>
    %c0_256 = arith.constant 0 : index
    %c0_257 = arith.constant 0 : index
    %211 = vector.load %arg5[%c0_256, %c0_257] : memref<32x1xf32, #tpu.memory_space<vmem>>, vector<32x1xf32>
    %212 = vector.broadcast %211 : vector<32x1xf32> to vector<32x7xf32>
    %213 = arith.addf %210, %212 : vector<32x7xf32>
    %cst_258 = arith.constant 0.000000e+00 : f32
    %214 = vector.broadcast %cst_258 : f32 to vector<32x7xf32>
    %215 = arith.maximumf %213, %214 : vector<32x7xf32>
    %c4_259 = arith.constant 4 : index
    %c0_260 = arith.constant 0 : index
    %c0_261 = arith.constant 0 : index
    %c0_262 = arith.constant 0 : index
    %216 = vector.load %arg13[%c4_259, %c0_260, %c0_261, %c0_262] : memref<16x2x16x8xf32, #tpu.memory_space<vmem>>, vector<1x1x16x7xf32>
    %217 = vector.shape_cast %216 : vector<1x1x16x7xf32> to vector<16x7xf32>
    %c4_263 = arith.constant 4 : index
    %c1_264 = arith.constant 1 : index
    %c0_265 = arith.constant 0 : index
    %c0_266 = arith.constant 0 : index
    %218 = vector.load %arg13[%c4_263, %c1_264, %c0_265, %c0_266] : memref<16x2x16x8xf32, #tpu.memory_space<vmem>>, vector<1x1x16x7xf32>
    %219 = vector.shape_cast %218 : vector<1x1x16x7xf32> to vector<16x7xf32>
    %c4_267 = arith.constant 4 : index
    %c0_268 = arith.constant 0 : index
    %c0_269 = arith.constant 0 : index
    %c1_270 = arith.constant 1 : index
    %220 = vector.load %arg13[%c4_267, %c0_268, %c0_269, %c1_270] : memref<16x2x16x8xf32, #tpu.memory_space<vmem>>, vector<1x1x16x7xf32>
    %221 = vector.shape_cast %220 : vector<1x1x16x7xf32> to vector<16x7xf32>
    %c5_271 = arith.constant 5 : index
    %c0_272 = arith.constant 0 : index
    %c0_273 = arith.constant 0 : index
    %c0_274 = arith.constant 0 : index
    %222 = vector.load %arg13[%c5_271, %c0_272, %c0_273, %c0_274] : memref<16x2x16x8xf32, #tpu.memory_space<vmem>>, vector<1x1x16x7xf32>
    %223 = vector.shape_cast %222 : vector<1x1x16x7xf32> to vector<16x7xf32>
    %c5_275 = arith.constant 5 : index
    %c1_276 = arith.constant 1 : index
    %c0_277 = arith.constant 0 : index
    %c0_278 = arith.constant 0 : index
    %224 = vector.load %arg13[%c5_275, %c1_276, %c0_277, %c0_278] : memref<16x2x16x8xf32, #tpu.memory_space<vmem>>, vector<1x1x16x7xf32>
    %225 = vector.shape_cast %224 : vector<1x1x16x7xf32> to vector<16x7xf32>
    %c5_279 = arith.constant 5 : index
    %c0_280 = arith.constant 0 : index
    %c0_281 = arith.constant 0 : index
    %c1_282 = arith.constant 1 : index
    %226 = vector.load %arg13[%c5_279, %c0_280, %c0_281, %c1_282] : memref<16x2x16x8xf32, #tpu.memory_space<vmem>>, vector<1x1x16x7xf32>
    %227 = vector.shape_cast %226 : vector<1x1x16x7xf32> to vector<16x7xf32>
    %c6_283 = arith.constant 6 : index
    %c0_284 = arith.constant 0 : index
    %c0_285 = arith.constant 0 : index
    %c0_286 = arith.constant 0 : index
    %228 = vector.load %arg13[%c6_283, %c0_284, %c0_285, %c0_286] : memref<16x2x16x8xf32, #tpu.memory_space<vmem>>, vector<1x1x16x7xf32>
    %229 = vector.shape_cast %228 : vector<1x1x16x7xf32> to vector<16x7xf32>
    %c6_287 = arith.constant 6 : index
    %c1_288 = arith.constant 1 : index
    %c0_289 = arith.constant 0 : index
    %c0_290 = arith.constant 0 : index
    %230 = vector.load %arg13[%c6_287, %c1_288, %c0_289, %c0_290] : memref<16x2x16x8xf32, #tpu.memory_space<vmem>>, vector<1x1x16x7xf32>
    %231 = vector.shape_cast %230 : vector<1x1x16x7xf32> to vector<16x7xf32>
    %c6_291 = arith.constant 6 : index
    %c0_292 = arith.constant 0 : index
    %c0_293 = arith.constant 0 : index
    %c1_294 = arith.constant 1 : index
    %232 = vector.load %arg13[%c6_291, %c0_292, %c0_293, %c1_294] : memref<16x2x16x8xf32, #tpu.memory_space<vmem>>, vector<1x1x16x7xf32>
    %233 = vector.shape_cast %232 : vector<1x1x16x7xf32> to vector<16x7xf32>
    %234 = tpu.concatenate %217, %219, %221, %223, %225, %227, %229, %231, %233 in 0 : vector<16x7xf32>, vector<16x7xf32>, vector<16x7xf32>, vector<16x7xf32>, vector<16x7xf32>, vector<16x7xf32>, vector<16x7xf32>, vector<16x7xf32>, vector<16x7xf32> -> vector<144x7xf32>
    %c0_295 = arith.constant 0 : index
    %c0_296 = arith.constant 0 : index
    %235 = vector.load %arg4[%c0_295, %c0_296] : memref<32x144xf32, #tpu.memory_space<vmem>>, vector<32x144xf32>
    %cst_297 = arith.constant dense<0.000000e+00> : vector<32x7xf32>
    %236 = tpu.matmul %235, %234, %cst_297 {dimension_numbers = #tpu.dot_dimension_numbers<[1], [0], [0], [1], [0, 0, 1, 1], [], []>} : vector<32x144xf32>, vector<144x7xf32>, vector<32x7xf32> -> vector<32x7xf32>
    %c0_298 = arith.constant 0 : index
    %c0_299 = arith.constant 0 : index
    %237 = vector.load %arg5[%c0_298, %c0_299] : memref<32x1xf32, #tpu.memory_space<vmem>>, vector<32x1xf32>
    %238 = vector.broadcast %237 : vector<32x1xf32> to vector<32x7xf32>
    %239 = arith.addf %236, %238 : vector<32x7xf32>
    %cst_300 = arith.constant 0.000000e+00 : f32
    %240 = vector.broadcast %cst_300 : f32 to vector<32x7xf32>
    %241 = arith.maximumf %239, %240 : vector<32x7xf32>
    %c6_301 = arith.constant 6 : index
    %c0_302 = arith.constant 0 : index
    %c0_303 = arith.constant 0 : index
    %c0_304 = arith.constant 0 : index
    %242 = vector.load %arg13[%c6_301, %c0_302, %c0_303, %c0_304] : memref<16x2x16x8xf32, #tpu.memory_space<vmem>>, vector<1x1x16x7xf32>
    %243 = vector.shape_cast %242 : vector<1x1x16x7xf32> to vector<16x7xf32>
    %c6_305 = arith.constant 6 : index
    %c1_306 = arith.constant 1 : index
    %c0_307 = arith.constant 0 : index
    %c0_308 = arith.constant 0 : index
    %244 = vector.load %arg13[%c6_305, %c1_306, %c0_307, %c0_308] : memref<16x2x16x8xf32, #tpu.memory_space<vmem>>, vector<1x1x16x7xf32>
    %245 = vector.shape_cast %244 : vector<1x1x16x7xf32> to vector<16x7xf32>
    %c6_309 = arith.constant 6 : index
    %c0_310 = arith.constant 0 : index
    %c0_311 = arith.constant 0 : index
    %c1_312 = arith.constant 1 : index
    %246 = vector.load %arg13[%c6_309, %c0_310, %c0_311, %c1_312] : memref<16x2x16x8xf32, #tpu.memory_space<vmem>>, vector<1x1x16x7xf32>
    %247 = vector.shape_cast %246 : vector<1x1x16x7xf32> to vector<16x7xf32>
    %c7_313 = arith.constant 7 : index
    %c0_314 = arith.constant 0 : index
    %c0_315 = arith.constant 0 : index
    %c0_316 = arith.constant 0 : index
    %248 = vector.load %arg13[%c7_313, %c0_314, %c0_315, %c0_316] : memref<16x2x16x8xf32, #tpu.memory_space<vmem>>, vector<1x1x16x7xf32>
    %249 = vector.shape_cast %248 : vector<1x1x16x7xf32> to vector<16x7xf32>
    %c7_317 = arith.constant 7 : index
    %c1_318 = arith.constant 1 : index
    %c0_319 = arith.constant 0 : index
    %c0_320 = arith.constant 0 : index
    %250 = vector.load %arg13[%c7_317, %c1_318, %c0_319, %c0_320] : memref<16x2x16x8xf32, #tpu.memory_space<vmem>>, vector<1x1x16x7xf32>
    %251 = vector.shape_cast %250 : vector<1x1x16x7xf32> to vector<16x7xf32>
    %c7_321 = arith.constant 7 : index
    %c0_322 = arith.constant 0 : index
    %c0_323 = arith.constant 0 : index
    %c1_324 = arith.constant 1 : index
    %252 = vector.load %arg13[%c7_321, %c0_322, %c0_323, %c1_324] : memref<16x2x16x8xf32, #tpu.memory_space<vmem>>, vector<1x1x16x7xf32>
    %253 = vector.shape_cast %252 : vector<1x1x16x7xf32> to vector<16x7xf32>
    %c8_325 = arith.constant 8 : index
    %c0_326 = arith.constant 0 : index
    %c0_327 = arith.constant 0 : index
    %c0_328 = arith.constant 0 : index
    %254 = vector.load %arg13[%c8_325, %c0_326, %c0_327, %c0_328] : memref<16x2x16x8xf32, #tpu.memory_space<vmem>>, vector<1x1x16x7xf32>
    %255 = vector.shape_cast %254 : vector<1x1x16x7xf32> to vector<16x7xf32>
    %c8_329 = arith.constant 8 : index
    %c1_330 = arith.constant 1 : index
    %c0_331 = arith.constant 0 : index
    %c0_332 = arith.constant 0 : index
    %256 = vector.load %arg13[%c8_329, %c1_330, %c0_331, %c0_332] : memref<16x2x16x8xf32, #tpu.memory_space<vmem>>, vector<1x1x16x7xf32>
    %257 = vector.shape_cast %256 : vector<1x1x16x7xf32> to vector<16x7xf32>
    %c8_333 = arith.constant 8 : index
    %c0_334 = arith.constant 0 : index
    %c0_335 = arith.constant 0 : index
    %c1_336 = arith.constant 1 : index
    %258 = vector.load %arg13[%c8_333, %c0_334, %c0_335, %c1_336] : memref<16x2x16x8xf32, #tpu.memory_space<vmem>>, vector<1x1x16x7xf32>
    %259 = vector.shape_cast %258 : vector<1x1x16x7xf32> to vector<16x7xf32>
    %260 = tpu.concatenate %243, %245, %247, %249, %251, %253, %255, %257, %259 in 0 : vector<16x7xf32>, vector<16x7xf32>, vector<16x7xf32>, vector<16x7xf32>, vector<16x7xf32>, vector<16x7xf32>, vector<16x7xf32>, vector<16x7xf32>, vector<16x7xf32> -> vector<144x7xf32>
    %c0_337 = arith.constant 0 : index
    %c0_338 = arith.constant 0 : index
    %261 = vector.load %arg4[%c0_337, %c0_338] : memref<32x144xf32, #tpu.memory_space<vmem>>, vector<32x144xf32>
    %cst_339 = arith.constant dense<0.000000e+00> : vector<32x7xf32>
    %262 = tpu.matmul %261, %260, %cst_339 {dimension_numbers = #tpu.dot_dimension_numbers<[1], [0], [0], [1], [0, 0, 1, 1], [], []>} : vector<32x144xf32>, vector<144x7xf32>, vector<32x7xf32> -> vector<32x7xf32>
    %c0_340 = arith.constant 0 : index
    %c0_341 = arith.constant 0 : index
    %263 = vector.load %arg5[%c0_340, %c0_341] : memref<32x1xf32, #tpu.memory_space<vmem>>, vector<32x1xf32>
    %264 = vector.broadcast %263 : vector<32x1xf32> to vector<32x7xf32>
    %265 = arith.addf %262, %264 : vector<32x7xf32>
    %cst_342 = arith.constant 0.000000e+00 : f32
    %266 = vector.broadcast %cst_342 : f32 to vector<32x7xf32>
    %267 = arith.maximumf %265, %266 : vector<32x7xf32>
    %c8_343 = arith.constant 8 : index
    %c0_344 = arith.constant 0 : index
    %c0_345 = arith.constant 0 : index
    %c0_346 = arith.constant 0 : index
    %268 = vector.load %arg13[%c8_343, %c0_344, %c0_345, %c0_346] : memref<16x2x16x8xf32, #tpu.memory_space<vmem>>, vector<1x1x16x7xf32>
    %269 = vector.shape_cast %268 : vector<1x1x16x7xf32> to vector<16x7xf32>
    %c8_347 = arith.constant 8 : index
    %c1_348 = arith.constant 1 : index
    %c0_349 = arith.constant 0 : index
    %c0_350 = arith.constant 0 : index
    %270 = vector.load %arg13[%c8_347, %c1_348, %c0_349, %c0_350] : memref<16x2x16x8xf32, #tpu.memory_space<vmem>>, vector<1x1x16x7xf32>
    %271 = vector.shape_cast %270 : vector<1x1x16x7xf32> to vector<16x7xf32>
    %c8_351 = arith.constant 8 : index
    %c0_352 = arith.constant 0 : index
    %c0_353 = arith.constant 0 : index
    %c1_354 = arith.constant 1 : index
    %272 = vector.load %arg13[%c8_351, %c0_352, %c0_353, %c1_354] : memref<16x2x16x8xf32, #tpu.memory_space<vmem>>, vector<1x1x16x7xf32>
    %273 = vector.shape_cast %272 : vector<1x1x16x7xf32> to vector<16x7xf32>
    %c9 = arith.constant 9 : index
    %c0_355 = arith.constant 0 : index
    %c0_356 = arith.constant 0 : index
    %c0_357 = arith.constant 0 : index
    %274 = vector.load %arg13[%c9, %c0_355, %c0_356, %c0_357] : memref<16x2x16x8xf32, #tpu.memory_space<vmem>>, vector<1x1x16x7xf32>
    %275 = vector.shape_cast %274 : vector<1x1x16x7xf32> to vector<16x7xf32>
    %c9_358 = arith.constant 9 : index
    %c1_359 = arith.constant 1 : index
    %c0_360 = arith.constant 0 : index
    %c0_361 = arith.constant 0 : index
    %276 = vector.load %arg13[%c9_358, %c1_359, %c0_360, %c0_361] : memref<16x2x16x8xf32, #tpu.memory_space<vmem>>, vector<1x1x16x7xf32>
    %277 = vector.shape_cast %276 : vector<1x1x16x7xf32> to vector<16x7xf32>
    %c9_362 = arith.constant 9 : index
    %c0_363 = arith.constant 0 : index
    %c0_364 = arith.constant 0 : index
    %c1_365 = arith.constant 1 : index
    %278 = vector.load %arg13[%c9_362, %c0_363, %c0_364, %c1_365] : memref<16x2x16x8xf32, #tpu.memory_space<vmem>>, vector<1x1x16x7xf32>
    %279 = vector.shape_cast %278 : vector<1x1x16x7xf32> to vector<16x7xf32>
    %c10 = arith.constant 10 : index
    %c0_366 = arith.constant 0 : index
    %c0_367 = arith.constant 0 : index
    %c0_368 = arith.constant 0 : index
    %280 = vector.load %arg13[%c10, %c0_366, %c0_367, %c0_368] : memref<16x2x16x8xf32, #tpu.memory_space<vmem>>, vector<1x1x16x7xf32>
    %281 = vector.shape_cast %280 : vector<1x1x16x7xf32> to vector<16x7xf32>
    %c10_369 = arith.constant 10 : index
    %c1_370 = arith.constant 1 : index
    %c0_371 = arith.constant 0 : index
    %c0_372 = arith.constant 0 : index
    %282 = vector.load %arg13[%c10_369, %c1_370, %c0_371, %c0_372] : memref<16x2x16x8xf32, #tpu.memory_space<vmem>>, vector<1x1x16x7xf32>
    %283 = vector.shape_cast %282 : vector<1x1x16x7xf32> to vector<16x7xf32>
    %c10_373 = arith.constant 10 : index
    %c0_374 = arith.constant 0 : index
    %c0_375 = arith.constant 0 : index
    %c1_376 = arith.constant 1 : index
    %284 = vector.load %arg13[%c10_373, %c0_374, %c0_375, %c1_376] : memref<16x2x16x8xf32, #tpu.memory_space<vmem>>, vector<1x1x16x7xf32>
    %285 = vector.shape_cast %284 : vector<1x1x16x7xf32> to vector<16x7xf32>
    %286 = tpu.concatenate %269, %271, %273, %275, %277, %279, %281, %283, %285 in 0 : vector<16x7xf32>, vector<16x7xf32>, vector<16x7xf32>, vector<16x7xf32>, vector<16x7xf32>, vector<16x7xf32>, vector<16x7xf32>, vector<16x7xf32>, vector<16x7xf32> -> vector<144x7xf32>
    %c0_377 = arith.constant 0 : index
    %c0_378 = arith.constant 0 : index
    %287 = vector.load %arg4[%c0_377, %c0_378] : memref<32x144xf32, #tpu.memory_space<vmem>>, vector<32x144xf32>
    %cst_379 = arith.constant dense<0.000000e+00> : vector<32x7xf32>
    %288 = tpu.matmul %287, %286, %cst_379 {dimension_numbers = #tpu.dot_dimension_numbers<[1], [0], [0], [1], [0, 0, 1, 1], [], []>} : vector<32x144xf32>, vector<144x7xf32>, vector<32x7xf32> -> vector<32x7xf32>
    %c0_380 = arith.constant 0 : index
    %c0_381 = arith.constant 0 : index
    %289 = vector.load %arg5[%c0_380, %c0_381] : memref<32x1xf32, #tpu.memory_space<vmem>>, vector<32x1xf32>
    %290 = vector.broadcast %289 : vector<32x1xf32> to vector<32x7xf32>
    %291 = arith.addf %288, %290 : vector<32x7xf32>
    %cst_382 = arith.constant 0.000000e+00 : f32
    %292 = vector.broadcast %cst_382 : f32 to vector<32x7xf32>
    %293 = arith.maximumf %291, %292 : vector<32x7xf32>
    %c10_383 = arith.constant 10 : index
    %c0_384 = arith.constant 0 : index
    %c0_385 = arith.constant 0 : index
    %c0_386 = arith.constant 0 : index
    %294 = vector.load %arg13[%c10_383, %c0_384, %c0_385, %c0_386] : memref<16x2x16x8xf32, #tpu.memory_space<vmem>>, vector<1x1x16x7xf32>
    %295 = vector.shape_cast %294 : vector<1x1x16x7xf32> to vector<16x7xf32>
    %c10_387 = arith.constant 10 : index
    %c1_388 = arith.constant 1 : index
    %c0_389 = arith.constant 0 : index
    %c0_390 = arith.constant 0 : index
    %296 = vector.load %arg13[%c10_387, %c1_388, %c0_389, %c0_390] : memref<16x2x16x8xf32, #tpu.memory_space<vmem>>, vector<1x1x16x7xf32>
    %297 = vector.shape_cast %296 : vector<1x1x16x7xf32> to vector<16x7xf32>
    %c10_391 = arith.constant 10 : index
    %c0_392 = arith.constant 0 : index
    %c0_393 = arith.constant 0 : index
    %c1_394 = arith.constant 1 : index
    %298 = vector.load %arg13[%c10_391, %c0_392, %c0_393, %c1_394] : memref<16x2x16x8xf32, #tpu.memory_space<vmem>>, vector<1x1x16x7xf32>
    %299 = vector.shape_cast %298 : vector<1x1x16x7xf32> to vector<16x7xf32>
    %c11 = arith.constant 11 : index
    %c0_395 = arith.constant 0 : index
    %c0_396 = arith.constant 0 : index
    %c0_397 = arith.constant 0 : index
    %300 = vector.load %arg13[%c11, %c0_395, %c0_396, %c0_397] : memref<16x2x16x8xf32, #tpu.memory_space<vmem>>, vector<1x1x16x7xf32>
    %301 = vector.shape_cast %300 : vector<1x1x16x7xf32> to vector<16x7xf32>
    %c11_398 = arith.constant 11 : index
    %c1_399 = arith.constant 1 : index
    %c0_400 = arith.constant 0 : index
    %c0_401 = arith.constant 0 : index
    %302 = vector.load %arg13[%c11_398, %c1_399, %c0_400, %c0_401] : memref<16x2x16x8xf32, #tpu.memory_space<vmem>>, vector<1x1x16x7xf32>
    %303 = vector.shape_cast %302 : vector<1x1x16x7xf32> to vector<16x7xf32>
    %c11_402 = arith.constant 11 : index
    %c0_403 = arith.constant 0 : index
    %c0_404 = arith.constant 0 : index
    %c1_405 = arith.constant 1 : index
    %304 = vector.load %arg13[%c11_402, %c0_403, %c0_404, %c1_405] : memref<16x2x16x8xf32, #tpu.memory_space<vmem>>, vector<1x1x16x7xf32>
    %305 = vector.shape_cast %304 : vector<1x1x16x7xf32> to vector<16x7xf32>
    %c12 = arith.constant 12 : index
    %c0_406 = arith.constant 0 : index
    %c0_407 = arith.constant 0 : index
    %c0_408 = arith.constant 0 : index
    %306 = vector.load %arg13[%c12, %c0_406, %c0_407, %c0_408] : memref<16x2x16x8xf32, #tpu.memory_space<vmem>>, vector<1x1x16x7xf32>
    %307 = vector.shape_cast %306 : vector<1x1x16x7xf32> to vector<16x7xf32>
    %c12_409 = arith.constant 12 : index
    %c1_410 = arith.constant 1 : index
    %c0_411 = arith.constant 0 : index
    %c0_412 = arith.constant 0 : index
    %308 = vector.load %arg13[%c12_409, %c1_410, %c0_411, %c0_412] : memref<16x2x16x8xf32, #tpu.memory_space<vmem>>, vector<1x1x16x7xf32>
    %309 = vector.shape_cast %308 : vector<1x1x16x7xf32> to vector<16x7xf32>
    %c12_413 = arith.constant 12 : index
    %c0_414 = arith.constant 0 : index
    %c0_415 = arith.constant 0 : index
    %c1_416 = arith.constant 1 : index
    %310 = vector.load %arg13[%c12_413, %c0_414, %c0_415, %c1_416] : memref<16x2x16x8xf32, #tpu.memory_space<vmem>>, vector<1x1x16x7xf32>
    %311 = vector.shape_cast %310 : vector<1x1x16x7xf32> to vector<16x7xf32>
    %312 = tpu.concatenate %295, %297, %299, %301, %303, %305, %307, %309, %311 in 0 : vector<16x7xf32>, vector<16x7xf32>, vector<16x7xf32>, vector<16x7xf32>, vector<16x7xf32>, vector<16x7xf32>, vector<16x7xf32>, vector<16x7xf32>, vector<16x7xf32> -> vector<144x7xf32>
    %c0_417 = arith.constant 0 : index
    %c0_418 = arith.constant 0 : index
    %313 = vector.load %arg4[%c0_417, %c0_418] : memref<32x144xf32, #tpu.memory_space<vmem>>, vector<32x144xf32>
    %cst_419 = arith.constant dense<0.000000e+00> : vector<32x7xf32>
    %314 = tpu.matmul %313, %312, %cst_419 {dimension_numbers = #tpu.dot_dimension_numbers<[1], [0], [0], [1], [0, 0, 1, 1], [], []>} : vector<32x144xf32>, vector<144x7xf32>, vector<32x7xf32> -> vector<32x7xf32>
    %c0_420 = arith.constant 0 : index
    %c0_421 = arith.constant 0 : index
    %315 = vector.load %arg5[%c0_420, %c0_421] : memref<32x1xf32, #tpu.memory_space<vmem>>, vector<32x1xf32>
    %316 = vector.broadcast %315 : vector<32x1xf32> to vector<32x7xf32>
    %317 = arith.addf %314, %316 : vector<32x7xf32>
    %cst_422 = arith.constant 0.000000e+00 : f32
    %318 = vector.broadcast %cst_422 : f32 to vector<32x7xf32>
    %319 = arith.maximumf %317, %318 : vector<32x7xf32>
    %c12_423 = arith.constant 12 : index
    %c0_424 = arith.constant 0 : index
    %c0_425 = arith.constant 0 : index
    %c0_426 = arith.constant 0 : index
    %320 = vector.load %arg13[%c12_423, %c0_424, %c0_425, %c0_426] : memref<16x2x16x8xf32, #tpu.memory_space<vmem>>, vector<1x1x16x7xf32>
    %321 = vector.shape_cast %320 : vector<1x1x16x7xf32> to vector<16x7xf32>
    %c12_427 = arith.constant 12 : index
    %c1_428 = arith.constant 1 : index
    %c0_429 = arith.constant 0 : index
    %c0_430 = arith.constant 0 : index
    %322 = vector.load %arg13[%c12_427, %c1_428, %c0_429, %c0_430] : memref<16x2x16x8xf32, #tpu.memory_space<vmem>>, vector<1x1x16x7xf32>
    %323 = vector.shape_cast %322 : vector<1x1x16x7xf32> to vector<16x7xf32>
    %c12_431 = arith.constant 12 : index
    %c0_432 = arith.constant 0 : index
    %c0_433 = arith.constant 0 : index
    %c1_434 = arith.constant 1 : index
    %324 = vector.load %arg13[%c12_431, %c0_432, %c0_433, %c1_434] : memref<16x2x16x8xf32, #tpu.memory_space<vmem>>, vector<1x1x16x7xf32>
    %325 = vector.shape_cast %324 : vector<1x1x16x7xf32> to vector<16x7xf32>
    %c13 = arith.constant 13 : index
    %c0_435 = arith.constant 0 : index
    %c0_436 = arith.constant 0 : index
    %c0_437 = arith.constant 0 : index
    %326 = vector.load %arg13[%c13, %c0_435, %c0_436, %c0_437] : memref<16x2x16x8xf32, #tpu.memory_space<vmem>>, vector<1x1x16x7xf32>
    %327 = vector.shape_cast %326 : vector<1x1x16x7xf32> to vector<16x7xf32>
    %c13_438 = arith.constant 13 : index
    %c1_439 = arith.constant 1 : index
    %c0_440 = arith.constant 0 : index
    %c0_441 = arith.constant 0 : index
    %328 = vector.load %arg13[%c13_438, %c1_439, %c0_440, %c0_441] : memref<16x2x16x8xf32, #tpu.memory_space<vmem>>, vector<1x1x16x7xf32>
    %329 = vector.shape_cast %328 : vector<1x1x16x7xf32> to vector<16x7xf32>
    %c13_442 = arith.constant 13 : index
    %c0_443 = arith.constant 0 : index
    %c0_444 = arith.constant 0 : index
    %c1_445 = arith.constant 1 : index
    %330 = vector.load %arg13[%c13_442, %c0_443, %c0_444, %c1_445] : memref<16x2x16x8xf32, #tpu.memory_space<vmem>>, vector<1x1x16x7xf32>
    %331 = vector.shape_cast %330 : vector<1x1x16x7xf32> to vector<16x7xf32>
    %c14 = arith.constant 14 : index
    %c0_446 = arith.constant 0 : index
    %c0_447 = arith.constant 0 : index
    %c0_448 = arith.constant 0 : index
    %332 = vector.load %arg13[%c14, %c0_446, %c0_447, %c0_448] : memref<16x2x16x8xf32, #tpu.memory_space<vmem>>, vector<1x1x16x7xf32>
    %333 = vector.shape_cast %332 : vector<1x1x16x7xf32> to vector<16x7xf32>
    %c14_449 = arith.constant 14 : index
    %c1_450 = arith.constant 1 : index
    %c0_451 = arith.constant 0 : index
    %c0_452 = arith.constant 0 : index
    %334 = vector.load %arg13[%c14_449, %c1_450, %c0_451, %c0_452] : memref<16x2x16x8xf32, #tpu.memory_space<vmem>>, vector<1x1x16x7xf32>
    %335 = vector.shape_cast %334 : vector<1x1x16x7xf32> to vector<16x7xf32>
    %c14_453 = arith.constant 14 : index
    %c0_454 = arith.constant 0 : index
    %c0_455 = arith.constant 0 : index
    %c1_456 = arith.constant 1 : index
    %336 = vector.load %arg13[%c14_453, %c0_454, %c0_455, %c1_456] : memref<16x2x16x8xf32, #tpu.memory_space<vmem>>, vector<1x1x16x7xf32>
    %337 = vector.shape_cast %336 : vector<1x1x16x7xf32> to vector<16x7xf32>
    %338 = tpu.concatenate %321, %323, %325, %327, %329, %331, %333, %335, %337 in 0 : vector<16x7xf32>, vector<16x7xf32>, vector<16x7xf32>, vector<16x7xf32>, vector<16x7xf32>, vector<16x7xf32>, vector<16x7xf32>, vector<16x7xf32>, vector<16x7xf32> -> vector<144x7xf32>
    %c0_457 = arith.constant 0 : index
    %c0_458 = arith.constant 0 : index
    %339 = vector.load %arg4[%c0_457, %c0_458] : memref<32x144xf32, #tpu.memory_space<vmem>>, vector<32x144xf32>
    %cst_459 = arith.constant dense<0.000000e+00> : vector<32x7xf32>
    %340 = tpu.matmul %339, %338, %cst_459 {dimension_numbers = #tpu.dot_dimension_numbers<[1], [0], [0], [1], [0, 0, 1, 1], [], []>} : vector<32x144xf32>, vector<144x7xf32>, vector<32x7xf32> -> vector<32x7xf32>
    %c0_460 = arith.constant 0 : index
    %c0_461 = arith.constant 0 : index
    %341 = vector.load %arg5[%c0_460, %c0_461] : memref<32x1xf32, #tpu.memory_space<vmem>>, vector<32x1xf32>
    %342 = vector.broadcast %341 : vector<32x1xf32> to vector<32x7xf32>
    %343 = arith.addf %340, %342 : vector<32x7xf32>
    %cst_462 = arith.constant 0.000000e+00 : f32
    %344 = vector.broadcast %cst_462 : f32 to vector<32x7xf32>
    %345 = arith.maximumf %343, %344 : vector<32x7xf32>
    %346 = tpu.concatenate %189, %215, %241, %267, %293, %319, %345 in 1 : vector<32x7xf32>, vector<32x7xf32>, vector<32x7xf32>, vector<32x7xf32>, vector<32x7xf32>, vector<32x7xf32>, vector<32x7xf32> -> vector<32x49xf32>
    %c0_463 = arith.constant 0 : index
    %c0_464 = arith.constant 0 : index
    %347 = vector.load %arg7[%c0_463, %c0_464] : memref<1x8xf32, #tpu.memory_space<vmem>>, vector<1x8xf32>
    %348 = vector.extract_strided_slice %346 {offsets = [0, 0], sizes = [1, 49], strides = [1, 1]} : vector<32x49xf32> to vector<1x49xf32>
    %c0_465 = arith.constant 0 : index
    %c0_466 = arith.constant 0 : index
    %c0_467 = arith.constant 0 : index
    %349 = vector.load %arg6[%c0_465, %c0_466, %c0_467] : memref<32x49x8xf32, #tpu.memory_space<vmem>>, vector<1x49x8xf32>
    %350 = vector.shape_cast %349 : vector<1x49x8xf32> to vector<49x8xf32>
    %cst_468 = arith.constant dense<0.000000e+00> : vector<1x8xf32>
    %351 = tpu.matmul %348, %350, %cst_468 {dimension_numbers = #tpu.dot_dimension_numbers<[1], [0], [0], [1], [0, 0, 1, 1], [], []>} : vector<1x49xf32>, vector<49x8xf32>, vector<1x8xf32> -> vector<1x8xf32>
    %352 = arith.addf %347, %351 : vector<1x8xf32>
    %353 = vector.extract_strided_slice %346 {offsets = [1, 0], sizes = [1, 49], strides = [1, 1]} : vector<32x49xf32> to vector<1x49xf32>
    %c1_469 = arith.constant 1 : index
    %c0_470 = arith.constant 0 : index
    %c0_471 = arith.constant 0 : index
    %354 = vector.load %arg6[%c1_469, %c0_470, %c0_471] : memref<32x49x8xf32, #tpu.memory_space<vmem>>, vector<1x49x8xf32>
    %355 = vector.shape_cast %354 : vector<1x49x8xf32> to vector<49x8xf32>
    %cst_472 = arith.constant dense<0.000000e+00> : vector<1x8xf32>
    %356 = tpu.matmul %353, %355, %cst_472 {dimension_numbers = #tpu.dot_dimension_numbers<[1], [0], [0], [1], [0, 0, 1, 1], [], []>} : vector<1x49xf32>, vector<49x8xf32>, vector<1x8xf32> -> vector<1x8xf32>
    %357 = arith.addf %352, %356 : vector<1x8xf32>
    %358 = vector.extract_strided_slice %346 {offsets = [2, 0], sizes = [1, 49], strides = [1, 1]} : vector<32x49xf32> to vector<1x49xf32>
    %c2_473 = arith.constant 2 : index
    %c0_474 = arith.constant 0 : index
    %c0_475 = arith.constant 0 : index
    %359 = vector.load %arg6[%c2_473, %c0_474, %c0_475] : memref<32x49x8xf32, #tpu.memory_space<vmem>>, vector<1x49x8xf32>
    %360 = vector.shape_cast %359 : vector<1x49x8xf32> to vector<49x8xf32>
    %cst_476 = arith.constant dense<0.000000e+00> : vector<1x8xf32>
    %361 = tpu.matmul %358, %360, %cst_476 {dimension_numbers = #tpu.dot_dimension_numbers<[1], [0], [0], [1], [0, 0, 1, 1], [], []>} : vector<1x49xf32>, vector<49x8xf32>, vector<1x8xf32> -> vector<1x8xf32>
    %362 = arith.addf %357, %361 : vector<1x8xf32>
    %363 = vector.extract_strided_slice %346 {offsets = [3, 0], sizes = [1, 49], strides = [1, 1]} : vector<32x49xf32> to vector<1x49xf32>
    %c3_477 = arith.constant 3 : index
    %c0_478 = arith.constant 0 : index
    %c0_479 = arith.constant 0 : index
    %364 = vector.load %arg6[%c3_477, %c0_478, %c0_479] : memref<32x49x8xf32, #tpu.memory_space<vmem>>, vector<1x49x8xf32>
    %365 = vector.shape_cast %364 : vector<1x49x8xf32> to vector<49x8xf32>
    %cst_480 = arith.constant dense<0.000000e+00> : vector<1x8xf32>
    %366 = tpu.matmul %363, %365, %cst_480 {dimension_numbers = #tpu.dot_dimension_numbers<[1], [0], [0], [1], [0, 0, 1, 1], [], []>} : vector<1x49xf32>, vector<49x8xf32>, vector<1x8xf32> -> vector<1x8xf32>
    %367 = arith.addf %362, %366 : vector<1x8xf32>
    %368 = vector.extract_strided_slice %346 {offsets = [4, 0], sizes = [1, 49], strides = [1, 1]} : vector<32x49xf32> to vector<1x49xf32>
    %c4_481 = arith.constant 4 : index
    %c0_482 = arith.constant 0 : index
    %c0_483 = arith.constant 0 : index
    %369 = vector.load %arg6[%c4_481, %c0_482, %c0_483] : memref<32x49x8xf32, #tpu.memory_space<vmem>>, vector<1x49x8xf32>
    %370 = vector.shape_cast %369 : vector<1x49x8xf32> to vector<49x8xf32>
    %cst_484 = arith.constant dense<0.000000e+00> : vector<1x8xf32>
    %371 = tpu.matmul %368, %370, %cst_484 {dimension_numbers = #tpu.dot_dimension_numbers<[1], [0], [0], [1], [0, 0, 1, 1], [], []>} : vector<1x49xf32>, vector<49x8xf32>, vector<1x8xf32> -> vector<1x8xf32>
    %372 = arith.addf %367, %371 : vector<1x8xf32>
    %373 = vector.extract_strided_slice %346 {offsets = [5, 0], sizes = [1, 49], strides = [1, 1]} : vector<32x49xf32> to vector<1x49xf32>
    %c5_485 = arith.constant 5 : index
    %c0_486 = arith.constant 0 : index
    %c0_487 = arith.constant 0 : index
    %374 = vector.load %arg6[%c5_485, %c0_486, %c0_487] : memref<32x49x8xf32, #tpu.memory_space<vmem>>, vector<1x49x8xf32>
    %375 = vector.shape_cast %374 : vector<1x49x8xf32> to vector<49x8xf32>
    %cst_488 = arith.constant dense<0.000000e+00> : vector<1x8xf32>
    %376 = tpu.matmul %373, %375, %cst_488 {dimension_numbers = #tpu.dot_dimension_numbers<[1], [0], [0], [1], [0, 0, 1, 1], [], []>} : vector<1x49xf32>, vector<49x8xf32>, vector<1x8xf32> -> vector<1x8xf32>
    %377 = arith.addf %372, %376 : vector<1x8xf32>
    %378 = vector.extract_strided_slice %346 {offsets = [6, 0], sizes = [1, 49], strides = [1, 1]} : vector<32x49xf32> to vector<1x49xf32>
    %c6_489 = arith.constant 6 : index
    %c0_490 = arith.constant 0 : index
    %c0_491 = arith.constant 0 : index
    %379 = vector.load %arg6[%c6_489, %c0_490, %c0_491] : memref<32x49x8xf32, #tpu.memory_space<vmem>>, vector<1x49x8xf32>
    %380 = vector.shape_cast %379 : vector<1x49x8xf32> to vector<49x8xf32>
    %cst_492 = arith.constant dense<0.000000e+00> : vector<1x8xf32>
    %381 = tpu.matmul %378, %380, %cst_492 {dimension_numbers = #tpu.dot_dimension_numbers<[1], [0], [0], [1], [0, 0, 1, 1], [], []>} : vector<1x49xf32>, vector<49x8xf32>, vector<1x8xf32> -> vector<1x8xf32>
    %382 = arith.addf %377, %381 : vector<1x8xf32>
    %383 = vector.extract_strided_slice %346 {offsets = [7, 0], sizes = [1, 49], strides = [1, 1]} : vector<32x49xf32> to vector<1x49xf32>
    %c7_493 = arith.constant 7 : index
    %c0_494 = arith.constant 0 : index
    %c0_495 = arith.constant 0 : index
    %384 = vector.load %arg6[%c7_493, %c0_494, %c0_495] : memref<32x49x8xf32, #tpu.memory_space<vmem>>, vector<1x49x8xf32>
    %385 = vector.shape_cast %384 : vector<1x49x8xf32> to vector<49x8xf32>
    %cst_496 = arith.constant dense<0.000000e+00> : vector<1x8xf32>
    %386 = tpu.matmul %383, %385, %cst_496 {dimension_numbers = #tpu.dot_dimension_numbers<[1], [0], [0], [1], [0, 0, 1, 1], [], []>} : vector<1x49xf32>, vector<49x8xf32>, vector<1x8xf32> -> vector<1x8xf32>
    %387 = arith.addf %382, %386 : vector<1x8xf32>
    %388 = vector.extract_strided_slice %346 {offsets = [8, 0], sizes = [1, 49], strides = [1, 1]} : vector<32x49xf32> to vector<1x49xf32>
    %c8_497 = arith.constant 8 : index
    %c0_498 = arith.constant 0 : index
    %c0_499 = arith.constant 0 : index
    %389 = vector.load %arg6[%c8_497, %c0_498, %c0_499] : memref<32x49x8xf32, #tpu.memory_space<vmem>>, vector<1x49x8xf32>
    %390 = vector.shape_cast %389 : vector<1x49x8xf32> to vector<49x8xf32>
    %cst_500 = arith.constant dense<0.000000e+00> : vector<1x8xf32>
    %391 = tpu.matmul %388, %390, %cst_500 {dimension_numbers = #tpu.dot_dimension_numbers<[1], [0], [0], [1], [0, 0, 1, 1], [], []>} : vector<1x49xf32>, vector<49x8xf32>, vector<1x8xf32> -> vector<1x8xf32>
    %392 = arith.addf %387, %391 : vector<1x8xf32>
    %393 = vector.extract_strided_slice %346 {offsets = [9, 0], sizes = [1, 49], strides = [1, 1]} : vector<32x49xf32> to vector<1x49xf32>
    %c9_501 = arith.constant 9 : index
    %c0_502 = arith.constant 0 : index
    %c0_503 = arith.constant 0 : index
    %394 = vector.load %arg6[%c9_501, %c0_502, %c0_503] : memref<32x49x8xf32, #tpu.memory_space<vmem>>, vector<1x49x8xf32>
    %395 = vector.shape_cast %394 : vector<1x49x8xf32> to vector<49x8xf32>
    %cst_504 = arith.constant dense<0.000000e+00> : vector<1x8xf32>
    %396 = tpu.matmul %393, %395, %cst_504 {dimension_numbers = #tpu.dot_dimension_numbers<[1], [0], [0], [1], [0, 0, 1, 1], [], []>} : vector<1x49xf32>, vector<49x8xf32>, vector<1x8xf32> -> vector<1x8xf32>
    %397 = arith.addf %392, %396 : vector<1x8xf32>
    %398 = vector.extract_strided_slice %346 {offsets = [10, 0], sizes = [1, 49], strides = [1, 1]} : vector<32x49xf32> to vector<1x49xf32>
    %c10_505 = arith.constant 10 : index
    %c0_506 = arith.constant 0 : index
    %c0_507 = arith.constant 0 : index
    %399 = vector.load %arg6[%c10_505, %c0_506, %c0_507] : memref<32x49x8xf32, #tpu.memory_space<vmem>>, vector<1x49x8xf32>
    %400 = vector.shape_cast %399 : vector<1x49x8xf32> to vector<49x8xf32>
    %cst_508 = arith.constant dense<0.000000e+00> : vector<1x8xf32>
    %401 = tpu.matmul %398, %400, %cst_508 {dimension_numbers = #tpu.dot_dimension_numbers<[1], [0], [0], [1], [0, 0, 1, 1], [], []>} : vector<1x49xf32>, vector<49x8xf32>, vector<1x8xf32> -> vector<1x8xf32>
    %402 = arith.addf %397, %401 : vector<1x8xf32>
    %403 = vector.extract_strided_slice %346 {offsets = [11, 0], sizes = [1, 49], strides = [1, 1]} : vector<32x49xf32> to vector<1x49xf32>
    %c11_509 = arith.constant 11 : index
    %c0_510 = arith.constant 0 : index
    %c0_511 = arith.constant 0 : index
    %404 = vector.load %arg6[%c11_509, %c0_510, %c0_511] : memref<32x49x8xf32, #tpu.memory_space<vmem>>, vector<1x49x8xf32>
    %405 = vector.shape_cast %404 : vector<1x49x8xf32> to vector<49x8xf32>
    %cst_512 = arith.constant dense<0.000000e+00> : vector<1x8xf32>
    %406 = tpu.matmul %403, %405, %cst_512 {dimension_numbers = #tpu.dot_dimension_numbers<[1], [0], [0], [1], [0, 0, 1, 1], [], []>} : vector<1x49xf32>, vector<49x8xf32>, vector<1x8xf32> -> vector<1x8xf32>
    %407 = arith.addf %402, %406 : vector<1x8xf32>
    %408 = vector.extract_strided_slice %346 {offsets = [12, 0], sizes = [1, 49], strides = [1, 1]} : vector<32x49xf32> to vector<1x49xf32>
    %c12_513 = arith.constant 12 : index
    %c0_514 = arith.constant 0 : index
    %c0_515 = arith.constant 0 : index
    %409 = vector.load %arg6[%c12_513, %c0_514, %c0_515] : memref<32x49x8xf32, #tpu.memory_space<vmem>>, vector<1x49x8xf32>
    %410 = vector.shape_cast %409 : vector<1x49x8xf32> to vector<49x8xf32>
    %cst_516 = arith.constant dense<0.000000e+00> : vector<1x8xf32>
    %411 = tpu.matmul %408, %410, %cst_516 {dimension_numbers = #tpu.dot_dimension_numbers<[1], [0], [0], [1], [0, 0, 1, 1], [], []>} : vector<1x49xf32>, vector<49x8xf32>, vector<1x8xf32> -> vector<1x8xf32>
    %412 = arith.addf %407, %411 : vector<1x8xf32>
    %413 = vector.extract_strided_slice %346 {offsets = [13, 0], sizes = [1, 49], strides = [1, 1]} : vector<32x49xf32> to vector<1x49xf32>
    %c13_517 = arith.constant 13 : index
    %c0_518 = arith.constant 0 : index
    %c0_519 = arith.constant 0 : index
    %414 = vector.load %arg6[%c13_517, %c0_518, %c0_519] : memref<32x49x8xf32, #tpu.memory_space<vmem>>, vector<1x49x8xf32>
    %415 = vector.shape_cast %414 : vector<1x49x8xf32> to vector<49x8xf32>
    %cst_520 = arith.constant dense<0.000000e+00> : vector<1x8xf32>
    %416 = tpu.matmul %413, %415, %cst_520 {dimension_numbers = #tpu.dot_dimension_numbers<[1], [0], [0], [1], [0, 0, 1, 1], [], []>} : vector<1x49xf32>, vector<49x8xf32>, vector<1x8xf32> -> vector<1x8xf32>
    %417 = arith.addf %412, %416 : vector<1x8xf32>
    %418 = vector.extract_strided_slice %346 {offsets = [14, 0], sizes = [1, 49], strides = [1, 1]} : vector<32x49xf32> to vector<1x49xf32>
    %c14_521 = arith.constant 14 : index
    %c0_522 = arith.constant 0 : index
    %c0_523 = arith.constant 0 : index
    %419 = vector.load %arg6[%c14_521, %c0_522, %c0_523] : memref<32x49x8xf32, #tpu.memory_space<vmem>>, vector<1x49x8xf32>
    %420 = vector.shape_cast %419 : vector<1x49x8xf32> to vector<49x8xf32>
    %cst_524 = arith.constant dense<0.000000e+00> : vector<1x8xf32>
    %421 = tpu.matmul %418, %420, %cst_524 {dimension_numbers = #tpu.dot_dimension_numbers<[1], [0], [0], [1], [0, 0, 1, 1], [], []>} : vector<1x49xf32>, vector<49x8xf32>, vector<1x8xf32> -> vector<1x8xf32>
    %422 = arith.addf %417, %421 : vector<1x8xf32>
    %423 = vector.extract_strided_slice %346 {offsets = [15, 0], sizes = [1, 49], strides = [1, 1]} : vector<32x49xf32> to vector<1x49xf32>
    %c15 = arith.constant 15 : index
    %c0_525 = arith.constant 0 : index
    %c0_526 = arith.constant 0 : index
    %424 = vector.load %arg6[%c15, %c0_525, %c0_526] : memref<32x49x8xf32, #tpu.memory_space<vmem>>, vector<1x49x8xf32>
    %425 = vector.shape_cast %424 : vector<1x49x8xf32> to vector<49x8xf32>
    %cst_527 = arith.constant dense<0.000000e+00> : vector<1x8xf32>
    %426 = tpu.matmul %423, %425, %cst_527 {dimension_numbers = #tpu.dot_dimension_numbers<[1], [0], [0], [1], [0, 0, 1, 1], [], []>} : vector<1x49xf32>, vector<49x8xf32>, vector<1x8xf32> -> vector<1x8xf32>
    %427 = arith.addf %422, %426 : vector<1x8xf32>
    %428 = vector.extract_strided_slice %346 {offsets = [16, 0], sizes = [1, 49], strides = [1, 1]} : vector<32x49xf32> to vector<1x49xf32>
    %c16 = arith.constant 16 : index
    %c0_528 = arith.constant 0 : index
    %c0_529 = arith.constant 0 : index
    %429 = vector.load %arg6[%c16, %c0_528, %c0_529] : memref<32x49x8xf32, #tpu.memory_space<vmem>>, vector<1x49x8xf32>
    %430 = vector.shape_cast %429 : vector<1x49x8xf32> to vector<49x8xf32>
    %cst_530 = arith.constant dense<0.000000e+00> : vector<1x8xf32>
    %431 = tpu.matmul %428, %430, %cst_530 {dimension_numbers = #tpu.dot_dimension_numbers<[1], [0], [0], [1], [0, 0, 1, 1], [], []>} : vector<1x49xf32>, vector<49x8xf32>, vector<1x8xf32> -> vector<1x8xf32>
    %432 = arith.addf %427, %431 : vector<1x8xf32>
    %433 = vector.extract_strided_slice %346 {offsets = [17, 0], sizes = [1, 49], strides = [1, 1]} : vector<32x49xf32> to vector<1x49xf32>
    %c17 = arith.constant 17 : index
    %c0_531 = arith.constant 0 : index
    %c0_532 = arith.constant 0 : index
    %434 = vector.load %arg6[%c17, %c0_531, %c0_532] : memref<32x49x8xf32, #tpu.memory_space<vmem>>, vector<1x49x8xf32>
    %435 = vector.shape_cast %434 : vector<1x49x8xf32> to vector<49x8xf32>
    %cst_533 = arith.constant dense<0.000000e+00> : vector<1x8xf32>
    %436 = tpu.matmul %433, %435, %cst_533 {dimension_numbers = #tpu.dot_dimension_numbers<[1], [0], [0], [1], [0, 0, 1, 1], [], []>} : vector<1x49xf32>, vector<49x8xf32>, vector<1x8xf32> -> vector<1x8xf32>
    %437 = arith.addf %432, %436 : vector<1x8xf32>
    %438 = vector.extract_strided_slice %346 {offsets = [18, 0], sizes = [1, 49], strides = [1, 1]} : vector<32x49xf32> to vector<1x49xf32>
    %c18 = arith.constant 18 : index
    %c0_534 = arith.constant 0 : index
    %c0_535 = arith.constant 0 : index
    %439 = vector.load %arg6[%c18, %c0_534, %c0_535] : memref<32x49x8xf32, #tpu.memory_space<vmem>>, vector<1x49x8xf32>
    %440 = vector.shape_cast %439 : vector<1x49x8xf32> to vector<49x8xf32>
    %cst_536 = arith.constant dense<0.000000e+00> : vector<1x8xf32>
    %441 = tpu.matmul %438, %440, %cst_536 {dimension_numbers = #tpu.dot_dimension_numbers<[1], [0], [0], [1], [0, 0, 1, 1], [], []>} : vector<1x49xf32>, vector<49x8xf32>, vector<1x8xf32> -> vector<1x8xf32>
    %442 = arith.addf %437, %441 : vector<1x8xf32>
    %443 = vector.extract_strided_slice %346 {offsets = [19, 0], sizes = [1, 49], strides = [1, 1]} : vector<32x49xf32> to vector<1x49xf32>
    %c19 = arith.constant 19 : index
    %c0_537 = arith.constant 0 : index
    %c0_538 = arith.constant 0 : index
    %444 = vector.load %arg6[%c19, %c0_537, %c0_538] : memref<32x49x8xf32, #tpu.memory_space<vmem>>, vector<1x49x8xf32>
    %445 = vector.shape_cast %444 : vector<1x49x8xf32> to vector<49x8xf32>
    %cst_539 = arith.constant dense<0.000000e+00> : vector<1x8xf32>
    %446 = tpu.matmul %443, %445, %cst_539 {dimension_numbers = #tpu.dot_dimension_numbers<[1], [0], [0], [1], [0, 0, 1, 1], [], []>} : vector<1x49xf32>, vector<49x8xf32>, vector<1x8xf32> -> vector<1x8xf32>
    %447 = arith.addf %442, %446 : vector<1x8xf32>
    %448 = vector.extract_strided_slice %346 {offsets = [20, 0], sizes = [1, 49], strides = [1, 1]} : vector<32x49xf32> to vector<1x49xf32>
    %c20 = arith.constant 20 : index
    %c0_540 = arith.constant 0 : index
    %c0_541 = arith.constant 0 : index
    %449 = vector.load %arg6[%c20, %c0_540, %c0_541] : memref<32x49x8xf32, #tpu.memory_space<vmem>>, vector<1x49x8xf32>
    %450 = vector.shape_cast %449 : vector<1x49x8xf32> to vector<49x8xf32>
    %cst_542 = arith.constant dense<0.000000e+00> : vector<1x8xf32>
    %451 = tpu.matmul %448, %450, %cst_542 {dimension_numbers = #tpu.dot_dimension_numbers<[1], [0], [0], [1], [0, 0, 1, 1], [], []>} : vector<1x49xf32>, vector<49x8xf32>, vector<1x8xf32> -> vector<1x8xf32>
    %452 = arith.addf %447, %451 : vector<1x8xf32>
    %453 = vector.extract_strided_slice %346 {offsets = [21, 0], sizes = [1, 49], strides = [1, 1]} : vector<32x49xf32> to vector<1x49xf32>
    %c21 = arith.constant 21 : index
    %c0_543 = arith.constant 0 : index
    %c0_544 = arith.constant 0 : index
    %454 = vector.load %arg6[%c21, %c0_543, %c0_544] : memref<32x49x8xf32, #tpu.memory_space<vmem>>, vector<1x49x8xf32>
    %455 = vector.shape_cast %454 : vector<1x49x8xf32> to vector<49x8xf32>
    %cst_545 = arith.constant dense<0.000000e+00> : vector<1x8xf32>
    %456 = tpu.matmul %453, %455, %cst_545 {dimension_numbers = #tpu.dot_dimension_numbers<[1], [0], [0], [1], [0, 0, 1, 1], [], []>} : vector<1x49xf32>, vector<49x8xf32>, vector<1x8xf32> -> vector<1x8xf32>
    %457 = arith.addf %452, %456 : vector<1x8xf32>
    %458 = vector.extract_strided_slice %346 {offsets = [22, 0], sizes = [1, 49], strides = [1, 1]} : vector<32x49xf32> to vector<1x49xf32>
    %c22 = arith.constant 22 : index
    %c0_546 = arith.constant 0 : index
    %c0_547 = arith.constant 0 : index
    %459 = vector.load %arg6[%c22, %c0_546, %c0_547] : memref<32x49x8xf32, #tpu.memory_space<vmem>>, vector<1x49x8xf32>
    %460 = vector.shape_cast %459 : vector<1x49x8xf32> to vector<49x8xf32>
    %cst_548 = arith.constant dense<0.000000e+00> : vector<1x8xf32>
    %461 = tpu.matmul %458, %460, %cst_548 {dimension_numbers = #tpu.dot_dimension_numbers<[1], [0], [0], [1], [0, 0, 1, 1], [], []>} : vector<1x49xf32>, vector<49x8xf32>, vector<1x8xf32> -> vector<1x8xf32>
    %462 = arith.addf %457, %461 : vector<1x8xf32>
    %463 = vector.extract_strided_slice %346 {offsets = [23, 0], sizes = [1, 49], strides = [1, 1]} : vector<32x49xf32> to vector<1x49xf32>
    %c23 = arith.constant 23 : index
    %c0_549 = arith.constant 0 : index
    %c0_550 = arith.constant 0 : index
    %464 = vector.load %arg6[%c23, %c0_549, %c0_550] : memref<32x49x8xf32, #tpu.memory_space<vmem>>, vector<1x49x8xf32>
    %465 = vector.shape_cast %464 : vector<1x49x8xf32> to vector<49x8xf32>
    %cst_551 = arith.constant dense<0.000000e+00> : vector<1x8xf32>
    %466 = tpu.matmul %463, %465, %cst_551 {dimension_numbers = #tpu.dot_dimension_numbers<[1], [0], [0], [1], [0, 0, 1, 1], [], []>} : vector<1x49xf32>, vector<49x8xf32>, vector<1x8xf32> -> vector<1x8xf32>
    %467 = arith.addf %462, %466 : vector<1x8xf32>
    %468 = vector.extract_strided_slice %346 {offsets = [24, 0], sizes = [1, 49], strides = [1, 1]} : vector<32x49xf32> to vector<1x49xf32>
    %c24 = arith.constant 24 : index
    %c0_552 = arith.constant 0 : index
    %c0_553 = arith.constant 0 : index
    %469 = vector.load %arg6[%c24, %c0_552, %c0_553] : memref<32x49x8xf32, #tpu.memory_space<vmem>>, vector<1x49x8xf32>
    %470 = vector.shape_cast %469 : vector<1x49x8xf32> to vector<49x8xf32>
    %cst_554 = arith.constant dense<0.000000e+00> : vector<1x8xf32>
    %471 = tpu.matmul %468, %470, %cst_554 {dimension_numbers = #tpu.dot_dimension_numbers<[1], [0], [0], [1], [0, 0, 1, 1], [], []>} : vector<1x49xf32>, vector<49x8xf32>, vector<1x8xf32> -> vector<1x8xf32>
    %472 = arith.addf %467, %471 : vector<1x8xf32>
    %473 = vector.extract_strided_slice %346 {offsets = [25, 0], sizes = [1, 49], strides = [1, 1]} : vector<32x49xf32> to vector<1x49xf32>
    %c25 = arith.constant 25 : index
    %c0_555 = arith.constant 0 : index
    %c0_556 = arith.constant 0 : index
    %474 = vector.load %arg6[%c25, %c0_555, %c0_556] : memref<32x49x8xf32, #tpu.memory_space<vmem>>, vector<1x49x8xf32>
    %475 = vector.shape_cast %474 : vector<1x49x8xf32> to vector<49x8xf32>
    %cst_557 = arith.constant dense<0.000000e+00> : vector<1x8xf32>
    %476 = tpu.matmul %473, %475, %cst_557 {dimension_numbers = #tpu.dot_dimension_numbers<[1], [0], [0], [1], [0, 0, 1, 1], [], []>} : vector<1x49xf32>, vector<49x8xf32>, vector<1x8xf32> -> vector<1x8xf32>
    %477 = arith.addf %472, %476 : vector<1x8xf32>
    %478 = vector.extract_strided_slice %346 {offsets = [26, 0], sizes = [1, 49], strides = [1, 1]} : vector<32x49xf32> to vector<1x49xf32>
    %c26 = arith.constant 26 : index
    %c0_558 = arith.constant 0 : index
    %c0_559 = arith.constant 0 : index
    %479 = vector.load %arg6[%c26, %c0_558, %c0_559] : memref<32x49x8xf32, #tpu.memory_space<vmem>>, vector<1x49x8xf32>
    %480 = vector.shape_cast %479 : vector<1x49x8xf32> to vector<49x8xf32>
    %cst_560 = arith.constant dense<0.000000e+00> : vector<1x8xf32>
    %481 = tpu.matmul %478, %480, %cst_560 {dimension_numbers = #tpu.dot_dimension_numbers<[1], [0], [0], [1], [0, 0, 1, 1], [], []>} : vector<1x49xf32>, vector<49x8xf32>, vector<1x8xf32> -> vector<1x8xf32>
    %482 = arith.addf %477, %481 : vector<1x8xf32>
    %483 = vector.extract_strided_slice %346 {offsets = [27, 0], sizes = [1, 49], strides = [1, 1]} : vector<32x49xf32> to vector<1x49xf32>
    %c27 = arith.constant 27 : index
    %c0_561 = arith.constant 0 : index
    %c0_562 = arith.constant 0 : index
    %484 = vector.load %arg6[%c27, %c0_561, %c0_562] : memref<32x49x8xf32, #tpu.memory_space<vmem>>, vector<1x49x8xf32>
    %485 = vector.shape_cast %484 : vector<1x49x8xf32> to vector<49x8xf32>
    %cst_563 = arith.constant dense<0.000000e+00> : vector<1x8xf32>
    %486 = tpu.matmul %483, %485, %cst_563 {dimension_numbers = #tpu.dot_dimension_numbers<[1], [0], [0], [1], [0, 0, 1, 1], [], []>} : vector<1x49xf32>, vector<49x8xf32>, vector<1x8xf32> -> vector<1x8xf32>
    %487 = arith.addf %482, %486 : vector<1x8xf32>
    %488 = vector.extract_strided_slice %346 {offsets = [28, 0], sizes = [1, 49], strides = [1, 1]} : vector<32x49xf32> to vector<1x49xf32>
    %c28 = arith.constant 28 : index
    %c0_564 = arith.constant 0 : index
    %c0_565 = arith.constant 0 : index
    %489 = vector.load %arg6[%c28, %c0_564, %c0_565] : memref<32x49x8xf32, #tpu.memory_space<vmem>>, vector<1x49x8xf32>
    %490 = vector.shape_cast %489 : vector<1x49x8xf32> to vector<49x8xf32>
    %cst_566 = arith.constant dense<0.000000e+00> : vector<1x8xf32>
    %491 = tpu.matmul %488, %490, %cst_566 {dimension_numbers = #tpu.dot_dimension_numbers<[1], [0], [0], [1], [0, 0, 1, 1], [], []>} : vector<1x49xf32>, vector<49x8xf32>, vector<1x8xf32> -> vector<1x8xf32>
    %492 = arith.addf %487, %491 : vector<1x8xf32>
    %493 = vector.extract_strided_slice %346 {offsets = [29, 0], sizes = [1, 49], strides = [1, 1]} : vector<32x49xf32> to vector<1x49xf32>
    %c29 = arith.constant 29 : index
    %c0_567 = arith.constant 0 : index
    %c0_568 = arith.constant 0 : index
    %494 = vector.load %arg6[%c29, %c0_567, %c0_568] : memref<32x49x8xf32, #tpu.memory_space<vmem>>, vector<1x49x8xf32>
    %495 = vector.shape_cast %494 : vector<1x49x8xf32> to vector<49x8xf32>
    %cst_569 = arith.constant dense<0.000000e+00> : vector<1x8xf32>
    %496 = tpu.matmul %493, %495, %cst_569 {dimension_numbers = #tpu.dot_dimension_numbers<[1], [0], [0], [1], [0, 0, 1, 1], [], []>} : vector<1x49xf32>, vector<49x8xf32>, vector<1x8xf32> -> vector<1x8xf32>
    %497 = arith.addf %492, %496 : vector<1x8xf32>
    %498 = vector.extract_strided_slice %346 {offsets = [30, 0], sizes = [1, 49], strides = [1, 1]} : vector<32x49xf32> to vector<1x49xf32>
    %c30 = arith.constant 30 : index
    %c0_570 = arith.constant 0 : index
    %c0_571 = arith.constant 0 : index
    %499 = vector.load %arg6[%c30, %c0_570, %c0_571] : memref<32x49x8xf32, #tpu.memory_space<vmem>>, vector<1x49x8xf32>
    %500 = vector.shape_cast %499 : vector<1x49x8xf32> to vector<49x8xf32>
    %cst_572 = arith.constant dense<0.000000e+00> : vector<1x8xf32>
    %501 = tpu.matmul %498, %500, %cst_572 {dimension_numbers = #tpu.dot_dimension_numbers<[1], [0], [0], [1], [0, 0, 1, 1], [], []>} : vector<1x49xf32>, vector<49x8xf32>, vector<1x8xf32> -> vector<1x8xf32>
    %502 = arith.addf %497, %501 : vector<1x8xf32>
    %503 = vector.extract_strided_slice %346 {offsets = [31, 0], sizes = [1, 49], strides = [1, 1]} : vector<32x49xf32> to vector<1x49xf32>
    %c31 = arith.constant 31 : index
    %c0_573 = arith.constant 0 : index
    %c0_574 = arith.constant 0 : index
    %504 = vector.load %arg6[%c31, %c0_573, %c0_574] : memref<32x49x8xf32, #tpu.memory_space<vmem>>, vector<1x49x8xf32>
    %505 = vector.shape_cast %504 : vector<1x49x8xf32> to vector<49x8xf32>
    %cst_575 = arith.constant dense<0.000000e+00> : vector<1x8xf32>
    %506 = tpu.matmul %503, %505, %cst_575 {dimension_numbers = #tpu.dot_dimension_numbers<[1], [0], [0], [1], [0, 0, 1, 1], [], []>} : vector<1x49xf32>, vector<49x8xf32>, vector<1x8xf32> -> vector<1x8xf32>
    %507 = arith.addf %502, %506 : vector<1x8xf32>
    %cst_576 = arith.constant 0.000000e+00 : f32
    %508 = vector.broadcast %cst_576 : f32 to vector<1x8xf32>
    %509 = arith.maximumf %507, %508 : vector<1x8xf32>
    %c0_577 = arith.constant 0 : index
    %c0_578 = arith.constant 0 : index
    %510 = vector.load %arg8[%c0_577, %c0_578] : memref<8x8xf32, #tpu.memory_space<vmem>>, vector<8x8xf32>
    %cst_579 = arith.constant dense<0.000000e+00> : vector<1x8xf32>
    %511 = tpu.matmul %509, %510, %cst_579 {dimension_numbers = #tpu.dot_dimension_numbers<[1], [0], [0], [1], [0, 0, 1, 1], [], []>} : vector<1x8xf32>, vector<8x8xf32>, vector<1x8xf32> -> vector<1x8xf32>
    %c0_580 = arith.constant 0 : index
    %c0_581 = arith.constant 0 : index
    %512 = vector.load %arg9[%c0_580, %c0_581] : memref<1x8xf32, #tpu.memory_space<vmem>>, vector<1x8xf32>
    %513 = arith.addf %511, %512 : vector<1x8xf32>
    %cst_582 = arith.constant 0.000000e+00 : f32
    %514 = vector.broadcast %cst_582 : f32 to vector<1x8xf32>
    %515 = arith.maximumf %513, %514 : vector<1x8xf32>
    %c0_583 = arith.constant 0 : index
    %c0_584 = arith.constant 0 : index
    %516 = vector.load %arg10[%c0_583, %c0_584] : memref<8x10xf32, #tpu.memory_space<vmem>>, vector<8x10xf32>
    %cst_585 = arith.constant dense<0.000000e+00> : vector<1x10xf32>
    %517 = tpu.matmul %515, %516, %cst_585 {dimension_numbers = #tpu.dot_dimension_numbers<[1], [0], [0], [1], [0, 0, 1, 1], [], []>} : vector<1x8xf32>, vector<8x10xf32>, vector<1x10xf32> -> vector<1x10xf32>
    %c0_586 = arith.constant 0 : index
    %c0_587 = arith.constant 0 : index
    %518 = vector.load %arg11[%c0_586, %c0_587] : memref<1x10xf32, #tpu.memory_space<vmem>>, vector<1x10xf32>
    %519 = arith.addf %517, %518 : vector<1x10xf32>
    %cst_588 = arith.constant dense<0xFF800000> : vector<1xf32>
    %520 = vector.multi_reduction <maximumf>, %519, %cst_588 [1] : vector<1x10xf32> to vector<1xf32>
    %521 = vector.shape_cast %520 : vector<1xf32> to vector<1x1xf32>
    %522 = vector.broadcast %521 : vector<1x1xf32> to vector<1x10xf32>
    %523 = arith.subf %519, %522 : vector<1x10xf32>
    %524 = math.exp %523 : vector<1x10xf32>
    %cst_589 = arith.constant dense<0.000000e+00> : vector<1xf32>
    %525 = vector.multi_reduction <add>, %524, %cst_589 [1] : vector<1x10xf32> to vector<1xf32>
    %526 = vector.shape_cast %525 : vector<1xf32> to vector<1x1xf32>
    %527 = math.log %526 : vector<1x1xf32>
    %528 = vector.broadcast %527 : vector<1x1xf32> to vector<1x10xf32>
    %529 = arith.subf %523, %528 : vector<1x10xf32>
    %c0_590 = arith.constant 0 : index
    %c0_591 = arith.constant 0 : index
    %c0_592 = arith.constant 0 : index
    %530 = vector.load %arg12[%c0_590, %c0_591, %c0_592] : memref<1x1x10xf32, #tpu.memory_space<vmem>>, vector<1x1x10xf32>
    %531 = vector.shape_cast %530 : vector<1x1x10xf32> to vector<1x10xf32>
    %532 = vector.shape_cast %529 : vector<1x10xf32> to vector<1x1x10xf32>
    tpu.vector_store %arg12[%c0_590, %c0_591, %c0_592], %532 {strides = array<i32>} : memref<1x1x10xf32, #tpu.memory_space<vmem>>, vector<1x1x10xf32>,
    return
  }
  func.func @transform_0(%arg0: i32) -> (i32, i32, i32, i32, i32) {
    %c0_i32 = arith.constant 0 : i32
    %c0_i32_0 = arith.constant 0 : i32
    %c0_i32_1 = arith.constant 0 : i32
    %c0_i32_2 = arith.constant 0 : i32
    %c0_i32_3 = arith.constant 0 : i32
    return %arg0, %c0_i32, %c0_i32_0, %c0_i32_1, %c0_i32_2 : i32, i32, i32, i32, i32
  }
  func.func @transform_1(%arg0: i32) -> (i32, i32, i32, i32) {
    %c0_i32 = arith.constant 0 : i32
    %c0_i32_0 = arith.constant 0 : i32
    %c0_i32_1 = arith.constant 0 : i32
    %c0_i32_2 = arith.constant 0 : i32
    %c0_i32_3 = arith.constant 0 : i32
    return %c0_i32, %c0_i32_0, %c0_i32_1, %c0_i32_2 : i32, i32, i32, i32
  }
  func.func @transform_2(%arg0: i32) -> (i32, i32, i32) {
    %c0_i32 = arith.constant 0 : i32
    %c0_i32_0 = arith.constant 0 : i32
    %c0_i32_1 = arith.constant 0 : i32
    %c0_i32_2 = arith.constant 0 : i32
    return %c0_i32, %c0_i32_0, %c0_i32_1 : i32, i32, i32
  }
  func.func @transform_3(%arg0: i32) -> (i32, i32) {
    %c0_i32 = arith.constant 0 : i32
    %c0_i32_0 = arith.constant 0 : i32
    %c0_i32_1 = arith.constant 0 : i32
    return %c0_i32, %c0_i32_0 : i32, i32
  }
  func.func @transform_4(%arg0: i32) -> (i32, i32) {
    %c0_i32 = arith.constant 0 : i32
    %c0_i32_0 = arith.constant 0 : i32
    %c0_i32_1 = arith.constant 0 : i32
    return %c0_i32, %c0_i32_0 : i32, i32
  }
  func.func @transform_5(%arg0: i32) -> (i32, i32, i32) {
    %c0_i32 = arith.constant 0 : i32
    %c0_i32_0 = arith.constant 0 : i32
    %c0_i32_1 = arith.constant 0 : i32
    %c0_i32_2 = arith.constant 0 : i32
    return %c0_i32, %c0_i32_0, %c0_i32_1 : i32, i32, i32
  }
  func.func @transform_6(%arg0: i32) -> (i32, i32) {
    %c0_i32 = arith.constant 0 : i32
    %c0_i32_0 = arith.constant 0 : i32
    %c0_i32_1 = arith.constant 0 : i32
    return %c0_i32, %c0_i32_0 : i32, i32
  }
  func.func @transform_7(%arg0: i32) -> (i32, i32) {
    %c0_i32 = arith.constant 0 : i32
    %c0_i32_0 = arith.constant 0 : i32
    %c0_i32_1 = arith.constant 0 : i32
    return %c0_i32, %c0_i32_0 : i32, i32
  }
  func.func @transform_8(%arg0: i32) -> (i32, i32) {
    %c0_i32 = arith.constant 0 : i32
    %c0_i32_0 = arith.constant 0 : i32
    %c0_i32_1 = arith.constant 0 : i32
    return %c0_i32, %c0_i32_0 : i32, i32
  }
  func.func @transform_9(%arg0: i32) -> (i32, i32) {
    %c0_i32 = arith.constant 0 : i32
    %c0_i32_0 = arith.constant 0 : i32
    %c0_i32_1 = arith.constant 0 : i32
    return %c0_i32, %c0_i32_0 : i32, i32
  }
  func.func @transform_10(%arg0: i32) -> (i32, i32) {
    %c0_i32 = arith.constant 0 : i32
    %c0_i32_0 = arith.constant 0 : i32
    %c0_i32_1 = arith.constant 0 : i32
    return %c0_i32, %c0_i32_0 : i32, i32
  }
  func.func @transform_11(%arg0: i32) -> (i32, i32, i32) {
    %c0_i32 = arith.constant 0 : i32
    %c0_i32_0 = arith.constant 0 : i32
    %c0_i32_1 = arith.constant 0 : i32
    return %arg0, %c0_i32, %c0_i32_0 : i32, i32, i32
  }
}

</mosaic_0001>

<llo_original>
// kernel: cnn_dnn_forward.1
$region0: #{cnn_dnn_forward.1}
  #allocation0 [shape = 'u32[]', space=smem, size = 0x4, offset = 0x4, fixed_abs, tag = 'smem constant byte address 0x4 - core index']
  #allocation1 [shape = 'u32[144,128]{1,0:T(1,128)}', space=vmem, size = 0x12000, scoped, tag = 'internal scratch']
  #allocation2 [shape = 'f32[16,2,16,8]{3,2,1,0:T(8,128)}', space=vmem, size = 0x40000, scoped, tag = 'scratch operand']
  %s0 = inlined_call_operand.vmem [shape: f32[2,2,15,4,8], index: 0, kind: input, shape index: {}]
  %s1 = inlined_call_operand.vmem [shape: f32[9,1,16,1], index: 1, kind: input, shape index: {}]
  %s2 = inlined_call_operand.vmem [shape: f32[1,16,1], index: 2, kind: input, shape index: {}]
  %s3 = inlined_call_operand.vmem [shape: f32[32,144], index: 3, kind: input, shape index: {}]
  %s4 = inlined_call_operand.vmem [shape: f32[32,1], index: 4, kind: input, shape index: {}]
  %s5 = inlined_call_operand.vmem [shape: f32[32,49,8], index: 5, kind: input, shape index: {}]
  %s6 = inlined_call_operand.vmem [shape: f32[1,8], index: 6, kind: input, shape index: {}]
  %s7 = inlined_call_operand.vmem [shape: f32[8,8], index: 7, kind: input, shape index: {}]
  %s8 = inlined_call_operand.vmem [shape: f32[1,8], index: 8, kind: input, shape index: {}]
  %s9 = inlined_call_operand.vmem [shape: f32[8,10], index: 9, kind: input, shape index: {}]
  %s10 = inlined_call_operand.vmem [shape: f32[1,10], index: 10, kind: input, shape index: {}]
  %s11 = inlined_call_operand.hbm [shape: f32[2,1,10], index: 11, kind: output, shape index: {}]
  %s12 = sld [smem:[#allocation0]]
  $region77: #{cnn_dnn_forward.1} parent=0
    _
  %s14 = ssub.s32 1, %s12
  %s15 = scalar_select 0, %s14, %s12
  $region1: #{cnn_dnn_forward.1} parent=0
    #allocation3 [shape = 'u8[1024]{0}', space=vmem, size = 0x400, scoped, tag = 'output window, operand 0']
    #allocation4 [shape = 's32[2]{0}', space=sflag, size = 0x8, scoped, tag = 'scoped memory for cnn_dnn_forward.1']
    %16 = vsyncpa [#allocation4], 0
    %s17 = scalar_lea.sflag [#allocation4], 1
    %18 = vsyncpa %s17, 0
    loop: start=0, step=1, limit=4
    $region2: #{cnn_dnn_forward.1} parent=1 // loop_pre_header
      _
    $region3: #{cnn_dnn_forward.1} parent=1 // loop_header
      %s20 = sphi 0, %s24
      %p21 = scmp.ge.s32.totalorder %s20, 4
      %s30 = sphi 0, %s32
      %s33 = sphi 0, %s30
      %s34 = sphi 0, %s33
      %s50 = sphi 0, %s34
      %s54 = sphi 0, %s54
      %s56 = sphi 0, %s54
      %s57 = sphi 0, %s56
      %s71 = sphi 0, %s57
      %s75 = sphi 0, %s75
      %s77 = sphi 0, %s75
      %s78 = sphi 0, %s77
      %s92 = sphi 0, %s78
      %s96 = sphi 0, %s96
      %s98 = sphi 0, %s96
      %s99 = sphi 0, %s98
      %s113 = sphi 0, %s99
      %s117 = sphi 0, %s117
      %s119 = sphi 0, %s117
      %s120 = sphi 0, %s119
      %s134 = sphi 0, %s120
      %s138 = sphi 0, %s138
      %s140 = sphi 0, %s138
      %s141 = sphi 0, %s140
      %s155 = sphi 0, %s141
      %s159 = sphi 0, %s159
      %s161 = sphi 0, %s159
      %s162 = sphi 0, %s161
      %s176 = sphi 0, %s162
      %s180 = sphi 0, %s180
      %s182 = sphi 0, %s180
      %s183 = sphi 0, %s182
      %s197 = sphi 0, %s183
      %s201 = sphi 0, %s201
      %s203 = sphi 0, %s201
      %s204 = sphi 0, %s203
      %s218 = sphi 0, %s204
      %s222 = sphi 0, %s222
      %s224 = sphi 0, %s222
      %s225 = sphi 0, %s224
      %s239 = sphi 0, %s225
      %s243 = sphi 0, %s243
      %s245 = sphi 0, %s243
      %s246 = sphi 0, %s245
      %s260 = sphi 0, %s246
      %s266 = sphi 0, %s268
      %s269 = sphi 0, %s266
      %s270 = sphi 0, %s269
      %s286 = sphi 0, %s270
    $region4: #{cnn_dnn_forward.1} parent=1 // loop_header_branch
      %23 = sbr.rel (%p21) target = $region8
    $region5: #{cnn_dnn_forward.1} parent=1 // loop_body
      %s25 = ssub.s32 %s20, 1
      %s26 = ssub.s32 %s20, 2
      %s27 = sadd.s32 %s20, 1
      %s28 = ssub.s32 %s20, %s27
      %p29 = scmp.eq.s32.totalorder %s28, 0
      %s31 = sadd.s32 %s30, 1
      %s32 = scalar_select %p29, %s30, %s31
      %p35 = pneg %p29
      %p36 = scmp.eq.s32.totalorder %s20, 1
      %p37 = por %p35, %p36
      %p38 = scmp.ne.s32.totalorder %s30, %s33
      %p39 = scmp.eq.s32.totalorder %s20, 0
      %p40 = por %p38, %p39
      %p41 = scmp.ne.s32.totalorder %s30, %s33
      %p42 = scmp.eq.s32.totalorder %s25, 1
      %p43 = por %p41, %p42
      %p44 = scmp.ne.s32.totalorder %s33, %s34
      %p45 = scmp.eq.s32.totalorder %s25, 0
      %p46 = por %p44, %p45
      %p47 = scmp.ne.s32.totalorder %s33, %s34
      %p48 = scmp.eq.s32.totalorder %s26, 1
      %p49 = por %p47, %p48
      %p51 = scmp.ne.s32.totalorder %s34, %s50
      %p52 = scmp.eq.s32.totalorder %s26, 0
      %p53 = por %p51, %p52
      %s55 = sadd.s32 %s54, 1
      %p58 = scmp.eq.s32.totalorder %s20, 1
      %p59 = scmp.ne.s32.totalorder %s54, %s56
      %p60 = scmp.eq.s32.totalorder %s20, 0
      %p61 = por %p59, %p60
      %p62 = scmp.ne.s32.totalorder %s54, %s56
      %p63 = scmp.eq.s32.totalorder %s25, 1
      %p64 = por %p62, %p63
      %p65 = scmp.ne.s32.totalorder %s56, %s57
      %p66 = scmp.eq.s32.totalorder %s25, 0
      %p67 = por %p65, %p66
      %p68 = scmp.ne.s32.totalorder %s56, %s57
      %p69 = scmp.eq.s32.totalorder %s26, 1
      %p70 = por %p68, %p69
      %p72 = scmp.ne.s32.totalorder %s57, %s71
      %p73 = scmp.eq.s32.totalorder %s26, 0
      %p74 = por %p72, %p73
      %s76 = sadd.s32 %s75, 1
      %p79 = scmp.eq.s32.totalorder %s20, 1
      %p80 = scmp.ne.s32.totalorder %s75, %s77
      %p81 = scmp.eq.s32.totalorder %s20, 0
      %p82 = por %p80, %p81
      %p83 = scmp.ne.s32.totalorder %s75, %s77
      %p84 = scmp.eq.s32.totalorder %s25, 1
      %p85 = por %p83, %p84
      %p86 = scmp.ne.s32.totalorder %s77, %s78
      %p87 = scmp.eq.s32.totalorder %s25, 0
      %p88 = por %p86, %p87
      %p89 = scmp.ne.s32.totalorder %s77, %s78
      %p90 = scmp.eq.s32.totalorder %s26, 1
      %p91 = por %p89, %p90
      %p93 = scmp.ne.s32.totalorder %s78, %s92
      %p94 = scmp.eq.s32.totalorder %s26, 0
      %p95 = por %p93, %p94
      %s97 = sadd.s32 %s96, 1
      %p100 = scmp.eq.s32.totalorder %s20, 1
      %p101 = scmp.ne.s32.totalorder %s96, %s98
      %p102 = scmp.eq.s32.totalorder %s20, 0
      %p103 = por %p101, %p102
      %p104 = scmp.ne.s32.totalorder %s96, %s98
      %p105 = scmp.eq.s32.totalorder %s25, 1
      %p106 = por %p104, %p105
      %p107 = scmp.ne.s32.totalorder %s98, %s99
      %p108 = scmp.eq.s32.totalorder %s25, 0
      %p109 = por %p107, %p108
      %p110 = scmp.ne.s32.totalorder %s98, %s99
      %p111 = scmp.eq.s32.totalorder %s26, 1
      %p112 = por %p110, %p111
      %p114 = scmp.ne.s32.totalorder %s99, %s113
      %p115 = scmp.eq.s32.totalorder %s26, 0
      %p116 = por %p114, %p115
      %s118 = sadd.s32 %s117, 1
      %p121 = scmp.eq.s32.totalorder %s20, 1
      %p122 = scmp.ne.s32.totalorder %s117, %s119
      %p123 = scmp.eq.s32.totalorder %s20, 0
      %p124 = por %p122, %p123
      %p125 = scmp.ne.s32.totalorder %s117, %s119
      %p126 = scmp.eq.s32.totalorder %s25, 1
      %p127 = por %p125, %p126
      %p128 = scmp.ne.s32.totalorder %s119, %s120
      %p129 = scmp.eq.s32.totalorder %s25, 0
      %p130 = por %p128, %p129
      %p131 = scmp.ne.s32.totalorder %s119, %s120
      %p132 = scmp.eq.s32.totalorder %s26, 1
      %p133 = por %p131, %p132
      %p135 = scmp.ne.s32.totalorder %s120, %s134
      %p136 = scmp.eq.s32.totalorder %s26, 0
      %p137 = por %p135, %p136
      %s139 = sadd.s32 %s138, 1
      %p142 = scmp.eq.s32.totalorder %s20, 1
      %p143 = scmp.ne.s32.totalorder %s138, %s140
      %p144 = scmp.eq.s32.totalorder %s20, 0
      %p145 = por %p143, %p144
      %p146 = scmp.ne.s32.totalorder %s138, %s140
      %p147 = scmp.eq.s32.totalorder %s25, 1
      %p148 = por %p146, %p147
      %p149 = scmp.ne.s32.totalorder %s140, %s141
      %p150 = scmp.eq.s32.totalorder %s25, 0
      %p151 = por %p149, %p150
      %p152 = scmp.ne.s32.totalorder %s140, %s141
      %p153 = scmp.eq.s32.totalorder %s26, 1
      %p154 = por %p152, %p153
      %p156 = scmp.ne.s32.totalorder %s141, %s155
      %p157 = scmp.eq.s32.totalorder %s26, 0
      %p158 = por %p156, %p157
      %s160 = sadd.s32 %s159, 1
      %p163 = scmp.eq.s32.totalorder %s20, 1
      %p164 = scmp.ne.s32.totalorder %s159, %s161
      %p165 = scmp.eq.s32.totalorder %s20, 0
      %p166 = por %p164, %p165
      %p167 = scmp.ne.s32.totalorder %s159, %s161
      %p168 = scmp.eq.s32.totalorder %s25, 1
      %p169 = por %p167, %p168
      %p170 = scmp.ne.s32.totalorder %s161, %s162
      %p171 = scmp.eq.s32.totalorder %s25, 0
      %p172 = por %p170, %p171
      %p173 = scmp.ne.s32.totalorder %s161, %s162
      %p174 = scmp.eq.s32.totalorder %s26, 1
      %p175 = por %p173, %p174
      %p177 = scmp.ne.s32.totalorder %s162, %s176
      %p178 = scmp.eq.s32.totalorder %s26, 0
      %p179 = por %p177, %p178
      %s181 = sadd.s32 %s180, 1
      %p184 = scmp.eq.s32.totalorder %s20, 1
      %p185 = scmp.ne.s32.totalorder %s180, %s182
      %p186 = scmp.eq.s32.totalorder %s20, 0
      %p187 = por %p185, %p186
      %p188 = scmp.ne.s32.totalorder %s180, %s182
      %p189 = scmp.eq.s32.totalorder %s25, 1
      %p190 = por %p188, %p189
      %p191 = scmp.ne.s32.totalorder %s182, %s183
      %p192 = scmp.eq.s32.totalorder %s25, 0
      %p193 = por %p191, %p192
      %p194 = scmp.ne.s32.totalorder %s182, %s183
      %p195 = scmp.eq.s32.totalorder %s26, 1
      %p196 = por %p194, %p195
      %p198 = scmp.ne.s32.totalorder %s183, %s197
      %p199 = scmp.eq.s32.totalorder %s26, 0
      %p200 = por %p198, %p199
      %s202 = sadd.s32 %s201, 1
      %p205 = scmp.eq.s32.totalorder %s20, 1
      %p206 = scmp.ne.s32.totalorder %s201, %s203
      %p207 = scmp.eq.s32.totalorder %s20, 0
      %p208 = por %p206, %p207
      %p209 = scmp.ne.s32.totalorder %s201, %s203
      %p210 = scmp.eq.s32.totalorder %s25, 1
      %p211 = por %p209, %p210
      %p212 = scmp.ne.s32.totalorder %s203, %s204
      %p213 = scmp.eq.s32.totalorder %s25, 0
      %p214 = por %p212, %p213
      %p215 = scmp.ne.s32.totalorder %s203, %s204
      %p216 = scmp.eq.s32.totalorder %s26, 1
      %p217 = por %p215, %p216
      %p219 = scmp.ne.s32.totalorder %s204, %s218
      %p220 = scmp.eq.s32.totalorder %s26, 0
      %p221 = por %p219, %p220
      %s223 = sadd.s32 %s222, 1
      %p226 = scmp.eq.s32.totalorder %s20, 1
      %p227 = scmp.ne.s32.totalorder %s222, %s224
      %p228 = scmp.eq.s32.totalorder %s20, 0
      %p229 = por %p227, %p228
      %p230 = scmp.ne.s32.totalorder %s222, %s224
      %p231 = scmp.eq.s32.totalorder %s25, 1
      %p232 = por %p230, %p231
      %p233 = scmp.ne.s32.totalorder %s224, %s225
      %p234 = scmp.eq.s32.totalorder %s25, 0
      %p235 = por %p233, %p234
      %p236 = scmp.ne.s32.totalorder %s224, %s225
      %p237 = scmp.eq.s32.totalorder %s26, 1
      %p238 = por %p236, %p237
      %p240 = scmp.ne.s32.totalorder %s225, %s239
      %p241 = scmp.eq.s32.totalorder %s26, 0
      %p242 = por %p240, %p241
      %s244 = sadd.s32 %s243, 1
      %p247 = scmp.eq.s32.totalorder %s20, 1
      %p248 = scmp.ne.s32.totalorder %s243, %s245
      %p249 = scmp.eq.s32.totalorder %s20, 0
      %p250 = por %p248, %p249
      %p251 = scmp.ne.s32.totalorder %s243, %s245
      %p252 = scmp.eq.s32.totalorder %s25, 1
      %p253 = por %p251, %p252
      %p254 = scmp.ne.s32.totalorder %s245, %s246
      %p255 = scmp.eq.s32.totalorder %s25, 0
      %p256 = por %p254, %p255
      %p257 = scmp.ne.s32.totalorder %s245, %s246
      %p258 = scmp.eq.s32.totalorder %s26, 1
      %p259 = por %p257, %p258
      %p261 = scmp.ne.s32.totalorder %s246, %s260
      %p262 = scmp.eq.s32.totalorder %s26, 0
      %p263 = por %p261, %p262
      %s264 = ssub.s32 %s20, %s27
      %p265 = scmp.eq.s32.totalorder %s264, 0
      %s267 = sadd.s32 %s266, 1
      %s268 = scalar_select %p265, %s266, %s267
      %p271 = pneg %p265
      %p272 = scmp.eq.s32.totalorder %s20, 1
      %p273 = por %p271, %p272
      %p274 = scmp.ne.s32.totalorder %s266, %s269
      %p275 = scmp.eq.s32.totalorder %s20, 0
      %p276 = por %p274, %p275
      %p277 = scmp.ne.s32.totalorder %s266, %s269
      %p278 = scmp.eq.s32.totalorder %s25, 1
      %p279 = por %p277, %p278
      %p280 = scmp.ne.s32.totalorder %s269, %s270
      %p281 = scmp.eq.s32.totalorder %s25, 0
      %p282 = por %p280, %p281
      %p283 = scmp.ne.s32.totalorder %s269, %s270
      %p284 = scmp.eq.s32.totalorder %s26, 1
      %p285 = por %p283, %p284
      %p287 = scmp.ne.s32.totalorder %s270, %s286
      %p288 = scmp.eq.s32.totalorder %s26, 0
      %p289 = por %p287, %p288
      %p290 = scmp.le.s32.totalorder 1, %s20
      %p291 = scmp.lt.s32.totalorder %s20, 3
      %p292 = pnand %p290, %p291
      %p293 = pneg %p292
      // Predicated region
      $region9: #{cnn_dnn_forward.1} parent=5 // pred_check
        _
      $region10: #{cnn_dnn_forward.1} parent=5 // pred_check_branch
        %295 = sbr.rel (%p292) target = $region12
      $region11: #{cnn_dnn_forward.1} parent=5 // pred_region
        %s296 = ssub.s32 %s20, 1
        // Predicated region
        $region13: #{cnn_dnn_forward.1} parent=11 // pred_check
          %p297 = pneg %p67
        $region14: #{cnn_dnn_forward.1} parent=11 // pred_check_branch
          %299 = sbr.rel (%p297) target = $region16
        $region15: #{cnn_dnn_forward.1} parent=11 // pred_region
          _
        $region16: #{cnn_dnn_forward.1} parent=11 // pred_fallthru
          _
        // Predicated region
        $region17: #{cnn_dnn_forward.1} parent=11 // pred_check
          %p300 = pneg %p88
        $region18: #{cnn_dnn_forward.1} parent=11 // pred_check_branch
          %302 = sbr.rel (%p300) target = $region20
        $region19: #{cnn_dnn_forward.1} parent=11 // pred_region
          _
        $region20: #{cnn_dnn_forward.1} parent=11 // pred_fallthru
          _
        // Predicated region
        $region21: #{cnn_dnn_forward.1} parent=11 // pred_check
          %p303 = pneg %p109
        $region22: #{cnn_dnn_forward.1} parent=11 // pred_check_branch
          %305 = sbr.rel (%p303) target = $region24
        $region23: #{cnn_dnn_forward.1} parent=11 // pred_region
          _
        $region24: #{cnn_dnn_forward.1} parent=11 // pred_fallthru
          _
        // Predicated region
        $region25: #{cnn_dnn_forward.1} parent=11 // pred_check
          %p306 = pneg %p130
        $region26: #{cnn_dnn_forward.1} parent=11 // pred_check_branch
          %308 = sbr.rel (%p306) target = $region28
        $region27: #{cnn_dnn_forward.1} parent=11 // pred_region
          _
        $region28: #{cnn_dnn_forward.1} parent=11 // pred_fallthru
          _
        // Predicated region
        $region29: #{cnn_dnn_forward.1} parent=11 // pred_check
          %p309 = pneg %p151
        $region30: #{cnn_dnn_forward.1} parent=11 // pred_check_branch
          %311 = sbr.rel (%p309) target = $region32
        $region31: #{cnn_dnn_forward.1} parent=11 // pred_region
          _
        $region32: #{cnn_dnn_forward.1} parent=11 // pred_fallthru
          _
        // Predicated region
        $region33: #{cnn_dnn_forward.1} parent=11 // pred_check
          %p312 = pneg %p172
        $region34: #{cnn_dnn_forward.1} parent=11 // pred_check_branch
          %314 = sbr.rel (%p312) target = $region36
        $region35: #{cnn_dnn_forward.1} parent=11 // pred_region
          _
        $region36: #{cnn_dnn_forward.1} parent=11 // pred_fallthru
          _
        // Predicated region
        $region37: #{cnn_dnn_forward.1} parent=11 // pred_check
          %p315 = pneg %p193
        $region38: #{cnn_dnn_forward.1} parent=11 // pred_check_branch
          %317 = sbr.rel (%p315) target = $region40
        $region39: #{cnn_dnn_forward.1} parent=11 // pred_region
          _
        $region40: #{cnn_dnn_forward.1} parent=11 // pred_fallthru
          _
        // Predicated region
        $region41: #{cnn_dnn_forward.1} parent=11 // pred_check
          %p318 = pneg %p214
        $region42: #{cnn_dnn_forward.1} parent=11 // pred_check_branch
          %320 = sbr.rel (%p318) target = $region44
        $region43: #{cnn_dnn_forward.1} parent=11 // pred_region
          _
        $region44: #{cnn_dnn_forward.1} parent=11 // pred_fallthru
          _
        // Predicated region
        $region45: #{cnn_dnn_forward.1} parent=11 // pred_check
          %p321 = pneg %p235
        $region46: #{cnn_dnn_forward.1} parent=11 // pred_check_branch
          %323 = sbr.rel (%p321) target = $region48
        $region47: #{cnn_dnn_forward.1} parent=11 // pred_region
          _
        $region48: #{cnn_dnn_forward.1} parent=11 // pred_fallthru
          _
        // Predicated region
        $region49: #{cnn_dnn_forward.1} parent=11 // pred_check
          %p324 = pneg %p256
        $region50: #{cnn_dnn_forward.1} parent=11 // pred_check_branch
          %326 = sbr.rel (%p324) target = $region52
        $region51: #{cnn_dnn_forward.1} parent=11 // pred_region
          _
        $region52: #{cnn_dnn_forward.1} parent=11 // pred_fallthru
          _
      $region12: #{cnn_dnn_forward.1} parent=5 // pred_fallthru
        _
      %p327 = scmp.lt.s32.totalorder %s20, 2
      // Predicated region
      $region53: #{cnn_dnn_forward.1} parent=5 // pred_check
        %p328 = pneg %p327
      $region54: #{cnn_dnn_forward.1} parent=5 // pred_check_branch
        %330 = sbr.rel (%p328) target = $region56
      $region55: #{cnn_dnn_forward.1} parent=5 // pred_region
        // Predicated region
        $region57: #{cnn_dnn_forward.1} parent=55 // pred_check
          %p331 = pneg %p40
        $region58: #{cnn_dnn_forward.1} parent=55 // pred_check_branch
          %333 = sbr.rel (%p331) target = $region60
        $region59: #{cnn_dnn_forward.1} parent=55 // pred_region
          %p334 = scmp.lt.s32.totalorder %s20, 1
          %s335 = scalar_select %p334, %s20, 1
          %s336 = smul.addr %s335, 30
          %s337 = smul.addr %s336, 4
          %s338 = scalar_lea.vmem %s0, %s337
        $region60: #{cnn_dnn_forward.1} parent=55 // pred_fallthru
          _
      $region56: #{cnn_dnn_forward.1} parent=5 // pred_fallthru
        _
      %p339 = scmp.le.s32.totalorder 1, %s20
      %p340 = scmp.lt.s32.totalorder %s20, 3
      %p341 = pnand %p339, %p340
      %p342 = pneg %p341
      // Predicated region
      $region61: #{cnn_dnn_forward.1} parent=5 // pred_check
        _
      $region62: #{cnn_dnn_forward.1} parent=5 // pred_check_branch
        %344 = sbr.rel (%p341) target = $region64
      $region63: #{cnn_dnn_forward.1} parent=5 // pred_region
        %s345 = ssub.s32 %s20, 1
        %p346 = scmp.lt.s32.totalorder %s25, 1
        %s347 = scalar_select %p346, %s25, 1
        %s348 = smul.addr %s347, 30
        %s349 = smul.addr %s348, 4
        %s350 = scalar_lea.vmem %s0, %s349
        %p351 = pneg %p46
        %p352 = pneg %p43
        %p353 = pneg %p67
        %p354 = pneg %p64
        %p355 = pneg %p88
        %p356 = pneg %p85
        %p357 = pneg %p109
        %p358 = pneg %p106
        %p359 = pneg %p130
        %p360 = pneg %p127
        %p361 = pneg %p151
        %p362 = pneg %p148
        %p363 = pneg %p172
        %p364 = pneg %p169
        %p365 = pneg %p193
        %p366 = pneg %p190
        %p367 = pneg %p214
        %p368 = pneg %p211
        %p369 = pneg %p235
        %p370 = pneg %p232
        %p371 = pneg %p256
        %p372 = pneg %p253
        %p373 = pneg %p282
        %p374 = pneg %p279
        %s375 = sand.u32 %s269, 1
        %s376 = scalar_lea.sflag [#allocation4], %s375
        %s377 = sand.u32 %s269, 1
        %s378 = scalar_lea.vmem [#allocation3], %s377
        %p379 = scmp.lt.s32.totalorder %s25, 1
        %s380 = scalar_select %p379, %s25, 1
        %s381 = smul.addr %s380, 30
        %s382 = smul.addr %s381, 4
        %s383 = scalar_lea.vmem %s0, %s382
        %vm384 = vcmask 64512
        %385 = vst.msk [vmem:[#allocation2] sm:$0xff] %vm384, 0.0
        %386 = vst.msk [vmem:[#allocation2 + $0x8] sm:$0xff] %vm384, 0.0
        %387 = vst.msk [vmem:[#allocation2 + $0x10] sm:$0xff] %vm384, 0.0
        %388 = vst.msk [vmem:[#allocation2 + $0x18] sm:$0xff] %vm384, 0.0
        %389 = vst.msk [vmem:[#allocation2 + $0x20] sm:$0xff] %vm384, 0.0
        %390 = vst.msk [vmem:[#allocation2 + $0x28] sm:$0xff] %vm384, 0.0
        %391 = vst.msk [vmem:[#allocation2 + $0x30] sm:$0xff] %vm384, 0.0
        %392 = vst.msk [vmem:[#allocation2 + $0x38] sm:$0xff] %vm384, 0.0
        %393 = vst.msk [vmem:[#allocation2 + $0x40] sm:$0xff] %vm384, 0.0
        %394 = vst.msk [vmem:[#allocation2 + $0x48] sm:$0xff] %vm384, 0.0
        %395 = vst.msk [vmem:[#allocation2 + $0x50] sm:$0xff] %vm384, 0.0
        %396 = vst.msk [vmem:[#allocation2 + $0x58] sm:$0xff] %vm384, 0.0
        %397 = vst.msk [vmem:[#allocation2 + $0x60] sm:$0xff] %vm384, 0.0
        %398 = vst.msk [vmem:[#allocation2 + $0x68] sm:$0xff] %vm384, 0.0
        %399 = vst.msk [vmem:[#allocation2 + $0x70] sm:$0xff] %vm384, 0.0
        %400 = vst.msk [vmem:[#allocation2 + $0x78] sm:$0xff] %vm384, 0.0
        %401 = vst.msk [vmem:[#allocation2 + $0x80] sm:$0xff] %vm384, 0.0
        %402 = vst.msk [vmem:[#allocation2 + $0x88] sm:$0xff] %vm384, 0.0
        %403 = vst.msk [vmem:[#allocation2 + $0x90] sm:$0xff] %vm384, 0.0
        %404 = vst.msk [vmem:[#allocation2 + $0x98] sm:$0xff] %vm384, 0.0
        %405 = vst.msk [vmem:[#allocation2 + $0xa0] sm:$0xff] %vm384, 0.0
        %406 = vst.msk [vmem:[#allocation2 + $0xa8] sm:$0xff] %vm384, 0.0
        %407 = vst.msk [vmem:[#allocation2 + $0xb0] sm:$0xff] %vm384, 0.0
        %408 = vst.msk [vmem:[#allocation2 + $0xb8] sm:$0xff] %vm384, 0.0
        %409 = vst.msk [vmem:[#allocation2 + $0xc0] sm:$0xff] %vm384, 0.0
        %410 = vst.msk [vmem:[#allocation2 + $0xc8] sm:$0xff] %vm384, 0.0
        %411 = vst.msk [vmem:[#allocation2 + $0xd0] sm:$0xff] %vm384, 0.0
        %412 = vst.msk [vmem:[#allocation2 + $0xd8] sm:$0xff] %vm384, 0.0
        %413 = vst.msk [vmem:[#allocation2 + $0xe0] sm:$0xff] %vm384, 0.0
        %414 = vst.msk [vmem:[#allocation2 + $0xe8] sm:$0xff] %vm384, 0.0
        %415 = vst.msk [vmem:[#allocation2 + $0xf0] sm:$0xff] %vm384, 0.0
        %416 = vst.msk [vmem:[#allocation2 + $0xf8] sm:$0xff] %vm384, 0.0
        %417 = vst.msk [vmem:[#allocation2 + $0x100] sm:$0xff] %vm384, 0.0
        %418 = vst.msk [vmem:[#allocation2 + $0x108] sm:$0xff] %vm384, 0.0
        %419 = vst.msk [vmem:[#allocation2 + $0x110] sm:$0xff] %vm384, 0.0
        %420 = vst.msk [vmem:[#allocation2 + $0x118] sm:$0xff] %vm384, 0.0
        %421 = vst.msk [vmem:[#allocation2 + $0x120] sm:$0xff] %vm384, 0.0
        %422 = vst.msk [vmem:[#allocation2 + $0x128] sm:$0xff] %vm384, 0.0
        %423 = vst.msk [vmem:[#allocation2 + $0x130] sm:$0xff] %vm384, 0.0
        %424 = vst.msk [vmem:[#allocation2 + $0x138] sm:$0xff] %vm384, 0.0
        %425 = vst.msk [vmem:[#allocation2 + $0x140] sm:$0xff] %vm384, 0.0
        %426 = vst.msk [vmem:[#allocation2 + $0x148] sm:$0xff] %vm384, 0.0
        %427 = vst.msk [vmem:[#allocation2 + $0x150] sm:$0xff] %vm384, 0.0
        %428 = vst.msk [vmem:[#allocation2 + $0x158] sm:$0xff] %vm384, 0.0
        %429 = vst.msk [vmem:[#allocation2 + $0x160] sm:$0xff] %vm384, 0.0
        %430 = vst.msk [vmem:[#allocation2 + $0x168] sm:$0xff] %vm384, 0.0
        %431 = vst.msk [vmem:[#allocation2 + $0x170] sm:$0xff] %vm384, 0.0
        %432 = vst.msk [vmem:[#allocation2 + $0x178] sm:$0xff] %vm384, 0.0
        %433 = vst.msk [vmem:[#allocation2 + $0x180] sm:$0xff] %vm384, 0.0
        %434 = vst.msk [vmem:[#allocation2 + $0x188] sm:$0xff] %vm384, 0.0
        %435 = vst.msk [vmem:[#allocation2 + $0x190] sm:$0xff] %vm384, 0.0
        %436 = vst.msk [vmem:[#allocation2 + $0x198] sm:$0xff] %vm384, 0.0
        %437 = vst.msk [vmem:[#allocation2 + $0x1a0] sm:$0xff] %vm384, 0.0
        %438 = vst.msk [vmem:[#allocation2 + $0x1a8] sm:$0xff] %vm384, 0.0
        %439 = vst.msk [vmem:[#allocation2 + $0x1b0] sm:$0xff] %vm384, 0.0
        %440 = vst.msk [vmem:[#allocation2 + $0x1b8] sm:$0xff] %vm384, 0.0
        %441 = vst.msk [vmem:[#allocation2 + $0x1c0] sm:$0xff] %vm384, 0.0
        %442 = vst.msk [vmem:[#allocation2 + $0x1c8] sm:$0xff] %vm384, 0.0
        %443 = vst.msk [vmem:[#allocation2 + $0x1d0] sm:$0xff] %vm384, 0.0
        %444 = vst.msk [vmem:[#allocation2 + $0x1d8] sm:$0xff] %vm384, 0.0
        %445 = vst.msk [vmem:[#allocation2 + $0x1e0] sm:$0xff] %vm384, 0.0
        %446 = vst.msk [vmem:[#allocation2 + $0x1e8] sm:$0xff] %vm384, 0.0
        %447 = vst.msk [vmem:[#allocation2 + $0x1f0] sm:$0xff] %vm384, 0.0
        %448 = vst.msk [vmem:[#allocation2 + $0x1f8] sm:$0xff] %vm384, 0.0
        %v449 = vld [vmem:[%s383] sm:$0x1]
        %v450 = vld [vmem:[%s383 + $0x4] sm:$0x1]
        %v451 = vld [vmem:[%s383 + $0x8] sm:$0x1]
        %v452 = vld [vmem:[%s383 + $0xc] sm:$0x1]
        %v453 = vld [vmem:[%s383 + $0x10] sm:$0x1]
        %v454 = vld [vmem:[%s383 + $0x14] sm:$0x1]
        %v455 = vld [vmem:[%s383 + $0x18] sm:$0x1]
        %v456 = vld [vmem:[%s383 + $0x1c] sm:$0x1]
        %v457 = vld [vmem:[%s383 + $0x20] sm:$0x1]
        %v458 = vld [vmem:[%s383 + $0x24] sm:$0x1]
        %v459 = vld [vmem:[%s383 + $0x28] sm:$0x1]
        %v460 = vld [vmem:[%s383 + $0x2c] sm:$0x1]
        %v461 = vld [vmem:[%s383 + $0x30] sm:$0x1]
        %v462 = vld [vmem:[%s383 + $0x34] sm:$0x1]
        %v463 = vld [vmem:[%s1] sm:$0xff]
        %v464 = vld [vmem:[%s1 + $0x8] sm:$0xff]
        %v465 = vlaneseq
        %v466 = vshrl.u32 %v465, 7
        %v467 = vsub.s32 0, %v466
        %v468 = vrot.slane %v449, %v467
        %v469 = vlaneseq
        %v470 = vshrl.u32 %v469, 7
        %v471 = vsub.s32 0, %v470
        %v472 = vrot.slane %v450, %v471
        %v473 = vlaneseq
        %v474 = vshrl.u32 %v473, 7
        %v475 = vsub.s32 0, %v474
        %v476 = vrot.slane %v451, %v475
        %v477 = vlaneseq
        %v478 = vshrl.u32 %v477, 7
        %v479 = vsub.s32 0, %v478
        %v480 = vrot.slane %v452, %v479
        %v481 = vlaneseq
        %v482 = vshrl.u32 %v481, 7
        %v483 = vsub.s32 0, %v482
        %v484 = vrot.slane %v453, %v483
        %v485 = vlaneseq
        %v486 = vshrl.u32 %v485, 7
        %v487 = vsub.s32 0, %v486
        %v488 = vrot.slane %v454, %v487
        %v489 = vlaneseq
        %v490 = vshrl.u32 %v489, 7
        %v491 = vsub.s32 0, %v490
        %v492 = vrot.slane %v455, %v491
        %v493 = vlaneseq
        %v494 = vshrl.u32 %v493, 7
        %v495 = vsub.s32 0, %v494
        %v496 = vrot.slane %v456, %v495
        %v497 = vlaneseq
        %v498 = vshrl.u32 %v497, 7
        %v499 = vsub.s32 0, %v498
        %v500 = vrot.slane %v457, %v499
        %v501 = vlaneseq
        %v502 = vshrl.u32 %v501, 7
        %v503 = vsub.s32 0, %v502
        %v504 = vrot.slane %v458, %v503
        %v505 = vlaneseq
        %v506 = vshrl.u32 %v505, 7
        %v507 = vsub.s32 0, %v506
        %v508 = vrot.slane %v459, %v507
        %v509 = vlaneseq
        %v510 = vshrl.u32 %v509, 7
        %v511 = vsub.s32 0, %v510
        %v512 = vrot.slane %v460, %v511
        %v513 = vlaneseq
        %v514 = vshrl.u32 %v513, 7
        %v515 = vsub.s32 0, %v514
        %v516 = vrot.slane %v461, %v515
        %v517 = vlaneseq
        %v518 = vshrl.u32 %v517, 7
        %v519 = vsub.s32 0, %v518
        %v520 = vrot.slane %v462, %v519
        %522 = vset.pattern.permute.xlu0 0
        %523 = vperm.xlu0 %522, %v463
        %v524 = vpop.permute.xlu0 %523
        %527 = vset.pattern.permute.xlu0 0
        %528 = vperm.xlu0 %527, %v464
        %v529 = vpop.permute.xlu0 %528
        %v531 = vmul.f32 %v468, %v524
        %v532 = vmul.f32 %v468, %v529
        %v533 = vmul.f32 %v472, %v524
        %v534 = vmul.f32 %v472, %v529
        %v535 = vmul.f32 %v476, %v524
        %v536 = vmul.f32 %v476, %v529
        %v537 = vmul.f32 %v480, %v524
        %v538 = vmul.f32 %v480, %v529
        %v539 = vmul.f32 %v484, %v524
        %v540 = vmul.f32 %v484, %v529
        %v541 = vmul.f32 %v488, %v524
        %v542 = vmul.f32 %v488, %v529
        %v543 = vmul.f32 %v492, %v524
        %v544 = vmul.f32 %v492, %v529
        %v545 = vmul.f32 %v496, %v524
        %v546 = vmul.f32 %v496, %v529
        %v547 = vmul.f32 %v500, %v524
        %v548 = vmul.f32 %v500, %v529
        %v549 = vmul.f32 %v504, %v524
        %v550 = vmul.f32 %v504, %v529
        %v551 = vmul.f32 %v508, %v524
        %v552 = vmul.f32 %v508, %v529
        %v553 = vmul.f32 %v512, %v524
        %v554 = vmul.f32 %v512, %v529
        %v555 = vmul.f32 %v516, %v524
        %v556 = vmul.f32 %v516, %v529
        %v557 = vmul.f32 %v520, %v524
        %v558 = vmul.f32 %v520, %v529
        %v559 = vadd.f32 %v531, 0.0
        %v560 = vadd.f32 %v532, 0.0
        %v561 = vadd.f32 %v533, 0.0
        %v562 = vadd.f32 %v534, 0.0
        %v563 = vadd.f32 %v535, 0.0
        %v564 = vadd.f32 %v536, 0.0
        %v565 = vadd.f32 %v537, 0.0
        %v566 = vadd.f32 %v538, 0.0
        %v567 = vadd.f32 %v539, 0.0
        %v568 = vadd.f32 %v540, 0.0
        %v569 = vadd.f32 %v541, 0.0
        %v570 = vadd.f32 %v542, 0.0
        %v571 = vadd.f32 %v543, 0.0
        %v572 = vadd.f32 %v544, 0.0
        %v573 = vadd.f32 %v545, 0.0
        %v574 = vadd.f32 %v546, 0.0
        %v575 = vadd.f32 %v547, 0.0
        %v576 = vadd.f32 %v548, 0.0
        %v577 = vadd.f32 %v549, 0.0
        %v578 = vadd.f32 %v550, 0.0
        %v579 = vadd.f32 %v551, 0.0
        %v580 = vadd.f32 %v552, 0.0
        %v581 = vadd.f32 %v553, 0.0
        %v582 = vadd.f32 %v554, 0.0
        %v583 = vadd.f32 %v555, 0.0
        %v584 = vadd.f32 %v556, 0.0
        %v585 = vadd.f32 %v557, 0.0
        %v586 = vadd.f32 %v558, 0.0
        %v587 = vld [vmem:[%s383 + $0x1] sm:$0x1]
        %v588 = vld [vmem:[%s383 + $0x5] sm:$0x1]
        %v589 = vld [vmem:[%s383 + $0x9] sm:$0x1]
        %v590 = vld [vmem:[%s383 + $0xd] sm:$0x1]
        %v591 = vld [vmem:[%s383 + $0x11] sm:$0x1]
        %v592 = vld [vmem:[%s383 + $0x15] sm:$0x1]
        %v593 = vld [vmem:[%s383 + $0x19] sm:$0x1]
        %v594 = vld [vmem:[%s383 + $0x1d] sm:$0x1]
        %v595 = vld [vmem:[%s383 + $0x21] sm:$0x1]
        %v596 = vld [vmem:[%s383 + $0x25] sm:$0x1]
        %v597 = vld [vmem:[%s383 + $0x29] sm:$0x1]
        %v598 = vld [vmem:[%s383 + $0x2d] sm:$0x1]
        %v599 = vld [vmem:[%s383 + $0x31] sm:$0x1]
        %v600 = vld [vmem:[%s383 + $0x35] sm:$0x1]
        %s601 = scalar_lea.vmem %s1, 16
        %v602 = vld [vmem:[%s601] sm:$0xff]
        %v603 = vld [vmem:[%s601 + $0x8] sm:$0xff]
        %v604 = vlaneseq
        %v605 = vshrl.u32 %v604, 7
        %v606 = vsub.s32 0, %v605
        %v607 = vrot.slane %v587, %v606
        %v608 = vlaneseq
        %v609 = vshrl.u32 %v608, 7
        %v610 = vsub.s32 0, %v609
        %v611 = vrot.slane %v588, %v610
        %v612 = vlaneseq
        %v613 = vshrl.u32 %v612, 7
        %v614 = vsub.s32 0, %v613
        %v615 = vrot.slane %v589, %v614
        %v616 = vlaneseq
        %v617 = vshrl.u32 %v616, 7
        %v618 = vsub.s32 0, %v617
        %v619 = vrot.slane %v590, %v618
        %v620 = vlaneseq
        %v621 = vshrl.u32 %v620, 7
        %v622 = vsub.s32 0, %v621
        %v623 = vrot.slane %v591, %v622
        %v624 = vlaneseq
        %v625 = vshrl.u32 %v624, 7
        %v626 = vsub.s32 0, %v625
        %v627 = vrot.slane %v592, %v626
        %v628 = vlaneseq
        %v629 = vshrl.u32 %v628, 7
        %v630 = vsub.s32 0, %v629
        %v631 = vrot.slane %v593, %v630
        %v632 = vlaneseq
        %v633 = vshrl.u32 %v632, 7
        %v634 = vsub.s32 0, %v633
        %v635 = vrot.slane %v594, %v634
        %v636 = vlaneseq
        %v637 = vshrl.u32 %v636, 7
        %v638 = vsub.s32 0, %v637
        %v639 = vrot.slane %v595, %v638
        %v640 = vlaneseq
        %v641 = vshrl.u32 %v640, 7
        %v642 = vsub.s32 0, %v641
        %v643 = vrot.slane %v596, %v642
        %v644 = vlaneseq
        %v645 = vshrl.u32 %v644, 7
        %v646 = vsub.s32 0, %v645
        %v647 = vrot.slane %v597, %v646
        %v648 = vlaneseq
        %v649 = vshrl.u32 %v648, 7
        %v650 = vsub.s32 0, %v649
        %v651 = vrot.slane %v598, %v650
        %v652 = vlaneseq
        %v653 = vshrl.u32 %v652, 7
        %v654 = vsub.s32 0, %v653
        %v655 = vrot.slane %v599, %v654
        %v656 = vlaneseq
        %v657 = vshrl.u32 %v656, 7
        %v658 = vsub.s32 0, %v657
        %v659 = vrot.slane %v600, %v658
        %661 = vset.pattern.permute.xlu0 0
        %662 = vperm.xlu0 %661, %v602
        %v663 = vpop.permute.xlu0 %662
        %666 = vset.pattern.permute.xlu0 0
        %667 = vperm.xlu0 %666, %v603
        %v668 = vpop.permute.xlu0 %667
        %v670 = vmul.f32 %v607, %v663
        %v671 = vmul.f32 %v607, %v668
        %v672 = vmul.f32 %v611, %v663
        %v673 = vmul.f32 %v611, %v668
        %v674 = vmul.f32 %v615, %v663
        %v675 = vmul.f32 %v615, %v668
        %v676 = vmul.f32 %v619, %v663
        %v677 = vmul.f32 %v619, %v668
        %v678 = vmul.f32 %v623, %v663
        %v679 = vmul.f32 %v623, %v668
        %v680 = vmul.f32 %v627, %v663
        %v681 = vmul.f32 %v627, %v668
        %v682 = vmul.f32 %v631, %v663
        %v683 = vmul.f32 %v631, %v668
        %v684 = vmul.f32 %v635, %v663
        %v685 = vmul.f32 %v635, %v668
        %v686 = vmul.f32 %v639, %v663
        %v687 = vmul.f32 %v639, %v668
        %v688 = vmul.f32 %v643, %v663
        %v689 = vmul.f32 %v643, %v668
        %v690 = vmul.f32 %v647, %v663
        %v691 = vmul.f32 %v647, %v668
        %v692 = vmul.f32 %v651, %v663
        %v693 = vmul.f32 %v651, %v668
        %v694 = vmul.f32 %v655, %v663
        %v695 = vmul.f32 %v655, %v668
        %v696 = vmul.f32 %v659, %v663
        %v697 = vmul.f32 %v659, %v668
        %v698 = vadd.f32 %v559, %v670
        %v699 = vadd.f32 %v560, %v671
        %v700 = vadd.f32 %v561, %v672
        %v701 = vadd.f32 %v562, %v673
        %v702 = vadd.f32 %v563, %v674
        %v703 = vadd.f32 %v564, %v675
        %v704 = vadd.f32 %v565, %v676
        %v705 = vadd.f32 %v566, %v677
        %v706 = vadd.f32 %v567, %v678
        %v707 = vadd.f32 %v568, %v679
        %v708 = vadd.f32 %v569, %v680
        %v709 = vadd.f32 %v570, %v681
        %v710 = vadd.f32 %v571, %v682
        %v711 = vadd.f32 %v572, %v683
        %v712 = vadd.f32 %v573, %v684
        %v713 = vadd.f32 %v574, %v685
        %v714 = vadd.f32 %v575, %v686
        %v715 = vadd.f32 %v576, %v687
        %v716 = vadd.f32 %v577, %v688
        %v717 = vadd.f32 %v578, %v689
        %v718 = vadd.f32 %v579, %v690
        %v719 = vadd.f32 %v580, %v691
        %v720 = vadd.f32 %v581, %v692
        %v721 = vadd.f32 %v582, %v693
        %v722 = vadd.f32 %v583, %v694
        %v723 = vadd.f32 %v584, %v695
        %v724 = vadd.f32 %v585, %v696
        %v725 = vadd.f32 %v586, %v697
        %v726 = vld [vmem:[%s383 + $0x2] sm:$0x1]
        %v727 = vld [vmem:[%s383 + $0x6] sm:$0x1]
        %v728 = vld [vmem:[%s383 + $0xa] sm:$0x1]
        %v729 = vld [vmem:[%s383 + $0xe] sm:$0x1]
        %v730 = vld [vmem:[%s383 + $0x12] sm:$0x1]
        %v731 = vld [vmem:[%s383 + $0x16] sm:$0x1]
        %v732 = vld [vmem:[%s383 + $0x1a] sm:$0x1]
        %v733 = vld [vmem:[%s383 + $0x1e] sm:$0x1]
        %v734 = vld [vmem:[%s383 + $0x22] sm:$0x1]
        %v735 = vld [vmem:[%s383 + $0x26] sm:$0x1]
        %v736 = vld [vmem:[%s383 + $0x2a] sm:$0x1]
        %v737 = vld [vmem:[%s383 + $0x2e] sm:$0x1]
        %v738 = vld [vmem:[%s383 + $0x32] sm:$0x1]
        %v739 = vld [vmem:[%s383 + $0x36] sm:$0x1]
        %s740 = scalar_lea.vmem %s1, 32
        %v741 = vld [vmem:[%s740] sm:$0xff]
        %v742 = vld [vmem:[%s740 + $0x8] sm:$0xff]
        %v743 = vlaneseq
        %v744 = vshrl.u32 %v743, 7
        %v745 = vsub.s32 0, %v744
        %v746 = vrot.slane %v726, %v745
        %v747 = vlaneseq
        %v748 = vshrl.u32 %v747, 7
        %v749 = vsub.s32 0, %v748
        %v750 = vrot.slane %v727, %v749
        %v751 = vlaneseq
        %v752 = vshrl.u32 %v751, 7
        %v753 = vsub.s32 0, %v752
        %v754 = vrot.slane %v728, %v753
        %v755 = vlaneseq
        %v756 = vshrl.u32 %v755, 7
        %v757 = vsub.s32 0, %v756
        %v758 = vrot.slane %v729, %v757
        %v759 = vlaneseq
        %v760 = vshrl.u32 %v759, 7
        %v761 = vsub.s32 0, %v760
        %v762 = vrot.slane %v730, %v761
        %v763 = vlaneseq
        %v764 = vshrl.u32 %v763, 7
        %v765 = vsub.s32 0, %v764
        %v766 = vrot.slane %v731, %v765
        %v767 = vlaneseq
        %v768 = vshrl.u32 %v767, 7
        %v769 = vsub.s32 0, %v768
        %v770 = vrot.slane %v732, %v769
        %v771 = vlaneseq
        %v772 = vshrl.u32 %v771, 7
        %v773 = vsub.s32 0, %v772
        %v774 = vrot.slane %v733, %v773
        %v775 = vlaneseq
        %v776 = vshrl.u32 %v775, 7
        %v777 = vsub.s32 0, %v776
        %v778 = vrot.slane %v734, %v777
        %v779 = vlaneseq
        %v780 = vshrl.u32 %v779, 7
        %v781 = vsub.s32 0, %v780
        %v782 = vrot.slane %v735, %v781
        %v783 = vlaneseq
        %v784 = vshrl.u32 %v783, 7
        %v785 = vsub.s32 0, %v784
        %v786 = vrot.slane %v736, %v785
        %v787 = vlaneseq
        %v788 = vshrl.u32 %v787, 7
        %v789 = vsub.s32 0, %v788
        %v790 = vrot.slane %v737, %v789
        %v791 = vlaneseq
        %v792 = vshrl.u32 %v791, 7
        %v793 = vsub.s32 0, %v792
        %v794 = vrot.slane %v738, %v793
        %v795 = vlaneseq
        %v796 = vshrl.u32 %v795, 7
        %v797 = vsub.s32 0, %v796
        %v798 = vrot.slane %v739, %v797
        %800 = vset.pattern.permute.xlu0 0
        %801 = vperm.xlu0 %800, %v741
        %v802 = vpop.permute.xlu0 %801
        %805 = vset.pattern.permute.xlu0 0
        %806 = vperm.xlu0 %805, %v742
        %v807 = vpop.permute.xlu0 %806
        %v809 = vmul.f32 %v746, %v802
        %v810 = vmul.f32 %v746, %v807
        %v811 = vmul.f32 %v750, %v802
        %v812 = vmul.f32 %v750, %v807
        %v813 = vmul.f32 %v754, %v802
        %v814 = vmul.f32 %v754, %v807
        %v815 = vmul.f32 %v758, %v802
        %v816 = vmul.f32 %v758, %v807
        %v817 = vmul.f32 %v762, %v802
        %v818 = vmul.f32 %v762, %v807
        %v819 = vmul.f32 %v766, %v802
        %v820 = vmul.f32 %v766, %v807
        %v821 = vmul.f32 %v770, %v802
        %v822 = vmul.f32 %v770, %v807
        %v823 = vmul.f32 %v774, %v802
        %v824 = vmul.f32 %v774, %v807
        %v825 = vmul.f32 %v778, %v802
        %v826 = vmul.f32 %v778, %v807
        %v827 = vmul.f32 %v782, %v802
        %v828 = vmul.f32 %v782, %v807
        %v829 = vmul.f32 %v786, %v802
        %v830 = vmul.f32 %v786, %v807
        %v831 = vmul.f32 %v790, %v802
        %v832 = vmul.f32 %v790, %v807
        %v833 = vmul.f32 %v794, %v802
        %v834 = vmul.f32 %v794, %v807
        %v835 = vmul.f32 %v798, %v802
        %v836 = vmul.f32 %v798, %v807
        %v837 = vadd.f32 %v698, %v809
        %v838 = vadd.f32 %v699, %v810
        %v839 = vadd.f32 %v700, %v811
        %v840 = vadd.f32 %v701, %v812
        %v841 = vadd.f32 %v702, %v813
        %v842 = vadd.f32 %v703, %v814
        %v843 = vadd.f32 %v704, %v815
        %v844 = vadd.f32 %v705, %v816
        %v845 = vadd.f32 %v706, %v817
        %v846 = vadd.f32 %v707, %v818
        %v847 = vadd.f32 %v708, %v819
        %v848 = vadd.f32 %v709, %v820
        %v849 = vadd.f32 %v710, %v821
        %v850 = vadd.f32 %v711, %v822
        %v851 = vadd.f32 %v712, %v823
        %v852 = vadd.f32 %v713, %v824
        %v853 = vadd.f32 %v714, %v825
        %v854 = vadd.f32 %v715, %v826
        %v855 = vadd.f32 %v716, %v827
        %v856 = vadd.f32 %v717, %v828
        %v857 = vadd.f32 %v718, %v829
        %v858 = vadd.f32 %v719, %v830
        %v859 = vadd.f32 %v720, %v831
        %v860 = vadd.f32 %v721, %v832
        %v861 = vadd.f32 %v722, %v833
        %v862 = vadd.f32 %v723, %v834
        %v863 = vadd.f32 %v724, %v835
        %v864 = vadd.f32 %v725, %v836
        %s865 = scalar_lea.vmem %s383, 60
        %v866 = vld [vmem:[%s865] sm:$0x1]
        %v867 = vld [vmem:[%s865 + $0x4] sm:$0x1]
        %v868 = vld [vmem:[%s865 + $0x8] sm:$0x1]
        %v869 = vld [vmem:[%s865 + $0xc] sm:$0x1]
        %v870 = vld [vmem:[%s865 + $0x10] sm:$0x1]
        %v871 = vld [vmem:[%s865 + $0x14] sm:$0x1]
        %v872 = vld [vmem:[%s865 + $0x18] sm:$0x1]
        %v873 = vld [vmem:[%s865 + $0x1c] sm:$0x1]
        %v874 = vld [vmem:[%s865 + $0x20] sm:$0x1]
        %v875 = vld [vmem:[%s865 + $0x24] sm:$0x1]
        %v876 = vld [vmem:[%s865 + $0x28] sm:$0x1]
        %v877 = vld [vmem:[%s865 + $0x2c] sm:$0x1]
        %v878 = vld [vmem:[%s865 + $0x30] sm:$0x1]
        %v879 = vld [vmem:[%s865 + $0x34] sm:$0x1]
        %s880 = scalar_lea.vmem %s1, 48
        %v881 = vld [vmem:[%s880] sm:$0xff]
        %v882 = vld [vmem:[%s880 + $0x8] sm:$0xff]
        %v883 = vlaneseq
        %v884 = vshrl.u32 %v883, 7
        %v885 = vsub.s32 0, %v884
        %v886 = vrot.slane %v866, %v885
        %v887 = vlaneseq
        %v888 = vshrl.u32 %v887, 7
        %v889 = vsub.s32 0, %v888
        %v890 = vrot.slane %v867, %v889
        %v891 = vlaneseq
        %v892 = vshrl.u32 %v891, 7
        %v893 = vsub.s32 0, %v892
        %v894 = vrot.slane %v868, %v893
        %v895 = vlaneseq
        %v896 = vshrl.u32 %v895, 7
        %v897 = vsub.s32 0, %v896
        %v898 = vrot.slane %v869, %v897
        %v899 = vlaneseq
        %v900 = vshrl.u32 %v899, 7
        %v901 = vsub.s32 0, %v900
        %v902 = vrot.slane %v870, %v901
        %v903 = vlaneseq
        %v904 = vshrl.u32 %v903, 7
        %v905 = vsub.s32 0, %v904
        %v906 = vrot.slane %v871, %v905
        %v907 = vlaneseq
        %v908 = vshrl.u32 %v907, 7
        %v909 = vsub.s32 0, %v908
        %v910 = vrot.slane %v872, %v909
        %v911 = vlaneseq
        %v912 = vshrl.u32 %v911, 7
        %v913 = vsub.s32 0, %v912
        %v914 = vrot.slane %v873, %v913
        %v915 = vlaneseq
        %v916 = vshrl.u32 %v915, 7
        %v917 = vsub.s32 0, %v916
        %v918 = vrot.slane %v874, %v917
        %v919 = vlaneseq
        %v920 = vshrl.u32 %v919, 7
        %v921 = vsub.s32 0, %v920
        %v922 = vrot.slane %v875, %v921
        %v923 = vlaneseq
        %v924 = vshrl.u32 %v923, 7
        %v925 = vsub.s32 0, %v924
        %v926 = vrot.slane %v876, %v925
        %v927 = vlaneseq
        %v928 = vshrl.u32 %v927, 7
        %v929 = vsub.s32 0, %v928
        %v930 = vrot.slane %v877, %v929
        %v931 = vlaneseq
        %v932 = vshrl.u32 %v931, 7
        %v933 = vsub.s32 0, %v932
        %v934 = vrot.slane %v878, %v933
        %v935 = vlaneseq
        %v936 = vshrl.u32 %v935, 7
        %v937 = vsub.s32 0, %v936
        %v938 = vrot.slane %v879, %v937
        %940 = vset.pattern.permute.xlu0 0
        %941 = vperm.xlu0 %940, %v881
        %v942 = vpop.permute.xlu0 %941
        %945 = vset.pattern.permute.xlu0 0
        %946 = vperm.xlu0 %945, %v882
        %v947 = vpop.permute.xlu0 %946
        %v949 = vmul.f32 %v886, %v942
        %v950 = vmul.f32 %v886, %v947
        %v951 = vmul.f32 %v890, %v942
        %v952 = vmul.f32 %v890, %v947
        %v953 = vmul.f32 %v894, %v942
        %v954 = vmul.f32 %v894, %v947
        %v955 = vmul.f32 %v898, %v942
        %v956 = vmul.f32 %v898, %v947
        %v957 = vmul.f32 %v902, %v942
        %v958 = vmul.f32 %v902, %v947
        %v959 = vmul.f32 %v906, %v942
        %v960 = vmul.f32 %v906, %v947
        %v961 = vmul.f32 %v910, %v942
        %v962 = vmul.f32 %v910, %v947
        %v963 = vmul.f32 %v914, %v942
        %v964 = vmul.f32 %v914, %v947
        %v965 = vmul.f32 %v918, %v942
        %v966 = vmul.f32 %v918, %v947
        %v967 = vmul.f32 %v922, %v942
        %v968 = vmul.f32 %v922, %v947
        %v969 = vmul.f32 %v926, %v942
        %v970 = vmul.f32 %v926, %v947
        %v971 = vmul.f32 %v930, %v942
        %v972 = vmul.f32 %v930, %v947
        %v973 = vmul.f32 %v934, %v942
        %v974 = vmul.f32 %v934, %v947
        %v975 = vmul.f32 %v938, %v942
        %v976 = vmul.f32 %v938, %v947
        %v977 = vadd.f32 %v837, %v949
        %v978 = vadd.f32 %v838, %v950
        %v979 = vadd.f32 %v839, %v951
        %v980 = vadd.f32 %v840, %v952
        %v981 = vadd.f32 %v841, %v953
        %v982 = vadd.f32 %v842, %v954
        %v983 = vadd.f32 %v843, %v955
        %v984 = vadd.f32 %v844, %v956
        %v985 = vadd.f32 %v845, %v957
        %v986 = vadd.f32 %v846, %v958
        %v987 = vadd.f32 %v847, %v959
        %v988 = vadd.f32 %v848, %v960
        %v989 = vadd.f32 %v849, %v961
        %v990 = vadd.f32 %v850, %v962
        %v991 = vadd.f32 %v851, %v963
        %v992 = vadd.f32 %v852, %v964
        %v993 = vadd.f32 %v853, %v965
        %v994 = vadd.f32 %v854, %v966
        %v995 = vadd.f32 %v855, %v967
        %v996 = vadd.f32 %v856, %v968
        %v997 = vadd.f32 %v857, %v969
        %v998 = vadd.f32 %v858, %v970
        %v999 = vadd.f32 %v859, %v971
        %v1000 = vadd.f32 %v860, %v972
        %v1001 = vadd.f32 %v861, %v973
        %v1002 = vadd.f32 %v862, %v974
        %v1003 = vadd.f32 %v863, %v975
        %v1004 = vadd.f32 %v864, %v976
        %v1005 = vld [vmem:[%s865 + $0x1] sm:$0x1]
        %v1006 = vld [vmem:[%s865 + $0x5] sm:$0x1]
        %v1007 = vld [vmem:[%s865 + $0x9] sm:$0x1]
        %v1008 = vld [vmem:[%s865 + $0xd] sm:$0x1]
        %v1009 = vld [vmem:[%s865 + $0x11] sm:$0x1]
        %v1010 = vld [vmem:[%s865 + $0x15] sm:$0x1]
        %v1011 = vld [vmem:[%s865 + $0x19] sm:$0x1]
        %v1012 = vld [vmem:[%s865 + $0x1d] sm:$0x1]
        %v1013 = vld [vmem:[%s865 + $0x21] sm:$0x1]
        %v1014 = vld [vmem:[%s865 + $0x25] sm:$0x1]
        %v1015 = vld [vmem:[%s865 + $0x29] sm:$0x1]
        %v1016 = vld [vmem:[%s865 + $0x2d] sm:$0x1]
        %v1017 = vld [vmem:[%s865 + $0x31] sm:$0x1]
        %v1018 = vld [vmem:[%s865 + $0x35] sm:$0x1]
        %s1019 = scalar_lea.vmem %s1, 64
        %v1020 = vld [vmem:[%s1019] sm:$0xff]
        %v1021 = vld [vmem:[%s1019 + $0x8] sm:$0xff]
        %v1022 = vlaneseq
        %v1023 = vshrl.u32 %v1022, 7
        %v1024 = vsub.s32 0, %v1023
        %v1025 = vrot.slane %v1005, %v1024
        %v1026 = vlaneseq
        %v1027 = vshrl.u32 %v1026, 7
        %v1028 = vsub.s32 0, %v1027
        %v1029 = vrot.slane %v1006, %v1028
        %v1030 = vlaneseq
        %v1031 = vshrl.u32 %v1030, 7
        %v1032 = vsub.s32 0, %v1031
        %v1033 = vrot.slane %v1007, %v1032
        %v1034 = vlaneseq
        %v1035 = vshrl.u32 %v1034, 7
        %v1036 = vsub.s32 0, %v1035
        %v1037 = vrot.slane %v1008, %v1036
        %v1038 = vlaneseq
        %v1039 = vshrl.u32 %v1038, 7
        %v1040 = vsub.s32 0, %v1039
        %v1041 = vrot.slane %v1009, %v1040
        %v1042 = vlaneseq
        %v1043 = vshrl.u32 %v1042, 7
        %v1044 = vsub.s32 0, %v1043
        %v1045 = vrot.slane %v1010, %v1044
        %v1046 = vlaneseq
        %v1047 = vshrl.u32 %v1046, 7
        %v1048 = vsub.s32 0, %v1047
        %v1049 = vrot.slane %v1011, %v1048
        %v1050 = vlaneseq
        %v1051 = vshrl.u32 %v1050, 7
        %v1052 = vsub.s32 0, %v1051
        %v1053 = vrot.slane %v1012, %v1052
        %v1054 = vlaneseq
        %v1055 = vshrl.u32 %v1054, 7
        %v1056 = vsub.s32 0, %v1055
        %v1057 = vrot.slane %v1013, %v1056
        %v1058 = vlaneseq
        %v1059 = vshrl.u32 %v1058, 7
        %v1060 = vsub.s32 0, %v1059
        %v1061 = vrot.slane %v1014, %v1060
        %v1062 = vlaneseq
        %v1063 = vshrl.u32 %v1062, 7
        %v1064 = vsub.s32 0, %v1063
        %v1065 = vrot.slane %v1015, %v1064
        %v1066 = vlaneseq
        %v1067 = vshrl.u32 %v1066, 7
        %v1068 = vsub.s32 0, %v1067
        %v1069 = vrot.slane %v1016, %v1068
        %v1070 = vlaneseq
        %v1071 = vshrl.u32 %v1070, 7
        %v1072 = vsub.s32 0, %v1071
        %v1073 = vrot.slane %v1017, %v1072
        %v1074 = vlaneseq
        %v1075 = vshrl.u32 %v1074, 7
        %v1076 = vsub.s32 0, %v1075
        %v1077 = vrot.slane %v1018, %v1076
        %1079 = vset.pattern.permute.xlu0 0
        %1080 = vperm.xlu0 %1079, %v1020
        %v1081 = vpop.permute.xlu0 %1080
        %1084 = vset.pattern.permute.xlu0 0
        %1085 = vperm.xlu0 %1084, %v1021
        %v1086 = vpop.permute.xlu0 %1085
        %v1088 = vmul.f32 %v1025, %v1081
        %v1089 = vmul.f32 %v1025, %v1086
        %v1090 = vmul.f32 %v1029, %v1081
        %v1091 = vmul.f32 %v1029, %v1086
        %v1092 = vmul.f32 %v1033, %v1081
        %v1093 = vmul.f32 %v1033, %v1086
        %v1094 = vmul.f32 %v1037, %v1081
        %v1095 = vmul.f32 %v1037, %v1086
        %v1096 = vmul.f32 %v1041, %v1081
        %v1097 = vmul.f32 %v1041, %v1086
        %v1098 = vmul.f32 %v1045, %v1081
        %v1099 = vmul.f32 %v1045, %v1086
        %v1100 = vmul.f32 %v1049, %v1081
        %v1101 = vmul.f32 %v1049, %v1086
        %v1102 = vmul.f32 %v1053, %v1081
        %v1103 = vmul.f32 %v1053, %v1086
        %v1104 = vmul.f32 %v1057, %v1081
        %v1105 = vmul.f32 %v1057, %v1086
        %v1106 = vmul.f32 %v1061, %v1081
        %v1107 = vmul.f32 %v1061, %v1086
        %v1108 = vmul.f32 %v1065, %v1081
        %v1109 = vmul.f32 %v1065, %v1086
        %v1110 = vmul.f32 %v1069, %v1081
        %v1111 = vmul.f32 %v1069, %v1086
        %v1112 = vmul.f32 %v1073, %v1081
        %v1113 = vmul.f32 %v1073, %v1086
        %v1114 = vmul.f32 %v1077, %v1081
        %v1115 = vmul.f32 %v1077, %v1086
        %v1116 = vadd.f32 %v977, %v1088
        %v1117 = vadd.f32 %v978, %v1089
        %v1118 = vadd.f32 %v979, %v1090
        %v1119 = vadd.f32 %v980, %v1091
        %v1120 = vadd.f32 %v981, %v1092
        %v1121 = vadd.f32 %v982, %v1093
        %v1122 = vadd.f32 %v983, %v1094
        %v1123 = vadd.f32 %v984, %v1095
        %v1124 = vadd.f32 %v985, %v1096
        %v1125 = vadd.f32 %v986, %v1097
        %v1126 = vadd.f32 %v987, %v1098
        %v1127 = vadd.f32 %v988, %v1099
        %v1128 = vadd.f32 %v989, %v1100
        %v1129 = vadd.f32 %v990, %v1101
        %v1130 = vadd.f32 %v991, %v1102
        %v1131 = vadd.f32 %v992, %v1103
        %v1132 = vadd.f32 %v993, %v1104
        %v1133 = vadd.f32 %v994, %v1105
        %v1134 = vadd.f32 %v995, %v1106
        %v1135 = vadd.f32 %v996, %v1107
        %v1136 = vadd.f32 %v997, %v1108
        %v1137 = vadd.f32 %v998, %v1109
        %v1138 = vadd.f32 %v999, %v1110
        %v1139 = vadd.f32 %v1000, %v1111
        %v1140 = vadd.f32 %v1001, %v1112
        %v1141 = vadd.f32 %v1002, %v1113
        %v1142 = vadd.f32 %v1003, %v1114
        %v1143 = vadd.f32 %v1004, %v1115
        %v1144 = vld [vmem:[%s865 + $0x2] sm:$0x1]
        %v1145 = vld [vmem:[%s865 + $0x6] sm:$0x1]
        %v1146 = vld [vmem:[%s865 + $0xa] sm:$0x1]
        %v1147 = vld [vmem:[%s865 + $0xe] sm:$0x1]
        %v1148 = vld [vmem:[%s865 + $0x12] sm:$0x1]
        %v1149 = vld [vmem:[%s865 + $0x16] sm:$0x1]
        %v1150 = vld [vmem:[%s865 + $0x1a] sm:$0x1]
        %v1151 = vld [vmem:[%s865 + $0x1e] sm:$0x1]
        %v1152 = vld [vmem:[%s865 + $0x22] sm:$0x1]
        %v1153 = vld [vmem:[%s865 + $0x26] sm:$0x1]
        %v1154 = vld [vmem:[%s865 + $0x2a] sm:$0x1]
        %v1155 = vld [vmem:[%s865 + $0x2e] sm:$0x1]
        %v1156 = vld [vmem:[%s865 + $0x32] sm:$0x1]
        %v1157 = vld [vmem:[%s865 + $0x36] sm:$0x1]
        %s1158 = scalar_lea.vmem %s1, 80
        %v1159 = vld [vmem:[%s1158] sm:$0xff]
        %v1160 = vld [vmem:[%s1158 + $0x8] sm:$0xff]
        %v1161 = vlaneseq
        %v1162 = vshrl.u32 %v1161, 7
        %v1163 = vsub.s32 0, %v1162
        %v1164 = vrot.slane %v1144, %v1163
        %v1165 = vlaneseq
        %v1166 = vshrl.u32 %v1165, 7
        %v1167 = vsub.s32 0, %v1166
        %v1168 = vrot.slane %v1145, %v1167
        %v1169 = vlaneseq
        %v1170 = vshrl.u32 %v1169, 7
        %v1171 = vsub.s32 0, %v1170
        %v1172 = vrot.slane %v1146, %v1171
        %v1173 = vlaneseq
        %v1174 = vshrl.u32 %v1173, 7
        %v1175 = vsub.s32 0, %v1174
        %v1176 = vrot.slane %v1147, %v1175
        %v1177 = vlaneseq
        %v1178 = vshrl.u32 %v1177, 7
        %v1179 = vsub.s32 0, %v1178
        %v1180 = vrot.slane %v1148, %v1179
        %v1181 = vlaneseq
        %v1182 = vshrl.u32 %v1181, 7
        %v1183 = vsub.s32 0, %v1182
        %v1184 = vrot.slane %v1149, %v1183
        %v1185 = vlaneseq
        %v1186 = vshrl.u32 %v1185, 7
        %v1187 = vsub.s32 0, %v1186
        %v1188 = vrot.slane %v1150, %v1187
        %v1189 = vlaneseq
        %v1190 = vshrl.u32 %v1189, 7
        %v1191 = vsub.s32 0, %v1190
        %v1192 = vrot.slane %v1151, %v1191
        %v1193 = vlaneseq
        %v1194 = vshrl.u32 %v1193, 7
        %v1195 = vsub.s32 0, %v1194
        %v1196 = vrot.slane %v1152, %v1195
        %v1197 = vlaneseq
        %v1198 = vshrl.u32 %v1197, 7
        %v1199 = vsub.s32 0, %v1198
        %v1200 = vrot.slane %v1153, %v1199
        %v1201 = vlaneseq
        %v1202 = vshrl.u32 %v1201, 7
        %v1203 = vsub.s32 0, %v1202
        %v1204 = vrot.slane %v1154, %v1203
        %v1205 = vlaneseq
        %v1206 = vshrl.u32 %v1205, 7
        %v1207 = vsub.s32 0, %v1206
        %v1208 = vrot.slane %v1155, %v1207
        %v1209 = vlaneseq
        %v1210 = vshrl.u32 %v1209, 7
        %v1211 = vsub.s32 0, %v1210
        %v1212 = vrot.slane %v1156, %v1211
        %v1213 = vlaneseq
        %v1214 = vshrl.u32 %v1213, 7
        %v1215 = vsub.s32 0, %v1214
        %v1216 = vrot.slane %v1157, %v1215
        %1218 = vset.pattern.permute.xlu0 0
        %1219 = vperm.xlu0 %1218, %v1159
        %v1220 = vpop.permute.xlu0 %1219
        %1223 = vset.pattern.permute.xlu0 0
        %1224 = vperm.xlu0 %1223, %v1160
        %v1225 = vpop.permute.xlu0 %1224
        %v1227 = vmul.f32 %v1164, %v1220
        %v1228 = vmul.f32 %v1164, %v1225
        %v1229 = vmul.f32 %v1168, %v1220
        %v1230 = vmul.f32 %v1168, %v1225
        %v1231 = vmul.f32 %v1172, %v1220
        %v1232 = vmul.f32 %v1172, %v1225
        %v1233 = vmul.f32 %v1176, %v1220
        %v1234 = vmul.f32 %v1176, %v1225
        %v1235 = vmul.f32 %v1180, %v1220
        %v1236 = vmul.f32 %v1180, %v1225
        %v1237 = vmul.f32 %v1184, %v1220
        %v1238 = vmul.f32 %v1184, %v1225
        %v1239 = vmul.f32 %v1188, %v1220
        %v1240 = vmul.f32 %v1188, %v1225
        %v1241 = vmul.f32 %v1192, %v1220
        %v1242 = vmul.f32 %v1192, %v1225
        %v1243 = vmul.f32 %v1196, %v1220
        %v1244 = vmul.f32 %v1196, %v1225
        %v1245 = vmul.f32 %v1200, %v1220
        %v1246 = vmul.f32 %v1200, %v1225
        %v1247 = vmul.f32 %v1204, %v1220
        %v1248 = vmul.f32 %v1204, %v1225
        %v1249 = vmul.f32 %v1208, %v1220
        %v1250 = vmul.f32 %v1208, %v1225
        %v1251 = vmul.f32 %v1212, %v1220
        %v1252 = vmul.f32 %v1212, %v1225
        %v1253 = vmul.f32 %v1216, %v1220
        %v1254 = vmul.f32 %v1216, %v1225
        %v1255 = vadd.f32 %v1116, %v1227
        %v1256 = vadd.f32 %v1117, %v1228
        %v1257 = vadd.f32 %v1118, %v1229
        %v1258 = vadd.f32 %v1119, %v1230
        %v1259 = vadd.f32 %v1120, %v1231
        %v1260 = vadd.f32 %v1121, %v1232
        %v1261 = vadd.f32 %v1122, %v1233
        %v1262 = vadd.f32 %v1123, %v1234
        %v1263 = vadd.f32 %v1124, %v1235
        %v1264 = vadd.f32 %v1125, %v1236
        %v1265 = vadd.f32 %v1126, %v1237
        %v1266 = vadd.f32 %v1127, %v1238
        %v1267 = vadd.f32 %v1128, %v1239
        %v1268 = vadd.f32 %v1129, %v1240
        %v1269 = vadd.f32 %v1130, %v1241
        %v1270 = vadd.f32 %v1131, %v1242
        %v1271 = vadd.f32 %v1132, %v1243
        %v1272 = vadd.f32 %v1133, %v1244
        %v1273 = vadd.f32 %v1134, %v1245
        %v1274 = vadd.f32 %v1135, %v1246
        %v1275 = vadd.f32 %v1136, %v1247
        %v1276 = vadd.f32 %v1137, %v1248
        %v1277 = vadd.f32 %v1138, %v1249
        %v1278 = vadd.f32 %v1139, %v1250
        %v1279 = vadd.f32 %v1140, %v1251
        %v1280 = vadd.f32 %v1141, %v1252
        %v1281 = vadd.f32 %v1142, %v1253
        %v1282 = vadd.f32 %v1143, %v1254
        %s1283 = scalar_lea.vmem %s383, 4
        %v1284 = vld [vmem:[%s1283] sm:$0x1]
        %v1285 = vld [vmem:[%s1283 + $0x4] sm:$0x1]
        %v1286 = vld [vmem:[%s1283 + $0x8] sm:$0x1]
        %v1287 = vld [vmem:[%s1283 + $0xc] sm:$0x1]
        %v1288 = vld [vmem:[%s1283 + $0x10] sm:$0x1]
        %v1289 = vld [vmem:[%s1283 + $0x14] sm:$0x1]
        %v1290 = vld [vmem:[%s1283 + $0x18] sm:$0x1]
        %v1291 = vld [vmem:[%s1283 + $0x1c] sm:$0x1]
        %v1292 = vld [vmem:[%s1283 + $0x20] sm:$0x1]
        %v1293 = vld [vmem:[%s1283 + $0x24] sm:$0x1]
        %v1294 = vld [vmem:[%s1283 + $0x28] sm:$0x1]
        %v1295 = vld [vmem:[%s1283 + $0x2c] sm:$0x1]
        %v1296 = vld [vmem:[%s1283 + $0x30] sm:$0x1]
        %v1297 = vld [vmem:[%s1283 + $0x34] sm:$0x1]
        %s1298 = scalar_lea.vmem %s1, 96
        %v1299 = vld [vmem:[%s1298] sm:$0xff]
        %v1300 = vld [vmem:[%s1298 + $0x8] sm:$0xff]
        %v1301 = vlaneseq
        %v1302 = vshrl.u32 %v1301, 7
        %v1303 = vsub.s32 0, %v1302
        %v1304 = vrot.slane %v1284, %v1303
        %v1305 = vlaneseq
        %v1306 = vshrl.u32 %v1305, 7
        %v1307 = vsub.s32 0, %v1306
        %v1308 = vrot.slane %v1285, %v1307
        %v1309 = vlaneseq
        %v1310 = vshrl.u32 %v1309, 7
        %v1311 = vsub.s32 0, %v1310
        %v1312 = vrot.slane %v1286, %v1311
        %v1313 = vlaneseq
        %v1314 = vshrl.u32 %v1313, 7
        %v1315 = vsub.s32 0, %v1314
        %v1316 = vrot.slane %v1287, %v1315
        %v1317 = vlaneseq
        %v1318 = vshrl.u32 %v1317, 7
        %v1319 = vsub.s32 0, %v1318
        %v1320 = vrot.slane %v1288, %v1319
        %v1321 = vlaneseq
        %v1322 = vshrl.u32 %v1321, 7
        %v1323 = vsub.s32 0, %v1322
        %v1324 = vrot.slane %v1289, %v1323
        %v1325 = vlaneseq
        %v1326 = vshrl.u32 %v1325, 7
        %v1327 = vsub.s32 0, %v1326
        %v1328 = vrot.slane %v1290, %v1327
        %v1329 = vlaneseq
        %v1330 = vshrl.u32 %v1329, 7
        %v1331 = vsub.s32 0, %v1330
        %v1332 = vrot.slane %v1291, %v1331
        %v1333 = vlaneseq
        %v1334 = vshrl.u32 %v1333, 7
        %v1335 = vsub.s32 0, %v1334
        %v1336 = vrot.slane %v1292, %v1335
        %v1337 = vlaneseq
        %v1338 = vshrl.u32 %v1337, 7
        %v1339 = vsub.s32 0, %v1338
        %v1340 = vrot.slane %v1293, %v1339
        %v1341 = vlaneseq
        %v1342 = vshrl.u32 %v1341, 7
        %v1343 = vsub.s32 0, %v1342
        %v1344 = vrot.slane %v1294, %v1343
        %v1345 = vlaneseq
        %v1346 = vshrl.u32 %v1345, 7
        %v1347 = vsub.s32 0, %v1346
        %v1348 = vrot.slane %v1295, %v1347
        %v1349 = vlaneseq
        %v1350 = vshrl.u32 %v1349, 7
        %v1351 = vsub.s32 0, %v1350
        %v1352 = vrot.slane %v1296, %v1351
        %v1353 = vlaneseq
        %v1354 = vshrl.u32 %v1353, 7
        %v1355 = vsub.s32 0, %v1354
        %v1356 = vrot.slane %v1297, %v1355
        %1358 = vset.pattern.permute.xlu0 0
        %1359 = vperm.xlu0 %1358, %v1299
        %v1360 = vpop.permute.xlu0 %1359
        %1363 = vset.pattern.permute.xlu0 0
        %1364 = vperm.xlu0 %1363, %v1300
        %v1365 = vpop.permute.xlu0 %1364
        %v1367 = vmul.f32 %v1304, %v1360
        %v1368 = vmul.f32 %v1304, %v1365
        %v1369 = vmul.f32 %v1308, %v1360
        %v1370 = vmul.f32 %v1308, %v1365
        %v1371 = vmul.f32 %v1312, %v1360
        %v1372 = vmul.f32 %v1312, %v1365
        %v1373 = vmul.f32 %v1316, %v1360
        %v1374 = vmul.f32 %v1316, %v1365
        %v1375 = vmul.f32 %v1320, %v1360
        %v1376 = vmul.f32 %v1320, %v1365
        %v1377 = vmul.f32 %v1324, %v1360
        %v1378 = vmul.f32 %v1324, %v1365
        %v1379 = vmul.f32 %v1328, %v1360
        %v1380 = vmul.f32 %v1328, %v1365
        %v1381 = vmul.f32 %v1332, %v1360
        %v1382 = vmul.f32 %v1332, %v1365
        %v1383 = vmul.f32 %v1336, %v1360
        %v1384 = vmul.f32 %v1336, %v1365
        %v1385 = vmul.f32 %v1340, %v1360
        %v1386 = vmul.f32 %v1340, %v1365
        %v1387 = vmul.f32 %v1344, %v1360
        %v1388 = vmul.f32 %v1344, %v1365
        %v1389 = vmul.f32 %v1348, %v1360
        %v1390 = vmul.f32 %v1348, %v1365
        %v1391 = vmul.f32 %v1352, %v1360
        %v1392 = vmul.f32 %v1352, %v1365
        %v1393 = vmul.f32 %v1356, %v1360
        %v1394 = vmul.f32 %v1356, %v1365
        %v1395 = vadd.f32 %v1255, %v1367
        %v1396 = vadd.f32 %v1256, %v1368
        %v1397 = vadd.f32 %v1257, %v1369
        %v1398 = vadd.f32 %v1258, %v1370
        %v1399 = vadd.f32 %v1259, %v1371
        %v1400 = vadd.f32 %v1260, %v1372
        %v1401 = vadd.f32 %v1261, %v1373
        %v1402 = vadd.f32 %v1262, %v1374
        %v1403 = vadd.f32 %v1263, %v1375
        %v1404 = vadd.f32 %v1264, %v1376
        %v1405 = vadd.f32 %v1265, %v1377
        %v1406 = vadd.f32 %v1266, %v1378
        %v1407 = vadd.f32 %v1267, %v1379
        %v1408 = vadd.f32 %v1268, %v1380
        %v1409 = vadd.f32 %v1269, %v1381
        %v1410 = vadd.f32 %v1270, %v1382
        %v1411 = vadd.f32 %v1271, %v1383
        %v1412 = vadd.f32 %v1272, %v1384
        %v1413 = vadd.f32 %v1273, %v1385
        %v1414 = vadd.f32 %v1274, %v1386
        %v1415 = vadd.f32 %v1275, %v1387
        %v1416 = vadd.f32 %v1276, %v1388
        %v1417 = vadd.f32 %v1277, %v1389
        %v1418 = vadd.f32 %v1278, %v1390
        %v1419 = vadd.f32 %v1279, %v1391
        %v1420 = vadd.f32 %v1280, %v1392
        %v1421 = vadd.f32 %v1281, %v1393
        %v1422 = vadd.f32 %v1282, %v1394
        %v1423 = vld [vmem:[%s1283 + $0x1] sm:$0x1]
        %v1424 = vld [vmem:[%s1283 + $0x5] sm:$0x1]
        %v1425 = vld [vmem:[%s1283 + $0x9] sm:$0x1]
        %v1426 = vld [vmem:[%s1283 + $0xd] sm:$0x1]
        %v1427 = vld [vmem:[%s1283 + $0x11] sm:$0x1]
        %v1428 = vld [vmem:[%s1283 + $0x15] sm:$0x1]
        %v1429 = vld [vmem:[%s1283 + $0x19] sm:$0x1]
        %v1430 = vld [vmem:[%s1283 + $0x1d] sm:$0x1]
        %v1431 = vld [vmem:[%s1283 + $0x21] sm:$0x1]
        %v1432 = vld [vmem:[%s1283 + $0x25] sm:$0x1]
        %v1433 = vld [vmem:[%s1283 + $0x29] sm:$0x1]
        %v1434 = vld [vmem:[%s1283 + $0x2d] sm:$0x1]
        %v1435 = vld [vmem:[%s1283 + $0x31] sm:$0x1]
        %v1436 = vld [vmem:[%s1283 + $0x35] sm:$0x1]
        %s1437 = scalar_lea.vmem %s1, 112
        %v1438 = vld [vmem:[%s1437] sm:$0xff]
        %v1439 = vld [vmem:[%s1437 + $0x8] sm:$0xff]
        %v1440 = vlaneseq
        %v1441 = vshrl.u32 %v1440, 7
        %v1442 = vsub.s32 0, %v1441
        %v1443 = vrot.slane %v1423, %v1442
        %v1444 = vlaneseq
        %v1445 = vshrl.u32 %v1444, 7
        %v1446 = vsub.s32 0, %v1445
        %v1447 = vrot.slane %v1424, %v1446
        %v1448 = vlaneseq
        %v1449 = vshrl.u32 %v1448, 7
        %v1450 = vsub.s32 0, %v1449
        %v1451 = vrot.slane %v1425, %v1450
        %v1452 = vlaneseq
        %v1453 = vshrl.u32 %v1452, 7
        %v1454 = vsub.s32 0, %v1453
        %v1455 = vrot.slane %v1426, %v1454
        %v1456 = vlaneseq
        %v1457 = vshrl.u32 %v1456, 7
        %v1458 = vsub.s32 0, %v1457
        %v1459 = vrot.slane %v1427, %v1458
        %v1460 = vlaneseq
        %v1461 = vshrl.u32 %v1460, 7
        %v1462 = vsub.s32 0, %v1461
        %v1463 = vrot.slane %v1428, %v1462
        %v1464 = vlaneseq
        %v1465 = vshrl.u32 %v1464, 7
        %v1466 = vsub.s32 0, %v1465
        %v1467 = vrot.slane %v1429, %v1466
        %v1468 = vlaneseq
        %v1469 = vshrl.u32 %v1468, 7
        %v1470 = vsub.s32 0, %v1469
        %v1471 = vrot.slane %v1430, %v1470
        %v1472 = vlaneseq
        %v1473 = vshrl.u32 %v1472, 7
        %v1474 = vsub.s32 0, %v1473
        %v1475 = vrot.slane %v1431, %v1474
        %v1476 = vlaneseq
        %v1477 = vshrl.u32 %v1476, 7
        %v1478 = vsub.s32 0, %v1477
        %v1479 = vrot.slane %v1432, %v1478
        %v1480 = vlaneseq
        %v1481 = vshrl.u32 %v1480, 7
        %v1482 = vsub.s32 0, %v1481
        %v1483 = vrot.slane %v1433, %v1482
        %v1484 = vlaneseq
        %v1485 = vshrl.u32 %v1484, 7
        %v1486 = vsub.s32 0, %v1485
        %v1487 = vrot.slane %v1434, %v1486
        %v1488 = vlaneseq
        %v1489 = vshrl.u32 %v1488, 7
        %v1490 = vsub.s32 0, %v1489
        %v1491 = vrot.slane %v1435, %v1490
        %v1492 = vlaneseq
        %v1493 = vshrl.u32 %v1492, 7
        %v1494 = vsub.s32 0, %v1493
        %v1495 = vrot.slane %v1436, %v1494
        %1497 = vset.pattern.permute.xlu0 0
        %1498 = vperm.xlu0 %1497, %v1438
        %v1499 = vpop.permute.xlu0 %1498
        %1502 = vset.pattern.permute.xlu0 0
        %1503 = vperm.xlu0 %1502, %v1439
        %v1504 = vpop.permute.xlu0 %1503
        %v1506 = vmul.f32 %v1443, %v1499
        %v1507 = vmul.f32 %v1443, %v1504
        %v1508 = vmul.f32 %v1447, %v1499
        %v1509 = vmul.f32 %v1447, %v1504
        %v1510 = vmul.f32 %v1451, %v1499
        %v1511 = vmul.f32 %v1451, %v1504
        %v1512 = vmul.f32 %v1455, %v1499
        %v1513 = vmul.f32 %v1455, %v1504
        %v1514 = vmul.f32 %v1459, %v1499
        %v1515 = vmul.f32 %v1459, %v1504
        %v1516 = vmul.f32 %v1463, %v1499
        %v1517 = vmul.f32 %v1463, %v1504
        %v1518 = vmul.f32 %v1467, %v1499
        %v1519 = vmul.f32 %v1467, %v1504
        %v1520 = vmul.f32 %v1471, %v1499
        %v1521 = vmul.f32 %v1471, %v1504
        %v1522 = vmul.f32 %v1475, %v1499
        %v1523 = vmul.f32 %v1475, %v1504
        %v1524 = vmul.f32 %v1479, %v1499
        %v1525 = vmul.f32 %v1479, %v1504
        %v1526 = vmul.f32 %v1483, %v1499
        %v1527 = vmul.f32 %v1483, %v1504
        %v1528 = vmul.f32 %v1487, %v1499
        %v1529 = vmul.f32 %v1487, %v1504
        %v1530 = vmul.f32 %v1491, %v1499
        %v1531 = vmul.f32 %v1491, %v1504
        %v1532 = vmul.f32 %v1495, %v1499
        %v1533 = vmul.f32 %v1495, %v1504
        %v1534 = vadd.f32 %v1395, %v1506
        %v1535 = vadd.f32 %v1396, %v1507
        %v1536 = vadd.f32 %v1397, %v1508
        %v1537 = vadd.f32 %v1398, %v1509
        %v1538 = vadd.f32 %v1399, %v1510
        %v1539 = vadd.f32 %v1400, %v1511
        %v1540 = vadd.f32 %v1401, %v1512
        %v1541 = vadd.f32 %v1402, %v1513
        %v1542 = vadd.f32 %v1403, %v1514
        %v1543 = vadd.f32 %v1404, %v1515
        %v1544 = vadd.f32 %v1405, %v1516
        %v1545 = vadd.f32 %v1406, %v1517
        %v1546 = vadd.f32 %v1407, %v1518
        %v1547 = vadd.f32 %v1408, %v1519
        %v1548 = vadd.f32 %v1409, %v1520
        %v1549 = vadd.f32 %v1410, %v1521
        %v1550 = vadd.f32 %v1411, %v1522
        %v1551 = vadd.f32 %v1412, %v1523
        %v1552 = vadd.f32 %v1413, %v1524
        %v1553 = vadd.f32 %v1414, %v1525
        %v1554 = vadd.f32 %v1415, %v1526
        %v1555 = vadd.f32 %v1416, %v1527
        %v1556 = vadd.f32 %v1417, %v1528
        %v1557 = vadd.f32 %v1418, %v1529
        %v1558 = vadd.f32 %v1419, %v1530
        %v1559 = vadd.f32 %v1420, %v1531
        %v1560 = vadd.f32 %v1421, %v1532
        %v1561 = vadd.f32 %v1422, %v1533
        %v1562 = vld [vmem:[%s1283 + $0x2] sm:$0x1]
        %v1563 = vld [vmem:[%s1283 + $0x6] sm:$0x1]
        %v1564 = vld [vmem:[%s1283 + $0xa] sm:$0x1]
        %v1565 = vld [vmem:[%s1283 + $0xe] sm:$0x1]
        %v1566 = vld [vmem:[%s1283 + $0x12] sm:$0x1]
        %v1567 = vld [vmem:[%s1283 + $0x16] sm:$0x1]
        %v1568 = vld [vmem:[%s1283 + $0x1a] sm:$0x1]
        %v1569 = vld [vmem:[%s1283 + $0x1e] sm:$0x1]
        %v1570 = vld [vmem:[%s1283 + $0x22] sm:$0x1]
        %v1571 = vld [vmem:[%s1283 + $0x26] sm:$0x1]
        %v1572 = vld [vmem:[%s1283 + $0x2a] sm:$0x1]
        %v1573 = vld [vmem:[%s1283 + $0x2e] sm:$0x1]
        %v1574 = vld [vmem:[%s1283 + $0x32] sm:$0x1]
        %v1575 = vld [vmem:[%s1283 + $0x36] sm:$0x1]
        %s1576 = scalar_lea.vmem %s1, 128
        %v1577 = vld [vmem:[%s1576] sm:$0xff]
        %v1578 = vld [vmem:[%s1576 + $0x8] sm:$0xff]
        %v1579 = vlaneseq
        %v1580 = vshrl.u32 %v1579, 7
        %v1581 = vsub.s32 0, %v1580
        %v1582 = vrot.slane %v1562, %v1581
        %v1583 = vlaneseq
        %v1584 = vshrl.u32 %v1583, 7
        %v1585 = vsub.s32 0, %v1584
        %v1586 = vrot.slane %v1563, %v1585
        %v1587 = vlaneseq
        %v1588 = vshrl.u32 %v1587, 7
        %v1589 = vsub.s32 0, %v1588
        %v1590 = vrot.slane %v1564, %v1589
        %v1591 = vlaneseq
        %v1592 = vshrl.u32 %v1591, 7
        %v1593 = vsub.s32 0, %v1592
        %v1594 = vrot.slane %v1565, %v1593
        %v1595 = vlaneseq
        %v1596 = vshrl.u32 %v1595, 7
        %v1597 = vsub.s32 0, %v1596
        %v1598 = vrot.slane %v1566, %v1597
        %v1599 = vlaneseq
        %v1600 = vshrl.u32 %v1599, 7
        %v1601 = vsub.s32 0, %v1600
        %v1602 = vrot.slane %v1567, %v1601
        %v1603 = vlaneseq
        %v1604 = vshrl.u32 %v1603, 7
        %v1605 = vsub.s32 0, %v1604
        %v1606 = vrot.slane %v1568, %v1605
        %v1607 = vlaneseq
        %v1608 = vshrl.u32 %v1607, 7
        %v1609 = vsub.s32 0, %v1608
        %v1610 = vrot.slane %v1569, %v1609
        %v1611 = vlaneseq
        %v1612 = vshrl.u32 %v1611, 7
        %v1613 = vsub.s32 0, %v1612
        %v1614 = vrot.slane %v1570, %v1613
        %v1615 = vlaneseq
        %v1616 = vshrl.u32 %v1615, 7
        %v1617 = vsub.s32 0, %v1616
        %v1618 = vrot.slane %v1571, %v1617
        %v1619 = vlaneseq
        %v1620 = vshrl.u32 %v1619, 7
        %v1621 = vsub.s32 0, %v1620
        %v1622 = vrot.slane %v1572, %v1621
        %v1623 = vlaneseq
        %v1624 = vshrl.u32 %v1623, 7
        %v1625 = vsub.s32 0, %v1624
        %v1626 = vrot.slane %v1573, %v1625
        %v1627 = vlaneseq
        %v1628 = vshrl.u32 %v1627, 7
        %v1629 = vsub.s32 0, %v1628
        %v1630 = vrot.slane %v1574, %v1629
        %v1631 = vlaneseq
        %v1632 = vshrl.u32 %v1631, 7
        %v1633 = vsub.s32 0, %v1632
        %v1634 = vrot.slane %v1575, %v1633
        %1636 = vset.pattern.permute.xlu0 0
        %1637 = vperm.xlu0 %1636, %v1577
        %v1638 = vpop.permute.xlu0 %1637
        %1641 = vset.pattern.permute.xlu0 0
        %1642 = vperm.xlu0 %1641, %v1578
        %v1643 = vpop.permute.xlu0 %1642
        %v1645 = vmul.f32 %v1582, %v1638
        %v1646 = vmul.f32 %v1582, %v1643
        %v1647 = vmul.f32 %v1586, %v1638
        %v1648 = vmul.f32 %v1586, %v1643
        %v1649 = vmul.f32 %v1590, %v1638
        %v1650 = vmul.f32 %v1590, %v1643
        %v1651 = vmul.f32 %v1594, %v1638
        %v1652 = vmul.f32 %v1594, %v1643
        %v1653 = vmul.f32 %v1598, %v1638
        %v1654 = vmul.f32 %v1598, %v1643
        %v1655 = vmul.f32 %v1602, %v1638
        %v1656 = vmul.f32 %v1602, %v1643
        %v1657 = vmul.f32 %v1606, %v1638
        %v1658 = vmul.f32 %v1606, %v1643
        %v1659 = vmul.f32 %v1610, %v1638
        %v1660 = vmul.f32 %v1610, %v1643
        %v1661 = vmul.f32 %v1614, %v1638
        %v1662 = vmul.f32 %v1614, %v1643
        %v1663 = vmul.f32 %v1618, %v1638
        %v1664 = vmul.f32 %v1618, %v1643
        %v1665 = vmul.f32 %v1622, %v1638
        %v1666 = vmul.f32 %v1622, %v1643
        %v1667 = vmul.f32 %v1626, %v1638
        %v1668 = vmul.f32 %v1626, %v1643
        %v1669 = vmul.f32 %v1630, %v1638
        %v1670 = vmul.f32 %v1630, %v1643
        %v1671 = vmul.f32 %v1634, %v1638
        %v1672 = vmul.f32 %v1634, %v1643
        %v1673 = vadd.f32 %v1534, %v1645
        %v1674 = vadd.f32 %v1535, %v1646
        %v1675 = vadd.f32 %v1536, %v1647
        %v1676 = vadd.f32 %v1537, %v1648
        %v1677 = vadd.f32 %v1538, %v1649
        %v1678 = vadd.f32 %v1539, %v1650
        %v1679 = vadd.f32 %v1540, %v1651
        %v1680 = vadd.f32 %v1541, %v1652
        %v1681 = vadd.f32 %v1542, %v1653
        %v1682 = vadd.f32 %v1543, %v1654
        %v1683 = vadd.f32 %v1544, %v1655
        %v1684 = vadd.f32 %v1545, %v1656
        %v1685 = vadd.f32 %v1546, %v1657
        %v1686 = vadd.f32 %v1547, %v1658
        %v1687 = vadd.f32 %v1548, %v1659
        %v1688 = vadd.f32 %v1549, %v1660
        %v1689 = vadd.f32 %v1550, %v1661
        %v1690 = vadd.f32 %v1551, %v1662
        %v1691 = vadd.f32 %v1552, %v1663
        %v1692 = vadd.f32 %v1553, %v1664
        %v1693 = vadd.f32 %v1554, %v1665
        %v1694 = vadd.f32 %v1555, %v1666
        %v1695 = vadd.f32 %v1556, %v1667
        %v1696 = vadd.f32 %v1557, %v1668
        %v1697 = vadd.f32 %v1558, %v1669
        %v1698 = vadd.f32 %v1559, %v1670
        %v1699 = vadd.f32 %v1560, %v1671
        %v1700 = vadd.f32 %v1561, %v1672
        %v1701 = vld [vmem:[%s2] sm:$0xff]
        %v1702 = vld [vmem:[%s2 + $0x8] sm:$0xff]
        %1704 = vset.pattern.permute.xlu0 0
        %1705 = vperm.xlu0 %1704, %v1701
        %v1706 = vpop.permute.xlu0 %1705
        %1709 = vset.pattern.permute.xlu0 0
        %1710 = vperm.xlu0 %1709, %v1702
        %v1711 = vpop.permute.xlu0 %1710
        %v1713 = vadd.f32 %v1673, %v1706
        %v1714 = vadd.f32 %v1674, %v1711
        %v1715 = vadd.f32 %v1675, %v1706
        %v1716 = vadd.f32 %v1676, %v1711
        %v1717 = vadd.f32 %v1677, %v1706
        %v1718 = vadd.f32 %v1678, %v1711
        %v1719 = vadd.f32 %v1679, %v1706
        %v1720 = vadd.f32 %v1680, %v1711
        %v1721 = vadd.f32 %v1681, %v1706
        %v1722 = vadd.f32 %v1682, %v1711
        %v1723 = vadd.f32 %v1683, %v1706
        %v1724 = vadd.f32 %v1684, %v1711
        %v1725 = vadd.f32 %v1685, %v1706
        %v1726 = vadd.f32 %v1686, %v1711
        %v1727 = vadd.f32 %v1687, %v1706
        %v1728 = vadd.f32 %v1688, %v1711
        %v1729 = vadd.f32 %v1689, %v1706
        %v1730 = vadd.f32 %v1690, %v1711
        %v1731 = vadd.f32 %v1691, %v1706
        %v1732 = vadd.f32 %v1692, %v1711
        %v1733 = vadd.f32 %v1693, %v1706
        %v1734 = vadd.f32 %v1694, %v1711
        %v1735 = vadd.f32 %v1695, %v1706
        %v1736 = vadd.f32 %v1696, %v1711
        %v1737 = vadd.f32 %v1697, %v1706
        %v1738 = vadd.f32 %v1698, %v1711
        %v1739 = vadd.f32 %v1699, %v1706
        %v1740 = vadd.f32 %v1700, %v1711
        %v1741 = vmax.f32 %v1713, 0.0
        %v1742 = vmax.f32 %v1714, 0.0
        %v1743 = vmax.f32 %v1715, 0.0
        %v1744 = vmax.f32 %v1716, 0.0
        %v1745 = vmax.f32 %v1717, 0.0
        %v1746 = vmax.f32 %v1718, 0.0
        %v1747 = vmax.f32 %v1719, 0.0
        %v1748 = vmax.f32 %v1720, 0.0
        %v1749 = vmax.f32 %v1721, 0.0
        %v1750 = vmax.f32 %v1722, 0.0
        %v1751 = vmax.f32 %v1723, 0.0
        %v1752 = vmax.f32 %v1724, 0.0
        %v1753 = vmax.f32 %v1725, 0.0
        %v1754 = vmax.f32 %v1726, 0.0
        %v1755 = vmax.f32 %v1727, 0.0
        %v1756 = vmax.f32 %v1728, 0.0
        %v1757 = vmax.f32 %v1729, 0.0
        %v1758 = vmax.f32 %v1730, 0.0
        %v1759 = vmax.f32 %v1731, 0.0
        %v1760 = vmax.f32 %v1732, 0.0
        %v1761 = vmax.f32 %v1733, 0.0
        %v1762 = vmax.f32 %v1734, 0.0
        %v1763 = vmax.f32 %v1735, 0.0
        %v1764 = vmax.f32 %v1736, 0.0
        %v1765 = vmax.f32 %v1737, 0.0
        %v1766 = vmax.f32 %v1738, 0.0
        %v1767 = vmax.f32 %v1739, 0.0
        %v1768 = vmax.f32 %v1740, 0.0
        %s1769 = scalar_lea.vmem [#allocation2], 48
        %vm1770 = vcmask 56320
        %1771 = vst.msk [vmem:[%s1769] sm:$0xff] %vm1770, %v1741
        %1772 = vst.msk [vmem:[%s1769 + $0x8] sm:$0xff] %vm1770, %v1742
        %1773 = vst.msk [vmem:[%s1769 + $0x20] sm:$0xff] %vm1770, %v1743
        %1774 = vst.msk [vmem:[%s1769 + $0x28] sm:$0xff] %vm1770, %v1744
        %1775 = vst.msk [vmem:[%s1769 + $0x40] sm:$0xff] %vm1770, %v1745
        %1776 = vst.msk [vmem:[%s1769 + $0x48] sm:$0xff] %vm1770, %v1746
        %1777 = vst.msk [vmem:[%s1769 + $0x60] sm:$0xff] %vm1770, %v1747
        %1778 = vst.msk [vmem:[%s1769 + $0x68] sm:$0xff] %vm1770, %v1748
        %1779 = vst.msk [vmem:[%s1769 + $0x80] sm:$0xff] %vm1770, %v1749
        %1780 = vst.msk [vmem:[%s1769 + $0x88] sm:$0xff] %vm1770, %v1750
        %1781 = vst.msk [vmem:[%s1769 + $0xa0] sm:$0xff] %vm1770, %v1751
        %1782 = vst.msk [vmem:[%s1769 + $0xa8] sm:$0xff] %vm1770, %v1752
        %1783 = vst.msk [vmem:[%s1769 + $0xc0] sm:$0xff] %vm1770, %v1753
        %1784 = vst.msk [vmem:[%s1769 + $0xc8] sm:$0xff] %vm1770, %v1754
        %1785 = vst.msk [vmem:[%s1769 + $0xe0] sm:$0xff] %vm1770, %v1755
        %1786 = vst.msk [vmem:[%s1769 + $0xe8] sm:$0xff] %vm1770, %v1756
        %1787 = vst.msk [vmem:[%s1769 + $0x100] sm:$0xff] %vm1770, %v1757
        %1788 = vst.msk [vmem:[%s1769 + $0x108] sm:$0xff] %vm1770, %v1758
        %1789 = vst.msk [vmem:[%s1769 + $0x120] sm:$0xff] %vm1770, %v1759
        %1790 = vst.msk [vmem:[%s1769 + $0x128] sm:$0xff] %vm1770, %v1760
        %1791 = vst.msk [vmem:[%s1769 + $0x140] sm:$0xff] %vm1770, %v1761
        %1792 = vst.msk [vmem:[%s1769 + $0x148] sm:$0xff] %vm1770, %v1762
        %1793 = vst.msk [vmem:[%s1769 + $0x160] sm:$0xff] %vm1770, %v1763
        %1794 = vst.msk [vmem:[%s1769 + $0x168] sm:$0xff] %vm1770, %v1764
        %1795 = vst.msk [vmem:[%s1769 + $0x180] sm:$0xff] %vm1770, %v1765
        %1796 = vst.msk [vmem:[%s1769 + $0x188] sm:$0xff] %vm1770, %v1766
        %1797 = vst.msk [vmem:[%s1769 + $0x1a0] sm:$0xff] %vm1770, %v1767
        %1798 = vst.msk [vmem:[%s1769 + $0x1a8] sm:$0xff] %vm1770, %v1768
        %v1799 = vld [vmem:[%s383 + $0x2] sm:$0x1]
        %v1800 = vld [vmem:[%s383 + $0x6] sm:$0x1]
        %v1801 = vld [vmem:[%s383 + $0xa] sm:$0x1]
        %v1802 = vld [vmem:[%s383 + $0xe] sm:$0x1]
        %v1803 = vld [vmem:[%s383 + $0x12] sm:$0x1]
        %v1804 = vld [vmem:[%s383 + $0x16] sm:$0x1]
        %v1805 = vld [vmem:[%s383 + $0x1a] sm:$0x1]
        %v1806 = vld [vmem:[%s383 + $0x1e] sm:$0x1]
        %v1807 = vld [vmem:[%s383 + $0x22] sm:$0x1]
        %v1808 = vld [vmem:[%s383 + $0x26] sm:$0x1]
        %v1809 = vld [vmem:[%s383 + $0x2a] sm:$0x1]
        %v1810 = vld [vmem:[%s383 + $0x2e] sm:$0x1]
        %v1811 = vld [vmem:[%s383 + $0x32] sm:$0x1]
        %v1812 = vld [vmem:[%s383 + $0x36] sm:$0x1]
        %v1813 = vld [vmem:[%s1] sm:$0xff]
        %v1814 = vld [vmem:[%s1 + $0x8] sm:$0xff]
        %v1815 = vlaneseq
        %v1816 = vshrl.u32 %v1815, 7
        %v1817 = vsub.s32 0, %v1816
        %v1818 = vrot.slane %v1799, %v1817
        %v1819 = vlaneseq
        %v1820 = vshrl.u32 %v1819, 7
        %v1821 = vsub.s32 0, %v1820
        %v1822 = vrot.slane %v1800, %v1821
        %v1823 = vlaneseq
        %v1824 = vshrl.u32 %v1823, 7
        %v1825 = vsub.s32 0, %v1824
        %v1826 = vrot.slane %v1801, %v1825
        %v1827 = vlaneseq
        %v1828 = vshrl.u32 %v1827, 7
        %v1829 = vsub.s32 0, %v1828
        %v1830 = vrot.slane %v1802, %v1829
        %v1831 = vlaneseq
        %v1832 = vshrl.u32 %v1831, 7
        %v1833 = vsub.s32 0, %v1832
        %v1834 = vrot.slane %v1803, %v1833
        %v1835 = vlaneseq
        %v1836 = vshrl.u32 %v1835, 7
        %v1837 = vsub.s32 0, %v1836
        %v1838 = vrot.slane %v1804, %v1837
        %v1839 = vlaneseq
        %v1840 = vshrl.u32 %v1839, 7
        %v1841 = vsub.s32 0, %v1840
        %v1842 = vrot.slane %v1805, %v1841
        %v1843 = vlaneseq
        %v1844 = vshrl.u32 %v1843, 7
        %v1845 = vsub.s32 0, %v1844
        %v1846 = vrot.slane %v1806, %v1845
        %v1847 = vlaneseq
        %v1848 = vshrl.u32 %v1847, 7
        %v1849 = vsub.s32 0, %v1848
        %v1850 = vrot.slane %v1807, %v1849
        %v1851 = vlaneseq
        %v1852 = vshrl.u32 %v1851, 7
        %v1853 = vsub.s32 0, %v1852
        %v1854 = vrot.slane %v1808, %v1853
        %v1855 = vlaneseq
        %v1856 = vshrl.u32 %v1855, 7
        %v1857 = vsub.s32 0, %v1856
        %v1858 = vrot.slane %v1809, %v1857
        %v1859 = vlaneseq
        %v1860 = vshrl.u32 %v1859, 7
        %v1861 = vsub.s32 0, %v1860
        %v1862 = vrot.slane %v1810, %v1861
        %v1863 = vlaneseq
        %v1864 = vshrl.u32 %v1863, 7
        %v1865 = vsub.s32 0, %v1864
        %v1866 = vrot.slane %v1811, %v1865
        %v1867 = vlaneseq
        %v1868 = vshrl.u32 %v1867, 7
        %v1869 = vsub.s32 0, %v1868
        %v1870 = vrot.slane %v1812, %v1869
        %1872 = vset.pattern.permute.xlu0 0
        %1873 = vperm.xlu0 %1872, %v1813
        %v1874 = vpop.permute.xlu0 %1873
        %1877 = vset.pattern.permute.xlu0 0
        %1878 = vperm.xlu0 %1877, %v1814
        %v1879 = vpop.permute.xlu0 %1878
        %v1881 = vmul.f32 %v1818, %v1874
        %v1882 = vmul.f32 %v1818, %v1879
        %v1883 = vmul.f32 %v1822, %v1874
        %v1884 = vmul.f32 %v1822, %v1879
        %v1885 = vmul.f32 %v1826, %v1874
        %v1886 = vmul.f32 %v1826, %v1879
        %v1887 = vmul.f32 %v1830, %v1874
        %v1888 = vmul.f32 %v1830, %v1879
        %v1889 = vmul.f32 %v1834, %v1874
        %v1890 = vmul.f32 %v1834, %v1879
        %v1891 = vmul.f32 %v1838, %v1874
        %v1892 = vmul.f32 %v1838, %v1879
        %v1893 = vmul.f32 %v1842, %v1874
        %v1894 = vmul.f32 %v1842, %v1879
        %v1895 = vmul.f32 %v1846, %v1874
        %v1896 = vmul.f32 %v1846, %v1879
        %v1897 = vmul.f32 %v1850, %v1874
        %v1898 = vmul.f32 %v1850, %v1879
        %v1899 = vmul.f32 %v1854, %v1874
        %v1900 = vmul.f32 %v1854, %v1879
        %v1901 = vmul.f32 %v1858, %v1874
        %v1902 = vmul.f32 %v1858, %v1879
        %v1903 = vmul.f32 %v1862, %v1874
        %v1904 = vmul.f32 %v1862, %v1879
        %v1905 = vmul.f32 %v1866, %v1874
        %v1906 = vmul.f32 %v1866, %v1879
        %v1907 = vmul.f32 %v1870, %v1874
        %v1908 = vmul.f32 %v1870, %v1879
        %v1909 = vadd.f32 %v1881, 0.0
        %v1910 = vadd.f32 %v1882, 0.0
        %v1911 = vadd.f32 %v1883, 0.0
        %v1912 = vadd.f32 %v1884, 0.0
        %v1913 = vadd.f32 %v1885, 0.0
        %v1914 = vadd.f32 %v1886, 0.0
        %v1915 = vadd.f32 %v1887, 0.0
        %v1916 = vadd.f32 %v1888, 0.0
        %v1917 = vadd.f32 %v1889, 0.0
        %v1918 = vadd.f32 %v1890, 0.0
        %v1919 = vadd.f32 %v1891, 0.0
        %v1920 = vadd.f32 %v1892, 0.0
        %v1921 = vadd.f32 %v1893, 0.0
        %v1922 = vadd.f32 %v1894, 0.0
        %v1923 = vadd.f32 %v1895, 0.0
        %v1924 = vadd.f32 %v1896, 0.0
        %v1925 = vadd.f32 %v1897, 0.0
        %v1926 = vadd.f32 %v1898, 0.0
        %v1927 = vadd.f32 %v1899, 0.0
        %v1928 = vadd.f32 %v1900, 0.0
        %v1929 = vadd.f32 %v1901, 0.0
        %v1930 = vadd.f32 %v1902, 0.0
        %v1931 = vadd.f32 %v1903, 0.0
        %v1932 = vadd.f32 %v1904, 0.0
        %v1933 = vadd.f32 %v1905, 0.0
        %v1934 = vadd.f32 %v1906, 0.0
        %v1935 = vadd.f32 %v1907, 0.0
        %v1936 = vadd.f32 %v1908, 0.0
        %v1937 = vld [vmem:[%s383 + $0x3] sm:$0x1]
        %v1938 = vld [vmem:[%s383 + $0x7] sm:$0x1]
        %v1939 = vld [vmem:[%s383 + $0xb] sm:$0x1]
        %v1940 = vld [vmem:[%s383 + $0xf] sm:$0x1]
        %v1941 = vld [vmem:[%s383 + $0x13] sm:$0x1]
        %v1942 = vld [vmem:[%s383 + $0x17] sm:$0x1]
        %v1943 = vld [vmem:[%s383 + $0x1b] sm:$0x1]
        %v1944 = vld [vmem:[%s383 + $0x1f] sm:$0x1]
        %v1945 = vld [vmem:[%s383 + $0x23] sm:$0x1]
        %v1946 = vld [vmem:[%s383 + $0x27] sm:$0x1]
        %v1947 = vld [vmem:[%s383 + $0x2b] sm:$0x1]
        %v1948 = vld [vmem:[%s383 + $0x2f] sm:$0x1]
        %v1949 = vld [vmem:[%s383 + $0x33] sm:$0x1]
        %v1950 = vld [vmem:[%s383 + $0x37] sm:$0x1]
        %v1951 = vld [vmem:[%s601] sm:$0xff]
        %v1952 = vld [vmem:[%s601 + $0x8] sm:$0xff]
        %v1953 = vlaneseq
        %v1954 = vshrl.u32 %v1953, 7
        %v1955 = vsub.s32 0, %v1954
        %v1956 = vrot.slane %v1937, %v1955
        %v1957 = vlaneseq
        %v1958 = vshrl.u32 %v1957, 7
        %v1959 = vsub.s32 0, %v1958
        %v1960 = vrot.slane %v1938, %v1959
        %v1961 = vlaneseq
        %v1962 = vshrl.u32 %v1961, 7
        %v1963 = vsub.s32 0, %v1962
        %v1964 = vrot.slane %v1939, %v1963
        %v1965 = vlaneseq
        %v1966 = vshrl.u32 %v1965, 7
        %v1967 = vsub.s32 0, %v1966
        %v1968 = vrot.slane %v1940, %v1967
        %v1969 = vlaneseq
        %v1970 = vshrl.u32 %v1969, 7
        %v1971 = vsub.s32 0, %v1970
        %v1972 = vrot.slane %v1941, %v1971
        %v1973 = vlaneseq
        %v1974 = vshrl.u32 %v1973, 7
        %v1975 = vsub.s32 0, %v1974
        %v1976 = vrot.slane %v1942, %v1975
        %v1977 = vlaneseq
        %v1978 = vshrl.u32 %v1977, 7
        %v1979 = vsub.s32 0, %v1978
        %v1980 = vrot.slane %v1943, %v1979
        %v1981 = vlaneseq
        %v1982 = vshrl.u32 %v1981, 7
        %v1983 = vsub.s32 0, %v1982
        %v1984 = vrot.slane %v1944, %v1983
        %v1985 = vlaneseq
        %v1986 = vshrl.u32 %v1985, 7
        %v1987 = vsub.s32 0, %v1986
        %v1988 = vrot.slane %v1945, %v1987
        %v1989 = vlaneseq
        %v1990 = vshrl.u32 %v1989, 7
        %v1991 = vsub.s32 0, %v1990
        %v1992 = vrot.slane %v1946, %v1991
        %v1993 = vlaneseq
        %v1994 = vshrl.u32 %v1993, 7
        %v1995 = vsub.s32 0, %v1994
        %v1996 = vrot.slane %v1947, %v1995
        %v1997 = vlaneseq
        %v1998 = vshrl.u32 %v1997, 7
        %v1999 = vsub.s32 0, %v1998
        %v2000 = vrot.slane %v1948, %v1999
        %v2001 = vlaneseq
        %v2002 = vshrl.u32 %v2001, 7
        %v2003 = vsub.s32 0, %v2002
        %v2004 = vrot.slane %v1949, %v2003
        %v2005 = vlaneseq
        %v2006 = vshrl.u32 %v2005, 7
        %v2007 = vsub.s32 0, %v2006
        %v2008 = vrot.slane %v1950, %v2007
        %2010 = vset.pattern.permute.xlu0 0
        %2011 = vperm.xlu0 %2010, %v1951
        %v2012 = vpop.permute.xlu0 %2011
        %2015 = vset.pattern.permute.xlu0 0
        %2016 = vperm.xlu0 %2015, %v1952
        %v2017 = vpop.permute.xlu0 %2016
        %v2019 = vmul.f32 %v1956, %v2012
        %v2020 = vmul.f32 %v1956, %v2017
        %v2021 = vmul.f32 %v1960, %v2012
        %v2022 = vmul.f32 %v1960, %v2017
        %v2023 = vmul.f32 %v1964, %v2012
        %v2024 = vmul.f32 %v1964, %v2017
        %v2025 = vmul.f32 %v1968, %v2012
        %v2026 = vmul.f32 %v1968, %v2017
        %v2027 = vmul.f32 %v1972, %v2012
        %v2028 = vmul.f32 %v1972, %v2017
        %v2029 = vmul.f32 %v1976, %v2012
        %v2030 = vmul.f32 %v1976, %v2017
        %v2031 = vmul.f32 %v1980, %v2012
        %v2032 = vmul.f32 %v1980, %v2017
        %v2033 = vmul.f32 %v1984, %v2012
        %v2034 = vmul.f32 %v1984, %v2017
        %v2035 = vmul.f32 %v1988, %v2012
        %v2036 = vmul.f32 %v1988, %v2017
        %v2037 = vmul.f32 %v1992, %v2012
        %v2038 = vmul.f32 %v1992, %v2017
        %v2039 = vmul.f32 %v1996, %v2012
        %v2040 = vmul.f32 %v1996, %v2017
        %v2041 = vmul.f32 %v2000, %v2012
        %v2042 = vmul.f32 %v2000, %v2017
        %v2043 = vmul.f32 %v2004, %v2012
        %v2044 = vmul.f32 %v2004, %v2017
        %v2045 = vmul.f32 %v2008, %v2012
        %v2046 = vmul.f32 %v2008, %v2017
        %v2047 = vadd.f32 %v1909, %v2019
        %v2048 = vadd.f32 %v1910, %v2020
        %v2049 = vadd.f32 %v1911, %v2021
        %v2050 = vadd.f32 %v1912, %v2022
        %v2051 = vadd.f32 %v1913, %v2023
        %v2052 = vadd.f32 %v1914, %v2024
        %v2053 = vadd.f32 %v1915, %v2025
        %v2054 = vadd.f32 %v1916, %v2026
        %v2055 = vadd.f32 %v1917, %v2027
        %v2056 = vadd.f32 %v1918, %v2028
        %v2057 = vadd.f32 %v1919, %v2029
        %v2058 = vadd.f32 %v1920, %v2030
        %v2059 = vadd.f32 %v1921, %v2031
        %v2060 = vadd.f32 %v1922, %v2032
        %v2061 = vadd.f32 %v1923, %v2033
        %v2062 = vadd.f32 %v1924, %v2034
        %v2063 = vadd.f32 %v1925, %v2035
        %v2064 = vadd.f32 %v1926, %v2036
        %v2065 = vadd.f32 %v1927, %v2037
        %v2066 = vadd.f32 %v1928, %v2038
        %v2067 = vadd.f32 %v1929, %v2039
        %v2068 = vadd.f32 %v1930, %v2040
        %v2069 = vadd.f32 %v1931, %v2041
        %v2070 = vadd.f32 %v1932, %v2042
        %v2071 = vadd.f32 %v1933, %v2043
        %v2072 = vadd.f32 %v1934, %v2044
        %v2073 = vadd.f32 %v1935, %v2045
        %v2074 = vadd.f32 %v1936, %v2046
        %v2075 = vld [vmem:[%s383] sm:$0x1]
        %v2076 = vld [vmem:[%s383 + $0x4] sm:$0x1]
        %v2077 = vld [vmem:[%s383 + $0x8] sm:$0x1]
        %v2078 = vld [vmem:[%s383 + $0xc] sm:$0x1]
        %v2079 = vld [vmem:[%s383 + $0x10] sm:$0x1]
        %v2080 = vld [vmem:[%s383 + $0x14] sm:$0x1]
        %v2081 = vld [vmem:[%s383 + $0x18] sm:$0x1]
        %v2082 = vld [vmem:[%s383 + $0x1c] sm:$0x1]
        %v2083 = vld [vmem:[%s383 + $0x20] sm:$0x1]
        %v2084 = vld [vmem:[%s383 + $0x24] sm:$0x1]
        %v2085 = vld [vmem:[%s383 + $0x28] sm:$0x1]
        %v2086 = vld [vmem:[%s383 + $0x2c] sm:$0x1]
        %v2087 = vld [vmem:[%s383 + $0x30] sm:$0x1]
        %v2088 = vld [vmem:[%s383 + $0x34] sm:$0x1]
        %v2089 = vld [vmem:[%s740] sm:$0xff]
        %v2090 = vld [vmem:[%s740 + $0x8] sm:$0xff]
        %v2091 = vlaneseq
        %v2092 = vshrl.u32 %v2091, 7
        %v2093 = vsub.s32 0, %v2092
        %v2094 = vrot.slane %v2075, %v2093
        %v2095 = vlaneseq
        %v2096 = vshrl.u32 %v2095, 7
        %v2097 = vsub.s32 0, %v2096
        %v2098 = vrot.slane %v2076, %v2097
        %v2099 = vlaneseq
        %v2100 = vshrl.u32 %v2099, 7
        %v2101 = vsub.s32 0, %v2100
        %v2102 = vrot.slane %v2077, %v2101
        %v2103 = vlaneseq
        %v2104 = vshrl.u32 %v2103, 7
        %v2105 = vsub.s32 0, %v2104
        %v2106 = vrot.slane %v2078, %v2105
        %v2107 = vlaneseq
        %v2108 = vshrl.u32 %v2107, 7
        %v2109 = vsub.s32 0, %v2108
        %v2110 = vrot.slane %v2079, %v2109
        %v2111 = vlaneseq
        %v2112 = vshrl.u32 %v2111, 7
        %v2113 = vsub.s32 0, %v2112
        %v2114 = vrot.slane %v2080, %v2113
        %v2115 = vlaneseq
        %v2116 = vshrl.u32 %v2115, 7
        %v2117 = vsub.s32 0, %v2116
        %v2118 = vrot.slane %v2081, %v2117
        %v2119 = vlaneseq
        %v2120 = vshrl.u32 %v2119, 7
        %v2121 = vsub.s32 0, %v2120
        %v2122 = vrot.slane %v2082, %v2121
        %v2123 = vlaneseq
        %v2124 = vshrl.u32 %v2123, 7
        %v2125 = vsub.s32 0, %v2124
        %v2126 = vrot.slane %v2083, %v2125
        %v2127 = vlaneseq
        %v2128 = vshrl.u32 %v2127, 7
        %v2129 = vsub.s32 0, %v2128
        %v2130 = vrot.slane %v2084, %v2129
        %v2131 = vlaneseq
        %v2132 = vshrl.u32 %v2131, 7
        %v2133 = vsub.s32 0, %v2132
        %v2134 = vrot.slane %v2085, %v2133
        %v2135 = vlaneseq
        %v2136 = vshrl.u32 %v2135, 7
        %v2137 = vsub.s32 0, %v2136
        %v2138 = vrot.slane %v2086, %v2137
        %v2139 = vlaneseq
        %v2140 = vshrl.u32 %v2139, 7
        %v2141 = vsub.s32 0, %v2140
        %v2142 = vrot.slane %v2087, %v2141
        %v2143 = vlaneseq
        %v2144 = vshrl.u32 %v2143, 7
        %v2145 = vsub.s32 0, %v2144
        %v2146 = vrot.slane %v2088, %v2145
        %2148 = vset.pattern.permute.xlu0 0
        %2149 = vperm.xlu0 %2148, %v2089
        %v2150 = vpop.permute.xlu0 %2149
        %2153 = vset.pattern.permute.xlu0 0
        %2154 = vperm.xlu0 %2153, %v2090
        %v2155 = vpop.permute.xlu0 %2154
        %v2157 = vmul.f32 %v2094, %v2150
        %v2158 = vmul.f32 %v2094, %v2155
        %v2159 = vmul.f32 %v2098, %v2150
        %v2160 = vmul.f32 %v2098, %v2155
        %v2161 = vmul.f32 %v2102, %v2150
        %v2162 = vmul.f32 %v2102, %v2155
        %v2163 = vmul.f32 %v2106, %v2150
        %v2164 = vmul.f32 %v2106, %v2155
        %v2165 = vmul.f32 %v2110, %v2150
        %v2166 = vmul.f32 %v2110, %v2155
        %v2167 = vmul.f32 %v2114, %v2150
        %v2168 = vmul.f32 %v2114, %v2155
        %v2169 = vmul.f32 %v2118, %v2150
        %v2170 = vmul.f32 %v2118, %v2155
        %v2171 = vmul.f32 %v2122, %v2150
        %v2172 = vmul.f32 %v2122, %v2155
        %v2173 = vmul.f32 %v2126, %v2150
        %v2174 = vmul.f32 %v2126, %v2155
        %v2175 = vmul.f32 %v2130, %v2150
        %v2176 = vmul.f32 %v2130, %v2155
        %v2177 = vmul.f32 %v2134, %v2150
        %v2178 = vmul.f32 %v2134, %v2155
        %v2179 = vmul.f32 %v2138, %v2150
        %v2180 = vmul.f32 %v2138, %v2155
        %v2181 = vmul.f32 %v2142, %v2150
        %v2182 = vmul.f32 %v2142, %v2155
        %v2183 = vmul.f32 %v2146, %v2150
        %v2184 = vmul.f32 %v2146, %v2155
        %2213 = vrot.lane.b32.xlu0 %v2157, 127
        %v2214 = vpop.permute.xlu0 %2213
        %2215 = vrot.lane.b32.xlu0 %v2158, 127
        %v2216 = vpop.permute.xlu0 %2215
        %2217 = vrot.lane.b32.xlu0 %v2159, 127
        %v2218 = vpop.permute.xlu0 %2217
        %2219 = vrot.lane.b32.xlu0 %v2160, 127
        %v2220 = vpop.permute.xlu0 %2219
        %2221 = vrot.lane.b32.xlu0 %v2161, 127
        %v2222 = vpop.permute.xlu0 %2221
        %2223 = vrot.lane.b32.xlu0 %v2162, 127
        %v2224 = vpop.permute.xlu0 %2223
        %2225 = vrot.lane.b32.xlu0 %v2163, 127
        %v2226 = vpop.permute.xlu0 %2225
        %2227 = vrot.lane.b32.xlu0 %v2164, 127
        %v2228 = vpop.permute.xlu0 %2227
        %2229 = vrot.lane.b32.xlu0 %v2165, 127
        %v2230 = vpop.permute.xlu0 %2229
        %2231 = vrot.lane.b32.xlu0 %v2166, 127
        %v2232 = vpop.permute.xlu0 %2231
        %2233 = vrot.lane.b32.xlu0 %v2167, 127
        %v2234 = vpop.permute.xlu0 %2233
        %2235 = vrot.lane.b32.xlu0 %v2168, 127
        %v2236 = vpop.permute.xlu0 %2235
        %2237 = vrot.lane.b32.xlu0 %v2169, 127
        %v2238 = vpop.permute.xlu0 %2237
        %2239 = vrot.lane.b32.xlu0 %v2170, 127
        %v2240 = vpop.permute.xlu0 %2239
        %2241 = vrot.lane.b32.xlu0 %v2171, 127
        %v2242 = vpop.permute.xlu0 %2241
        %2243 = vrot.lane.b32.xlu0 %v2172, 127
        %v2244 = vpop.permute.xlu0 %2243
        %2245 = vrot.lane.b32.xlu0 %v2173, 127
        %v2246 = vpop.permute.xlu0 %2245
        %2247 = vrot.lane.b32.xlu0 %v2174, 127
        %v2248 = vpop.permute.xlu0 %2247
        %2249 = vrot.lane.b32.xlu0 %v2175, 127
        %v2250 = vpop.permute.xlu0 %2249
        %2251 = vrot.lane.b32.xlu0 %v2176, 127
        %v2252 = vpop.permute.xlu0 %2251
        %2253 = vrot.lane.b32.xlu0 %v2177, 127
        %v2254 = vpop.permute.xlu0 %2253
        %2255 = vrot.lane.b32.xlu0 %v2178, 127
        %v2256 = vpop.permute.xlu0 %2255
        %2257 = vrot.lane.b32.xlu0 %v2179, 127
        %v2258 = vpop.permute.xlu0 %2257
        %2259 = vrot.lane.b32.xlu0 %v2180, 127
        %v2260 = vpop.permute.xlu0 %2259
        %2261 = vrot.lane.b32.xlu0 %v2181, 127
        %v2262 = vpop.permute.xlu0 %2261
        %2263 = vrot.lane.b32.xlu0 %v2182, 127
        %v2264 = vpop.permute.xlu0 %2263
        %2265 = vrot.lane.b32.xlu0 %v2183, 127
        %v2266 = vpop.permute.xlu0 %2265
        %2267 = vrot.lane.b32.xlu0 %v2184, 127
        %v2268 = vpop.permute.xlu0 %2267
        %v2297 = vadd.f32 %v2047, %v2214
        %v2298 = vadd.f32 %v2048, %v2216
        %v2299 = vadd.f32 %v2049, %v2218
        %v2300 = vadd.f32 %v2050, %v2220
        %v2301 = vadd.f32 %v2051, %v2222
        %v2302 = vadd.f32 %v2052, %v2224
        %v2303 = vadd.f32 %v2053, %v2226
        %v2304 = vadd.f32 %v2054, %v2228
        %v2305 = vadd.f32 %v2055, %v2230
        %v2306 = vadd.f32 %v2056, %v2232
        %v2307 = vadd.f32 %v2057, %v2234
        %v2308 = vadd.f32 %v2058, %v2236
        %v2309 = vadd.f32 %v2059, %v2238
        %v2310 = vadd.f32 %v2060, %v2240
        %v2311 = vadd.f32 %v2061, %v2242
        %v2312 = vadd.f32 %v2062, %v2244
        %v2313 = vadd.f32 %v2063, %v2246
        %v2314 = vadd.f32 %v2064, %v2248
        %v2315 = vadd.f32 %v2065, %v2250
        %v2316 = vadd.f32 %v2066, %v2252
        %v2317 = vadd.f32 %v2067, %v2254
        %v2318 = vadd.f32 %v2068, %v2256
        %v2319 = vadd.f32 %v2069, %v2258
        %v2320 = vadd.f32 %v2070, %v2260
        %v2321 = vadd.f32 %v2071, %v2262
        %v2322 = vadd.f32 %v2072, %v2264
        %v2323 = vadd.f32 %v2073, %v2266
        %v2324 = vadd.f32 %v2074, %v2268
        %v2325 = vld [vmem:[%s865 + $0x2] sm:$0x1]
        %v2326 = vld [vmem:[%s865 + $0x6] sm:$0x1]
        %v2327 = vld [vmem:[%s865 + $0xa] sm:$0x1]
        %v2328 = vld [vmem:[%s865 + $0xe] sm:$0x1]
        %v2329 = vld [vmem:[%s865 + $0x12] sm:$0x1]
        %v2330 = vld [vmem:[%s865 + $0x16] sm:$0x1]
        %v2331 = vld [vmem:[%s865 + $0x1a] sm:$0x1]
        %v2332 = vld [vmem:[%s865 + $0x1e] sm:$0x1]
        %v2333 = vld [vmem:[%s865 + $0x22] sm:$0x1]
        %v2334 = vld [vmem:[%s865 + $0x26] sm:$0x1]
        %v2335 = vld [vmem:[%s865 + $0x2a] sm:$0x1]
        %v2336 = vld [vmem:[%s865 + $0x2e] sm:$0x1]
        %v2337 = vld [vmem:[%s865 + $0x32] sm:$0x1]
        %v2338 = vld [vmem:[%s865 + $0x36] sm:$0x1]
        %v2339 = vld [vmem:[%s880] sm:$0xff]
        %v2340 = vld [vmem:[%s880 + $0x8] sm:$0xff]
        %v2341 = vlaneseq
        %v2342 = vshrl.u32 %v2341, 7
        %v2343 = vsub.s32 0, %v2342
        %v2344 = vrot.slane %v2325, %v2343
        %v2345 = vlaneseq
        %v2346 = vshrl.u32 %v2345, 7
        %v2347 = vsub.s32 0, %v2346
        %v2348 = vrot.slane %v2326, %v2347
        %v2349 = vlaneseq
        %v2350 = vshrl.u32 %v2349, 7
        %v2351 = vsub.s32 0, %v2350
        %v2352 = vrot.slane %v2327, %v2351
        %v2353 = vlaneseq
        %v2354 = vshrl.u32 %v2353, 7
        %v2355 = vsub.s32 0, %v2354
        %v2356 = vrot.slane %v2328, %v2355
        %v2357 = vlaneseq
        %v2358 = vshrl.u32 %v2357, 7
        %v2359 = vsub.s32 0, %v2358
        %v2360 = vrot.slane %v2329, %v2359
        %v2361 = vlaneseq
        %v2362 = vshrl.u32 %v2361, 7
        %v2363 = vsub.s32 0, %v2362
        %v2364 = vrot.slane %v2330, %v2363
        %v2365 = vlaneseq
        %v2366 = vshrl.u32 %v2365, 7
        %v2367 = vsub.s32 0, %v2366
        %v2368 = vrot.slane %v2331, %v2367
        %v2369 = vlaneseq
        %v2370 = vshrl.u32 %v2369, 7
        %v2371 = vsub.s32 0, %v2370
        %v2372 = vrot.slane %v2332, %v2371
        %v2373 = vlaneseq
        %v2374 = vshrl.u32 %v2373, 7
        %v2375 = vsub.s32 0, %v2374
        %v2376 = vrot.slane %v2333, %v2375
        %v2377 = vlaneseq
        %v2378 = vshrl.u32 %v2377, 7
        %v2379 = vsub.s32 0, %v2378
        %v2380 = vrot.slane %v2334, %v2379
        %v2381 = vlaneseq
        %v2382 = vshrl.u32 %v2381, 7
        %v2383 = vsub.s32 0, %v2382
        %v2384 = vrot.slane %v2335, %v2383
        %v2385 = vlaneseq
        %v2386 = vshrl.u32 %v2385, 7
        %v2387 = vsub.s32 0, %v2386
        %v2388 = vrot.slane %v2336, %v2387
        %v2389 = vlaneseq
        %v2390 = vshrl.u32 %v2389, 7
        %v2391 = vsub.s32 0, %v2390
        %v2392 = vrot.slane %v2337, %v2391
        %v2393 = vlaneseq
        %v2394 = vshrl.u32 %v2393, 7
        %v2395 = vsub.s32 0, %v2394
        %v2396 = vrot.slane %v2338, %v2395
        %2398 = vset.pattern.permute.xlu0 0
        %2399 = vperm.xlu0 %2398, %v2339
        %v2400 = vpop.permute.xlu0 %2399
        %2403 = vset.pattern.permute.xlu0 0
        %2404 = vperm.xlu0 %2403, %v2340
        %v2405 = vpop.permute.xlu0 %2404
        %v2407 = vmul.f32 %v2344, %v2400
        %v2408 = vmul.f32 %v2344, %v2405
        %v2409 = vmul.f32 %v2348, %v2400
        %v2410 = vmul.f32 %v2348, %v2405
        %v2411 = vmul.f32 %v2352, %v2400
        %v2412 = vmul.f32 %v2352, %v2405
        %v2413 = vmul.f32 %v2356, %v2400
        %v2414 = vmul.f32 %v2356, %v2405
        %v2415 = vmul.f32 %v2360, %v2400
        %v2416 = vmul.f32 %v2360, %v2405
        %v2417 = vmul.f32 %v2364, %v2400
        %v2418 = vmul.f32 %v2364, %v2405
        %v2419 = vmul.f32 %v2368, %v2400
        %v2420 = vmul.f32 %v2368, %v2405
        %v2421 = vmul.f32 %v2372, %v2400
        %v2422 = vmul.f32 %v2372, %v2405
        %v2423 = vmul.f32 %v2376, %v2400
        %v2424 = vmul.f32 %v2376, %v2405
        %v2425 = vmul.f32 %v2380, %v2400
        %v2426 = vmul.f32 %v2380, %v2405
        %v2427 = vmul.f32 %v2384, %v2400
        %v2428 = vmul.f32 %v2384, %v2405
        %v2429 = vmul.f32 %v2388, %v2400
        %v2430 = vmul.f32 %v2388, %v2405
        %v2431 = vmul.f32 %v2392, %v2400
        %v2432 = vmul.f32 %v2392, %v2405
        %v2433 = vmul.f32 %v2396, %v2400
        %v2434 = vmul.f32 %v2396, %v2405
        %v2435 = vadd.f32 %v2297, %v2407
        %v2436 = vadd.f32 %v2298, %v2408
        %v2437 = vadd.f32 %v2299, %v2409
        %v2438 = vadd.f32 %v2300, %v2410
        %v2439 = vadd.f32 %v2301, %v2411
        %v2440 = vadd.f32 %v2302, %v2412
        %v2441 = vadd.f32 %v2303, %v2413
        %v2442 = vadd.f32 %v2304, %v2414
        %v2443 = vadd.f32 %v2305, %v2415
        %v2444 = vadd.f32 %v2306, %v2416
        %v2445 = vadd.f32 %v2307, %v2417
        %v2446 = vadd.f32 %v2308, %v2418
        %v2447 = vadd.f32 %v2309, %v2419
        %v2448 = vadd.f32 %v2310, %v2420
        %v2449 = vadd.f32 %v2311, %v2421
        %v2450 = vadd.f32 %v2312, %v2422
        %v2451 = vadd.f32 %v2313, %v2423
        %v2452 = vadd.f32 %v2314, %v2424
        %v2453 = vadd.f32 %v2315, %v2425
        %v2454 = vadd.f32 %v2316, %v2426
        %v2455 = vadd.f32 %v2317, %v2427
        %v2456 = vadd.f32 %v2318, %v2428
        %v2457 = vadd.f32 %v2319, %v2429
        %v2458 = vadd.f32 %v2320, %v2430
        %v2459 = vadd.f32 %v2321, %v2431
        %v2460 = vadd.f32 %v2322, %v2432
        %v2461 = vadd.f32 %v2323, %v2433
        %v2462 = vadd.f32 %v2324, %v2434
        %v2463 = vld [vmem:[%s865 + $0x3] sm:$0x1]
        %v2464 = vld [vmem:[%s865 + $0x7] sm:$0x1]
        %v2465 = vld [vmem:[%s865 + $0xb] sm:$0x1]
        %v2466 = vld [vmem:[%s865 + $0xf] sm:$0x1]
        %v2467 = vld [vmem:[%s865 + $0x13] sm:$0x1]
        %v2468 = vld [vmem:[%s865 + $0x17] sm:$0x1]
        %v2469 = vld [vmem:[%s865 + $0x1b] sm:$0x1]
        %v2470 = vld [vmem:[%s865 + $0x1f] sm:$0x1]
        %v2471 = vld [vmem:[%s865 + $0x23] sm:$0x1]
        %v2472 = vld [vmem:[%s865 + $0x27] sm:$0x1]
        %v2473 = vld [vmem:[%s865 + $0x2b] sm:$0x1]
        %v2474 = vld [vmem:[%s865 + $0x2f] sm:$0x1]
        %v2475 = vld [vmem:[%s865 + $0x33] sm:$0x1]
        %v2476 = vld [vmem:[%s865 + $0x37] sm:$0x1]
        %v2477 = vld [vmem:[%s1019] sm:$0xff]
        %v2478 = vld [vmem:[%s1019 + $0x8] sm:$0xff]
        %v2479 = vlaneseq
        %v2480 = vshrl.u32 %v2479, 7
        %v2481 = vsub.s32 0, %v2480
        %v2482 = vrot.slane %v2463, %v2481
        %v2483 = vlaneseq
        %v2484 = vshrl.u32 %v2483, 7
        %v2485 = vsub.s32 0, %v2484
        %v2486 = vrot.slane %v2464, %v2485
        %v2487 = vlaneseq
        %v2488 = vshrl.u32 %v2487, 7
        %v2489 = vsub.s32 0, %v2488
        %v2490 = vrot.slane %v2465, %v2489
        %v2491 = vlaneseq
        %v2492 = vshrl.u32 %v2491, 7
        %v2493 = vsub.s32 0, %v2492
        %v2494 = vrot.slane %v2466, %v2493
        %v2495 = vlaneseq
        %v2496 = vshrl.u32 %v2495, 7
        %v2497 = vsub.s32 0, %v2496
        %v2498 = vrot.slane %v2467, %v2497
        %v2499 = vlaneseq
        %v2500 = vshrl.u32 %v2499, 7
        %v2501 = vsub.s32 0, %v2500
        %v2502 = vrot.slane %v2468, %v2501
        %v2503 = vlaneseq
        %v2504 = vshrl.u32 %v2503, 7
        %v2505 = vsub.s32 0, %v2504
        %v2506 = vrot.slane %v2469, %v2505
        %v2507 = vlaneseq
        %v2508 = vshrl.u32 %v2507, 7
        %v2509 = vsub.s32 0, %v2508
        %v2510 = vrot.slane %v2470, %v2509
        %v2511 = vlaneseq
        %v2512 = vshrl.u32 %v2511, 7
        %v2513 = vsub.s32 0, %v2512
        %v2514 = vrot.slane %v2471, %v2513
        %v2515 = vlaneseq
        %v2516 = vshrl.u32 %v2515, 7
        %v2517 = vsub.s32 0, %v2516
        %v2518 = vrot.slane %v2472, %v2517
        %v2519 = vlaneseq
        %v2520 = vshrl.u32 %v2519, 7
        %v2521 = vsub.s32 0, %v2520
        %v2522 = vrot.slane %v2473, %v2521
        %v2523 = vlaneseq
        %v2524 = vshrl.u32 %v2523, 7
        %v2525 = vsub.s32 0, %v2524
        %v2526 = vrot.slane %v2474, %v2525
        %v2527 = vlaneseq
        %v2528 = vshrl.u32 %v2527, 7
        %v2529 = vsub.s32 0, %v2528
        %v2530 = vrot.slane %v2475, %v2529
        %v2531 = vlaneseq
        %v2532 = vshrl.u32 %v2531, 7
        %v2533 = vsub.s32 0, %v2532
        %v2534 = vrot.slane %v2476, %v2533
        %2536 = vset.pattern.permute.xlu0 0
        %2537 = vperm.xlu0 %2536, %v2477
        %v2538 = vpop.permute.xlu0 %2537
        %2541 = vset.pattern.permute.xlu0 0
        %2542 = vperm.xlu0 %2541, %v2478
        %v2543 = vpop.permute.xlu0 %2542
        %v2545 = vmul.f32 %v2482, %v2538
        %v2546 = vmul.f32 %v2482, %v2543
        %v2547 = vmul.f32 %v2486, %v2538
        %v2548 = vmul.f32 %v2486, %v2543
        %v2549 = vmul.f32 %v2490, %v2538
        %v2550 = vmul.f32 %v2490, %v2543
        %v2551 = vmul.f32 %v2494, %v2538
        %v2552 = vmul.f32 %v2494, %v2543
        %v2553 = vmul.f32 %v2498, %v2538
        %v2554 = vmul.f32 %v2498, %v2543
        %v2555 = vmul.f32 %v2502, %v2538
        %v2556 = vmul.f32 %v2502, %v2543
        %v2557 = vmul.f32 %v2506, %v2538
        %v2558 = vmul.f32 %v2506, %v2543
        %v2559 = vmul.f32 %v2510, %v2538
        %v2560 = vmul.f32 %v2510, %v2543
        %v2561 = vmul.f32 %v2514, %v2538
        %v2562 = vmul.f32 %v2514, %v2543
        %v2563 = vmul.f32 %v2518, %v2538
        %v2564 = vmul.f32 %v2518, %v2543
        %v2565 = vmul.f32 %v2522, %v2538
        %v2566 = vmul.f32 %v2522, %v2543
        %v2567 = vmul.f32 %v2526, %v2538
        %v2568 = vmul.f32 %v2526, %v2543
        %v2569 = vmul.f32 %v2530, %v2538
        %v2570 = vmul.f32 %v2530, %v2543
        %v2571 = vmul.f32 %v2534, %v2538
        %v2572 = vmul.f32 %v2534, %v2543
        %v2573 = vadd.f32 %v2435, %v2545
        %v2574 = vadd.f32 %v2436, %v2546
        %v2575 = vadd.f32 %v2437, %v2547
        %v2576 = vadd.f32 %v2438, %v2548
        %v2577 = vadd.f32 %v2439, %v2549
        %v2578 = vadd.f32 %v2440, %v2550
        %v2579 = vadd.f32 %v2441, %v2551
        %v2580 = vadd.f32 %v2442, %v2552
        %v2581 = vadd.f32 %v2443, %v2553
        %v2582 = vadd.f32 %v2444, %v2554
        %v2583 = vadd.f32 %v2445, %v2555
        %v2584 = vadd.f32 %v2446, %v2556
        %v2585 = vadd.f32 %v2447, %v2557
        %v2586 = vadd.f32 %v2448, %v2558
        %v2587 = vadd.f32 %v2449, %v2559
        %v2588 = vadd.f32 %v2450, %v2560
        %v2589 = vadd.f32 %v2451, %v2561
        %v2590 = vadd.f32 %v2452, %v2562
        %v2591 = vadd.f32 %v2453, %v2563
        %v2592 = vadd.f32 %v2454, %v2564
        %v2593 = vadd.f32 %v2455, %v2565
        %v2594 = vadd.f32 %v2456, %v2566
        %v2595 = vadd.f32 %v2457, %v2567
        %v2596 = vadd.f32 %v2458, %v2568
        %v2597 = vadd.f32 %v2459, %v2569
        %v2598 = vadd.f32 %v2460, %v2570
        %v2599 = vadd.f32 %v2461, %v2571
        %v2600 = vadd.f32 %v2462, %v2572
        %v2601 = vld [vmem:[%s865] sm:$0x1]
        %v2602 = vld [vmem:[%s865 + $0x4] sm:$0x1]
        %v2603 = vld [vmem:[%s865 + $0x8] sm:$0x1]
        %v2604 = vld [vmem:[%s865 + $0xc] sm:$0x1]
        %v2605 = vld [vmem:[%s865 + $0x10] sm:$0x1]
        %v2606 = vld [vmem:[%s865 + $0x14] sm:$0x1]
        %v2607 = vld [vmem:[%s865 + $0x18] sm:$0x1]
        %v2608 = vld [vmem:[%s865 + $0x1c] sm:$0x1]
        %v2609 = vld [vmem:[%s865 + $0x20] sm:$0x1]
        %v2610 = vld [vmem:[%s865 + $0x24] sm:$0x1]
        %v2611 = vld [vmem:[%s865 + $0x28] sm:$0x1]
        %v2612 = vld [vmem:[%s865 + $0x2c] sm:$0x1]
        %v2613 = vld [vmem:[%s865 + $0x30] sm:$0x1]
        %v2614 = vld [vmem:[%s865 + $0x34] sm:$0x1]
        %v2615 = vld [vmem:[%s1158] sm:$0xff]
        %v2616 = vld [vmem:[%s1158 + $0x8] sm:$0xff]
        %v2617 = vlaneseq
        %v2618 = vshrl.u32 %v2617, 7
        %v2619 = vsub.s32 0, %v2618
        %v2620 = vrot.slane %v2601, %v2619
        %v2621 = vlaneseq
        %v2622 = vshrl.u32 %v2621, 7
        %v2623 = vsub.s32 0, %v2622
        %v2624 = vrot.slane %v2602, %v2623
        %v2625 = vlaneseq
        %v2626 = vshrl.u32 %v2625, 7
        %v2627 = vsub.s32 0, %v2626
        %v2628 = vrot.slane %v2603, %v2627
        %v2629 = vlaneseq
        %v2630 = vshrl.u32 %v2629, 7
        %v2631 = vsub.s32 0, %v2630
        %v2632 = vrot.slane %v2604, %v2631
        %v2633 = vlaneseq
        %v2634 = vshrl.u32 %v2633, 7
        %v2635 = vsub.s32 0, %v2634
        %v2636 = vrot.slane %v2605, %v2635
        %v2637 = vlaneseq
        %v2638 = vshrl.u32 %v2637, 7
        %v2639 = vsub.s32 0, %v2638
        %v2640 = vrot.slane %v2606, %v2639
        %v2641 = vlaneseq
        %v2642 = vshrl.u32 %v2641, 7
        %v2643 = vsub.s32 0, %v2642
        %v2644 = vrot.slane %v2607, %v2643
        %v2645 = vlaneseq
        %v2646 = vshrl.u32 %v2645, 7
        %v2647 = vsub.s32 0, %v2646
        %v2648 = vrot.slane %v2608, %v2647
        %v2649 = vlaneseq
        %v2650 = vshrl.u32 %v2649, 7
        %v2651 = vsub.s32 0, %v2650
        %v2652 = vrot.slane %v2609, %v2651
        %v2653 = vlaneseq
        %v2654 = vshrl.u32 %v2653, 7
        %v2655 = vsub.s32 0, %v2654
        %v2656 = vrot.slane %v2610, %v2655
        %v2657 = vlaneseq
        %v2658 = vshrl.u32 %v2657, 7
        %v2659 = vsub.s32 0, %v2658
        %v2660 = vrot.slane %v2611, %v2659
        %v2661 = vlaneseq
        %v2662 = vshrl.u32 %v2661, 7
        %v2663 = vsub.s32 0, %v2662
        %v2664 = vrot.slane %v2612, %v2663
        %v2665 = vlaneseq
        %v2666 = vshrl.u32 %v2665, 7
        %v2667 = vsub.s32 0, %v2666
        %v2668 = vrot.slane %v2613, %v2667
        %v2669 = vlaneseq
        %v2670 = vshrl.u32 %v2669, 7
        %v2671 = vsub.s32 0, %v2670
        %v2672 = vrot.slane %v2614, %v2671
        %2674 = vset.pattern.permute.xlu0 0
        %2675 = vperm.xlu0 %2674, %v2615
        %v2676 = vpop.permute.xlu0 %2675
        %2679 = vset.pattern.permute.xlu0 0
        %2680 = vperm.xlu0 %2679, %v2616
        %v2681 = vpop.permute.xlu0 %2680
        %v2683 = vmul.f32 %v2620, %v2676
        %v2684 = vmul.f32 %v2620, %v2681
        %v2685 = vmul.f32 %v2624, %v2676
        %v2686 = vmul.f32 %v2624, %v2681
        %v2687 = vmul.f32 %v2628, %v2676
        %v2688 = vmul.f32 %v2628, %v2681
        %v2689 = vmul.f32 %v2632, %v2676
        %v2690 = vmul.f32 %v2632, %v2681
        %v2691 = vmul.f32 %v2636, %v2676
        %v2692 = vmul.f32 %v2636, %v2681
        %v2693 = vmul.f32 %v2640, %v2676
        %v2694 = vmul.f32 %v2640, %v2681
        %v2695 = vmul.f32 %v2644, %v2676
        %v2696 = vmul.f32 %v2644, %v2681
        %v2697 = vmul.f32 %v2648, %v2676
        %v2698 = vmul.f32 %v2648, %v2681
        %v2699 = vmul.f32 %v2652, %v2676
        %v2700 = vmul.f32 %v2652, %v2681
        %v2701 = vmul.f32 %v2656, %v2676
        %v2702 = vmul.f32 %v2656, %v2681
        %v2703 = vmul.f32 %v2660, %v2676
        %v2704 = vmul.f32 %v2660, %v2681
        %v2705 = vmul.f32 %v2664, %v2676
        %v2706 = vmul.f32 %v2664, %v2681
        %v2707 = vmul.f32 %v2668, %v2676
        %v2708 = vmul.f32 %v2668, %v2681
        %v2709 = vmul.f32 %v2672, %v2676
        %v2710 = vmul.f32 %v2672, %v2681
        %2739 = vrot.lane.b32.xlu0 %v2683, 127
        %v2740 = vpop.permute.xlu0 %2739
        %2741 = vrot.lane.b32.xlu0 %v2684, 127
        %v2742 = vpop.permute.xlu0 %2741
        %2743 = vrot.lane.b32.xlu0 %v2685, 127
        %v2744 = vpop.permute.xlu0 %2743
        %2745 = vrot.lane.b32.xlu0 %v2686, 127
        %v2746 = vpop.permute.xlu0 %2745
        %2747 = vrot.lane.b32.xlu0 %v2687, 127
        %v2748 = vpop.permute.xlu0 %2747
        %2749 = vrot.lane.b32.xlu0 %v2688, 127
        %v2750 = vpop.permute.xlu0 %2749
        %2751 = vrot.lane.b32.xlu0 %v2689, 127
        %v2752 = vpop.permute.xlu0 %2751
        %2753 = vrot.lane.b32.xlu0 %v2690, 127
        %v2754 = vpop.permute.xlu0 %2753
        %2755 = vrot.lane.b32.xlu0 %v2691, 127
        %v2756 = vpop.permute.xlu0 %2755
        %2757 = vrot.lane.b32.xlu0 %v2692, 127
        %v2758 = vpop.permute.xlu0 %2757
        %2759 = vrot.lane.b32.xlu0 %v2693, 127
        %v2760 = vpop.permute.xlu0 %2759
        %2761 = vrot.lane.b32.xlu0 %v2694, 127
        %v2762 = vpop.permute.xlu0 %2761
        %2763 = vrot.lane.b32.xlu0 %v2695, 127
        %v2764 = vpop.permute.xlu0 %2763
        %2765 = vrot.lane.b32.xlu0 %v2696, 127
        %v2766 = vpop.permute.xlu0 %2765
        %2767 = vrot.lane.b32.xlu0 %v2697, 127
        %v2768 = vpop.permute.xlu0 %2767
        %2769 = vrot.lane.b32.xlu0 %v2698, 127
        %v2770 = vpop.permute.xlu0 %2769
        %2771 = vrot.lane.b32.xlu0 %v2699, 127
        %v2772 = vpop.permute.xlu0 %2771
        %2773 = vrot.lane.b32.xlu0 %v2700, 127
        %v2774 = vpop.permute.xlu0 %2773
        %2775 = vrot.lane.b32.xlu0 %v2701, 127
        %v2776 = vpop.permute.xlu0 %2775
        %2777 = vrot.lane.b32.xlu0 %v2702, 127
        %v2778 = vpop.permute.xlu0 %2777
        %2779 = vrot.lane.b32.xlu0 %v2703, 127
        %v2780 = vpop.permute.xlu0 %2779
        %2781 = vrot.lane.b32.xlu0 %v2704, 127
        %v2782 = vpop.permute.xlu0 %2781
        %2783 = vrot.lane.b32.xlu0 %v2705, 127
        %v2784 = vpop.permute.xlu0 %2783
        %2785 = vrot.lane.b32.xlu0 %v2706, 127
        %v2786 = vpop.permute.xlu0 %2785
        %2787 = vrot.lane.b32.xlu0 %v2707, 127
        %v2788 = vpop.permute.xlu0 %2787
        %2789 = vrot.lane.b32.xlu0 %v2708, 127
        %v2790 = vpop.permute.xlu0 %2789
        %2791 = vrot.lane.b32.xlu0 %v2709, 127
        %v2792 = vpop.permute.xlu0 %2791
        %2793 = vrot.lane.b32.xlu0 %v2710, 127
        %v2794 = vpop.permute.xlu0 %2793
        %v2823 = vadd.f32 %v2573, %v2740
        %v2824 = vadd.f32 %v2574, %v2742
        %v2825 = vadd.f32 %v2575, %v2744
        %v2826 = vadd.f32 %v2576, %v2746
        %v2827 = vadd.f32 %v2577, %v2748
        %v2828 = vadd.f32 %v2578, %v2750
        %v2829 = vadd.f32 %v2579, %v2752
        %v2830 = vadd.f32 %v2580, %v2754
        %v2831 = vadd.f32 %v2581, %v2756
        %v2832 = vadd.f32 %v2582, %v2758
        %v2833 = vadd.f32 %v2583, %v2760
        %v2834 = vadd.f32 %v2584, %v2762
        %v2835 = vadd.f32 %v2585, %v2764
        %v2836 = vadd.f32 %v2586, %v2766
        %v2837 = vadd.f32 %v2587, %v2768
        %v2838 = vadd.f32 %v2588, %v2770
        %v2839 = vadd.f32 %v2589, %v2772
        %v2840 = vadd.f32 %v2590, %v2774
        %v2841 = vadd.f32 %v2591, %v2776
        %v2842 = vadd.f32 %v2592, %v2778
        %v2843 = vadd.f32 %v2593, %v2780
        %v2844 = vadd.f32 %v2594, %v2782
        %v2845 = vadd.f32 %v2595, %v2784
        %v2846 = vadd.f32 %v2596, %v2786
        %v2847 = vadd.f32 %v2597, %v2788
        %v2848 = vadd.f32 %v2598, %v2790
        %v2849 = vadd.f32 %v2599, %v2792
        %v2850 = vadd.f32 %v2600, %v2794
        %v2851 = vld [vmem:[%s1283 + $0x2] sm:$0x1]
        %v2852 = vld [vmem:[%s1283 + $0x6] sm:$0x1]
        %v2853 = vld [vmem:[%s1283 + $0xa] sm:$0x1]
        %v2854 = vld [vmem:[%s1283 + $0xe] sm:$0x1]
        %v2855 = vld [vmem:[%s1283 + $0x12] sm:$0x1]
        %v2856 = vld [vmem:[%s1283 + $0x16] sm:$0x1]
        %v2857 = vld [vmem:[%s1283 + $0x1a] sm:$0x1]
        %v2858 = vld [vmem:[%s1283 + $0x1e] sm:$0x1]
        %v2859 = vld [vmem:[%s1283 + $0x22] sm:$0x1]
        %v2860 = vld [vmem:[%s1283 + $0x26] sm:$0x1]
        %v2861 = vld [vmem:[%s1283 + $0x2a] sm:$0x1]
        %v2862 = vld [vmem:[%s1283 + $0x2e] sm:$0x1]
        %v2863 = vld [vmem:[%s1283 + $0x32] sm:$0x1]
        %v2864 = vld [vmem:[%s1283 + $0x36] sm:$0x1]
        %v2865 = vld [vmem:[%s1298] sm:$0xff]
        %v2866 = vld [vmem:[%s1298 + $0x8] sm:$0xff]
        %v2867 = vlaneseq
        %v2868 = vshrl.u32 %v2867, 7
        %v2869 = vsub.s32 0, %v2868
        %v2870 = vrot.slane %v2851, %v2869
        %v2871 = vlaneseq
        %v2872 = vshrl.u32 %v2871, 7
        %v2873 = vsub.s32 0, %v2872
        %v2874 = vrot.slane %v2852, %v2873
        %v2875 = vlaneseq
        %v2876 = vshrl.u32 %v2875, 7
        %v2877 = vsub.s32 0, %v2876
        %v2878 = vrot.slane %v2853, %v2877
        %v2879 = vlaneseq
        %v2880 = vshrl.u32 %v2879, 7
        %v2881 = vsub.s32 0, %v2880
        %v2882 = vrot.slane %v2854, %v2881
        %v2883 = vlaneseq
        %v2884 = vshrl.u32 %v2883, 7
        %v2885 = vsub.s32 0, %v2884
        %v2886 = vrot.slane %v2855, %v2885
        %v2887 = vlaneseq
        %v2888 = vshrl.u32 %v2887, 7
        %v2889 = vsub.s32 0, %v2888
        %v2890 = vrot.slane %v2856, %v2889
        %v2891 = vlaneseq
        %v2892 = vshrl.u32 %v2891, 7
        %v2893 = vsub.s32 0, %v2892
        %v2894 = vrot.slane %v2857, %v2893
        %v2895 = vlaneseq
        %v2896 = vshrl.u32 %v2895, 7
        %v2897 = vsub.s32 0, %v2896
        %v2898 = vrot.slane %v2858, %v2897
        %v2899 = vlaneseq
        %v2900 = vshrl.u32 %v2899, 7
        %v2901 = vsub.s32 0, %v2900
        %v2902 = vrot.slane %v2859, %v2901
        %v2903 = vlaneseq
        %v2904 = vshrl.u32 %v2903, 7
        %v2905 = vsub.s32 0, %v2904
        %v2906 = vrot.slane %v2860, %v2905
        %v2907 = vlaneseq
        %v2908 = vshrl.u32 %v2907, 7
        %v2909 = vsub.s32 0, %v2908
        %v2910 = vrot.slane %v2861, %v2909
        %v2911 = vlaneseq
        %v2912 = vshrl.u32 %v2911, 7
        %v2913 = vsub.s32 0, %v2912
        %v2914 = vrot.slane %v2862, %v2913
        %v2915 = vlaneseq
        %v2916 = vshrl.u32 %v2915, 7
        %v2917 = vsub.s32 0, %v2916
        %v2918 = vrot.slane %v2863, %v2917
        %v2919 = vlaneseq
        %v2920 = vshrl.u32 %v2919, 7
        %v2921 = vsub.s32 0, %v2920
        %v2922 = vrot.slane %v2864, %v2921
        %2924 = vset.pattern.permute.xlu0 0
        %2925 = vperm.xlu0 %2924, %v2865
        %v2926 = vpop.permute.xlu0 %2925
        %2929 = vset.pattern.permute.xlu0 0
        %2930 = vperm.xlu0 %2929, %v2866
        %v2931 = vpop.permute.xlu0 %2930
        %v2933 = vmul.f32 %v2870, %v2926
        %v2934 = vmul.f32 %v2870, %v2931
        %v2935 = vmul.f32 %v2874, %v2926
        %v2936 = vmul.f32 %v2874, %v2931
        %v2937 = vmul.f32 %v2878, %v2926
        %v2938 = vmul.f32 %v2878, %v2931
        %v2939 = vmul.f32 %v2882, %v2926
        %v2940 = vmul.f32 %v2882, %v2931
        %v2941 = vmul.f32 %v2886, %v2926
        %v2942 = vmul.f32 %v2886, %v2931
        %v2943 = vmul.f32 %v2890, %v2926
        %v2944 = vmul.f32 %v2890, %v2931
        %v2945 = vmul.f32 %v2894, %v2926
        %v2946 = vmul.f32 %v2894, %v2931
        %v2947 = vmul.f32 %v2898, %v2926
        %v2948 = vmul.f32 %v2898, %v2931
        %v2949 = vmul.f32 %v2902, %v2926
        %v2950 = vmul.f32 %v2902, %v2931
        %v2951 = vmul.f32 %v2906, %v2926
        %v2952 = vmul.f32 %v2906, %v2931
        %v2953 = vmul.f32 %v2910, %v2926
        %v2954 = vmul.f32 %v2910, %v2931
        %v2955 = vmul.f32 %v2914, %v2926
        %v2956 = vmul.f32 %v2914, %v2931
        %v2957 = vmul.f32 %v2918, %v2926
        %v2958 = vmul.f32 %v2918, %v2931
        %v2959 = vmul.f32 %v2922, %v2926
        %v2960 = vmul.f32 %v2922, %v2931
        %v2961 = vadd.f32 %v2823, %v2933
        %v2962 = vadd.f32 %v2824, %v2934
        %v2963 = vadd.f32 %v2825, %v2935
        %v2964 = vadd.f32 %v2826, %v2936
        %v2965 = vadd.f32 %v2827, %v2937
        %v2966 = vadd.f32 %v2828, %v2938
        %v2967 = vadd.f32 %v2829, %v2939
        %v2968 = vadd.f32 %v2830, %v2940
        %v2969 = vadd.f32 %v2831, %v2941
        %v2970 = vadd.f32 %v2832, %v2942
        %v2971 = vadd.f32 %v2833, %v2943
        %v2972 = vadd.f32 %v2834, %v2944
        %v2973 = vadd.f32 %v2835, %v2945
        %v2974 = vadd.f32 %v2836, %v2946
        %v2975 = vadd.f32 %v2837, %v2947
        %v2976 = vadd.f32 %v2838, %v2948
        %v2977 = vadd.f32 %v2839, %v2949
        %v2978 = vadd.f32 %v2840, %v2950
        %v2979 = vadd.f32 %v2841, %v2951
        %v2980 = vadd.f32 %v2842, %v2952
        %v2981 = vadd.f32 %v2843, %v2953
        %v2982 = vadd.f32 %v2844, %v2954
        %v2983 = vadd.f32 %v2845, %v2955
        %v2984 = vadd.f32 %v2846, %v2956
        %v2985 = vadd.f32 %v2847, %v2957
        %v2986 = vadd.f32 %v2848, %v2958
        %v2987 = vadd.f32 %v2849, %v2959
        %v2988 = vadd.f32 %v2850, %v2960
        %v2989 = vld [vmem:[%s1283 + $0x3] sm:$0x1]
        %v2990 = vld [vmem:[%s1283 + $0x7] sm:$0x1]
        %v2991 = vld [vmem:[%s1283 + $0xb] sm:$0x1]
        %v2992 = vld [vmem:[%s1283 + $0xf] sm:$0x1]
        %v2993 = vld [vmem:[%s1283 + $0x13] sm:$0x1]
        %v2994 = vld [vmem:[%s1283 + $0x17] sm:$0x1]
        %v2995 = vld [vmem:[%s1283 + $0x1b] sm:$0x1]
        %v2996 = vld [vmem:[%s1283 + $0x1f] sm:$0x1]
        %v2997 = vld [vmem:[%s1283 + $0x23] sm:$0x1]
        %v2998 = vld [vmem:[%s1283 + $0x27] sm:$0x1]
        %v2999 = vld [vmem:[%s1283 + $0x2b] sm:$0x1]
        %v3000 = vld [vmem:[%s1283 + $0x2f] sm:$0x1]
        %v3001 = vld [vmem:[%s1283 + $0x33] sm:$0x1]
        %v3002 = vld [vmem:[%s1283 + $0x37] sm:$0x1]
        %v3003 = vld [vmem:[%s1437] sm:$0xff]
        %v3004 = vld [vmem:[%s1437 + $0x8] sm:$0xff]
        %v3005 = vlaneseq
        %v3006 = vshrl.u32 %v3005, 7
        %v3007 = vsub.s32 0, %v3006
        %v3008 = vrot.slane %v2989, %v3007
        %v3009 = vlaneseq
        %v3010 = vshrl.u32 %v3009, 7
        %v3011 = vsub.s32 0, %v3010
        %v3012 = vrot.slane %v2990, %v3011
        %v3013 = vlaneseq
        %v3014 = vshrl.u32 %v3013, 7
        %v3015 = vsub.s32 0, %v3014
        %v3016 = vrot.slane %v2991, %v3015
        %v3017 = vlaneseq
        %v3018 = vshrl.u32 %v3017, 7
        %v3019 = vsub.s32 0, %v3018
        %v3020 = vrot.slane %v2992, %v3019
        %v3021 = vlaneseq
        %v3022 = vshrl.u32 %v3021, 7
        %v3023 = vsub.s32 0, %v3022
        %v3024 = vrot.slane %v2993, %v3023
        %v3025 = vlaneseq
        %v3026 = vshrl.u32 %v3025, 7
        %v3027 = vsub.s32 0, %v3026
        %v3028 = vrot.slane %v2994, %v3027
        %v3029 = vlaneseq
        %v3030 = vshrl.u32 %v3029, 7
        %v3031 = vsub.s32 0, %v3030
        %v3032 = vrot.slane %v2995, %v3031
        %v3033 = vlaneseq
        %v3034 = vshrl.u32 %v3033, 7
        %v3035 = vsub.s32 0, %v3034
        %v3036 = vrot.slane %v2996, %v3035
        %v3037 = vlaneseq
        %v3038 = vshrl.u32 %v3037, 7
        %v3039 = vsub.s32 0, %v3038
        %v3040 = vrot.slane %v2997, %v3039
        %v3041 = vlaneseq
        %v3042 = vshrl.u32 %v3041, 7
        %v3043 = vsub.s32 0, %v3042
        %v3044 = vrot.slane %v2998, %v3043
        %v3045 = vlaneseq
        %v3046 = vshrl.u32 %v3045, 7
        %v3047 = vsub.s32 0, %v3046
        %v3048 = vrot.slane %v2999, %v3047
        %v3049 = vlaneseq
        %v3050 = vshrl.u32 %v3049, 7
        %v3051 = vsub.s32 0, %v3050
        %v3052 = vrot.slane %v3000, %v3051
        %v3053 = vlaneseq
        %v3054 = vshrl.u32 %v3053, 7
        %v3055 = vsub.s32 0, %v3054
        %v3056 = vrot.slane %v3001, %v3055
        %v3057 = vlaneseq
        %v3058 = vshrl.u32 %v3057, 7
        %v3059 = vsub.s32 0, %v3058
        %v3060 = vrot.slane %v3002, %v3059
        %3062 = vset.pattern.permute.xlu0 0
        %3063 = vperm.xlu0 %3062, %v3003
        %v3064 = vpop.permute.xlu0 %3063
        %3067 = vset.pattern.permute.xlu0 0
        %3068 = vperm.xlu0 %3067, %v3004
        %v3069 = vpop.permute.xlu0 %3068
        %v3071 = vmul.f32 %v3008, %v3064
        %v3072 = vmul.f32 %v3008, %v3069
        %v3073 = vmul.f32 %v3012, %v3064
        %v3074 = vmul.f32 %v3012, %v3069
        %v3075 = vmul.f32 %v3016, %v3064
        %v3076 = vmul.f32 %v3016, %v3069
        %v3077 = vmul.f32 %v3020, %v3064
        %v3078 = vmul.f32 %v3020, %v3069
        %v3079 = vmul.f32 %v3024, %v3064
        %v3080 = vmul.f32 %v3024, %v3069
        %v3081 = vmul.f32 %v3028, %v3064
        %v3082 = vmul.f32 %v3028, %v3069
        %v3083 = vmul.f32 %v3032, %v3064
        %v3084 = vmul.f32 %v3032, %v3069
        %v3085 = vmul.f32 %v3036, %v3064
        %v3086 = vmul.f32 %v3036, %v3069
        %v3087 = vmul.f32 %v3040, %v3064
        %v3088 = vmul.f32 %v3040, %v3069
        %v3089 = vmul.f32 %v3044, %v3064
        %v3090 = vmul.f32 %v3044, %v3069
        %v3091 = vmul.f32 %v3048, %v3064
        %v3092 = vmul.f32 %v3048, %v3069
        %v3093 = vmul.f32 %v3052, %v3064
        %v3094 = vmul.f32 %v3052, %v3069
        %v3095 = vmul.f32 %v3056, %v3064
        %v3096 = vmul.f32 %v3056, %v3069
        %v3097 = vmul.f32 %v3060, %v3064
        %v3098 = vmul.f32 %v3060, %v3069
        %v3099 = vadd.f32 %v2961, %v3071
        %v3100 = vadd.f32 %v2962, %v3072
        %v3101 = vadd.f32 %v2963, %v3073
        %v3102 = vadd.f32 %v2964, %v3074
        %v3103 = vadd.f32 %v2965, %v3075
        %v3104 = vadd.f32 %v2966, %v3076
        %v3105 = vadd.f32 %v2967, %v3077
        %v3106 = vadd.f32 %v2968, %v3078
        %v3107 = vadd.f32 %v2969, %v3079
        %v3108 = vadd.f32 %v2970, %v3080
        %v3109 = vadd.f32 %v2971, %v3081
        %v3110 = vadd.f32 %v2972, %v3082
        %v3111 = vadd.f32 %v2973, %v3083
        %v3112 = vadd.f32 %v2974, %v3084
        %v3113 = vadd.f32 %v2975, %v3085
        %v3114 = vadd.f32 %v2976, %v3086
        %v3115 = vadd.f32 %v2977, %v3087
        %v3116 = vadd.f32 %v2978, %v3088
        %v3117 = vadd.f32 %v2979, %v3089
        %v3118 = vadd.f32 %v2980, %v3090
        %v3119 = vadd.f32 %v2981, %v3091
        %v3120 = vadd.f32 %v2982, %v3092
        %v3121 = vadd.f32 %v2983, %v3093
        %v3122 = vadd.f32 %v2984, %v3094
        %v3123 = vadd.f32 %v2985, %v3095
        %v3124 = vadd.f32 %v2986, %v3096
        %v3125 = vadd.f32 %v2987, %v3097
        %v3126 = vadd.f32 %v2988, %v3098
        %v3127 = vld [vmem:[%s1283] sm:$0x1]
        %v3128 = vld [vmem:[%s1283 + $0x4] sm:$0x1]
        %v3129 = vld [vmem:[%s1283 + $0x8] sm:$0x1]
        %v3130 = vld [vmem:[%s1283 + $0xc] sm:$0x1]
        %v3131 = vld [vmem:[%s1283 + $0x10] sm:$0x1]
        %v3132 = vld [vmem:[%s1283 + $0x14] sm:$0x1]
        %v3133 = vld [vmem:[%s1283 + $0x18] sm:$0x1]
        %v3134 = vld [vmem:[%s1283 + $0x1c] sm:$0x1]
        %v3135 = vld [vmem:[%s1283 + $0x20] sm:$0x1]
        %v3136 = vld [vmem:[%s1283 + $0x24] sm:$0x1]
        %v3137 = vld [vmem:[%s1283 + $0x28] sm:$0x1]
        %v3138 = vld [vmem:[%s1283 + $0x2c] sm:$0x1]
        %v3139 = vld [vmem:[%s1283 + $0x30] sm:$0x1]
        %v3140 = vld [vmem:[%s1283 + $0x34] sm:$0x1]
        %v3141 = vld [vmem:[%s1576] sm:$0xff]
        %v3142 = vld [vmem:[%s1576 + $0x8] sm:$0xff]
        %v3143 = vlaneseq
        %v3144 = vshrl.u32 %v3143, 7
        %v3145 = vsub.s32 0, %v3144
        %v3146 = vrot.slane %v3127, %v3145
        %v3147 = vlaneseq
        %v3148 = vshrl.u32 %v3147, 7
        %v3149 = vsub.s32 0, %v3148
        %v3150 = vrot.slane %v3128, %v3149
        %v3151 = vlaneseq
        %v3152 = vshrl.u32 %v3151, 7
        %v3153 = vsub.s32 0, %v3152
        %v3154 = vrot.slane %v3129, %v3153
        %v3155 = vlaneseq
        %v3156 = vshrl.u32 %v3155, 7
        %v3157 = vsub.s32 0, %v3156
        %v3158 = vrot.slane %v3130, %v3157
        %v3159 = vlaneseq
        %v3160 = vshrl.u32 %v3159, 7
        %v3161 = vsub.s32 0, %v3160
        %v3162 = vrot.slane %v3131, %v3161
        %v3163 = vlaneseq
        %v3164 = vshrl.u32 %v3163, 7
        %v3165 = vsub.s32 0, %v3164
        %v3166 = vrot.slane %v3132, %v3165
        %v3167 = vlaneseq
        %v3168 = vshrl.u32 %v3167, 7
        %v3169 = vsub.s32 0, %v3168
        %v3170 = vrot.slane %v3133, %v3169
        %v3171 = vlaneseq
        %v3172 = vshrl.u32 %v3171, 7
        %v3173 = vsub.s32 0, %v3172
        %v3174 = vrot.slane %v3134, %v3173
        %v3175 = vlaneseq
        %v3176 = vshrl.u32 %v3175, 7
        %v3177 = vsub.s32 0, %v3176
        %v3178 = vrot.slane %v3135, %v3177
        %v3179 = vlaneseq
        %v3180 = vshrl.u32 %v3179, 7
        %v3181 = vsub.s32 0, %v3180
        %v3182 = vrot.slane %v3136, %v3181
        %v3183 = vlaneseq
        %v3184 = vshrl.u32 %v3183, 7
        %v3185 = vsub.s32 0, %v3184
        %v3186 = vrot.slane %v3137, %v3185
        %v3187 = vlaneseq
        %v3188 = vshrl.u32 %v3187, 7
        %v3189 = vsub.s32 0, %v3188
        %v3190 = vrot.slane %v3138, %v3189
        %v3191 = vlaneseq
        %v3192 = vshrl.u32 %v3191, 7
        %v3193 = vsub.s32 0, %v3192
        %v3194 = vrot.slane %v3139, %v3193
        %v3195 = vlaneseq
        %v3196 = vshrl.u32 %v3195, 7
        %v3197 = vsub.s32 0, %v3196
        %v3198 = vrot.slane %v3140, %v3197
        %3200 = vset.pattern.permute.xlu0 0
        %3201 = vperm.xlu0 %3200, %v3141
        %v3202 = vpop.permute.xlu0 %3201
        %3205 = vset.pattern.permute.xlu0 0
        %3206 = vperm.xlu0 %3205, %v3142
        %v3207 = vpop.permute.xlu0 %3206
        %v3209 = vmul.f32 %v3146, %v3202
        %v3210 = vmul.f32 %v3146, %v3207
        %v3211 = vmul.f32 %v3150, %v3202
        %v3212 = vmul.f32 %v3150, %v3207
        %v3213 = vmul.f32 %v3154, %v3202
        %v3214 = vmul.f32 %v3154, %v3207
        %v3215 = vmul.f32 %v3158, %v3202
        %v3216 = vmul.f32 %v3158, %v3207
        %v3217 = vmul.f32 %v3162, %v3202
        %v3218 = vmul.f32 %v3162, %v3207
        %v3219 = vmul.f32 %v3166, %v3202
        %v3220 = vmul.f32 %v3166, %v3207
        %v3221 = vmul.f32 %v3170, %v3202
        %v3222 = vmul.f32 %v3170, %v3207
        %v3223 = vmul.f32 %v3174, %v3202
        %v3224 = vmul.f32 %v3174, %v3207
        %v3225 = vmul.f32 %v3178, %v3202
        %v3226 = vmul.f32 %v3178, %v3207
        %v3227 = vmul.f32 %v3182, %v3202
        %v3228 = vmul.f32 %v3182, %v3207
        %v3229 = vmul.f32 %v3186, %v3202
        %v3230 = vmul.f32 %v3186, %v3207
        %v3231 = vmul.f32 %v3190, %v3202
        %v3232 = vmul.f32 %v3190, %v3207
        %v3233 = vmul.f32 %v3194, %v3202
        %v3234 = vmul.f32 %v3194, %v3207
        %v3235 = vmul.f32 %v3198, %v3202
        %v3236 = vmul.f32 %v3198, %v3207
        %3265 = vrot.lane.b32.xlu0 %v3209, 127
        %v3266 = vpop.permute.xlu0 %3265
        %3267 = vrot.lane.b32.xlu0 %v3210, 127
        %v3268 = vpop.permute.xlu0 %3267
        %3269 = vrot.lane.b32.xlu0 %v3211, 127
        %v3270 = vpop.permute.xlu0 %3269
        %3271 = vrot.lane.b32.xlu0 %v3212, 127
        %v3272 = vpop.permute.xlu0 %3271
        %3273 = vrot.lane.b32.xlu0 %v3213, 127
        %v3274 = vpop.permute.xlu0 %3273
        %3275 = vrot.lane.b32.xlu0 %v3214, 127
        %v3276 = vpop.permute.xlu0 %3275
        %3277 = vrot.lane.b32.xlu0 %v3215, 127
        %v3278 = vpop.permute.xlu0 %3277
        %3279 = vrot.lane.b32.xlu0 %v3216, 127
        %v3280 = vpop.permute.xlu0 %3279
        %3281 = vrot.lane.b32.xlu0 %v3217, 127
        %v3282 = vpop.permute.xlu0 %3281
        %3283 = vrot.lane.b32.xlu0 %v3218, 127
        %v3284 = vpop.permute.xlu0 %3283
        %3285 = vrot.lane.b32.xlu0 %v3219, 127
        %v3286 = vpop.permute.xlu0 %3285
        %3287 = vrot.lane.b32.xlu0 %v3220, 127
        %v3288 = vpop.permute.xlu0 %3287
        %3289 = vrot.lane.b32.xlu0 %v3221, 127
        %v3290 = vpop.permute.xlu0 %3289
        %3291 = vrot.lane.b32.xlu0 %v3222, 127
        %v3292 = vpop.permute.xlu0 %3291
        %3293 = vrot.lane.b32.xlu0 %v3223, 127
        %v3294 = vpop.permute.xlu0 %3293
        %3295 = vrot.lane.b32.xlu0 %v3224, 127
        %v3296 = vpop.permute.xlu0 %3295
        %3297 = vrot.lane.b32.xlu0 %v3225, 127
        %v3298 = vpop.permute.xlu0 %3297
        %3299 = vrot.lane.b32.xlu0 %v3226, 127
        %v3300 = vpop.permute.xlu0 %3299
        %3301 = vrot.lane.b32.xlu0 %v3227, 127
        %v3302 = vpop.permute.xlu0 %3301
        %3303 = vrot.lane.b32.xlu0 %v3228, 127
        %v3304 = vpop.permute.xlu0 %3303
        %3305 = vrot.lane.b32.xlu0 %v3229, 127
        %v3306 = vpop.permute.xlu0 %3305
        %3307 = vrot.lane.b32.xlu0 %v3230, 127
        %v3308 = vpop.permute.xlu0 %3307
        %3309 = vrot.lane.b32.xlu0 %v3231, 127
        %v3310 = vpop.permute.xlu0 %3309
        %3311 = vrot.lane.b32.xlu0 %v3232, 127
        %v3312 = vpop.permute.xlu0 %3311
        %3313 = vrot.lane.b32.xlu0 %v3233, 127
        %v3314 = vpop.permute.xlu0 %3313
        %3315 = vrot.lane.b32.xlu0 %v3234, 127
        %v3316 = vpop.permute.xlu0 %3315
        %3317 = vrot.lane.b32.xlu0 %v3235, 127
        %v3318 = vpop.permute.xlu0 %3317
        %3319 = vrot.lane.b32.xlu0 %v3236, 127
        %v3320 = vpop.permute.xlu0 %3319
        %v3349 = vadd.f32 %v3099, %v3266
        %v3350 = vadd.f32 %v3100, %v3268
        %v3351 = vadd.f32 %v3101, %v3270
        %v3352 = vadd.f32 %v3102, %v3272
        %v3353 = vadd.f32 %v3103, %v3274
        %v3354 = vadd.f32 %v3104, %v3276
        %v3355 = vadd.f32 %v3105, %v3278
        %v3356 = vadd.f32 %v3106, %v3280
        %v3357 = vadd.f32 %v3107, %v3282
        %v3358 = vadd.f32 %v3108, %v3284
        %v3359 = vadd.f32 %v3109, %v3286
        %v3360 = vadd.f32 %v3110, %v3288
        %v3361 = vadd.f32 %v3111, %v3290
        %v3362 = vadd.f32 %v3112, %v3292
        %v3363 = vadd.f32 %v3113, %v3294
        %v3364 = vadd.f32 %v3114, %v3296
        %v3365 = vadd.f32 %v3115, %v3298
        %v3366 = vadd.f32 %v3116, %v3300
        %v3367 = vadd.f32 %v3117, %v3302
        %v3368 = vadd.f32 %v3118, %v3304
        %v3369 = vadd.f32 %v3119, %v3306
        %v3370 = vadd.f32 %v3120, %v3308
        %v3371 = vadd.f32 %v3121, %v3310
        %v3372 = vadd.f32 %v3122, %v3312
        %v3373 = vadd.f32 %v3123, %v3314
        %v3374 = vadd.f32 %v3124, %v3316
        %v3375 = vadd.f32 %v3125, %v3318
        %v3376 = vadd.f32 %v3126, %v3320
        %v3377 = vld [vmem:[%s2] sm:$0xff]
        %v3378 = vld [vmem:[%s2 + $0x8] sm:$0xff]
        %3380 = vset.pattern.permute.xlu0 0
        %3381 = vperm.xlu0 %3380, %v3377
        %v3382 = vpop.permute.xlu0 %3381
        %3385 = vset.pattern.permute.xlu0 0
        %3386 = vperm.xlu0 %3385, %v3378
        %v3387 = vpop.permute.xlu0 %3386
        %v3389 = vadd.f32 %v3349, %v3382
        %v3390 = vadd.f32 %v3350, %v3387
        %v3391 = vadd.f32 %v3351, %v3382
        %v3392 = vadd.f32 %v3352, %v3387
        %v3393 = vadd.f32 %v3353, %v3382
        %v3394 = vadd.f32 %v3354, %v3387
        %v3395 = vadd.f32 %v3355, %v3382
        %v3396 = vadd.f32 %v3356, %v3387
        %v3397 = vadd.f32 %v3357, %v3382
        %v3398 = vadd.f32 %v3358, %v3387
        %v3399 = vadd.f32 %v3359, %v3382
        %v3400 = vadd.f32 %v3360, %v3387
        %v3401 = vadd.f32 %v3361, %v3382
        %v3402 = vadd.f32 %v3362, %v3387
        %v3403 = vadd.f32 %v3363, %v3382
        %v3404 = vadd.f32 %v3364, %v3387
        %v3405 = vadd.f32 %v3365, %v3382
        %v3406 = vadd.f32 %v3366, %v3387
        %v3407 = vadd.f32 %v3367, %v3382
        %v3408 = vadd.f32 %v3368, %v3387
        %v3409 = vadd.f32 %v3369, %v3382
        %v3410 = vadd.f32 %v3370, %v3387
        %v3411 = vadd.f32 %v3371, %v3382
        %v3412 = vadd.f32 %v3372, %v3387
        %v3413 = vadd.f32 %v3373, %v3382
        %v3414 = vadd.f32 %v3374, %v3387
        %v3415 = vadd.f32 %v3375, %v3382
        %v3416 = vadd.f32 %v3376, %v3387
        %v3417 = vmax.f32 %v3389, 0.0
        %v3418 = vmax.f32 %v3390, 0.0
        %v3419 = vmax.f32 %v3391, 0.0
        %v3420 = vmax.f32 %v3392, 0.0
        %v3421 = vmax.f32 %v3393, 0.0
        %v3422 = vmax.f32 %v3394, 0.0
        %v3423 = vmax.f32 %v3395, 0.0
        %v3424 = vmax.f32 %v3396, 0.0
        %v3425 = vmax.f32 %v3397, 0.0
        %v3426 = vmax.f32 %v3398, 0.0
        %v3427 = vmax.f32 %v3399, 0.0
        %v3428 = vmax.f32 %v3400, 0.0
        %v3429 = vmax.f32 %v3401, 0.0
        %v3430 = vmax.f32 %v3402, 0.0
        %v3431 = vmax.f32 %v3403, 0.0
        %v3432 = vmax.f32 %v3404, 0.0
        %v3433 = vmax.f32 %v3405, 0.0
        %v3434 = vmax.f32 %v3406, 0.0
        %v3435 = vmax.f32 %v3407, 0.0
        %v3436 = vmax.f32 %v3408, 0.0
        %v3437 = vmax.f32 %v3409, 0.0
        %v3438 = vmax.f32 %v3410, 0.0
        %v3439 = vmax.f32 %v3411, 0.0
        %v3440 = vmax.f32 %v3412, 0.0
        %v3441 = vmax.f32 %v3413, 0.0
        %v3442 = vmax.f32 %v3414, 0.0
        %v3443 = vmax.f32 %v3415, 0.0
        %v3444 = vmax.f32 %v3416, 0.0
        %3473 = vrot.lane.b32.xlu0 %v3417, 1
        %v3474 = vpop.permute.xlu0 %3473
        %3475 = vrot.lane.b32.xlu0 %v3418, 1
        %v3476 = vpop.permute.xlu0 %3475
        %3477 = vrot.lane.b32.xlu0 %v3419, 1
        %v3478 = vpop.permute.xlu0 %3477
        %3479 = vrot.lane.b32.xlu0 %v3420, 1
        %v3480 = vpop.permute.xlu0 %3479
        %3481 = vrot.lane.b32.xlu0 %v3421, 1
        %v3482 = vpop.permute.xlu0 %3481
        %3483 = vrot.lane.b32.xlu0 %v3422, 1
        %v3484 = vpop.permute.xlu0 %3483
        %3485 = vrot.lane.b32.xlu0 %v3423, 1
        %v3486 = vpop.permute.xlu0 %3485
        %3487 = vrot.lane.b32.xlu0 %v3424, 1
        %v3488 = vpop.permute.xlu0 %3487
        %3489 = vrot.lane.b32.xlu0 %v3425, 1
        %v3490 = vpop.permute.xlu0 %3489
        %3491 = vrot.lane.b32.xlu0 %v3426, 1
        %v3492 = vpop.permute.xlu0 %3491
        %3493 = vrot.lane.b32.xlu0 %v3427, 1
        %v3494 = vpop.permute.xlu0 %3493
        %3495 = vrot.lane.b32.xlu0 %v3428, 1
        %v3496 = vpop.permute.xlu0 %3495
        %3497 = vrot.lane.b32.xlu0 %v3429, 1
        %v3498 = vpop.permute.xlu0 %3497
        %3499 = vrot.lane.b32.xlu0 %v3430, 1
        %v3500 = vpop.permute.xlu0 %3499
        %3501 = vrot.lane.b32.xlu0 %v3431, 1
        %v3502 = vpop.permute.xlu0 %3501
        %3503 = vrot.lane.b32.xlu0 %v3432, 1
        %v3504 = vpop.permute.xlu0 %3503
        %3505 = vrot.lane.b32.xlu0 %v3433, 1
        %v3506 = vpop.permute.xlu0 %3505
        %3507 = vrot.lane.b32.xlu0 %v3434, 1
        %v3508 = vpop.permute.xlu0 %3507
        %3509 = vrot.lane.b32.xlu0 %v3435, 1
        %v3510 = vpop.permute.xlu0 %3509
        %3511 = vrot.lane.b32.xlu0 %v3436, 1
        %v3512 = vpop.permute.xlu0 %3511
        %3513 = vrot.lane.b32.xlu0 %v3437, 1
        %v3514 = vpop.permute.xlu0 %3513
        %3515 = vrot.lane.b32.xlu0 %v3438, 1
        %v3516 = vpop.permute.xlu0 %3515
        %3517 = vrot.lane.b32.xlu0 %v3439, 1
        %v3518 = vpop.permute.xlu0 %3517
        %3519 = vrot.lane.b32.xlu0 %v3440, 1
        %v3520 = vpop.permute.xlu0 %3519
        %3521 = vrot.lane.b32.xlu0 %v3441, 1
        %v3522 = vpop.permute.xlu0 %3521
        %3523 = vrot.lane.b32.xlu0 %v3442, 1
        %v3524 = vpop.permute.xlu0 %3523
        %3525 = vrot.lane.b32.xlu0 %v3443, 1
        %v3526 = vpop.permute.xlu0 %3525
        %3527 = vrot.lane.b32.xlu0 %v3444, 1
        %v3528 = vpop.permute.xlu0 %3527
        %s3557 = scalar_lea.vmem [#allocation2], 32
        %vm3558 = vcmask 64520
        %3559 = vst.msk [vmem:[%s3557] sm:$0xff] %vm3558, %v3474
        %3560 = vst.msk [vmem:[%s3557 + $0x8] sm:$0xff] %vm3558, %v3476
        %3561 = vst.msk [vmem:[%s3557 + $0x20] sm:$0xff] %vm3558, %v3478
        %3562 = vst.msk [vmem:[%s3557 + $0x28] sm:$0xff] %vm3558, %v3480
        %3563 = vst.msk [vmem:[%s3557 + $0x40] sm:$0xff] %vm3558, %v3482
        %3564 = vst.msk [vmem:[%s3557 + $0x48] sm:$0xff] %vm3558, %v3484
        %3565 = vst.msk [vmem:[%s3557 + $0x60] sm:$0xff] %vm3558, %v3486
        %3566 = vst.msk [vmem:[%s3557 + $0x68] sm:$0xff] %vm3558, %v3488
        %3567 = vst.msk [vmem:[%s3557 + $0x80] sm:$0xff] %vm3558, %v3490
        %3568 = vst.msk [vmem:[%s3557 + $0x88] sm:$0xff] %vm3558, %v3492
        %3569 = vst.msk [vmem:[%s3557 + $0xa0] sm:$0xff] %vm3558, %v3494
        %3570 = vst.msk [vmem:[%s3557 + $0xa8] sm:$0xff] %vm3558, %v3496
        %3571 = vst.msk [vmem:[%s3557 + $0xc0] sm:$0xff] %vm3558, %v3498
        %3572 = vst.msk [vmem:[%s3557 + $0xc8] sm:$0xff] %vm3558, %v3500
        %3573 = vst.msk [vmem:[%s3557 + $0xe0] sm:$0xff] %vm3558, %v3502
        %3574 = vst.msk [vmem:[%s3557 + $0xe8] sm:$0xff] %vm3558, %v3504
        %3575 = vst.msk [vmem:[%s3557 + $0x100] sm:$0xff] %vm3558, %v3506
        %3576 = vst.msk [vmem:[%s3557 + $0x108] sm:$0xff] %vm3558, %v3508
        %3577 = vst.msk [vmem:[%s3557 + $0x120] sm:$0xff] %vm3558, %v3510
        %3578 = vst.msk [vmem:[%s3557 + $0x128] sm:$0xff] %vm3558, %v3512
        %3579 = vst.msk [vmem:[%s3557 + $0x140] sm:$0xff] %vm3558, %v3514
        %3580 = vst.msk [vmem:[%s3557 + $0x148] sm:$0xff] %vm3558, %v3516
        %3581 = vst.msk [vmem:[%s3557 + $0x160] sm:$0xff] %vm3558, %v3518
        %3582 = vst.msk [vmem:[%s3557 + $0x168] sm:$0xff] %vm3558, %v3520
        %3583 = vst.msk [vmem:[%s3557 + $0x180] sm:$0xff] %vm3558, %v3522
        %3584 = vst.msk [vmem:[%s3557 + $0x188] sm:$0xff] %vm3558, %v3524
        %3585 = vst.msk [vmem:[%s3557 + $0x1a0] sm:$0xff] %vm3558, %v3526
        %3586 = vst.msk [vmem:[%s3557 + $0x1a8] sm:$0xff] %vm3558, %v3528
        %v3587 = vld [vmem:[#allocation2] sm:$0xff]
        %v3588 = vld [vmem:[#allocation2 + $0x8] sm:$0xff]
        %s3589 = scalar_lea.vmem [#allocation2], 16
        %v3590 = vld [vmem:[%s3589] sm:$0xff]
        %v3591 = vld [vmem:[%s3589 + $0x8] sm:$0xff]
        %v3592 = vld [vmem:[%s3557] sm:$0xff]
        %v3593 = vld [vmem:[%s3557 + $0x8] sm:$0xff]
        %v3594 = vld [vmem:[%s1769] sm:$0xff]
        %v3595 = vld [vmem:[%s1769 + $0x8] sm:$0xff]
        %s3596 = scalar_lea.vmem [#allocation2], 64
        %v3597 = vld [vmem:[%s3596] sm:$0xff]
        %v3598 = vld [vmem:[%s3596 + $0x8] sm:$0xff]
        %s3599 = scalar_lea.vmem [#allocation2], 80
        %v3600 = vld [vmem:[%s3599] sm:$0xff]
        %v3601 = vld [vmem:[%s3599 + $0x8] sm:$0xff]
        %3604 = vrot.lane.b32.xlu0 %v3587, 127
        %v3605 = vpop.permute.xlu0 %3604
        %3606 = vrot.lane.b32.xlu0 %v3588, 127
        %v3607 = vpop.permute.xlu0 %3606
        %3612 = vrot.lane.b32.xlu0 %v3592, 127
        %v3613 = vpop.permute.xlu0 %3612
        %3614 = vrot.lane.b32.xlu0 %v3593, 127
        %v3615 = vpop.permute.xlu0 %3614
        %3620 = vrot.lane.b32.xlu0 %v3597, 127
        %v3621 = vpop.permute.xlu0 %3620
        %3622 = vrot.lane.b32.xlu0 %v3598, 127
        %v3623 = vpop.permute.xlu0 %3622
        %v3626 = vld [vmem:[%s3] sm:$0xff]
        %v3627 = vld [vmem:[%s3 + $0x8] sm:$0xff]
        %v3628 = vld [vmem:[%s3 + $0x10] sm:$0xff]
        %v3629 = vld [vmem:[%s3 + $0x18] sm:$0xff]
        %v3630 = vld [vmem:[%s3 + $0x20] sm:$0xff]
        %v3631 = vld [vmem:[%s3 + $0x28] sm:$0xff]
        %v3632 = vld [vmem:[%s3 + $0x30] sm:$0xff]
        %v3633 = vld [vmem:[%s3 + $0x38] sm:$0xff]
        %v3634 = vld [vmem:[%s4] sm:$0xff]
        %v3635 = vld [vmem:[%s4 + $0x8] sm:$0xff]
        %v3636 = vld [vmem:[%s4 + $0x10] sm:$0xff]
        %v3637 = vld [vmem:[%s4 + $0x18] sm:$0xff]
        %3639 = vset.pattern.permute.xlu0 0
        %3640 = vperm.xlu0 %3639, %v3634
        %v3641 = vpop.permute.xlu0 %3640
        %3644 = vset.pattern.permute.xlu0 0
        %3645 = vperm.xlu0 %3644, %v3635
        %v3646 = vpop.permute.xlu0 %3645
        %3649 = vset.pattern.permute.xlu0 0
        %3650 = vperm.xlu0 %3649, %v3636
        %v3651 = vpop.permute.xlu0 %3650
        %3654 = vset.pattern.permute.xlu0 0
        %3655 = vperm.xlu0 %3654, %v3637
        %v3656 = vpop.permute.xlu0 %3655
        %vm3658 = vcmask 130048
        %v3660 = vsel %vm3658, %v3627, 0
        %v3663 = vsel %vm3658, %v3629, 0
        %v3666 = vsel %vm3658, %v3631, 0
        %v3669 = vsel %vm3658, %v3633, 0
        %3671 = vmatprep.subr.mxu0 0.0
        %3672 = vmatpush1.msra.mxu0 %v3601
        %3673 = vmatprep.subr.mxu0 0.0
        %3674 = vmatpush1.msra.mxu0 %v3600
        %3675 = vmatprep.subr.mxu0 0.0
        %3676 = vmatpush1.msra.mxu0 %v3598
        %3677 = vmatprep.subr.mxu0 0.0
        %3678 = vmatpush1.msra.mxu0 %v3597
        %3679 = vmatprep.subr.mxu0 0.0
        %3680 = vmatpush1.msra.mxu0 %v3615
        %3681 = vmatprep.subr.mxu0 0.0
        %3682 = vmatpush1.msra.mxu0 %v3613
        %3683 = vmatprep.subr.mxu0 0.0
        %3684 = vmatpush1.msra.mxu0 %v3595
        %3685 = vmatprep.subr.mxu0 0.0
        %3686 = vmatpush1.msra.mxu0 %v3594
        %3687 = vmatprep.subr.mxu0 0.0
        %3688 = vmatpush1.msra.mxu0 %v3593
        %3689 = vmatprep.subr.mxu0 0.0
        %3690 = vmatpush1.msra.mxu0 %v3592
        %3691 = vmatprep.subr.mxu0 0.0
        %3692 = vmatpush1.msra.mxu0 %v3607
        %3693 = vmatprep.subr.mxu0 0.0
        %3694 = vmatpush1.msra.mxu0 %v3605
        %3695 = vmatprep.subr.mxu0 0.0
        %3696 = vmatpush1.msra.mxu0 %v3591
        %3697 = vmatprep.subr.mxu0 0.0
        %3698 = vmatpush1.msra.mxu0 %v3590
        %3699 = vmatprep.subr.mxu0 0.0
        %3700 = vmatpush1.msra.mxu0 %v3588
        %3701 = vmatprep.subr.mxu0 0.0
        %3702 = vmatpush1.msra.mxu0 %v3587
        %3703 = vmatprep.subr.mxu0 0.0
        %3704 = vmatpush2.msra.mxu0 0.0
        %3705 = vmatprep.subr.mxu0 0.0
        %3706 = vmatpush2.msra.mxu0 0.0
        %3707 = vmatprep.subr.mxu0 0.0
        %3708 = vmatpush2.msra.mxu0 0.0
        %3709 = vmatprep.subr.mxu0 0.0
        %3710 = vmatpush2.msra.mxu0 0.0
        %3711 = vmatprep.subr.mxu0 0.0
        %3712 = vmatpush2.msra.mxu0 0.0
        %3713 = vmatprep.subr.mxu0 0.0
        %3714 = vmatpush2.msra.mxu0 0.0
        %3715 = vmatprep.subr.mxu0 0.0
        %3716 = vmatpush2.msra.mxu0 0.0
        %3717 = vmatprep.subr.mxu0 0.0
        %3718 = vmatpush2.msra.mxu0 0.0
        %3719 = vmatprep.subr.mxu0 0.0
        %3720 = vmatpush2.msra.mxu0 0.0
        %3721 = vmatprep.subr.mxu0 0.0
        %3722 = vmatpush2.msra.mxu0 0.0
        %3723 = vmatprep.subr.mxu0 0.0
        %3724 = vmatpush2.msra.mxu0 0.0
        %3725 = vmatprep.subr.mxu0 0.0
        %3726 = vmatpush2.msra.mxu0 0.0
        %3727 = vmatprep.subr.mxu0 0.0
        %3728 = vmatpush2.msra.mxu0 0.0
        %3729 = vmatprep.subr.mxu0 0.0
        %3730 = vmatpush2.msra.mxu0 0.0
        %3731 = vmatprep.subr.mxu0 0.0
        %3732 = vmatpush2.msra.mxu0 %v3623
        %3733 = vmatprep.subr.mxu0 0.0
        %3734 = vmatpush2.msra.mxu0 %v3621
        %3735 = vmatprep.mubr.f32.mxu0 %v3660
        %3736 = vmatmul.mubr.f32.gmra.mxu0 %v3626
        %v3737 = vpop.f32.mrf.mxu0
        %v3738 = vadd.f32 %v3641, %v3737
        %v3739 = vpop.f32.mrf.mxu0
        %3740 = vmatprep.mubr.f32.mxu0 %v3663
        %3741 = vmatmul.mubr.f32.gmra.mxu0 %v3628
        %v3742 = vpop.f32.mrf.mxu0
        %v3743 = vadd.f32 %v3646, %v3742
        %v3744 = vpop.f32.mrf.mxu0
        %3745 = vmatprep.mubr.f32.mxu0 %v3666
        %3746 = vmatmul.mubr.f32.gmra.mxu0 %v3630
        %v3747 = vpop.f32.mrf.mxu0
        %v3748 = vadd.f32 %v3651, %v3747
        %v3749 = vpop.f32.mrf.mxu0
        %3750 = vmatprep.mubr.f32.mxu0 %v3669
        %3751 = vmatmul.mubr.f32.gmra.mxu0 %v3632
        %v3752 = vpop.f32.mrf.mxu0
        %v3753 = vadd.f32 %v3656, %v3752
        %v3754 = vpop.f32.mrf.mxu0
        %3755 = vdwg.mxu0
        %v3756 = vmax.f32 %v3738, 0.0
        %v3757 = vmax.f32 %v3743, 0.0
        %v3758 = vmax.f32 %v3748, 0.0
        %v3759 = vmax.f32 %v3753, 0.0
        %s3760 = scalar_lea.vmem [#allocation2], 96
        %v3761 = vld [vmem:[%s3760] sm:$0xff]
        %v3762 = vld [vmem:[%s3760 + $0x8] sm:$0xff]
        %s3763 = scalar_lea.vmem [#allocation2], 112
        %v3764 = vld [vmem:[%s3763] sm:$0xff]
        %v3765 = vld [vmem:[%s3763 + $0x8] sm:$0xff]
        %s3766 = scalar_lea.vmem [#allocation2], 128
        %v3767 = vld [vmem:[%s3766] sm:$0xff]
        %v3768 = vld [vmem:[%s3766 + $0x8] sm:$0xff]
        %s3769 = scalar_lea.vmem [#allocation2], 144
        %v3770 = vld [vmem:[%s3769] sm:$0xff]
        %v3771 = vld [vmem:[%s3769 + $0x8] sm:$0xff]
        %3774 = vrot.lane.b32.xlu0 %v3761, 127
        %v3775 = vpop.permute.xlu0 %3774
        %3776 = vrot.lane.b32.xlu0 %v3762, 127
        %v3777 = vpop.permute.xlu0 %3776
        %3782 = vrot.lane.b32.xlu0 %v3767, 127
        %v3783 = vpop.permute.xlu0 %3782
        %3784 = vrot.lane.b32.xlu0 %v3768, 127
        %v3785 = vpop.permute.xlu0 %3784
        %3788 = vmatprep.subr.mxu0 0.0
        %3789 = vmatpush1.msra.mxu0 %v3771
        %3790 = vmatprep.subr.mxu0 0.0
        %3791 = vmatpush1.msra.mxu0 %v3770
        %3792 = vmatprep.subr.mxu0 0.0
        %3793 = vmatpush1.msra.mxu0 %v3768
        %3794 = vmatprep.subr.mxu0 0.0
        %3795 = vmatpush1.msra.mxu0 %v3767
        %3796 = vmatprep.subr.mxu0 0.0
        %3797 = vmatpush1.msra.mxu0 %v3777
        %3798 = vmatprep.subr.mxu0 0.0
        %3799 = vmatpush1.msra.mxu0 %v3775
        %3800 = vmatprep.subr.mxu0 0.0
        %3801 = vmatpush1.msra.mxu0 %v3765
        %3802 = vmatprep.subr.mxu0 0.0
        %3803 = vmatpush1.msra.mxu0 %v3764
        %3804 = vmatprep.subr.mxu0 0.0
        %3805 = vmatpush1.msra.mxu0 %v3762
        %3806 = vmatprep.subr.mxu0 0.0
        %3807 = vmatpush1.msra.mxu0 %v3761
        %3808 = vmatprep.subr.mxu0 0.0
        %3809 = vmatpush1.msra.mxu0 %v3623
        %3810 = vmatprep.subr.mxu0 0.0
        %3811 = vmatpush1.msra.mxu0 %v3621
        %3812 = vmatprep.subr.mxu0 0.0
        %3813 = vmatpush1.msra.mxu0 %v3601
        %3814 = vmatprep.subr.mxu0 0.0
        %3815 = vmatpush1.msra.mxu0 %v3600
        %3816 = vmatprep.subr.mxu0 0.0
        %3817 = vmatpush1.msra.mxu0 %v3598
        %3818 = vmatprep.subr.mxu0 0.0
        %3819 = vmatpush1.msra.mxu0 %v3597
        %3820 = vmatprep.subr.mxu0 0.0
        %3821 = vmatpush2.msra.mxu0 0.0
        %3822 = vmatprep.subr.mxu0 0.0
        %3823 = vmatpush2.msra.mxu0 0.0
        %3824 = vmatprep.subr.mxu0 0.0
        %3825 = vmatpush2.msra.mxu0 0.0
        %3826 = vmatprep.subr.mxu0 0.0
        %3827 = vmatpush2.msra.mxu0 0.0
        %3828 = vmatprep.subr.mxu0 0.0
        %3829 = vmatpush2.msra.mxu0 0.0
        %3830 = vmatprep.subr.mxu0 0.0
        %3831 = vmatpush2.msra.mxu0 0.0
        %3832 = vmatprep.subr.mxu0 0.0
        %3833 = vmatpush2.msra.mxu0 0.0
        %3834 = vmatprep.subr.mxu0 0.0
        %3835 = vmatpush2.msra.mxu0 0.0
        %3836 = vmatprep.subr.mxu0 0.0
        %3837 = vmatpush2.msra.mxu0 0.0
        %3838 = vmatprep.subr.mxu0 0.0
        %3839 = vmatpush2.msra.mxu0 0.0
        %3840 = vmatprep.subr.mxu0 0.0
        %3841 = vmatpush2.msra.mxu0 0.0
        %3842 = vmatprep.subr.mxu0 0.0
        %3843 = vmatpush2.msra.mxu0 0.0
        %3844 = vmatprep.subr.mxu0 0.0
        %3845 = vmatpush2.msra.mxu0 0.0
        %3846 = vmatprep.subr.mxu0 0.0
        %3847 = vmatpush2.msra.mxu0 0.0
        %3848 = vmatprep.subr.mxu0 0.0
        %3849 = vmatpush2.msra.mxu0 %v3785
        %3850 = vmatprep.subr.mxu0 0.0
        %3851 = vmatpush2.msra.mxu0 %v3783
        %3852 = vmatprep.mubr.f32.mxu0 %v3660
        %3853 = vmatmul.mubr.f32.gmra.mxu0 %v3626
        %v3854 = vpop.f32.mrf.mxu0
        %v3855 = vadd.f32 %v3641, %v3854
        %v3856 = vpop.f32.mrf.mxu0
        %3857 = vmatprep.mubr.f32.mxu0 %v3663
        %3858 = vmatmul.mubr.f32.gmra.mxu0 %v3628
        %v3859 = vpop.f32.mrf.mxu0
        %v3860 = vadd.f32 %v3646, %v3859
        %v3861 = vpop.f32.mrf.mxu0
        %3862 = vmatprep.mubr.f32.mxu0 %v3666
        %3863 = vmatmul.mubr.f32.gmra.mxu0 %v3630
        %v3864 = vpop.f32.mrf.mxu0
        %v3865 = vadd.f32 %v3651, %v3864
        %v3866 = vpop.f32.mrf.mxu0
        %3867 = vmatprep.mubr.f32.mxu0 %v3669
        %3868 = vmatmul.mubr.f32.gmra.mxu0 %v3632
        %v3869 = vpop.f32.mrf.mxu0
        %v3870 = vadd.f32 %v3656, %v3869
        %v3871 = vpop.f32.mrf.mxu0
        %3872 = vdwg.mxu0
        %v3873 = vmax.f32 %v3855, 0.0
        %v3874 = vmax.f32 %v3860, 0.0
        %v3875 = vmax.f32 %v3865, 0.0
        %v3876 = vmax.f32 %v3870, 0.0
        %s3877 = scalar_lea.vmem [#allocation2], 160
        %v3878 = vld [vmem:[%s3877] sm:$0xff]
        %v3879 = vld [vmem:[%s3877 + $0x8] sm:$0xff]
        %s3880 = scalar_lea.vmem [#allocation2], 176
        %v3881 = vld [vmem:[%s3880] sm:$0xff]
        %v3882 = vld [vmem:[%s3880 + $0x8] sm:$0xff]
        %s3883 = scalar_lea.vmem [#allocation2], 192
        %v3884 = vld [vmem:[%s3883] sm:$0xff]
        %v3885 = vld [vmem:[%s3883 + $0x8] sm:$0xff]
        %s3886 = scalar_lea.vmem [#allocation2], 208
        %v3887 = vld [vmem:[%s3886] sm:$0xff]
        %v3888 = vld [vmem:[%s3886 + $0x8] sm:$0xff]
        %3891 = vrot.lane.b32.xlu0 %v3878, 127
        %v3892 = vpop.permute.xlu0 %3891
        %3893 = vrot.lane.b32.xlu0 %v3879, 127
        %v3894 = vpop.permute.xlu0 %3893
        %3899 = vrot.lane.b32.xlu0 %v3884, 127
        %v3900 = vpop.permute.xlu0 %3899
        %3901 = vrot.lane.b32.xlu0 %v3885, 127
        %v3902 = vpop.permute.xlu0 %3901
        %3905 = vmatprep.subr.mxu0 0.0
        %3906 = vmatpush1.msra.mxu0 %v3888
        %3907 = vmatprep.subr.mxu0 0.0
        %3908 = vmatpush1.msra.mxu0 %v3887
        %3909 = vmatprep.subr.mxu0 0.0
        %3910 = vmatpush1.msra.mxu0 %v3885
        %3911 = vmatprep.subr.mxu0 0.0
        %3912 = vmatpush1.msra.mxu0 %v3884
        %3913 = vmatprep.subr.mxu0 0.0
        %3914 = vmatpush1.msra.mxu0 %v3894
        %3915 = vmatprep.subr.mxu0 0.0
        %3916 = vmatpush1.msra.mxu0 %v3892
        %3917 = vmatprep.subr.mxu0 0.0
        %3918 = vmatpush1.msra.mxu0 %v3882
        %3919 = vmatprep.subr.mxu0 0.0
        %3920 = vmatpush1.msra.mxu0 %v3881
        %3921 = vmatprep.subr.mxu0 0.0
        %3922 = vmatpush1.msra.mxu0 %v3879
        %3923 = vmatprep.subr.mxu0 0.0
        %3924 = vmatpush1.msra.mxu0 %v3878
        %3925 = vmatprep.subr.mxu0 0.0
        %3926 = vmatpush1.msra.mxu0 %v3785
        %3927 = vmatprep.subr.mxu0 0.0
        %3928 = vmatpush1.msra.mxu0 %v3783
        %3929 = vmatprep.subr.mxu0 0.0
        %3930 = vmatpush1.msra.mxu0 %v3771
        %3931 = vmatprep.subr.mxu0 0.0
        %3932 = vmatpush1.msra.mxu0 %v3770
        %3933 = vmatprep.subr.mxu0 0.0
        %3934 = vmatpush1.msra.mxu0 %v3768
        %3935 = vmatprep.subr.mxu0 0.0
        %3936 = vmatpush1.msra.mxu0 %v3767
        %3937 = vmatprep.subr.mxu0 0.0
        %3938 = vmatpush2.msra.mxu0 0.0
        %3939 = vmatprep.subr.mxu0 0.0
        %3940 = vmatpush2.msra.mxu0 0.0
        %3941 = vmatprep.subr.mxu0 0.0
        %3942 = vmatpush2.msra.mxu0 0.0
        %3943 = vmatprep.subr.mxu0 0.0
        %3944 = vmatpush2.msra.mxu0 0.0
        %3945 = vmatprep.subr.mxu0 0.0
        %3946 = vmatpush2.msra.mxu0 0.0
        %3947 = vmatprep.subr.mxu0 0.0
        %3948 = vmatpush2.msra.mxu0 0.0
        %3949 = vmatprep.subr.mxu0 0.0
        %3950 = vmatpush2.msra.mxu0 0.0
        %3951 = vmatprep.subr.mxu0 0.0
        %3952 = vmatpush2.msra.mxu0 0.0
        %3953 = vmatprep.subr.mxu0 0.0
        %3954 = vmatpush2.msra.mxu0 0.0
        %3955 = vmatprep.subr.mxu0 0.0
        %3956 = vmatpush2.msra.mxu0 0.0
        %3957 = vmatprep.subr.mxu0 0.0
        %3958 = vmatpush2.msra.mxu0 0.0
        %3959 = vmatprep.subr.mxu0 0.0
        %3960 = vmatpush2.msra.mxu0 0.0
        %3961 = vmatprep.subr.mxu0 0.0
        %3962 = vmatpush2.msra.mxu0 0.0
        %3963 = vmatprep.subr.mxu0 0.0
        %3964 = vmatpush2.msra.mxu0 0.0
        %3965 = vmatprep.subr.mxu0 0.0
        %3966 = vmatpush2.msra.mxu0 %v3902
        %3967 = vmatprep.subr.mxu0 0.0
        %3968 = vmatpush2.msra.mxu0 %v3900
        %3969 = vmatprep.mubr.f32.mxu0 %v3660
        %3970 = vmatmul.mubr.f32.gmra.mxu0 %v3626
        %v3971 = vpop.f32.mrf.mxu0
        %v3972 = vadd.f32 %v3641, %v3971
        %v3973 = vpop.f32.mrf.mxu0
        %3974 = vmatprep.mubr.f32.mxu0 %v3663
        %3975 = vmatmul.mubr.f32.gmra.mxu0 %v3628
        %v3976 = vpop.f32.mrf.mxu0
        %v3977 = vadd.f32 %v3646, %v3976
        %v3978 = vpop.f32.mrf.mxu0
        %3979 = vmatprep.mubr.f32.mxu0 %v3666
        %3980 = vmatmul.mubr.f32.gmra.mxu0 %v3630
        %v3981 = vpop.f32.mrf.mxu0
        %v3982 = vadd.f32 %v3651, %v3981
        %v3983 = vpop.f32.mrf.mxu0
        %3984 = vmatprep.mubr.f32.mxu0 %v3669
        %3985 = vmatmul.mubr.f32.gmra.mxu0 %v3632
        %v3986 = vpop.f32.mrf.mxu0
        %v3987 = vadd.f32 %v3656, %v3986
        %v3988 = vpop.f32.mrf.mxu0
        %3989 = vdwg.mxu0
        %v3990 = vmax.f32 %v3972, 0.0
        %v3991 = vmax.f32 %v3977, 0.0
        %v3992 = vmax.f32 %v3982, 0.0
        %v3993 = vmax.f32 %v3987, 0.0
        %s3994 = scalar_lea.vmem [#allocation2], 224
        %v3995 = vld [vmem:[%s3994] sm:$0xff]
        %v3996 = vld [vmem:[%s3994 + $0x8] sm:$0xff]
        %s3997 = scalar_lea.vmem [#allocation2], 240
        %v3998 = vld [vmem:[%s3997] sm:$0xff]
        %v3999 = vld [vmem:[%s3997 + $0x8] sm:$0xff]
        %s4000 = scalar_lea.vmem [#allocation2], 256
        %v4001 = vld [vmem:[%s4000] sm:$0xff]
        %v4002 = vld [vmem:[%s4000 + $0x8] sm:$0xff]
        %s4003 = scalar_lea.vmem [#allocation2], 272
        %v4004 = vld [vmem:[%s4003] sm:$0xff]
        %v4005 = vld [vmem:[%s4003 + $0x8] sm:$0xff]
        %4008 = vrot.lane.b32.xlu0 %v3995, 127
        %v4009 = vpop.permute.xlu0 %4008
        %4010 = vrot.lane.b32.xlu0 %v3996, 127
        %v4011 = vpop.permute.xlu0 %4010
        %4016 = vrot.lane.b32.xlu0 %v4001, 127
        %v4017 = vpop.permute.xlu0 %4016
        %4018 = vrot.lane.b32.xlu0 %v4002, 127
        %v4019 = vpop.permute.xlu0 %4018
        %4022 = vmatprep.subr.mxu0 0.0
        %4023 = vmatpush1.msra.mxu0 %v4005
        %4024 = vmatprep.subr.mxu0 0.0
        %4025 = vmatpush1.msra.mxu0 %v4004
        %4026 = vmatprep.subr.mxu0 0.0
        %4027 = vmatpush1.msra.mxu0 %v4002
        %4028 = vmatprep.subr.mxu0 0.0
        %4029 = vmatpush1.msra.mxu0 %v4001
        %4030 = vmatprep.subr.mxu0 0.0
        %4031 = vmatpush1.msra.mxu0 %v4011
        %4032 = vmatprep.subr.mxu0 0.0
        %4033 = vmatpush1.msra.mxu0 %v4009
        %4034 = vmatprep.subr.mxu0 0.0
        %4035 = vmatpush1.msra.mxu0 %v3999
        %4036 = vmatprep.subr.mxu0 0.0
        %4037 = vmatpush1.msra.mxu0 %v3998
        %4038 = vmatprep.subr.mxu0 0.0
        %4039 = vmatpush1.msra.mxu0 %v3996
        %4040 = vmatprep.subr.mxu0 0.0
        %4041 = vmatpush1.msra.mxu0 %v3995
        %4042 = vmatprep.subr.mxu0 0.0
        %4043 = vmatpush1.msra.mxu0 %v3902
        %4044 = vmatprep.subr.mxu0 0.0
        %4045 = vmatpush1.msra.mxu0 %v3900
        %4046 = vmatprep.subr.mxu0 0.0
        %4047 = vmatpush1.msra.mxu0 %v3888
        %4048 = vmatprep.subr.mxu0 0.0
        %4049 = vmatpush1.msra.mxu0 %v3887
        %4050 = vmatprep.subr.mxu0 0.0
        %4051 = vmatpush1.msra.mxu0 %v3885
        %4052 = vmatprep.subr.mxu0 0.0
        %4053 = vmatpush1.msra.mxu0 %v3884
        %4054 = vmatprep.subr.mxu0 0.0
        %4055 = vmatpush2.msra.mxu0 0.0
        %4056 = vmatprep.subr.mxu0 0.0
        %4057 = vmatpush2.msra.mxu0 0.0
        %4058 = vmatprep.subr.mxu0 0.0
        %4059 = vmatpush2.msra.mxu0 0.0
        %4060 = vmatprep.subr.mxu0 0.0
        %4061 = vmatpush2.msra.mxu0 0.0
        %4062 = vmatprep.subr.mxu0 0.0
        %4063 = vmatpush2.msra.mxu0 0.0
        %4064 = vmatprep.subr.mxu0 0.0
        %4065 = vmatpush2.msra.mxu0 0.0
        %4066 = vmatprep.subr.mxu0 0.0
        %4067 = vmatpush2.msra.mxu0 0.0
        %4068 = vmatprep.subr.mxu0 0.0
        %4069 = vmatpush2.msra.mxu0 0.0
        %4070 = vmatprep.subr.mxu0 0.0
        %4071 = vmatpush2.msra.mxu0 0.0
        %4072 = vmatprep.subr.mxu0 0.0
        %4073 = vmatpush2.msra.mxu0 0.0
        %4074 = vmatprep.subr.mxu0 0.0
        %4075 = vmatpush2.msra.mxu0 0.0
        %4076 = vmatprep.subr.mxu0 0.0
        %4077 = vmatpush2.msra.mxu0 0.0
        %4078 = vmatprep.subr.mxu0 0.0
        %4079 = vmatpush2.msra.mxu0 0.0
        %4080 = vmatprep.subr.mxu0 0.0
        %4081 = vmatpush2.msra.mxu0 0.0
        %4082 = vmatprep.subr.mxu0 0.0
        %4083 = vmatpush2.msra.mxu0 %v4019
        %4084 = vmatprep.subr.mxu0 0.0
        %4085 = vmatpush2.msra.mxu0 %v4017
        %4086 = vmatprep.mubr.f32.mxu0 %v3660
        %4087 = vmatmul.mubr.f32.gmra.mxu0 %v3626
        %v4088 = vpop.f32.mrf.mxu0
        %v4089 = vadd.f32 %v3641, %v4088
        %v4090 = vpop.f32.mrf.mxu0
        %4091 = vmatprep.mubr.f32.mxu0 %v3663
        %4092 = vmatmul.mubr.f32.gmra.mxu0 %v3628
        %v4093 = vpop.f32.mrf.mxu0
        %v4094 = vadd.f32 %v3646, %v4093
        %v4095 = vpop.f32.mrf.mxu0
        %4096 = vmatprep.mubr.f32.mxu0 %v3666
        %4097 = vmatmul.mubr.f32.gmra.mxu0 %v3630
        %v4098 = vpop.f32.mrf.mxu0
        %v4099 = vadd.f32 %v3651, %v4098
        %v4100 = vpop.f32.mrf.mxu0
        %4101 = vmatprep.mubr.f32.mxu0 %v3669
        %4102 = vmatmul.mubr.f32.gmra.mxu0 %v3632
        %v4103 = vpop.f32.mrf.mxu0
        %v4104 = vadd.f32 %v3656, %v4103
        %v4105 = vpop.f32.mrf.mxu0
        %4106 = vdwg.mxu0
        %v4107 = vmax.f32 %v4089, 0.0
        %v4108 = vmax.f32 %v4094, 0.0
        %v4109 = vmax.f32 %v4099, 0.0
        %v4110 = vmax.f32 %v4104, 0.0
        %s4111 = scalar_lea.vmem [#allocation2], 288
        %v4112 = vld [vmem:[%s4111] sm:$0xff]
        %v4113 = vld [vmem:[%s4111 + $0x8] sm:$0xff]
        %s4114 = scalar_lea.vmem [#allocation2], 304
        %v4115 = vld [vmem:[%s4114] sm:$0xff]
        %v4116 = vld [vmem:[%s4114 + $0x8] sm:$0xff]
        %s4117 = scalar_lea.vmem [#allocation2], 320
        %v4118 = vld [vmem:[%s4117] sm:$0xff]
        %v4119 = vld [vmem:[%s4117 + $0x8] sm:$0xff]
        %s4120 = scalar_lea.vmem [#allocation2], 336
        %v4121 = vld [vmem:[%s4120] sm:$0xff]
        %v4122 = vld [vmem:[%s4120 + $0x8] sm:$0xff]
        %4125 = vrot.lane.b32.xlu0 %v4112, 127
        %v4126 = vpop.permute.xlu0 %4125
        %4127 = vrot.lane.b32.xlu0 %v4113, 127
        %v4128 = vpop.permute.xlu0 %4127
        %4133 = vrot.lane.b32.xlu0 %v4118, 127
        %v4134 = vpop.permute.xlu0 %4133
        %4135 = vrot.lane.b32.xlu0 %v4119, 127
        %v4136 = vpop.permute.xlu0 %4135
        %4139 = vmatprep.subr.mxu0 0.0
        %4140 = vmatpush1.msra.mxu0 %v4122
        %4141 = vmatprep.subr.mxu0 0.0
        %4142 = vmatpush1.msra.mxu0 %v4121
        %4143 = vmatprep.subr.mxu0 0.0
        %4144 = vmatpush1.msra.mxu0 %v4119
        %4145 = vmatprep.subr.mxu0 0.0
        %4146 = vmatpush1.msra.mxu0 %v4118
        %4147 = vmatprep.subr.mxu0 0.0
        %4148 = vmatpush1.msra.mxu0 %v4128
        %4149 = vmatprep.subr.mxu0 0.0
        %4150 = vmatpush1.msra.mxu0 %v4126
        %4151 = vmatprep.subr.mxu0 0.0
        %4152 = vmatpush1.msra.mxu0 %v4116
        %4153 = vmatprep.subr.mxu0 0.0
        %4154 = vmatpush1.msra.mxu0 %v4115
        %4155 = vmatprep.subr.mxu0 0.0
        %4156 = vmatpush1.msra.mxu0 %v4113
        %4157 = vmatprep.subr.mxu0 0.0
        %4158 = vmatpush1.msra.mxu0 %v4112
        %4159 = vmatprep.subr.mxu0 0.0
        %4160 = vmatpush1.msra.mxu0 %v4019
        %4161 = vmatprep.subr.mxu0 0.0
        %4162 = vmatpush1.msra.mxu0 %v4017
        %4163 = vmatprep.subr.mxu0 0.0
        %4164 = vmatpush1.msra.mxu0 %v4005
        %4165 = vmatprep.subr.mxu0 0.0
        %4166 = vmatpush1.msra.mxu0 %v4004
        %4167 = vmatprep.subr.mxu0 0.0
        %4168 = vmatpush1.msra.mxu0 %v4002
        %4169 = vmatprep.subr.mxu0 0.0
        %4170 = vmatpush1.msra.mxu0 %v4001
        %4171 = vmatprep.subr.mxu0 0.0
        %4172 = vmatpush2.msra.mxu0 0.0
        %4173 = vmatprep.subr.mxu0 0.0
        %4174 = vmatpush2.msra.mxu0 0.0
        %4175 = vmatprep.subr.mxu0 0.0
        %4176 = vmatpush2.msra.mxu0 0.0
        %4177 = vmatprep.subr.mxu0 0.0
        %4178 = vmatpush2.msra.mxu0 0.0
        %4179 = vmatprep.subr.mxu0 0.0
        %4180 = vmatpush2.msra.mxu0 0.0
        %4181 = vmatprep.subr.mxu0 0.0
        %4182 = vmatpush2.msra.mxu0 0.0
        %4183 = vmatprep.subr.mxu0 0.0
        %4184 = vmatpush2.msra.mxu0 0.0
        %4185 = vmatprep.subr.mxu0 0.0
        %4186 = vmatpush2.msra.mxu0 0.0
        %4187 = vmatprep.subr.mxu0 0.0
        %4188 = vmatpush2.msra.mxu0 0.0
        %4189 = vmatprep.subr.mxu0 0.0
        %4190 = vmatpush2.msra.mxu0 0.0
        %4191 = vmatprep.subr.mxu0 0.0
        %4192 = vmatpush2.msra.mxu0 0.0
        %4193 = vmatprep.subr.mxu0 0.0
        %4194 = vmatpush2.msra.mxu0 0.0
        %4195 = vmatprep.subr.mxu0 0.0
        %4196 = vmatpush2.msra.mxu0 0.0
        %4197 = vmatprep.subr.mxu0 0.0
        %4198 = vmatpush2.msra.mxu0 0.0
        %4199 = vmatprep.subr.mxu0 0.0
        %4200 = vmatpush2.msra.mxu0 %v4136
        %4201 = vmatprep.subr.mxu0 0.0
        %4202 = vmatpush2.msra.mxu0 %v4134
        %4203 = vmatprep.mubr.f32.mxu0 %v3660
        %4204 = vmatmul.mubr.f32.gmra.mxu0 %v3626
        %v4205 = vpop.f32.mrf.mxu0
        %v4206 = vadd.f32 %v3641, %v4205
        %v4207 = vpop.f32.mrf.mxu0
        %4208 = vmatprep.mubr.f32.mxu0 %v3663
        %4209 = vmatmul.mubr.f32.gmra.mxu0 %v3628
        %v4210 = vpop.f32.mrf.mxu0
        %v4211 = vadd.f32 %v3646, %v4210
        %v4212 = vpop.f32.mrf.mxu0
        %4213 = vmatprep.mubr.f32.mxu0 %v3666
        %4214 = vmatmul.mubr.f32.gmra.mxu0 %v3630
        %v4215 = vpop.f32.mrf.mxu0
        %v4216 = vadd.f32 %v3651, %v4215
        %v4217 = vpop.f32.mrf.mxu0
        %4218 = vmatprep.mubr.f32.mxu0 %v3669
        %4219 = vmatmul.mubr.f32.gmra.mxu0 %v3632
        %v4220 = vpop.f32.mrf.mxu0
        %v4221 = vadd.f32 %v3656, %v4220
        %v4222 = vpop.f32.mrf.mxu0
        %4223 = vdwg.mxu0
        %v4224 = vmax.f32 %v4206, 0.0
        %v4225 = vmax.f32 %v4211, 0.0
        %v4226 = vmax.f32 %v4216, 0.0
        %v4227 = vmax.f32 %v4221, 0.0
        %s4228 = scalar_lea.vmem [#allocation2], 352
        %v4229 = vld [vmem:[%s4228] sm:$0xff]
        %v4230 = vld [vmem:[%s4228 + $0x8] sm:$0xff]
        %s4231 = scalar_lea.vmem [#allocation2], 368
        %v4232 = vld [vmem:[%s4231] sm:$0xff]
        %v4233 = vld [vmem:[%s4231 + $0x8] sm:$0xff]
        %s4234 = scalar_lea.vmem [#allocation2], 384
        %v4235 = vld [vmem:[%s4234] sm:$0xff]
        %v4236 = vld [vmem:[%s4234 + $0x8] sm:$0xff]
        %s4237 = scalar_lea.vmem [#allocation2], 400
        %v4238 = vld [vmem:[%s4237] sm:$0xff]
        %v4239 = vld [vmem:[%s4237 + $0x8] sm:$0xff]
        %4242 = vrot.lane.b32.xlu0 %v4229, 127
        %v4243 = vpop.permute.xlu0 %4242
        %4244 = vrot.lane.b32.xlu0 %v4230, 127
        %v4245 = vpop.permute.xlu0 %4244
        %4250 = vrot.lane.b32.xlu0 %v4235, 127
        %v4251 = vpop.permute.xlu0 %4250
        %4252 = vrot.lane.b32.xlu0 %v4236, 127
        %v4253 = vpop.permute.xlu0 %4252
        %4256 = vmatprep.subr.mxu0 0.0
        %4257 = vmatpush1.msra.mxu0 %v4239
        %4258 = vmatprep.subr.mxu0 0.0
        %4259 = vmatpush1.msra.mxu0 %v4238
        %4260 = vmatprep.subr.mxu0 0.0
        %4261 = vmatpush1.msra.mxu0 %v4236
        %4262 = vmatprep.subr.mxu0 0.0
        %4263 = vmatpush1.msra.mxu0 %v4235
        %4264 = vmatprep.subr.mxu0 0.0
        %4265 = vmatpush1.msra.mxu0 %v4245
        %4266 = vmatprep.subr.mxu0 0.0
        %4267 = vmatpush1.msra.mxu0 %v4243
        %4268 = vmatprep.subr.mxu0 0.0
        %4269 = vmatpush1.msra.mxu0 %v4233
        %4270 = vmatprep.subr.mxu0 0.0
        %4271 = vmatpush1.msra.mxu0 %v4232
        %4272 = vmatprep.subr.mxu0 0.0
        %4273 = vmatpush1.msra.mxu0 %v4230
        %4274 = vmatprep.subr.mxu0 0.0
        %4275 = vmatpush1.msra.mxu0 %v4229
        %4276 = vmatprep.subr.mxu0 0.0
        %4277 = vmatpush1.msra.mxu0 %v4136
        %4278 = vmatprep.subr.mxu0 0.0
        %4279 = vmatpush1.msra.mxu0 %v4134
        %4280 = vmatprep.subr.mxu0 0.0
        %4281 = vmatpush1.msra.mxu0 %v4122
        %4282 = vmatprep.subr.mxu0 0.0
        %4283 = vmatpush1.msra.mxu0 %v4121
        %4284 = vmatprep.subr.mxu0 0.0
        %4285 = vmatpush1.msra.mxu0 %v4119
        %4286 = vmatprep.subr.mxu0 0.0
        %4287 = vmatpush1.msra.mxu0 %v4118
        %4288 = vmatprep.subr.mxu0 0.0
        %4289 = vmatpush2.msra.mxu0 0.0
        %4290 = vmatprep.subr.mxu0 0.0
        %4291 = vmatpush2.msra.mxu0 0.0
        %4292 = vmatprep.subr.mxu0 0.0
        %4293 = vmatpush2.msra.mxu0 0.0
        %4294 = vmatprep.subr.mxu0 0.0
        %4295 = vmatpush2.msra.mxu0 0.0
        %4296 = vmatprep.subr.mxu0 0.0
        %4297 = vmatpush2.msra.mxu0 0.0
        %4298 = vmatprep.subr.mxu0 0.0
        %4299 = vmatpush2.msra.mxu0 0.0
        %4300 = vmatprep.subr.mxu0 0.0
        %4301 = vmatpush2.msra.mxu0 0.0
        %4302 = vmatprep.subr.mxu0 0.0
        %4303 = vmatpush2.msra.mxu0 0.0
        %4304 = vmatprep.subr.mxu0 0.0
        %4305 = vmatpush2.msra.mxu0 0.0
        %4306 = vmatprep.subr.mxu0 0.0
        %4307 = vmatpush2.msra.mxu0 0.0
        %4308 = vmatprep.subr.mxu0 0.0
        %4309 = vmatpush2.msra.mxu0 0.0
        %4310 = vmatprep.subr.mxu0 0.0
        %4311 = vmatpush2.msra.mxu0 0.0
        %4312 = vmatprep.subr.mxu0 0.0
        %4313 = vmatpush2.msra.mxu0 0.0
        %4314 = vmatprep.subr.mxu0 0.0
        %4315 = vmatpush2.msra.mxu0 0.0
        %4316 = vmatprep.subr.mxu0 0.0
        %4317 = vmatpush2.msra.mxu0 %v4253
        %4318 = vmatprep.subr.mxu0 0.0
        %4319 = vmatpush2.msra.mxu0 %v4251
        %4320 = vmatprep.mubr.f32.mxu0 %v3660
        %4321 = vmatmul.mubr.f32.gmra.mxu0 %v3626
        %v4322 = vpop.f32.mrf.mxu0
        %v4323 = vadd.f32 %v3641, %v4322
        %v4324 = vpop.f32.mrf.mxu0
        %4325 = vmatprep.mubr.f32.mxu0 %v3663
        %4326 = vmatmul.mubr.f32.gmra.mxu0 %v3628
        %v4327 = vpop.f32.mrf.mxu0
        %v4328 = vadd.f32 %v3646, %v4327
        %v4329 = vpop.f32.mrf.mxu0
        %4330 = vmatprep.mubr.f32.mxu0 %v3666
        %4331 = vmatmul.mubr.f32.gmra.mxu0 %v3630
        %v4332 = vpop.f32.mrf.mxu0
        %v4333 = vadd.f32 %v3651, %v4332
        %v4334 = vpop.f32.mrf.mxu0
        %4335 = vmatprep.mubr.f32.mxu0 %v3669
        %4336 = vmatmul.mubr.f32.gmra.mxu0 %v3632
        %v4337 = vpop.f32.mrf.mxu0
        %v4338 = vadd.f32 %v3656, %v4337
        %v4339 = vpop.f32.mrf.mxu0
        %4340 = vdwg.mxu0
        %v4341 = vmax.f32 %v4323, 0.0
        %v4342 = vmax.f32 %v4328, 0.0
        %v4343 = vmax.f32 %v4333, 0.0
        %v4344 = vmax.f32 %v4338, 0.0
        %s4345 = scalar_lea.vmem [#allocation2], 416
        %v4346 = vld [vmem:[%s4345] sm:$0xff]
        %v4347 = vld [vmem:[%s4345 + $0x8] sm:$0xff]
        %s4348 = scalar_lea.vmem [#allocation2], 432
        %v4349 = vld [vmem:[%s4348] sm:$0xff]
        %v4350 = vld [vmem:[%s4348 + $0x8] sm:$0xff]
        %s4351 = scalar_lea.vmem [#allocation2], 448
        %v4352 = vld [vmem:[%s4351] sm:$0xff]
        %v4353 = vld [vmem:[%s4351 + $0x8] sm:$0xff]
        %s4354 = scalar_lea.vmem [#allocation2], 464
        %v4355 = vld [vmem:[%s4354] sm:$0xff]
        %v4356 = vld [vmem:[%s4354 + $0x8] sm:$0xff]
        %4359 = vrot.lane.b32.xlu0 %v4346, 127
        %v4360 = vpop.permute.xlu0 %4359
        %4361 = vrot.lane.b32.xlu0 %v4347, 127
        %v4362 = vpop.permute.xlu0 %4361
        %4367 = vrot.lane.b32.xlu0 %v4352, 127
        %v4368 = vpop.permute.xlu0 %4367
        %4369 = vrot.lane.b32.xlu0 %v4353, 127
        %v4370 = vpop.permute.xlu0 %4369
        %4373 = vmatprep.subr.mxu0 0.0
        %4374 = vmatpush1.msra.mxu0 %v4356
        %4375 = vmatprep.subr.mxu0 0.0
        %4376 = vmatpush1.msra.mxu0 %v4355
        %4377 = vmatprep.subr.mxu0 0.0
        %4378 = vmatpush1.msra.mxu0 %v4353
        %4379 = vmatprep.subr.mxu0 0.0
        %4380 = vmatpush1.msra.mxu0 %v4352
        %4381 = vmatprep.subr.mxu0 0.0
        %4382 = vmatpush1.msra.mxu0 %v4362
        %4383 = vmatprep.subr.mxu0 0.0
        %4384 = vmatpush1.msra.mxu0 %v4360
        %4385 = vmatprep.subr.mxu0 0.0
        %4386 = vmatpush1.msra.mxu0 %v4350
        %4387 = vmatprep.subr.mxu0 0.0
        %4388 = vmatpush1.msra.mxu0 %v4349
        %4389 = vmatprep.subr.mxu0 0.0
        %4390 = vmatpush1.msra.mxu0 %v4347
        %4391 = vmatprep.subr.mxu0 0.0
        %4392 = vmatpush1.msra.mxu0 %v4346
        %4393 = vmatprep.subr.mxu0 0.0
        %4394 = vmatpush1.msra.mxu0 %v4253
        %4395 = vmatprep.subr.mxu0 0.0
        %4396 = vmatpush1.msra.mxu0 %v4251
        %4397 = vmatprep.subr.mxu0 0.0
        %4398 = vmatpush1.msra.mxu0 %v4239
        %4399 = vmatprep.subr.mxu0 0.0
        %4400 = vmatpush1.msra.mxu0 %v4238
        %4401 = vmatprep.subr.mxu0 0.0
        %4402 = vmatpush1.msra.mxu0 %v4236
        %4403 = vmatprep.subr.mxu0 0.0
        %4404 = vmatpush1.msra.mxu0 %v4235
        %4405 = vmatprep.subr.mxu0 0.0
        %4406 = vmatpush2.msra.mxu0 0.0
        %4407 = vmatprep.subr.mxu0 0.0
        %4408 = vmatpush2.msra.mxu0 0.0
        %4409 = vmatprep.subr.mxu0 0.0
        %4410 = vmatpush2.msra.mxu0 0.0
        %4411 = vmatprep.subr.mxu0 0.0
        %4412 = vmatpush2.msra.mxu0 0.0
        %4413 = vmatprep.subr.mxu0 0.0
        %4414 = vmatpush2.msra.mxu0 0.0
        %4415 = vmatprep.subr.mxu0 0.0
        %4416 = vmatpush2.msra.mxu0 0.0
        %4417 = vmatprep.subr.mxu0 0.0
        %4418 = vmatpush2.msra.mxu0 0.0
        %4419 = vmatprep.subr.mxu0 0.0
        %4420 = vmatpush2.msra.mxu0 0.0
        %4421 = vmatprep.subr.mxu0 0.0
        %4422 = vmatpush2.msra.mxu0 0.0
        %4423 = vmatprep.subr.mxu0 0.0
        %4424 = vmatpush2.msra.mxu0 0.0
        %4425 = vmatprep.subr.mxu0 0.0
        %4426 = vmatpush2.msra.mxu0 0.0
        %4427 = vmatprep.subr.mxu0 0.0
        %4428 = vmatpush2.msra.mxu0 0.0
        %4429 = vmatprep.subr.mxu0 0.0
        %4430 = vmatpush2.msra.mxu0 0.0
        %4431 = vmatprep.subr.mxu0 0.0
        %4432 = vmatpush2.msra.mxu0 0.0
        %4433 = vmatprep.subr.mxu0 0.0
        %4434 = vmatpush2.msra.mxu0 %v4370
        %4435 = vmatprep.subr.mxu0 0.0
        %4436 = vmatpush2.msra.mxu0 %v4368
        %4437 = vmatprep.mubr.f32.mxu0 %v3660
        %4438 = vmatmul.mubr.f32.gmra.mxu0 %v3626
        %v4439 = vpop.f32.mrf.mxu0
        %v4440 = vadd.f32 %v3641, %v4439
        %v4441 = vpop.f32.mrf.mxu0
        %4442 = vmatprep.mubr.f32.mxu0 %v3663
        %4443 = vmatmul.mubr.f32.gmra.mxu0 %v3628
        %v4444 = vpop.f32.mrf.mxu0
        %v4445 = vadd.f32 %v3646, %v4444
        %v4446 = vpop.f32.mrf.mxu0
        %4447 = vmatprep.mubr.f32.mxu0 %v3666
        %4448 = vmatmul.mubr.f32.gmra.mxu0 %v3630
        %v4449 = vpop.f32.mrf.mxu0
        %v4450 = vadd.f32 %v3651, %v4449
        %v4451 = vpop.f32.mrf.mxu0
        %4452 = vmatprep.mubr.f32.mxu0 %v3669
        %4453 = vmatmul.mubr.f32.gmra.mxu0 %v3632
        %v4454 = vpop.f32.mrf.mxu0
        %v4455 = vadd.f32 %v3656, %v4454
        %v4456 = vpop.f32.mrf.mxu0
        %4457 = vdwg.mxu0
        %v4458 = vmax.f32 %v4440, 0.0
        %v4459 = vmax.f32 %v4445, 0.0
        %v4460 = vmax.f32 %v4450, 0.0
        %v4461 = vmax.f32 %v4455, 0.0
        %4466 = vrot.lane.b32.xlu0 %v3873, 7
        %v4467 = vpop.permute.xlu0 %4466
        %4468 = vrot.lane.b32.xlu0 %v3874, 7
        %v4469 = vpop.permute.xlu0 %4468
        %4470 = vrot.lane.b32.xlu0 %v3875, 7
        %v4471 = vpop.permute.xlu0 %4470
        %4472 = vrot.lane.b32.xlu0 %v3876, 7
        %v4473 = vpop.permute.xlu0 %4472
        %4482 = vrot.lane.b32.xlu0 %v3990, 14
        %v4483 = vpop.permute.xlu0 %4482
        %4484 = vrot.lane.b32.xlu0 %v3991, 14
        %v4485 = vpop.permute.xlu0 %4484
        %4486 = vrot.lane.b32.xlu0 %v3992, 14
        %v4487 = vpop.permute.xlu0 %4486
        %4488 = vrot.lane.b32.xlu0 %v3993, 14
        %v4489 = vpop.permute.xlu0 %4488
        %4498 = vrot.lane.b32.xlu0 %v4107, 21
        %v4499 = vpop.permute.xlu0 %4498
        %4500 = vrot.lane.b32.xlu0 %v4108, 21
        %v4501 = vpop.permute.xlu0 %4500
        %4502 = vrot.lane.b32.xlu0 %v4109, 21
        %v4503 = vpop.permute.xlu0 %4502
        %4504 = vrot.lane.b32.xlu0 %v4110, 21
        %v4505 = vpop.permute.xlu0 %4504
        %4514 = vrot.lane.b32.xlu0 %v4224, 28
        %v4515 = vpop.permute.xlu0 %4514
        %4516 = vrot.lane.b32.xlu0 %v4225, 28
        %v4517 = vpop.permute.xlu0 %4516
        %4518 = vrot.lane.b32.xlu0 %v4226, 28
        %v4519 = vpop.permute.xlu0 %4518
        %4520 = vrot.lane.b32.xlu0 %v4227, 28
        %v4521 = vpop.permute.xlu0 %4520
        %4530 = vrot.lane.b32.xlu0 %v4341, 35
        %v4531 = vpop.permute.xlu0 %4530
        %4532 = vrot.lane.b32.xlu0 %v4342, 35
        %v4533 = vpop.permute.xlu0 %4532
        %4534 = vrot.lane.b32.xlu0 %v4343, 35
        %v4535 = vpop.permute.xlu0 %4534
        %4536 = vrot.lane.b32.xlu0 %v4344, 35
        %v4537 = vpop.permute.xlu0 %4536
        %4546 = vrot.lane.b32.xlu0 %v4458, 42
        %v4547 = vpop.permute.xlu0 %4546
        %4548 = vrot.lane.b32.xlu0 %v4459, 42
        %v4549 = vpop.permute.xlu0 %4548
        %4550 = vrot.lane.b32.xlu0 %v4460, 42
        %v4551 = vpop.permute.xlu0 %4550
        %4552 = vrot.lane.b32.xlu0 %v4461, 42
        %v4553 = vpop.permute.xlu0 %4552
        %v4558 = vsel %vm1770, %v3756, %v4467
        %v4559 = vsel %vm1770, %v3757, %v4469
        %v4560 = vsel %vm1770, %v3758, %v4471
        %v4561 = vsel %vm1770, %v3759, %v4473
        %vm4562 = vcmask 113664
        %v4563 = vsel %vm4562, %v4558, %v4483
        %v4564 = vsel %vm4562, %v4559, %v4485
        %v4565 = vsel %vm4562, %v4560, %v4487
        %v4566 = vsel %vm4562, %v4561, %v4489
        %vm4567 = vcmask 171008
        %v4568 = vsel %vm4567, %v4563, %v4499
        %v4569 = vsel %vm4567, %v4564, %v4501
        %v4570 = vsel %vm4567, %v4565, %v4503
        %v4571 = vsel %vm4567, %v4566, %v4505
        %vm4572 = vcmask 228352
        %v4573 = vsel %vm4572, %v4568, %v4515
        %v4574 = vsel %vm4572, %v4569, %v4517
        %v4575 = vsel %vm4572, %v4570, %v4519
        %v4576 = vsel %vm4572, %v4571, %v4521
        %vm4577 = vcmask 285696
        %v4578 = vsel %vm4577, %v4573, %v4531
        %v4579 = vsel %vm4577, %v4574, %v4533
        %v4580 = vsel %vm4577, %v4575, %v4535
        %v4581 = vsel %vm4577, %v4576, %v4537
        %vm4582 = vcmask 343040
        %v4583 = vsel %vm4582, %v4578, %v4547
        %v4584 = vsel %vm4582, %v4579, %v4549
        %v4585 = vsel %vm4582, %v4580, %v4551
        %v4586 = vsel %vm4582, %v4581, %v4553
        %v4587 = vld [vmem:[%s6] sm:$0x1]
        %v4588 = vld [vmem:[%s5] sm:$0xff]
        %v4589 = vld [vmem:[%s5 + $0x8] sm:$0xff]
        %v4590 = vld [vmem:[%s5 + $0x10] sm:$0xff]
        %v4591 = vld [vmem:[%s5 + $0x18] sm:$0xff]
        %v4592 = vld [vmem:[%s5 + $0x20] sm:$0xff]
        %v4593 = vld [vmem:[%s5 + $0x28] sm:$0xff]
        %v4594 = vld [vmem:[%s5 + $0x30] sm:$0x1]
        %vm4595 = vcmask 400384
        %v4597 = vsel %vm4595, %v4583, 0
        %vm4599 = vcmask 1040384
        %v4601 = vsel %vm4599, %v4594, 0
        %4603 = vmatprep.subr.mxu0 0.0
        %4604 = vmatpush1.msra.mxu0 0.0
        %4605 = vmatprep.subr.mxu0 0.0
        %4606 = vmatpush1.msra.mxu0 0.0
        %4607 = vmatprep.subr.mxu0 0.0
        %4608 = vmatpush1.msra.mxu0 0.0
        %4609 = vmatprep.subr.mxu0 0.0
        %4610 = vmatpush1.msra.mxu0 0.0
        %4611 = vmatprep.subr.mxu0 0.0
        %4612 = vmatpush1.msra.mxu0 0.0
        %4613 = vmatprep.subr.mxu0 0.0
        %4614 = vmatpush1.msra.mxu0 0.0
        %4615 = vmatprep.subr.mxu0 0.0
        %4616 = vmatpush1.msra.mxu0 0.0
        %4617 = vmatprep.subr.mxu0 0.0
        %4618 = vmatpush1.msra.mxu0 0.0
        %4619 = vmatprep.subr.mxu0 0.0
        %4620 = vmatpush1.msra.mxu0 0.0
        %4621 = vmatprep.subr.mxu0 0.0
        %4622 = vmatpush1.msra.mxu0 %v4601
        %4623 = vmatprep.subr.mxu0 0.0
        %4624 = vmatpush1.msra.mxu0 %v4593
        %4625 = vmatprep.subr.mxu0 0.0
        %4626 = vmatpush1.msra.mxu0 %v4592
        %4627 = vmatprep.subr.mxu0 0.0
        %4628 = vmatpush1.msra.mxu0 %v4591
        %4629 = vmatprep.subr.mxu0 0.0
        %4630 = vmatpush1.msra.mxu0 %v4590
        %4631 = vmatprep.subr.mxu0 0.0
        %4632 = vmatpush1.msra.mxu0 %v4589
        %4633 = vmatprep.subr.mxu0 0.0
        %4634 = vmatpush1.msra.mxu0 %v4588
        %4635 = vmatprep.subr.mxu0 0.0
        %4636 = vmatpush2.msra.mxu0 0.0
        %4637 = vmatprep.subr.mxu0 0.0
        %4638 = vmatpush2.msra.mxu0 0.0
        %4639 = vmatprep.subr.mxu0 0.0
        %4640 = vmatpush2.msra.mxu0 0.0
        %4641 = vmatprep.subr.mxu0 0.0
        %4642 = vmatpush2.msra.mxu0 0.0
        %4643 = vmatprep.subr.mxu0 0.0
        %4644 = vmatpush2.msra.mxu0 0.0
        %4645 = vmatprep.subr.mxu0 0.0
        %4646 = vmatpush2.msra.mxu0 0.0
        %4647 = vmatprep.subr.mxu0 0.0
        %4648 = vmatpush2.msra.mxu0 0.0
        %4649 = vmatprep.subr.mxu0 0.0
        %4650 = vmatpush2.msra.mxu0 0.0
        %4651 = vmatprep.subr.mxu0 0.0
        %4652 = vmatpush2.msra.mxu0 0.0
        %4653 = vmatprep.subr.mxu0 0.0
        %4654 = vmatpush2.msra.mxu0 0.0
        %4655 = vmatprep.subr.mxu0 0.0
        %4656 = vmatpush2.msra.mxu0 0.0
        %4657 = vmatprep.subr.mxu0 0.0
        %4658 = vmatpush2.msra.mxu0 0.0
        %4659 = vmatprep.subr.mxu0 0.0
        %4660 = vmatpush2.msra.mxu0 0.0
        %4661 = vmatprep.subr.mxu0 0.0
        %4662 = vmatpush2.msra.mxu0 0.0
        %4663 = vmatprep.subr.mxu0 0.0
        %4664 = vmatpush2.msra.mxu0 0.0
        %4665 = vmatprep.subr.mxu0 0.0
        %4666 = vmatpush2.msra.mxu0 0.0
        %4667 = vmatprep.mubr.f32.mxu0 0.0
        %4668 = vmatmul.mubr.f32.gmra.mxu0 %v4597
        %v4669 = vpop.f32.mrf.mxu0
        %v4670 = vadd.f32 0.0, %v4669
        %v4671 = vpop.f32.mrf.mxu0
        %4672 = vdwg.mxu0
        %v4673 = vadd.f32 %v4587, %v4670
        %s4674 = scalar_lea.vmem %s5, 56
        %v4675 = vld [vmem:[%s4674] sm:$0xff]
        %v4676 = vld [vmem:[%s4674 + $0x8] sm:$0xff]
        %v4677 = vld [vmem:[%s4674 + $0x10] sm:$0xff]
        %v4678 = vld [vmem:[%s4674 + $0x18] sm:$0xff]
        %v4679 = vld [vmem:[%s4674 + $0x20] sm:$0xff]
        %v4680 = vld [vmem:[%s4674 + $0x28] sm:$0xff]
        %v4681 = vld [vmem:[%s4674 + $0x30] sm:$0x1]
        %v4682 = vrot.slane %v4583, 1
        %v4683 = vsel %vm4595, %v4682, 0
        %v4686 = vsel %vm4599, %v4681, 0
        %4688 = vmatprep.subr.mxu0 0.0
        %4689 = vmatpush1.msra.mxu0 0.0
        %4690 = vmatprep.subr.mxu0 0.0
        %4691 = vmatpush1.msra.mxu0 0.0
        %4692 = vmatprep.subr.mxu0 0.0
        %4693 = vmatpush1.msra.mxu0 0.0
        %4694 = vmatprep.subr.mxu0 0.0
        %4695 = vmatpush1.msra.mxu0 0.0
        %4696 = vmatprep.subr.mxu0 0.0
        %4697 = vmatpush1.msra.mxu0 0.0
        %4698 = vmatprep.subr.mxu0 0.0
        %4699 = vmatpush1.msra.mxu0 0.0
        %4700 = vmatprep.subr.mxu0 0.0
        %4701 = vmatpush1.msra.mxu0 0.0
        %4702 = vmatprep.subr.mxu0 0.0
        %4703 = vmatpush1.msra.mxu0 0.0
        %4704 = vmatprep.subr.mxu0 0.0
        %4705 = vmatpush1.msra.mxu0 0.0
        %4706 = vmatprep.subr.mxu0 0.0
        %4707 = vmatpush1.msra.mxu0 %v4686
        %4708 = vmatprep.subr.mxu0 0.0
        %4709 = vmatpush1.msra.mxu0 %v4680
        %4710 = vmatprep.subr.mxu0 0.0
        %4711 = vmatpush1.msra.mxu0 %v4679
        %4712 = vmatprep.subr.mxu0 0.0
        %4713 = vmatpush1.msra.mxu0 %v4678
        %4714 = vmatprep.subr.mxu0 0.0
        %4715 = vmatpush1.msra.mxu0 %v4677
        %4716 = vmatprep.subr.mxu0 0.0
        %4717 = vmatpush1.msra.mxu0 %v4676
        %4718 = vmatprep.subr.mxu0 0.0
        %4719 = vmatpush1.msra.mxu0 %v4675
        %4720 = vmatprep.subr.mxu0 0.0
        %4721 = vmatpush2.msra.mxu0 0.0
        %4722 = vmatprep.subr.mxu0 0.0
        %4723 = vmatpush2.msra.mxu0 0.0
        %4724 = vmatprep.subr.mxu0 0.0
        %4725 = vmatpush2.msra.mxu0 0.0
        %4726 = vmatprep.subr.mxu0 0.0
        %4727 = vmatpush2.msra.mxu0 0.0
        %4728 = vmatprep.subr.mxu0 0.0
        %4729 = vmatpush2.msra.mxu0 0.0
        %4730 = vmatprep.subr.mxu0 0.0
        %4731 = vmatpush2.msra.mxu0 0.0
        %4732 = vmatprep.subr.mxu0 0.0
        %4733 = vmatpush2.msra.mxu0 0.0
        %4734 = vmatprep.subr.mxu0 0.0
        %4735 = vmatpush2.msra.mxu0 0.0
        %4736 = vmatprep.subr.mxu0 0.0
        %4737 = vmatpush2.msra.mxu0 0.0
        %4738 = vmatprep.subr.mxu0 0.0
        %4739 = vmatpush2.msra.mxu0 0.0
        %4740 = vmatprep.subr.mxu0 0.0
        %4741 = vmatpush2.msra.mxu0 0.0
        %4742 = vmatprep.subr.mxu0 0.0
        %4743 = vmatpush2.msra.mxu0 0.0
        %4744 = vmatprep.subr.mxu0 0.0
        %4745 = vmatpush2.msra.mxu0 0.0
        %4746 = vmatprep.subr.mxu0 0.0
        %4747 = vmatpush2.msra.mxu0 0.0
        %4748 = vmatprep.subr.mxu0 0.0
        %4749 = vmatpush2.msra.mxu0 0.0
        %4750 = vmatprep.subr.mxu0 0.0
        %4751 = vmatpush2.msra.mxu0 0.0
        %4752 = vmatprep.mubr.f32.mxu0 0.0
        %4753 = vmatmul.mubr.f32.gmra.mxu0 %v4683
        %v4754 = vpop.f32.mrf.mxu0
        %v4755 = vadd.f32 0.0, %v4754
        %v4756 = vpop.f32.mrf.mxu0
        %4757 = vdwg.mxu0
        %v4758 = vadd.f32 %v4673, %v4755
        %s4759 = scalar_lea.vmem %s5, 112
        %v4760 = vld [vmem:[%s4759] sm:$0xff]
        %v4761 = vld [vmem:[%s4759 + $0x8] sm:$0xff]
        %v4762 = vld [vmem:[%s4759 + $0x10] sm:$0xff]
        %v4763 = vld [vmem:[%s4759 + $0x18] sm:$0xff]
        %v4764 = vld [vmem:[%s4759 + $0x20] sm:$0xff]
        %v4765 = vld [vmem:[%s4759 + $0x28] sm:$0xff]
        %v4766 = vld [vmem:[%s4759 + $0x30] sm:$0x1]
        %v4767 = vrot.slane %v4583, 2
        %v4768 = vsel %vm4595, %v4767, 0
        %v4771 = vsel %vm4599, %v4766, 0
        %4773 = vmatprep.subr.mxu0 0.0
        %4774 = vmatpush1.msra.mxu0 0.0
        %4775 = vmatprep.subr.mxu0 0.0
        %4776 = vmatpush1.msra.mxu0 0.0
        %4777 = vmatprep.subr.mxu0 0.0
        %4778 = vmatpush1.msra.mxu0 0.0
        %4779 = vmatprep.subr.mxu0 0.0
        %4780 = vmatpush1.msra.mxu0 0.0
        %4781 = vmatprep.subr.mxu0 0.0
        %4782 = vmatpush1.msra.mxu0 0.0
        %4783 = vmatprep.subr.mxu0 0.0
        %4784 = vmatpush1.msra.mxu0 0.0
        %4785 = vmatprep.subr.mxu0 0.0
        %4786 = vmatpush1.msra.mxu0 0.0
        %4787 = vmatprep.subr.mxu0 0.0
        %4788 = vmatpush1.msra.mxu0 0.0
        %4789 = vmatprep.subr.mxu0 0.0
        %4790 = vmatpush1.msra.mxu0 0.0
        %4791 = vmatprep.subr.mxu0 0.0
        %4792 = vmatpush1.msra.mxu0 %v4771
        %4793 = vmatprep.subr.mxu0 0.0
        %4794 = vmatpush1.msra.mxu0 %v4765
        %4795 = vmatprep.subr.mxu0 0.0
        %4796 = vmatpush1.msra.mxu0 %v4764
        %4797 = vmatprep.subr.mxu0 0.0
        %4798 = vmatpush1.msra.mxu0 %v4763
        %4799 = vmatprep.subr.mxu0 0.0
        %4800 = vmatpush1.msra.mxu0 %v4762
        %4801 = vmatprep.subr.mxu0 0.0
        %4802 = vmatpush1.msra.mxu0 %v4761
        %4803 = vmatprep.subr.mxu0 0.0
        %4804 = vmatpush1.msra.mxu0 %v4760
        %4805 = vmatprep.subr.mxu0 0.0
        %4806 = vmatpush2.msra.mxu0 0.0
        %4807 = vmatprep.subr.mxu0 0.0
        %4808 = vmatpush2.msra.mxu0 0.0
        %4809 = vmatprep.subr.mxu0 0.0
        %4810 = vmatpush2.msra.mxu0 0.0
        %4811 = vmatprep.subr.mxu0 0.0
        %4812 = vmatpush2.msra.mxu0 0.0
        %4813 = vmatprep.subr.mxu0 0.0
        %4814 = vmatpush2.msra.mxu0 0.0
        %4815 = vmatprep.subr.mxu0 0.0
        %4816 = vmatpush2.msra.mxu0 0.0
        %4817 = vmatprep.subr.mxu0 0.0
        %4818 = vmatpush2.msra.mxu0 0.0
        %4819 = vmatprep.subr.mxu0 0.0
        %4820 = vmatpush2.msra.mxu0 0.0
        %4821 = vmatprep.subr.mxu0 0.0
        %4822 = vmatpush2.msra.mxu0 0.0
        %4823 = vmatprep.subr.mxu0 0.0
        %4824 = vmatpush2.msra.mxu0 0.0
        %4825 = vmatprep.subr.mxu0 0.0
        %4826 = vmatpush2.msra.mxu0 0.0
        %4827 = vmatprep.subr.mxu0 0.0
        %4828 = vmatpush2.msra.mxu0 0.0
        %4829 = vmatprep.subr.mxu0 0.0
        %4830 = vmatpush2.msra.mxu0 0.0
        %4831 = vmatprep.subr.mxu0 0.0
        %4832 = vmatpush2.msra.mxu0 0.0
        %4833 = vmatprep.subr.mxu0 0.0
        %4834 = vmatpush2.msra.mxu0 0.0
        %4835 = vmatprep.subr.mxu0 0.0
        %4836 = vmatpush2.msra.mxu0 0.0
        %4837 = vmatprep.mubr.f32.mxu0 0.0
        %4838 = vmatmul.mubr.f32.gmra.mxu0 %v4768
        %v4839 = vpop.f32.mrf.mxu0
        %v4840 = vadd.f32 0.0, %v4839
        %v4841 = vpop.f32.mrf.mxu0
        %4842 = vdwg.mxu0
        %v4843 = vadd.f32 %v4758, %v4840
        %s4844 = scalar_lea.vmem %s5, 168
        %v4845 = vld [vmem:[%s4844] sm:$0xff]
        %v4846 = vld [vmem:[%s4844 + $0x8] sm:$0xff]
        %v4847 = vld [vmem:[%s4844 + $0x10] sm:$0xff]
        %v4848 = vld [vmem:[%s4844 + $0x18] sm:$0xff]
        %v4849 = vld [vmem:[%s4844 + $0x20] sm:$0xff]
        %v4850 = vld [vmem:[%s4844 + $0x28] sm:$0xff]
        %v4851 = vld [vmem:[%s4844 + $0x30] sm:$0x1]
        %v4852 = vrot.slane %v4583, 3
        %v4853 = vsel %vm4595, %v4852, 0
        %v4856 = vsel %vm4599, %v4851, 0
        %4858 = vmatprep.subr.mxu0 0.0
        %4859 = vmatpush1.msra.mxu0 0.0
        %4860 = vmatprep.subr.mxu0 0.0
        %4861 = vmatpush1.msra.mxu0 0.0
        %4862 = vmatprep.subr.mxu0 0.0
        %4863 = vmatpush1.msra.mxu0 0.0
        %4864 = vmatprep.subr.mxu0 0.0
        %4865 = vmatpush1.msra.mxu0 0.0
        %4866 = vmatprep.subr.mxu0 0.0
        %4867 = vmatpush1.msra.mxu0 0.0
        %4868 = vmatprep.subr.mxu0 0.0
        %4869 = vmatpush1.msra.mxu0 0.0
        %4870 = vmatprep.subr.mxu0 0.0
        %4871 = vmatpush1.msra.mxu0 0.0
        %4872 = vmatprep.subr.mxu0 0.0
        %4873 = vmatpush1.msra.mxu0 0.0
        %4874 = vmatprep.subr.mxu0 0.0
        %4875 = vmatpush1.msra.mxu0 0.0
        %4876 = vmatprep.subr.mxu0 0.0
        %4877 = vmatpush1.msra.mxu0 %v4856
        %4878 = vmatprep.subr.mxu0 0.0
        %4879 = vmatpush1.msra.mxu0 %v4850
        %4880 = vmatprep.subr.mxu0 0.0
        %4881 = vmatpush1.msra.mxu0 %v4849
        %4882 = vmatprep.subr.mxu0 0.0
        %4883 = vmatpush1.msra.mxu0 %v4848
        %4884 = vmatprep.subr.mxu0 0.0
        %4885 = vmatpush1.msra.mxu0 %v4847
        %4886 = vmatprep.subr.mxu0 0.0
        %4887 = vmatpush1.msra.mxu0 %v4846
        %4888 = vmatprep.subr.mxu0 0.0
        %4889 = vmatpush1.msra.mxu0 %v4845
        %4890 = vmatprep.subr.mxu0 0.0
        %4891 = vmatpush2.msra.mxu0 0.0
        %4892 = vmatprep.subr.mxu0 0.0
        %4893 = vmatpush2.msra.mxu0 0.0
        %4894 = vmatprep.subr.mxu0 0.0
        %4895 = vmatpush2.msra.mxu0 0.0
        %4896 = vmatprep.subr.mxu0 0.0
        %4897 = vmatpush2.msra.mxu0 0.0
        %4898 = vmatprep.subr.mxu0 0.0
        %4899 = vmatpush2.msra.mxu0 0.0
        %4900 = vmatprep.subr.mxu0 0.0
        %4901 = vmatpush2.msra.mxu0 0.0
        %4902 = vmatprep.subr.mxu0 0.0
        %4903 = vmatpush2.msra.mxu0 0.0
        %4904 = vmatprep.subr.mxu0 0.0
        %4905 = vmatpush2.msra.mxu0 0.0
        %4906 = vmatprep.subr.mxu0 0.0
        %4907 = vmatpush2.msra.mxu0 0.0
        %4908 = vmatprep.subr.mxu0 0.0
        %4909 = vmatpush2.msra.mxu0 0.0
        %4910 = vmatprep.subr.mxu0 0.0
        %4911 = vmatpush2.msra.mxu0 0.0
        %4912 = vmatprep.subr.mxu0 0.0
        %4913 = vmatpush2.msra.mxu0 0.0
        %4914 = vmatprep.subr.mxu0 0.0
        %4915 = vmatpush2.msra.mxu0 0.0
        %4916 = vmatprep.subr.mxu0 0.0
        %4917 = vmatpush2.msra.mxu0 0.0
        %4918 = vmatprep.subr.mxu0 0.0
        %4919 = vmatpush2.msra.mxu0 0.0
        %4920 = vmatprep.subr.mxu0 0.0
        %4921 = vmatpush2.msra.mxu0 0.0
        %4922 = vmatprep.mubr.f32.mxu0 0.0
        %4923 = vmatmul.mubr.f32.gmra.mxu0 %v4853
        %v4924 = vpop.f32.mrf.mxu0
        %v4925 = vadd.f32 0.0, %v4924
        %v4926 = vpop.f32.mrf.mxu0
        %4927 = vdwg.mxu0
        %v4928 = vadd.f32 %v4843, %v4925
        %s4929 = scalar_lea.vmem %s5, 224
        %v4930 = vld [vmem:[%s4929] sm:$0xff]
        %v4931 = vld [vmem:[%s4929 + $0x8] sm:$0xff]
        %v4932 = vld [vmem:[%s4929 + $0x10] sm:$0xff]
        %v4933 = vld [vmem:[%s4929 + $0x18] sm:$0xff]
        %v4934 = vld [vmem:[%s4929 + $0x20] sm:$0xff]
        %v4935 = vld [vmem:[%s4929 + $0x28] sm:$0xff]
        %v4936 = vld [vmem:[%s4929 + $0x30] sm:$0x1]
        %v4937 = vrot.slane %v4583, 4
        %v4938 = vsel %vm4595, %v4937, 0
        %v4941 = vsel %vm4599, %v4936, 0
        %4943 = vmatprep.subr.mxu0 0.0
        %4944 = vmatpush1.msra.mxu0 0.0
        %4945 = vmatprep.subr.mxu0 0.0
        %4946 = vmatpush1.msra.mxu0 0.0
        %4947 = vmatprep.subr.mxu0 0.0
        %4948 = vmatpush1.msra.mxu0 0.0
        %4949 = vmatprep.subr.mxu0 0.0
        %4950 = vmatpush1.msra.mxu0 0.0
        %4951 = vmatprep.subr.mxu0 0.0
        %4952 = vmatpush1.msra.mxu0 0.0
        %4953 = vmatprep.subr.mxu0 0.0
        %4954 = vmatpush1.msra.mxu0 0.0
        %4955 = vmatprep.subr.mxu0 0.0
        %4956 = vmatpush1.msra.mxu0 0.0
        %4957 = vmatprep.subr.mxu0 0.0
        %4958 = vmatpush1.msra.mxu0 0.0
        %4959 = vmatprep.subr.mxu0 0.0
        %4960 = vmatpush1.msra.mxu0 0.0
        %4961 = vmatprep.subr.mxu0 0.0
        %4962 = vmatpush1.msra.mxu0 %v4941
        %4963 = vmatprep.subr.mxu0 0.0
        %4964 = vmatpush1.msra.mxu0 %v4935
        %4965 = vmatprep.subr.mxu0 0.0
        %4966 = vmatpush1.msra.mxu0 %v4934
        %4967 = vmatprep.subr.mxu0 0.0
        %4968 = vmatpush1.msra.mxu0 %v4933
        %4969 = vmatprep.subr.mxu0 0.0
        %4970 = vmatpush1.msra.mxu0 %v4932
        %4971 = vmatprep.subr.mxu0 0.0
        %4972 = vmatpush1.msra.mxu0 %v4931
        %4973 = vmatprep.subr.mxu0 0.0
        %4974 = vmatpush1.msra.mxu0 %v4930
        %4975 = vmatprep.subr.mxu0 0.0
        %4976 = vmatpush2.msra.mxu0 0.0
        %4977 = vmatprep.subr.mxu0 0.0
        %4978 = vmatpush2.msra.mxu0 0.0
        %4979 = vmatprep.subr.mxu0 0.0
        %4980 = vmatpush2.msra.mxu0 0.0
        %4981 = vmatprep.subr.mxu0 0.0
        %4982 = vmatpush2.msra.mxu0 0.0
        %4983 = vmatprep.subr.mxu0 0.0
        %4984 = vmatpush2.msra.mxu0 0.0
        %4985 = vmatprep.subr.mxu0 0.0
        %4986 = vmatpush2.msra.mxu0 0.0
        %4987 = vmatprep.subr.mxu0 0.0
        %4988 = vmatpush2.msra.mxu0 0.0
        %4989 = vmatprep.subr.mxu0 0.0
        %4990 = vmatpush2.msra.mxu0 0.0
        %4991 = vmatprep.subr.mxu0 0.0
        %4992 = vmatpush2.msra.mxu0 0.0
        %4993 = vmatprep.subr.mxu0 0.0
        %4994 = vmatpush2.msra.mxu0 0.0
        %4995 = vmatprep.subr.mxu0 0.0
        %4996 = vmatpush2.msra.mxu0 0.0
        %4997 = vmatprep.subr.mxu0 0.0
        %4998 = vmatpush2.msra.mxu0 0.0
        %4999 = vmatprep.subr.mxu0 0.0
        %5000 = vmatpush2.msra.mxu0 0.0
        %5001 = vmatprep.subr.mxu0 0.0
        %5002 = vmatpush2.msra.mxu0 0.0
        %5003 = vmatprep.subr.mxu0 0.0
        %5004 = vmatpush2.msra.mxu0 0.0
        %5005 = vmatprep.subr.mxu0 0.0
        %5006 = vmatpush2.msra.mxu0 0.0
        %5007 = vmatprep.mubr.f32.mxu0 0.0
        %5008 = vmatmul.mubr.f32.gmra.mxu0 %v4938
        %v5009 = vpop.f32.mrf.mxu0
        %v5010 = vadd.f32 0.0, %v5009
        %v5011 = vpop.f32.mrf.mxu0
        %5012 = vdwg.mxu0
        %v5013 = vadd.f32 %v4928, %v5010
        %s5014 = scalar_lea.vmem %s5, 280
        %v5015 = vld [vmem:[%s5014] sm:$0xff]
        %v5016 = vld [vmem:[%s5014 + $0x8] sm:$0xff]
        %v5017 = vld [vmem:[%s5014 + $0x10] sm:$0xff]
        %v5018 = vld [vmem:[%s5014 + $0x18] sm:$0xff]
        %v5019 = vld [vmem:[%s5014 + $0x20] sm:$0xff]
        %v5020 = vld [vmem:[%s5014 + $0x28] sm:$0xff]
        %v5021 = vld [vmem:[%s5014 + $0x30] sm:$0x1]
        %v5022 = vrot.slane %v4583, 5
        %v5023 = vsel %vm4595, %v5022, 0
        %v5026 = vsel %vm4599, %v5021, 0
        %5028 = vmatprep.subr.mxu0 0.0
        %5029 = vmatpush1.msra.mxu0 0.0
        %5030 = vmatprep.subr.mxu0 0.0
        %5031 = vmatpush1.msra.mxu0 0.0
        %5032 = vmatprep.subr.mxu0 0.0
        %5033 = vmatpush1.msra.mxu0 0.0
        %5034 = vmatprep.subr.mxu0 0.0
        %5035 = vmatpush1.msra.mxu0 0.0
        %5036 = vmatprep.subr.mxu0 0.0
        %5037 = vmatpush1.msra.mxu0 0.0
        %5038 = vmatprep.subr.mxu0 0.0
        %5039 = vmatpush1.msra.mxu0 0.0
        %5040 = vmatprep.subr.mxu0 0.0
        %5041 = vmatpush1.msra.mxu0 0.0
        %5042 = vmatprep.subr.mxu0 0.0
        %5043 = vmatpush1.msra.mxu0 0.0
        %5044 = vmatprep.subr.mxu0 0.0
        %5045 = vmatpush1.msra.mxu0 0.0
        %5046 = vmatprep.subr.mxu0 0.0
        %5047 = vmatpush1.msra.mxu0 %v5026
        %5048 = vmatprep.subr.mxu0 0.0
        %5049 = vmatpush1.msra.mxu0 %v5020
        %5050 = vmatprep.subr.mxu0 0.0
        %5051 = vmatpush1.msra.mxu0 %v5019
        %5052 = vmatprep.subr.mxu0 0.0
        %5053 = vmatpush1.msra.mxu0 %v5018
        %5054 = vmatprep.subr.mxu0 0.0
        %5055 = vmatpush1.msra.mxu0 %v5017
        %5056 = vmatprep.subr.mxu0 0.0
        %5057 = vmatpush1.msra.mxu0 %v5016
        %5058 = vmatprep.subr.mxu0 0.0
        %5059 = vmatpush1.msra.mxu0 %v5015
        %5060 = vmatprep.subr.mxu0 0.0
        %5061 = vmatpush2.msra.mxu0 0.0
        %5062 = vmatprep.subr.mxu0 0.0
        %5063 = vmatpush2.msra.mxu0 0.0
        %5064 = vmatprep.subr.mxu0 0.0
        %5065 = vmatpush2.msra.mxu0 0.0
        %5066 = vmatprep.subr.mxu0 0.0
        %5067 = vmatpush2.msra.mxu0 0.0
        %5068 = vmatprep.subr.mxu0 0.0
        %5069 = vmatpush2.msra.mxu0 0.0
        %5070 = vmatprep.subr.mxu0 0.0
        %5071 = vmatpush2.msra.mxu0 0.0
        %5072 = vmatprep.subr.mxu0 0.0
        %5073 = vmatpush2.msra.mxu0 0.0
        %5074 = vmatprep.subr.mxu0 0.0
        %5075 = vmatpush2.msra.mxu0 0.0
        %5076 = vmatprep.subr.mxu0 0.0
        %5077 = vmatpush2.msra.mxu0 0.0
        %5078 = vmatprep.subr.mxu0 0.0
        %5079 = vmatpush2.msra.mxu0 0.0
        %5080 = vmatprep.subr.mxu0 0.0
        %5081 = vmatpush2.msra.mxu0 0.0
        %5082 = vmatprep.subr.mxu0 0.0
        %5083 = vmatpush2.msra.mxu0 0.0
        %5084 = vmatprep.subr.mxu0 0.0
        %5085 = vmatpush2.msra.mxu0 0.0
        %5086 = vmatprep.subr.mxu0 0.0
        %5087 = vmatpush2.msra.mxu0 0.0
        %5088 = vmatprep.subr.mxu0 0.0
        %5089 = vmatpush2.msra.mxu0 0.0
        %5090 = vmatprep.subr.mxu0 0.0
        %5091 = vmatpush2.msra.mxu0 0.0
        %5092 = vmatprep.mubr.f32.mxu0 0.0
        %5093 = vmatmul.mubr.f32.gmra.mxu0 %v5023
        %v5094 = vpop.f32.mrf.mxu0
        %v5095 = vadd.f32 0.0, %v5094
        %v5096 = vpop.f32.mrf.mxu0
        %5097 = vdwg.mxu0
        %v5098 = vadd.f32 %v5013, %v5095
        %s5099 = scalar_lea.vmem %s5, 336
        %v5100 = vld [vmem:[%s5099] sm:$0xff]
        %v5101 = vld [vmem:[%s5099 + $0x8] sm:$0xff]
        %v5102 = vld [vmem:[%s5099 + $0x10] sm:$0xff]
        %v5103 = vld [vmem:[%s5099 + $0x18] sm:$0xff]
        %v5104 = vld [vmem:[%s5099 + $0x20] sm:$0xff]
        %v5105 = vld [vmem:[%s5099 + $0x28] sm:$0xff]
        %v5106 = vld [vmem:[%s5099 + $0x30] sm:$0x1]
        %v5107 = vrot.slane %v4583, 6
        %v5108 = vsel %vm4595, %v5107, 0
        %v5111 = vsel %vm4599, %v5106, 0
        %5113 = vmatprep.subr.mxu0 0.0
        %5114 = vmatpush1.msra.mxu0 0.0
        %5115 = vmatprep.subr.mxu0 0.0
        %5116 = vmatpush1.msra.mxu0 0.0
        %5117 = vmatprep.subr.mxu0 0.0
        %5118 = vmatpush1.msra.mxu0 0.0
        %5119 = vmatprep.subr.mxu0 0.0
        %5120 = vmatpush1.msra.mxu0 0.0
        %5121 = vmatprep.subr.mxu0 0.0
        %5122 = vmatpush1.msra.mxu0 0.0
        %5123 = vmatprep.subr.mxu0 0.0
        %5124 = vmatpush1.msra.mxu0 0.0
        %5125 = vmatprep.subr.mxu0 0.0
        %5126 = vmatpush1.msra.mxu0 0.0
        %5127 = vmatprep.subr.mxu0 0.0
        %5128 = vmatpush1.msra.mxu0 0.0
        %5129 = vmatprep.subr.mxu0 0.0
        %5130 = vmatpush1.msra.mxu0 0.0
        %5131 = vmatprep.subr.mxu0 0.0
        %5132 = vmatpush1.msra.mxu0 %v5111
        %5133 = vmatprep.subr.mxu0 0.0
        %5134 = vmatpush1.msra.mxu0 %v5105
        %5135 = vmatprep.subr.mxu0 0.0
        %5136 = vmatpush1.msra.mxu0 %v5104
        %5137 = vmatprep.subr.mxu0 0.0
        %5138 = vmatpush1.msra.mxu0 %v5103
        %5139 = vmatprep.subr.mxu0 0.0
        %5140 = vmatpush1.msra.mxu0 %v5102
        %5141 = vmatprep.subr.mxu0 0.0
        %5142 = vmatpush1.msra.mxu0 %v5101
        %5143 = vmatprep.subr.mxu0 0.0
        %5144 = vmatpush1.msra.mxu0 %v5100
        %5145 = vmatprep.subr.mxu0 0.0
        %5146 = vmatpush2.msra.mxu0 0.0
        %5147 = vmatprep.subr.mxu0 0.0
        %5148 = vmatpush2.msra.mxu0 0.0
        %5149 = vmatprep.subr.mxu0 0.0
        %5150 = vmatpush2.msra.mxu0 0.0
        %5151 = vmatprep.subr.mxu0 0.0
        %5152 = vmatpush2.msra.mxu0 0.0
        %5153 = vmatprep.subr.mxu0 0.0
        %5154 = vmatpush2.msra.mxu0 0.0
        %5155 = vmatprep.subr.mxu0 0.0
        %5156 = vmatpush2.msra.mxu0 0.0
        %5157 = vmatprep.subr.mxu0 0.0
        %5158 = vmatpush2.msra.mxu0 0.0
        %5159 = vmatprep.subr.mxu0 0.0
        %5160 = vmatpush2.msra.mxu0 0.0
        %5161 = vmatprep.subr.mxu0 0.0
        %5162 = vmatpush2.msra.mxu0 0.0
        %5163 = vmatprep.subr.mxu0 0.0
        %5164 = vmatpush2.msra.mxu0 0.0
        %5165 = vmatprep.subr.mxu0 0.0
        %5166 = vmatpush2.msra.mxu0 0.0
        %5167 = vmatprep.subr.mxu0 0.0
        %5168 = vmatpush2.msra.mxu0 0.0
        %5169 = vmatprep.subr.mxu0 0.0
        %5170 = vmatpush2.msra.mxu0 0.0
        %5171 = vmatprep.subr.mxu0 0.0
        %5172 = vmatpush2.msra.mxu0 0.0
        %5173 = vmatprep.subr.mxu0 0.0
        %5174 = vmatpush2.msra.mxu0 0.0
        %5175 = vmatprep.subr.mxu0 0.0
        %5176 = vmatpush2.msra.mxu0 0.0
        %5177 = vmatprep.mubr.f32.mxu0 0.0
        %5178 = vmatmul.mubr.f32.gmra.mxu0 %v5108
        %v5179 = vpop.f32.mrf.mxu0
        %v5180 = vadd.f32 0.0, %v5179
        %v5181 = vpop.f32.mrf.mxu0
        %5182 = vdwg.mxu0
        %v5183 = vadd.f32 %v5098, %v5180
        %s5184 = scalar_lea.vmem %s5, 392
        %v5185 = vld [vmem:[%s5184] sm:$0xff]
        %v5186 = vld [vmem:[%s5184 + $0x8] sm:$0xff]
        %v5187 = vld [vmem:[%s5184 + $0x10] sm:$0xff]
        %v5188 = vld [vmem:[%s5184 + $0x18] sm:$0xff]
        %v5189 = vld [vmem:[%s5184 + $0x20] sm:$0xff]
        %v5190 = vld [vmem:[%s5184 + $0x28] sm:$0xff]
        %v5191 = vld [vmem:[%s5184 + $0x30] sm:$0x1]
        %v5192 = vrot.slane %v4583, 7
        %v5193 = vsel %vm4595, %v5192, 0
        %v5196 = vsel %vm4599, %v5191, 0
        %5198 = vmatprep.subr.mxu0 0.0
        %5199 = vmatpush1.msra.mxu0 0.0
        %5200 = vmatprep.subr.mxu0 0.0
        %5201 = vmatpush1.msra.mxu0 0.0
        %5202 = vmatprep.subr.mxu0 0.0
        %5203 = vmatpush1.msra.mxu0 0.0
        %5204 = vmatprep.subr.mxu0 0.0
        %5205 = vmatpush1.msra.mxu0 0.0
        %5206 = vmatprep.subr.mxu0 0.0
        %5207 = vmatpush1.msra.mxu0 0.0
        %5208 = vmatprep.subr.mxu0 0.0
        %5209 = vmatpush1.msra.mxu0 0.0
        %5210 = vmatprep.subr.mxu0 0.0
        %5211 = vmatpush1.msra.mxu0 0.0
        %5212 = vmatprep.subr.mxu0 0.0
        %5213 = vmatpush1.msra.mxu0 0.0
        %5214 = vmatprep.subr.mxu0 0.0
        %5215 = vmatpush1.msra.mxu0 0.0
        %5216 = vmatprep.subr.mxu0 0.0
        %5217 = vmatpush1.msra.mxu0 %v5196
        %5218 = vmatprep.subr.mxu0 0.0
        %5219 = vmatpush1.msra.mxu0 %v5190
        %5220 = vmatprep.subr.mxu0 0.0
        %5221 = vmatpush1.msra.mxu0 %v5189
        %5222 = vmatprep.subr.mxu0 0.0
        %5223 = vmatpush1.msra.mxu0 %v5188
        %5224 = vmatprep.subr.mxu0 0.0
        %5225 = vmatpush1.msra.mxu0 %v5187
        %5226 = vmatprep.subr.mxu0 0.0
        %5227 = vmatpush1.msra.mxu0 %v5186
        %5228 = vmatprep.subr.mxu0 0.0
        %5229 = vmatpush1.msra.mxu0 %v5185
        %5230 = vmatprep.subr.mxu0 0.0
        %5231 = vmatpush2.msra.mxu0 0.0
        %5232 = vmatprep.subr.mxu0 0.0
        %5233 = vmatpush2.msra.mxu0 0.0
        %5234 = vmatprep.subr.mxu0 0.0
        %5235 = vmatpush2.msra.mxu0 0.0
        %5236 = vmatprep.subr.mxu0 0.0
        %5237 = vmatpush2.msra.mxu0 0.0
        %5238 = vmatprep.subr.mxu0 0.0
        %5239 = vmatpush2.msra.mxu0 0.0
        %5240 = vmatprep.subr.mxu0 0.0
        %5241 = vmatpush2.msra.mxu0 0.0
        %5242 = vmatprep.subr.mxu0 0.0
        %5243 = vmatpush2.msra.mxu0 0.0
        %5244 = vmatprep.subr.mxu0 0.0
        %5245 = vmatpush2.msra.mxu0 0.0
        %5246 = vmatprep.subr.mxu0 0.0
        %5247 = vmatpush2.msra.mxu0 0.0
        %5248 = vmatprep.subr.mxu0 0.0
        %5249 = vmatpush2.msra.mxu0 0.0
        %5250 = vmatprep.subr.mxu0 0.0
        %5251 = vmatpush2.msra.mxu0 0.0
        %5252 = vmatprep.subr.mxu0 0.0
        %5253 = vmatpush2.msra.mxu0 0.0
        %5254 = vmatprep.subr.mxu0 0.0
        %5255 = vmatpush2.msra.mxu0 0.0
        %5256 = vmatprep.subr.mxu0 0.0
        %5257 = vmatpush2.msra.mxu0 0.0
        %5258 = vmatprep.subr.mxu0 0.0
        %5259 = vmatpush2.msra.mxu0 0.0
        %5260 = vmatprep.subr.mxu0 0.0
        %5261 = vmatpush2.msra.mxu0 0.0
        %5262 = vmatprep.mubr.f32.mxu0 0.0
        %5263 = vmatmul.mubr.f32.gmra.mxu0 %v5193
        %v5264 = vpop.f32.mrf.mxu0
        %v5265 = vadd.f32 0.0, %v5264
        %v5266 = vpop.f32.mrf.mxu0
        %5267 = vdwg.mxu0
        %v5268 = vadd.f32 %v5183, %v5265
        %s5269 = scalar_lea.vmem %s5, 448
        %v5270 = vld [vmem:[%s5269] sm:$0xff]
        %v5271 = vld [vmem:[%s5269 + $0x8] sm:$0xff]
        %v5272 = vld [vmem:[%s5269 + $0x10] sm:$0xff]
        %v5273 = vld [vmem:[%s5269 + $0x18] sm:$0xff]
        %v5274 = vld [vmem:[%s5269 + $0x20] sm:$0xff]
        %v5275 = vld [vmem:[%s5269 + $0x28] sm:$0xff]
        %v5276 = vld [vmem:[%s5269 + $0x30] sm:$0x1]
        %v5278 = vsel %vm4595, %v4584, 0
        %v5281 = vsel %vm4599, %v5276, 0
        %5283 = vmatprep.subr.mxu0 0.0
        %5284 = vmatpush1.msra.mxu0 0.0
        %5285 = vmatprep.subr.mxu0 0.0
        %5286 = vmatpush1.msra.mxu0 0.0
        %5287 = vmatprep.subr.mxu0 0.0
        %5288 = vmatpush1.msra.mxu0 0.0
        %5289 = vmatprep.subr.mxu0 0.0
        %5290 = vmatpush1.msra.mxu0 0.0
        %5291 = vmatprep.subr.mxu0 0.0
        %5292 = vmatpush1.msra.mxu0 0.0
        %5293 = vmatprep.subr.mxu0 0.0
        %5294 = vmatpush1.msra.mxu0 0.0
        %5295 = vmatprep.subr.mxu0 0.0
        %5296 = vmatpush1.msra.mxu0 0.0
        %5297 = vmatprep.subr.mxu0 0.0
        %5298 = vmatpush1.msra.mxu0 0.0
        %5299 = vmatprep.subr.mxu0 0.0
        %5300 = vmatpush1.msra.mxu0 0.0
        %5301 = vmatprep.subr.mxu0 0.0
        %5302 = vmatpush1.msra.mxu0 %v5281
        %5303 = vmatprep.subr.mxu0 0.0
        %5304 = vmatpush1.msra.mxu0 %v5275
        %5305 = vmatprep.subr.mxu0 0.0
        %5306 = vmatpush1.msra.mxu0 %v5274
        %5307 = vmatprep.subr.mxu0 0.0
        %5308 = vmatpush1.msra.mxu0 %v5273
        %5309 = vmatprep.subr.mxu0 0.0
        %5310 = vmatpush1.msra.mxu0 %v5272
        %5311 = vmatprep.subr.mxu0 0.0
        %5312 = vmatpush1.msra.mxu0 %v5271
        %5313 = vmatprep.subr.mxu0 0.0
        %5314 = vmatpush1.msra.mxu0 %v5270
        %5315 = vmatprep.subr.mxu0 0.0
        %5316 = vmatpush2.msra.mxu0 0.0
        %5317 = vmatprep.subr.mxu0 0.0
        %5318 = vmatpush2.msra.mxu0 0.0
        %5319 = vmatprep.subr.mxu0 0.0
        %5320 = vmatpush2.msra.mxu0 0.0
        %5321 = vmatprep.subr.mxu0 0.0
        %5322 = vmatpush2.msra.mxu0 0.0
        %5323 = vmatprep.subr.mxu0 0.0
        %5324 = vmatpush2.msra.mxu0 0.0
        %5325 = vmatprep.subr.mxu0 0.0
        %5326 = vmatpush2.msra.mxu0 0.0
        %5327 = vmatprep.subr.mxu0 0.0
        %5328 = vmatpush2.msra.mxu0 0.0
        %5329 = vmatprep.subr.mxu0 0.0
        %5330 = vmatpush2.msra.mxu0 0.0
        %5331 = vmatprep.subr.mxu0 0.0
        %5332 = vmatpush2.msra.mxu0 0.0
        %5333 = vmatprep.subr.mxu0 0.0
        %5334 = vmatpush2.msra.mxu0 0.0
        %5335 = vmatprep.subr.mxu0 0.0
        %5336 = vmatpush2.msra.mxu0 0.0
        %5337 = vmatprep.subr.mxu0 0.0
        %5338 = vmatpush2.msra.mxu0 0.0
        %5339 = vmatprep.subr.mxu0 0.0
        %5340 = vmatpush2.msra.mxu0 0.0
        %5341 = vmatprep.subr.mxu0 0.0
        %5342 = vmatpush2.msra.mxu0 0.0
        %5343 = vmatprep.subr.mxu0 0.0
        %5344 = vmatpush2.msra.mxu0 0.0
        %5345 = vmatprep.subr.mxu0 0.0
        %5346 = vmatpush2.msra.mxu0 0.0
        %5347 = vmatprep.mubr.f32.mxu0 0.0
        %5348 = vmatmul.mubr.f32.gmra.mxu0 %v5278
        %v5349 = vpop.f32.mrf.mxu0
        %v5350 = vadd.f32 0.0, %v5349
        %v5351 = vpop.f32.mrf.mxu0
        %5352 = vdwg.mxu0
        %v5353 = vadd.f32 %v5268, %v5350
        %s5354 = scalar_lea.vmem %s5, 504
        %v5355 = vld [vmem:[%s5354] sm:$0xff]
        %v5356 = vld [vmem:[%s5354 + $0x8] sm:$0xff]
        %v5357 = vld [vmem:[%s5354 + $0x10] sm:$0xff]
        %v5358 = vld [vmem:[%s5354 + $0x18] sm:$0xff]
        %v5359 = vld [vmem:[%s5354 + $0x20] sm:$0xff]
        %v5360 = vld [vmem:[%s5354 + $0x28] sm:$0xff]
        %v5361 = vld [vmem:[%s5354 + $0x30] sm:$0x1]
        %v5362 = vrot.slane %v4584, 1
        %v5363 = vsel %vm4595, %v5362, 0
        %v5366 = vsel %vm4599, %v5361, 0
        %5368 = vmatprep.subr.mxu0 0.0
        %5369 = vmatpush1.msra.mxu0 0.0
        %5370 = vmatprep.subr.mxu0 0.0
        %5371 = vmatpush1.msra.mxu0 0.0
        %5372 = vmatprep.subr.mxu0 0.0
        %5373 = vmatpush1.msra.mxu0 0.0
        %5374 = vmatprep.subr.mxu0 0.0
        %5375 = vmatpush1.msra.mxu0 0.0
        %5376 = vmatprep.subr.mxu0 0.0
        %5377 = vmatpush1.msra.mxu0 0.0
        %5378 = vmatprep.subr.mxu0 0.0
        %5379 = vmatpush1.msra.mxu0 0.0
        %5380 = vmatprep.subr.mxu0 0.0
        %5381 = vmatpush1.msra.mxu0 0.0
        %5382 = vmatprep.subr.mxu0 0.0
        %5383 = vmatpush1.msra.mxu0 0.0
        %5384 = vmatprep.subr.mxu0 0.0
        %5385 = vmatpush1.msra.mxu0 0.0
        %5386 = vmatprep.subr.mxu0 0.0
        %5387 = vmatpush1.msra.mxu0 %v5366
        %5388 = vmatprep.subr.mxu0 0.0
        %5389 = vmatpush1.msra.mxu0 %v5360
        %5390 = vmatprep.subr.mxu0 0.0
        %5391 = vmatpush1.msra.mxu0 %v5359
        %5392 = vmatprep.subr.mxu0 0.0
        %5393 = vmatpush1.msra.mxu0 %v5358
        %5394 = vmatprep.subr.mxu0 0.0
        %5395 = vmatpush1.msra.mxu0 %v5357
        %5396 = vmatprep.subr.mxu0 0.0
        %5397 = vmatpush1.msra.mxu0 %v5356
        %5398 = vmatprep.subr.mxu0 0.0
        %5399 = vmatpush1.msra.mxu0 %v5355
        %5400 = vmatprep.subr.mxu0 0.0
        %5401 = vmatpush2.msra.mxu0 0.0
        %5402 = vmatprep.subr.mxu0 0.0
        %5403 = vmatpush2.msra.mxu0 0.0
        %5404 = vmatprep.subr.mxu0 0.0
        %5405 = vmatpush2.msra.mxu0 0.0
        %5406 = vmatprep.subr.mxu0 0.0
        %5407 = vmatpush2.msra.mxu0 0.0
        %5408 = vmatprep.subr.mxu0 0.0
        %5409 = vmatpush2.msra.mxu0 0.0
        %5410 = vmatprep.subr.mxu0 0.0
        %5411 = vmatpush2.msra.mxu0 0.0
        %5412 = vmatprep.subr.mxu0 0.0
        %5413 = vmatpush2.msra.mxu0 0.0
        %5414 = vmatprep.subr.mxu0 0.0
        %5415 = vmatpush2.msra.mxu0 0.0
        %5416 = vmatprep.subr.mxu0 0.0
        %5417 = vmatpush2.msra.mxu0 0.0
        %5418 = vmatprep.subr.mxu0 0.0
        %5419 = vmatpush2.msra.mxu0 0.0
        %5420 = vmatprep.subr.mxu0 0.0
        %5421 = vmatpush2.msra.mxu0 0.0
        %5422 = vmatprep.subr.mxu0 0.0
        %5423 = vmatpush2.msra.mxu0 0.0
        %5424 = vmatprep.subr.mxu0 0.0
        %5425 = vmatpush2.msra.mxu0 0.0
        %5426 = vmatprep.subr.mxu0 0.0
        %5427 = vmatpush2.msra.mxu0 0.0
        %5428 = vmatprep.subr.mxu0 0.0
        %5429 = vmatpush2.msra.mxu0 0.0
        %5430 = vmatprep.subr.mxu0 0.0
        %5431 = vmatpush2.msra.mxu0 0.0
        %5432 = vmatprep.mubr.f32.mxu0 0.0
        %5433 = vmatmul.mubr.f32.gmra.mxu0 %v5363
        %v5434 = vpop.f32.mrf.mxu0
        %v5435 = vadd.f32 0.0, %v5434
        %v5436 = vpop.f32.mrf.mxu0
        %5437 = vdwg.mxu0
        %v5438 = vadd.f32 %v5353, %v5435
        %s5439 = scalar_lea.vmem %s5, 560
        %v5440 = vld [vmem:[%s5439] sm:$0xff]
        %v5441 = vld [vmem:[%s5439 + $0x8] sm:$0xff]
        %v5442 = vld [vmem:[%s5439 + $0x10] sm:$0xff]
        %v5443 = vld [vmem:[%s5439 + $0x18] sm:$0xff]
        %v5444 = vld [vmem:[%s5439 + $0x20] sm:$0xff]
        %v5445 = vld [vmem:[%s5439 + $0x28] sm:$0xff]
        %v5446 = vld [vmem:[%s5439 + $0x30] sm:$0x1]
        %v5447 = vrot.slane %v4584, 2
        %v5448 = vsel %vm4595, %v5447, 0
        %v5451 = vsel %vm4599, %v5446, 0
        %5453 = vmatprep.subr.mxu0 0.0
        %5454 = vmatpush1.msra.mxu0 0.0
        %5455 = vmatprep.subr.mxu0 0.0
        %5456 = vmatpush1.msra.mxu0 0.0
        %5457 = vmatprep.subr.mxu0 0.0
        %5458 = vmatpush1.msra.mxu0 0.0
        %5459 = vmatprep.subr.mxu0 0.0
        %5460 = vmatpush1.msra.mxu0 0.0
        %5461 = vmatprep.subr.mxu0 0.0
        %5462 = vmatpush1.msra.mxu0 0.0
        %5463 = vmatprep.subr.mxu0 0.0
        %5464 = vmatpush1.msra.mxu0 0.0
        %5465 = vmatprep.subr.mxu0 0.0
        %5466 = vmatpush1.msra.mxu0 0.0
        %5467 = vmatprep.subr.mxu0 0.0
        %5468 = vmatpush1.msra.mxu0 0.0
        %5469 = vmatprep.subr.mxu0 0.0
        %5470 = vmatpush1.msra.mxu0 0.0
        %5471 = vmatprep.subr.mxu0 0.0
        %5472 = vmatpush1.msra.mxu0 %v5451
        %5473 = vmatprep.subr.mxu0 0.0
        %5474 = vmatpush1.msra.mxu0 %v5445
        %5475 = vmatprep.subr.mxu0 0.0
        %5476 = vmatpush1.msra.mxu0 %v5444
        %5477 = vmatprep.subr.mxu0 0.0
        %5478 = vmatpush1.msra.mxu0 %v5443
        %5479 = vmatprep.subr.mxu0 0.0
        %5480 = vmatpush1.msra.mxu0 %v5442
        %5481 = vmatprep.subr.mxu0 0.0
        %5482 = vmatpush1.msra.mxu0 %v5441
        %5483 = vmatprep.subr.mxu0 0.0
        %5484 = vmatpush1.msra.mxu0 %v5440
        %5485 = vmatprep.subr.mxu0 0.0
        %5486 = vmatpush2.msra.mxu0 0.0
        %5487 = vmatprep.subr.mxu0 0.0
        %5488 = vmatpush2.msra.mxu0 0.0
        %5489 = vmatprep.subr.mxu0 0.0
        %5490 = vmatpush2.msra.mxu0 0.0
        %5491 = vmatprep.subr.mxu0 0.0
        %5492 = vmatpush2.msra.mxu0 0.0
        %5493 = vmatprep.subr.mxu0 0.0
        %5494 = vmatpush2.msra.mxu0 0.0
        %5495 = vmatprep.subr.mxu0 0.0
        %5496 = vmatpush2.msra.mxu0 0.0
        %5497 = vmatprep.subr.mxu0 0.0
        %5498 = vmatpush2.msra.mxu0 0.0
        %5499 = vmatprep.subr.mxu0 0.0
        %5500 = vmatpush2.msra.mxu0 0.0
        %5501 = vmatprep.subr.mxu0 0.0
        %5502 = vmatpush2.msra.mxu0 0.0
        %5503 = vmatprep.subr.mxu0 0.0
        %5504 = vmatpush2.msra.mxu0 0.0
        %5505 = vmatprep.subr.mxu0 0.0
        %5506 = vmatpush2.msra.mxu0 0.0
        %5507 = vmatprep.subr.mxu0 0.0
        %5508 = vmatpush2.msra.mxu0 0.0
        %5509 = vmatprep.subr.mxu0 0.0
        %5510 = vmatpush2.msra.mxu0 0.0
        %5511 = vmatprep.subr.mxu0 0.0
        %5512 = vmatpush2.msra.mxu0 0.0
        %5513 = vmatprep.subr.mxu0 0.0
        %5514 = vmatpush2.msra.mxu0 0.0
        %5515 = vmatprep.subr.mxu0 0.0
        %5516 = vmatpush2.msra.mxu0 0.0
        %5517 = vmatprep.mubr.f32.mxu0 0.0
        %5518 = vmatmul.mubr.f32.gmra.mxu0 %v5448
        %v5519 = vpop.f32.mrf.mxu0
        %v5520 = vadd.f32 0.0, %v5519
        %v5521 = vpop.f32.mrf.mxu0
        %5522 = vdwg.mxu0
        %v5523 = vadd.f32 %v5438, %v5520
        %s5524 = scalar_lea.vmem %s5, 616
        %v5525 = vld [vmem:[%s5524] sm:$0xff]
        %v5526 = vld [vmem:[%s5524 + $0x8] sm:$0xff]
        %v5527 = vld [vmem:[%s5524 + $0x10] sm:$0xff]
        %v5528 = vld [vmem:[%s5524 + $0x18] sm:$0xff]
        %v5529 = vld [vmem:[%s5524 + $0x20] sm:$0xff]
        %v5530 = vld [vmem:[%s5524 + $0x28] sm:$0xff]
        %v5531 = vld [vmem:[%s5524 + $0x30] sm:$0x1]
        %v5532 = vrot.slane %v4584, 3
        %v5533 = vsel %vm4595, %v5532, 0
        %v5536 = vsel %vm4599, %v5531, 0
        %5538 = vmatprep.subr.mxu0 0.0
        %5539 = vmatpush1.msra.mxu0 0.0
        %5540 = vmatprep.subr.mxu0 0.0
        %5541 = vmatpush1.msra.mxu0 0.0
        %5542 = vmatprep.subr.mxu0 0.0
        %5543 = vmatpush1.msra.mxu0 0.0
        %5544 = vmatprep.subr.mxu0 0.0
        %5545 = vmatpush1.msra.mxu0 0.0
        %5546 = vmatprep.subr.mxu0 0.0
        %5547 = vmatpush1.msra.mxu0 0.0
        %5548 = vmatprep.subr.mxu0 0.0
        %5549 = vmatpush1.msra.mxu0 0.0
        %5550 = vmatprep.subr.mxu0 0.0
        %5551 = vmatpush1.msra.mxu0 0.0
        %5552 = vmatprep.subr.mxu0 0.0
        %5553 = vmatpush1.msra.mxu0 0.0
        %5554 = vmatprep.subr.mxu0 0.0
        %5555 = vmatpush1.msra.mxu0 0.0
        %5556 = vmatprep.subr.mxu0 0.0
        %5557 = vmatpush1.msra.mxu0 %v5536
        %5558 = vmatprep.subr.mxu0 0.0
        %5559 = vmatpush1.msra.mxu0 %v5530
        %5560 = vmatprep.subr.mxu0 0.0
        %5561 = vmatpush1.msra.mxu0 %v5529
        %5562 = vmatprep.subr.mxu0 0.0
        %5563 = vmatpush1.msra.mxu0 %v5528
        %5564 = vmatprep.subr.mxu0 0.0
        %5565 = vmatpush1.msra.mxu0 %v5527
        %5566 = vmatprep.subr.mxu0 0.0
        %5567 = vmatpush1.msra.mxu0 %v5526
        %5568 = vmatprep.subr.mxu0 0.0
        %5569 = vmatpush1.msra.mxu0 %v5525
        %5570 = vmatprep.subr.mxu0 0.0
        %5571 = vmatpush2.msra.mxu0 0.0
        %5572 = vmatprep.subr.mxu0 0.0
        %5573 = vmatpush2.msra.mxu0 0.0
        %5574 = vmatprep.subr.mxu0 0.0
        %5575 = vmatpush2.msra.mxu0 0.0
        %5576 = vmatprep.subr.mxu0 0.0
        %5577 = vmatpush2.msra.mxu0 0.0
        %5578 = vmatprep.subr.mxu0 0.0
        %5579 = vmatpush2.msra.mxu0 0.0
        %5580 = vmatprep.subr.mxu0 0.0
        %5581 = vmatpush2.msra.mxu0 0.0
        %5582 = vmatprep.subr.mxu0 0.0
        %5583 = vmatpush2.msra.mxu0 0.0
        %5584 = vmatprep.subr.mxu0 0.0
        %5585 = vmatpush2.msra.mxu0 0.0
        %5586 = vmatprep.subr.mxu0 0.0
        %5587 = vmatpush2.msra.mxu0 0.0
        %5588 = vmatprep.subr.mxu0 0.0
        %5589 = vmatpush2.msra.mxu0 0.0
        %5590 = vmatprep.subr.mxu0 0.0
        %5591 = vmatpush2.msra.mxu0 0.0
        %5592 = vmatprep.subr.mxu0 0.0
        %5593 = vmatpush2.msra.mxu0 0.0
        %5594 = vmatprep.subr.mxu0 0.0
        %5595 = vmatpush2.msra.mxu0 0.0
        %5596 = vmatprep.subr.mxu0 0.0
        %5597 = vmatpush2.msra.mxu0 0.0
        %5598 = vmatprep.subr.mxu0 0.0
        %5599 = vmatpush2.msra.mxu0 0.0
        %5600 = vmatprep.subr.mxu0 0.0
        %5601 = vmatpush2.msra.mxu0 0.0
        %5602 = vmatprep.mubr.f32.mxu0 0.0
        %5603 = vmatmul.mubr.f32.gmra.mxu0 %v5533
        %v5604 = vpop.f32.mrf.mxu0
        %v5605 = vadd.f32 0.0, %v5604
        %v5606 = vpop.f32.mrf.mxu0
        %5607 = vdwg.mxu0
        %v5608 = vadd.f32 %v5523, %v5605
        %s5609 = scalar_lea.vmem %s5, 672
        %v5610 = vld [vmem:[%s5609] sm:$0xff]
        %v5611 = vld [vmem:[%s5609 + $0x8] sm:$0xff]
        %v5612 = vld [vmem:[%s5609 + $0x10] sm:$0xff]
        %v5613 = vld [vmem:[%s5609 + $0x18] sm:$0xff]
        %v5614 = vld [vmem:[%s5609 + $0x20] sm:$0xff]
        %v5615 = vld [vmem:[%s5609 + $0x28] sm:$0xff]
        %v5616 = vld [vmem:[%s5609 + $0x30] sm:$0x1]
        %v5617 = vrot.slane %v4584, 4
        %v5618 = vsel %vm4595, %v5617, 0
        %v5621 = vsel %vm4599, %v5616, 0
        %5623 = vmatprep.subr.mxu0 0.0
        %5624 = vmatpush1.msra.mxu0 0.0
        %5625 = vmatprep.subr.mxu0 0.0
        %5626 = vmatpush1.msra.mxu0 0.0
        %5627 = vmatprep.subr.mxu0 0.0
        %5628 = vmatpush1.msra.mxu0 0.0
        %5629 = vmatprep.subr.mxu0 0.0
        %5630 = vmatpush1.msra.mxu0 0.0
        %5631 = vmatprep.subr.mxu0 0.0
        %5632 = vmatpush1.msra.mxu0 0.0
        %5633 = vmatprep.subr.mxu0 0.0
        %5634 = vmatpush1.msra.mxu0 0.0
        %5635 = vmatprep.subr.mxu0 0.0
        %5636 = vmatpush1.msra.mxu0 0.0
        %5637 = vmatprep.subr.mxu0 0.0
        %5638 = vmatpush1.msra.mxu0 0.0
        %5639 = vmatprep.subr.mxu0 0.0
        %5640 = vmatpush1.msra.mxu0 0.0
        %5641 = vmatprep.subr.mxu0 0.0
        %5642 = vmatpush1.msra.mxu0 %v5621
        %5643 = vmatprep.subr.mxu0 0.0
        %5644 = vmatpush1.msra.mxu0 %v5615
        %5645 = vmatprep.subr.mxu0 0.0
        %5646 = vmatpush1.msra.mxu0 %v5614
        %5647 = vmatprep.subr.mxu0 0.0
        %5648 = vmatpush1.msra.mxu0 %v5613
        %5649 = vmatprep.subr.mxu0 0.0
        %5650 = vmatpush1.msra.mxu0 %v5612
        %5651 = vmatprep.subr.mxu0 0.0
        %5652 = vmatpush1.msra.mxu0 %v5611
        %5653 = vmatprep.subr.mxu0 0.0
        %5654 = vmatpush1.msra.mxu0 %v5610
        %5655 = vmatprep.subr.mxu0 0.0
        %5656 = vmatpush2.msra.mxu0 0.0
        %5657 = vmatprep.subr.mxu0 0.0
        %5658 = vmatpush2.msra.mxu0 0.0
        %5659 = vmatprep.subr.mxu0 0.0
        %5660 = vmatpush2.msra.mxu0 0.0
        %5661 = vmatprep.subr.mxu0 0.0
        %5662 = vmatpush2.msra.mxu0 0.0
        %5663 = vmatprep.subr.mxu0 0.0
        %5664 = vmatpush2.msra.mxu0 0.0
        %5665 = vmatprep.subr.mxu0 0.0
        %5666 = vmatpush2.msra.mxu0 0.0
        %5667 = vmatprep.subr.mxu0 0.0
        %5668 = vmatpush2.msra.mxu0 0.0
        %5669 = vmatprep.subr.mxu0 0.0
        %5670 = vmatpush2.msra.mxu0 0.0
        %5671 = vmatprep.subr.mxu0 0.0
        %5672 = vmatpush2.msra.mxu0 0.0
        %5673 = vmatprep.subr.mxu0 0.0
        %5674 = vmatpush2.msra.mxu0 0.0
        %5675 = vmatprep.subr.mxu0 0.0
        %5676 = vmatpush2.msra.mxu0 0.0
        %5677 = vmatprep.subr.mxu0 0.0
        %5678 = vmatpush2.msra.mxu0 0.0
        %5679 = vmatprep.subr.mxu0 0.0
        %5680 = vmatpush2.msra.mxu0 0.0
        %5681 = vmatprep.subr.mxu0 0.0
        %5682 = vmatpush2.msra.mxu0 0.0
        %5683 = vmatprep.subr.mxu0 0.0
        %5684 = vmatpush2.msra.mxu0 0.0
        %5685 = vmatprep.subr.mxu0 0.0
        %5686 = vmatpush2.msra.mxu0 0.0
        %5687 = vmatprep.mubr.f32.mxu0 0.0
        %5688 = vmatmul.mubr.f32.gmra.mxu0 %v5618
        %v5689 = vpop.f32.mrf.mxu0
        %v5690 = vadd.f32 0.0, %v5689
        %v5691 = vpop.f32.mrf.mxu0
        %5692 = vdwg.mxu0
        %v5693 = vadd.f32 %v5608, %v5690
        %s5694 = scalar_lea.vmem %s5, 728
        %v5695 = vld [vmem:[%s5694] sm:$0xff]
        %v5696 = vld [vmem:[%s5694 + $0x8] sm:$0xff]
        %v5697 = vld [vmem:[%s5694 + $0x10] sm:$0xff]
        %v5698 = vld [vmem:[%s5694 + $0x18] sm:$0xff]
        %v5699 = vld [vmem:[%s5694 + $0x20] sm:$0xff]
        %v5700 = vld [vmem:[%s5694 + $0x28] sm:$0xff]
        %v5701 = vld [vmem:[%s5694 + $0x30] sm:$0x1]
        %v5702 = vrot.slane %v4584, 5
        %v5703 = vsel %vm4595, %v5702, 0
        %v5706 = vsel %vm4599, %v5701, 0
        %5708 = vmatprep.subr.mxu0 0.0
        %5709 = vmatpush1.msra.mxu0 0.0
        %5710 = vmatprep.subr.mxu0 0.0
        %5711 = vmatpush1.msra.mxu0 0.0
        %5712 = vmatprep.subr.mxu0 0.0
        %5713 = vmatpush1.msra.mxu0 0.0
        %5714 = vmatprep.subr.mxu0 0.0
        %5715 = vmatpush1.msra.mxu0 0.0
        %5716 = vmatprep.subr.mxu0 0.0
        %5717 = vmatpush1.msra.mxu0 0.0
        %5718 = vmatprep.subr.mxu0 0.0
        %5719 = vmatpush1.msra.mxu0 0.0
        %5720 = vmatprep.subr.mxu0 0.0
        %5721 = vmatpush1.msra.mxu0 0.0
        %5722 = vmatprep.subr.mxu0 0.0
        %5723 = vmatpush1.msra.mxu0 0.0
        %5724 = vmatprep.subr.mxu0 0.0
        %5725 = vmatpush1.msra.mxu0 0.0
        %5726 = vmatprep.subr.mxu0 0.0
        %5727 = vmatpush1.msra.mxu0 %v5706
        %5728 = vmatprep.subr.mxu0 0.0
        %5729 = vmatpush1.msra.mxu0 %v5700
        %5730 = vmatprep.subr.mxu0 0.0
        %5731 = vmatpush1.msra.mxu0 %v5699
        %5732 = vmatprep.subr.mxu0 0.0
        %5733 = vmatpush1.msra.mxu0 %v5698
        %5734 = vmatprep.subr.mxu0 0.0
        %5735 = vmatpush1.msra.mxu0 %v5697
        %5736 = vmatprep.subr.mxu0 0.0
        %5737 = vmatpush1.msra.mxu0 %v5696
        %5738 = vmatprep.subr.mxu0 0.0
        %5739 = vmatpush1.msra.mxu0 %v5695
        %5740 = vmatprep.subr.mxu0 0.0
        %5741 = vmatpush2.msra.mxu0 0.0
        %5742 = vmatprep.subr.mxu0 0.0
        %5743 = vmatpush2.msra.mxu0 0.0
        %5744 = vmatprep.subr.mxu0 0.0
        %5745 = vmatpush2.msra.mxu0 0.0
        %5746 = vmatprep.subr.mxu0 0.0
        %5747 = vmatpush2.msra.mxu0 0.0
        %5748 = vmatprep.subr.mxu0 0.0
        %5749 = vmatpush2.msra.mxu0 0.0
        %5750 = vmatprep.subr.mxu0 0.0
        %5751 = vmatpush2.msra.mxu0 0.0
        %5752 = vmatprep.subr.mxu0 0.0
        %5753 = vmatpush2.msra.mxu0 0.0
        %5754 = vmatprep.subr.mxu0 0.0
        %5755 = vmatpush2.msra.mxu0 0.0
        %5756 = vmatprep.subr.mxu0 0.0
        %5757 = vmatpush2.msra.mxu0 0.0
        %5758 = vmatprep.subr.mxu0 0.0
        %5759 = vmatpush2.msra.mxu0 0.0
        %5760 = vmatprep.subr.mxu0 0.0
        %5761 = vmatpush2.msra.mxu0 0.0
        %5762 = vmatprep.subr.mxu0 0.0
        %5763 = vmatpush2.msra.mxu0 0.0
        %5764 = vmatprep.subr.mxu0 0.0
        %5765 = vmatpush2.msra.mxu0 0.0
        %5766 = vmatprep.subr.mxu0 0.0
        %5767 = vmatpush2.msra.mxu0 0.0
        %5768 = vmatprep.subr.mxu0 0.0
        %5769 = vmatpush2.msra.mxu0 0.0
        %5770 = vmatprep.subr.mxu0 0.0
        %5771 = vmatpush2.msra.mxu0 0.0
        %5772 = vmatprep.mubr.f32.mxu0 0.0
        %5773 = vmatmul.mubr.f32.gmra.mxu0 %v5703
        %v5774 = vpop.f32.mrf.mxu0
        %v5775 = vadd.f32 0.0, %v5774
        %v5776 = vpop.f32.mrf.mxu0
        %5777 = vdwg.mxu0
        %v5778 = vadd.f32 %v5693, %v5775
        %s5779 = scalar_lea.vmem %s5, 784
        %v5780 = vld [vmem:[%s5779] sm:$0xff]
        %v5781 = vld [vmem:[%s5779 + $0x8] sm:$0xff]
        %v5782 = vld [vmem:[%s5779 + $0x10] sm:$0xff]
        %v5783 = vld [vmem:[%s5779 + $0x18] sm:$0xff]
        %v5784 = vld [vmem:[%s5779 + $0x20] sm:$0xff]
        %v5785 = vld [vmem:[%s5779 + $0x28] sm:$0xff]
        %v5786 = vld [vmem:[%s5779 + $0x30] sm:$0x1]
        %v5787 = vrot.slane %v4584, 6
        %v5788 = vsel %vm4595, %v5787, 0
        %v5791 = vsel %vm4599, %v5786, 0
        %5793 = vmatprep.subr.mxu0 0.0
        %5794 = vmatpush1.msra.mxu0 0.0
        %5795 = vmatprep.subr.mxu0 0.0
        %5796 = vmatpush1.msra.mxu0 0.0
        %5797 = vmatprep.subr.mxu0 0.0
        %5798 = vmatpush1.msra.mxu0 0.0
        %5799 = vmatprep.subr.mxu0 0.0
        %5800 = vmatpush1.msra.mxu0 0.0
        %5801 = vmatprep.subr.mxu0 0.0
        %5802 = vmatpush1.msra.mxu0 0.0
        %5803 = vmatprep.subr.mxu0 0.0
        %5804 = vmatpush1.msra.mxu0 0.0
        %5805 = vmatprep.subr.mxu0 0.0
        %5806 = vmatpush1.msra.mxu0 0.0
        %5807 = vmatprep.subr.mxu0 0.0
        %5808 = vmatpush1.msra.mxu0 0.0
        %5809 = vmatprep.subr.mxu0 0.0
        %5810 = vmatpush1.msra.mxu0 0.0
        %5811 = vmatprep.subr.mxu0 0.0
        %5812 = vmatpush1.msra.mxu0 %v5791
        %5813 = vmatprep.subr.mxu0 0.0
        %5814 = vmatpush1.msra.mxu0 %v5785
        %5815 = vmatprep.subr.mxu0 0.0
        %5816 = vmatpush1.msra.mxu0 %v5784
        %5817 = vmatprep.subr.mxu0 0.0
        %5818 = vmatpush1.msra.mxu0 %v5783
        %5819 = vmatprep.subr.mxu0 0.0
        %5820 = vmatpush1.msra.mxu0 %v5782
        %5821 = vmatprep.subr.mxu0 0.0
        %5822 = vmatpush1.msra.mxu0 %v5781
        %5823 = vmatprep.subr.mxu0 0.0
        %5824 = vmatpush1.msra.mxu0 %v5780
        %5825 = vmatprep.subr.mxu0 0.0
        %5826 = vmatpush2.msra.mxu0 0.0
        %5827 = vmatprep.subr.mxu0 0.0
        %5828 = vmatpush2.msra.mxu0 0.0
        %5829 = vmatprep.subr.mxu0 0.0
        %5830 = vmatpush2.msra.mxu0 0.0
        %5831 = vmatprep.subr.mxu0 0.0
        %5832 = vmatpush2.msra.mxu0 0.0
        %5833 = vmatprep.subr.mxu0 0.0
        %5834 = vmatpush2.msra.mxu0 0.0
        %5835 = vmatprep.subr.mxu0 0.0
        %5836 = vmatpush2.msra.mxu0 0.0
        %5837 = vmatprep.subr.mxu0 0.0
        %5838 = vmatpush2.msra.mxu0 0.0
        %5839 = vmatprep.subr.mxu0 0.0
        %5840 = vmatpush2.msra.mxu0 0.0
        %5841 = vmatprep.subr.mxu0 0.0
        %5842 = vmatpush2.msra.mxu0 0.0
        %5843 = vmatprep.subr.mxu0 0.0
        %5844 = vmatpush2.msra.mxu0 0.0
        %5845 = vmatprep.subr.mxu0 0.0
        %5846 = vmatpush2.msra.mxu0 0.0
        %5847 = vmatprep.subr.mxu0 0.0
        %5848 = vmatpush2.msra.mxu0 0.0
        %5849 = vmatprep.subr.mxu0 0.0
        %5850 = vmatpush2.msra.mxu0 0.0
        %5851 = vmatprep.subr.mxu0 0.0
        %5852 = vmatpush2.msra.mxu0 0.0
        %5853 = vmatprep.subr.mxu0 0.0
        %5854 = vmatpush2.msra.mxu0 0.0
        %5855 = vmatprep.subr.mxu0 0.0
        %5856 = vmatpush2.msra.mxu0 0.0
        %5857 = vmatprep.mubr.f32.mxu0 0.0
        %5858 = vmatmul.mubr.f32.gmra.mxu0 %v5788
        %v5859 = vpop.f32.mrf.mxu0
        %v5860 = vadd.f32 0.0, %v5859
        %v5861 = vpop.f32.mrf.mxu0
        %5862 = vdwg.mxu0
        %v5863 = vadd.f32 %v5778, %v5860
        %s5864 = scalar_lea.vmem %s5, 840
        %v5865 = vld [vmem:[%s5864] sm:$0xff]
        %v5866 = vld [vmem:[%s5864 + $0x8] sm:$0xff]
        %v5867 = vld [vmem:[%s5864 + $0x10] sm:$0xff]
        %v5868 = vld [vmem:[%s5864 + $0x18] sm:$0xff]
        %v5869 = vld [vmem:[%s5864 + $0x20] sm:$0xff]
        %v5870 = vld [vmem:[%s5864 + $0x28] sm:$0xff]
        %v5871 = vld [vmem:[%s5864 + $0x30] sm:$0x1]
        %v5872 = vrot.slane %v4584, 7
        %v5873 = vsel %vm4595, %v5872, 0
        %v5876 = vsel %vm4599, %v5871, 0
        %5878 = vmatprep.subr.mxu0 0.0
        %5879 = vmatpush1.msra.mxu0 0.0
        %5880 = vmatprep.subr.mxu0 0.0
        %5881 = vmatpush1.msra.mxu0 0.0
        %5882 = vmatprep.subr.mxu0 0.0
        %5883 = vmatpush1.msra.mxu0 0.0
        %5884 = vmatprep.subr.mxu0 0.0
        %5885 = vmatpush1.msra.mxu0 0.0
        %5886 = vmatprep.subr.mxu0 0.0
        %5887 = vmatpush1.msra.mxu0 0.0
        %5888 = vmatprep.subr.mxu0 0.0
        %5889 = vmatpush1.msra.mxu0 0.0
        %5890 = vmatprep.subr.mxu0 0.0
        %5891 = vmatpush1.msra.mxu0 0.0
        %5892 = vmatprep.subr.mxu0 0.0
        %5893 = vmatpush1.msra.mxu0 0.0
        %5894 = vmatprep.subr.mxu0 0.0
        %5895 = vmatpush1.msra.mxu0 0.0
        %5896 = vmatprep.subr.mxu0 0.0
        %5897 = vmatpush1.msra.mxu0 %v5876
        %5898 = vmatprep.subr.mxu0 0.0
        %5899 = vmatpush1.msra.mxu0 %v5870
        %5900 = vmatprep.subr.mxu0 0.0
        %5901 = vmatpush1.msra.mxu0 %v5869
        %5902 = vmatprep.subr.mxu0 0.0
        %5903 = vmatpush1.msra.mxu0 %v5868
        %5904 = vmatprep.subr.mxu0 0.0
        %5905 = vmatpush1.msra.mxu0 %v5867
        %5906 = vmatprep.subr.mxu0 0.0
        %5907 = vmatpush1.msra.mxu0 %v5866
        %5908 = vmatprep.subr.mxu0 0.0
        %5909 = vmatpush1.msra.mxu0 %v5865
        %5910 = vmatprep.subr.mxu0 0.0
        %5911 = vmatpush2.msra.mxu0 0.0
        %5912 = vmatprep.subr.mxu0 0.0
        %5913 = vmatpush2.msra.mxu0 0.0
        %5914 = vmatprep.subr.mxu0 0.0
        %5915 = vmatpush2.msra.mxu0 0.0
        %5916 = vmatprep.subr.mxu0 0.0
        %5917 = vmatpush2.msra.mxu0 0.0
        %5918 = vmatprep.subr.mxu0 0.0
        %5919 = vmatpush2.msra.mxu0 0.0
        %5920 = vmatprep.subr.mxu0 0.0
        %5921 = vmatpush2.msra.mxu0 0.0
        %5922 = vmatprep.subr.mxu0 0.0
        %5923 = vmatpush2.msra.mxu0 0.0
        %5924 = vmatprep.subr.mxu0 0.0
        %5925 = vmatpush2.msra.mxu0 0.0
        %5926 = vmatprep.subr.mxu0 0.0
        %5927 = vmatpush2.msra.mxu0 0.0
        %5928 = vmatprep.subr.mxu0 0.0
        %5929 = vmatpush2.msra.mxu0 0.0
        %5930 = vmatprep.subr.mxu0 0.0
        %5931 = vmatpush2.msra.mxu0 0.0
        %5932 = vmatprep.subr.mxu0 0.0
        %5933 = vmatpush2.msra.mxu0 0.0
        %5934 = vmatprep.subr.mxu0 0.0
        %5935 = vmatpush2.msra.mxu0 0.0
        %5936 = vmatprep.subr.mxu0 0.0
        %5937 = vmatpush2.msra.mxu0 0.0
        %5938 = vmatprep.subr.mxu0 0.0
        %5939 = vmatpush2.msra.mxu0 0.0
        %5940 = vmatprep.subr.mxu0 0.0
        %5941 = vmatpush2.msra.mxu0 0.0
        %5942 = vmatprep.mubr.f32.mxu0 0.0
        %5943 = vmatmul.mubr.f32.gmra.mxu0 %v5873
        %v5944 = vpop.f32.mrf.mxu0
        %v5945 = vadd.f32 0.0, %v5944
        %v5946 = vpop.f32.mrf.mxu0
        %5947 = vdwg.mxu0
        %v5948 = vadd.f32 %v5863, %v5945
        %s5949 = scalar_lea.vmem %s5, 896
        %v5950 = vld [vmem:[%s5949] sm:$0xff]
        %v5951 = vld [vmem:[%s5949 + $0x8] sm:$0xff]
        %v5952 = vld [vmem:[%s5949 + $0x10] sm:$0xff]
        %v5953 = vld [vmem:[%s5949 + $0x18] sm:$0xff]
        %v5954 = vld [vmem:[%s5949 + $0x20] sm:$0xff]
        %v5955 = vld [vmem:[%s5949 + $0x28] sm:$0xff]
        %v5956 = vld [vmem:[%s5949 + $0x30] sm:$0x1]
        %v5958 = vsel %vm4595, %v4585, 0
        %v5961 = vsel %vm4599, %v5956, 0
        %5963 = vmatprep.subr.mxu0 0.0
        %5964 = vmatpush1.msra.mxu0 0.0
        %5965 = vmatprep.subr.mxu0 0.0
        %5966 = vmatpush1.msra.mxu0 0.0
        %5967 = vmatprep.subr.mxu0 0.0
        %5968 = vmatpush1.msra.mxu0 0.0
        %5969 = vmatprep.subr.mxu0 0.0
        %5970 = vmatpush1.msra.mxu0 0.0
        %5971 = vmatprep.subr.mxu0 0.0
        %5972 = vmatpush1.msra.mxu0 0.0
        %5973 = vmatprep.subr.mxu0 0.0
        %5974 = vmatpush1.msra.mxu0 0.0
        %5975 = vmatprep.subr.mxu0 0.0
        %5976 = vmatpush1.msra.mxu0 0.0
        %5977 = vmatprep.subr.mxu0 0.0
        %5978 = vmatpush1.msra.mxu0 0.0
        %5979 = vmatprep.subr.mxu0 0.0
        %5980 = vmatpush1.msra.mxu0 0.0
        %5981 = vmatprep.subr.mxu0 0.0
        %5982 = vmatpush1.msra.mxu0 %v5961
        %5983 = vmatprep.subr.mxu0 0.0
        %5984 = vmatpush1.msra.mxu0 %v5955
        %5985 = vmatprep.subr.mxu0 0.0
        %5986 = vmatpush1.msra.mxu0 %v5954
        %5987 = vmatprep.subr.mxu0 0.0
        %5988 = vmatpush1.msra.mxu0 %v5953
        %5989 = vmatprep.subr.mxu0 0.0
        %5990 = vmatpush1.msra.mxu0 %v5952
        %5991 = vmatprep.subr.mxu0 0.0
        %5992 = vmatpush1.msra.mxu0 %v5951
        %5993 = vmatprep.subr.mxu0 0.0
        %5994 = vmatpush1.msra.mxu0 %v5950
        %5995 = vmatprep.subr.mxu0 0.0
        %5996 = vmatpush2.msra.mxu0 0.0
        %5997 = vmatprep.subr.mxu0 0.0
        %5998 = vmatpush2.msra.mxu0 0.0
        %5999 = vmatprep.subr.mxu0 0.0
        %6000 = vmatpush2.msra.mxu0 0.0
        %6001 = vmatprep.subr.mxu0 0.0
        %6002 = vmatpush2.msra.mxu0 0.0
        %6003 = vmatprep.subr.mxu0 0.0
        %6004 = vmatpush2.msra.mxu0 0.0
        %6005 = vmatprep.subr.mxu0 0.0
        %6006 = vmatpush2.msra.mxu0 0.0
        %6007 = vmatprep.subr.mxu0 0.0
        %6008 = vmatpush2.msra.mxu0 0.0
        %6009 = vmatprep.subr.mxu0 0.0
        %6010 = vmatpush2.msra.mxu0 0.0
        %6011 = vmatprep.subr.mxu0 0.0
        %6012 = vmatpush2.msra.mxu0 0.0
        %6013 = vmatprep.subr.mxu0 0.0
        %6014 = vmatpush2.msra.mxu0 0.0
        %6015 = vmatprep.subr.mxu0 0.0
        %6016 = vmatpush2.msra.mxu0 0.0
        %6017 = vmatprep.subr.mxu0 0.0
        %6018 = vmatpush2.msra.mxu0 0.0
        %6019 = vmatprep.subr.mxu0 0.0
        %6020 = vmatpush2.msra.mxu0 0.0
        %6021 = vmatprep.subr.mxu0 0.0
        %6022 = vmatpush2.msra.mxu0 0.0
        %6023 = vmatprep.subr.mxu0 0.0
        %6024 = vmatpush2.msra.mxu0 0.0
        %6025 = vmatprep.subr.mxu0 0.0
        %6026 = vmatpush2.msra.mxu0 0.0
        %6027 = vmatprep.mubr.f32.mxu0 0.0
        %6028 = vmatmul.mubr.f32.gmra.mxu0 %v5958
        %v6029 = vpop.f32.mrf.mxu0
        %v6030 = vadd.f32 0.0, %v6029
        %v6031 = vpop.f32.mrf.mxu0
        %6032 = vdwg.mxu0
        %v6033 = vadd.f32 %v5948, %v6030
        %s6034 = scalar_lea.vmem %s5, 952
        %v6035 = vld [vmem:[%s6034] sm:$0xff]
        %v6036 = vld [vmem:[%s6034 + $0x8] sm:$0xff]
        %v6037 = vld [vmem:[%s6034 + $0x10] sm:$0xff]
        %v6038 = vld [vmem:[%s6034 + $0x18] sm:$0xff]
        %v6039 = vld [vmem:[%s6034 + $0x20] sm:$0xff]
        %v6040 = vld [vmem:[%s6034 + $0x28] sm:$0xff]
        %v6041 = vld [vmem:[%s6034 + $0x30] sm:$0x1]
        %v6042 = vrot.slane %v4585, 1
        %v6043 = vsel %vm4595, %v6042, 0
        %v6046 = vsel %vm4599, %v6041, 0
        %6048 = vmatprep.subr.mxu0 0.0
        %6049 = vmatpush1.msra.mxu0 0.0
        %6050 = vmatprep.subr.mxu0 0.0
        %6051 = vmatpush1.msra.mxu0 0.0
        %6052 = vmatprep.subr.mxu0 0.0
        %6053 = vmatpush1.msra.mxu0 0.0
        %6054 = vmatprep.subr.mxu0 0.0
        %6055 = vmatpush1.msra.mxu0 0.0
        %6056 = vmatprep.subr.mxu0 0.0
        %6057 = vmatpush1.msra.mxu0 0.0
        %6058 = vmatprep.subr.mxu0 0.0
        %6059 = vmatpush1.msra.mxu0 0.0
        %6060 = vmatprep.subr.mxu0 0.0
        %6061 = vmatpush1.msra.mxu0 0.0
        %6062 = vmatprep.subr.mxu0 0.0
        %6063 = vmatpush1.msra.mxu0 0.0
        %6064 = vmatprep.subr.mxu0 0.0
        %6065 = vmatpush1.msra.mxu0 0.0
        %6066 = vmatprep.subr.mxu0 0.0
        %6067 = vmatpush1.msra.mxu0 %v6046
        %6068 = vmatprep.subr.mxu0 0.0
        %6069 = vmatpush1.msra.mxu0 %v6040
        %6070 = vmatprep.subr.mxu0 0.0
        %6071 = vmatpush1.msra.mxu0 %v6039
        %6072 = vmatprep.subr.mxu0 0.0
        %6073 = vmatpush1.msra.mxu0 %v6038
        %6074 = vmatprep.subr.mxu0 0.0
        %6075 = vmatpush1.msra.mxu0 %v6037
        %6076 = vmatprep.subr.mxu0 0.0
        %6077 = vmatpush1.msra.mxu0 %v6036
        %6078 = vmatprep.subr.mxu0 0.0
        %6079 = vmatpush1.msra.mxu0 %v6035
        %6080 = vmatprep.subr.mxu0 0.0
        %6081 = vmatpush2.msra.mxu0 0.0
        %6082 = vmatprep.subr.mxu0 0.0
        %6083 = vmatpush2.msra.mxu0 0.0
        %6084 = vmatprep.subr.mxu0 0.0
        %6085 = vmatpush2.msra.mxu0 0.0
        %6086 = vmatprep.subr.mxu0 0.0
        %6087 = vmatpush2.msra.mxu0 0.0
        %6088 = vmatprep.subr.mxu0 0.0
        %6089 = vmatpush2.msra.mxu0 0.0
        %6090 = vmatprep.subr.mxu0 0.0
        %6091 = vmatpush2.msra.mxu0 0.0
        %6092 = vmatprep.subr.mxu0 0.0
        %6093 = vmatpush2.msra.mxu0 0.0
        %6094 = vmatprep.subr.mxu0 0.0
        %6095 = vmatpush2.msra.mxu0 0.0
        %6096 = vmatprep.subr.mxu0 0.0
        %6097 = vmatpush2.msra.mxu0 0.0
        %6098 = vmatprep.subr.mxu0 0.0
        %6099 = vmatpush2.msra.mxu0 0.0
        %6100 = vmatprep.subr.mxu0 0.0
        %6101 = vmatpush2.msra.mxu0 0.0
        %6102 = vmatprep.subr.mxu0 0.0
        %6103 = vmatpush2.msra.mxu0 0.0
        %6104 = vmatprep.subr.mxu0 0.0
        %6105 = vmatpush2.msra.mxu0 0.0
        %6106 = vmatprep.subr.mxu0 0.0
        %6107 = vmatpush2.msra.mxu0 0.0
        %6108 = vmatprep.subr.mxu0 0.0
        %6109 = vmatpush2.msra.mxu0 0.0
        %6110 = vmatprep.subr.mxu0 0.0
        %6111 = vmatpush2.msra.mxu0 0.0
        %6112 = vmatprep.mubr.f32.mxu0 0.0
        %6113 = vmatmul.mubr.f32.gmra.mxu0 %v6043
        %v6114 = vpop.f32.mrf.mxu0
        %v6115 = vadd.f32 0.0, %v6114
        %v6116 = vpop.f32.mrf.mxu0
        %6117 = vdwg.mxu0
        %v6118 = vadd.f32 %v6033, %v6115
        %s6119 = scalar_lea.vmem %s5, 1008
        %v6120 = vld [vmem:[%s6119] sm:$0xff]
        %v6121 = vld [vmem:[%s6119 + $0x8] sm:$0xff]
        %v6122 = vld [vmem:[%s6119 + $0x10] sm:$0xff]
        %v6123 = vld [vmem:[%s6119 + $0x18] sm:$0xff]
        %v6124 = vld [vmem:[%s6119 + $0x20] sm:$0xff]
        %v6125 = vld [vmem:[%s6119 + $0x28] sm:$0xff]
        %v6126 = vld [vmem:[%s6119 + $0x30] sm:$0x1]
        %v6127 = vrot.slane %v4585, 2
        %v6128 = vsel %vm4595, %v6127, 0
        %v6131 = vsel %vm4599, %v6126, 0
        %6133 = vmatprep.subr.mxu0 0.0
        %6134 = vmatpush1.msra.mxu0 0.0
        %6135 = vmatprep.subr.mxu0 0.0
        %6136 = vmatpush1.msra.mxu0 0.0
        %6137 = vmatprep.subr.mxu0 0.0
        %6138 = vmatpush1.msra.mxu0 0.0
        %6139 = vmatprep.subr.mxu0 0.0
        %6140 = vmatpush1.msra.mxu0 0.0
        %6141 = vmatprep.subr.mxu0 0.0
        %6142 = vmatpush1.msra.mxu0 0.0
        %6143 = vmatprep.subr.mxu0 0.0
        %6144 = vmatpush1.msra.mxu0 0.0
        %6145 = vmatprep.subr.mxu0 0.0
        %6146 = vmatpush1.msra.mxu0 0.0
        %6147 = vmatprep.subr.mxu0 0.0
        %6148 = vmatpush1.msra.mxu0 0.0
        %6149 = vmatprep.subr.mxu0 0.0
        %6150 = vmatpush1.msra.mxu0 0.0
        %6151 = vmatprep.subr.mxu0 0.0
        %6152 = vmatpush1.msra.mxu0 %v6131
        %6153 = vmatprep.subr.mxu0 0.0
        %6154 = vmatpush1.msra.mxu0 %v6125
        %6155 = vmatprep.subr.mxu0 0.0
        %6156 = vmatpush1.msra.mxu0 %v6124
        %6157 = vmatprep.subr.mxu0 0.0
        %6158 = vmatpush1.msra.mxu0 %v6123
        %6159 = vmatprep.subr.mxu0 0.0
        %6160 = vmatpush1.msra.mxu0 %v6122
        %6161 = vmatprep.subr.mxu0 0.0
        %6162 = vmatpush1.msra.mxu0 %v6121
        %6163 = vmatprep.subr.mxu0 0.0
        %6164 = vmatpush1.msra.mxu0 %v6120
        %6165 = vmatprep.subr.mxu0 0.0
        %6166 = vmatpush2.msra.mxu0 0.0
        %6167 = vmatprep.subr.mxu0 0.0
        %6168 = vmatpush2.msra.mxu0 0.0
        %6169 = vmatprep.subr.mxu0 0.0
        %6170 = vmatpush2.msra.mxu0 0.0
        %6171 = vmatprep.subr.mxu0 0.0
        %6172 = vmatpush2.msra.mxu0 0.0
        %6173 = vmatprep.subr.mxu0 0.0
        %6174 = vmatpush2.msra.mxu0 0.0
        %6175 = vmatprep.subr.mxu0 0.0
        %6176 = vmatpush2.msra.mxu0 0.0
        %6177 = vmatprep.subr.mxu0 0.0
        %6178 = vmatpush2.msra.mxu0 0.0
        %6179 = vmatprep.subr.mxu0 0.0
        %6180 = vmatpush2.msra.mxu0 0.0
        %6181 = vmatprep.subr.mxu0 0.0
        %6182 = vmatpush2.msra.mxu0 0.0
        %6183 = vmatprep.subr.mxu0 0.0
        %6184 = vmatpush2.msra.mxu0 0.0
        %6185 = vmatprep.subr.mxu0 0.0
        %6186 = vmatpush2.msra.mxu0 0.0
        %6187 = vmatprep.subr.mxu0 0.0
        %6188 = vmatpush2.msra.mxu0 0.0
        %6189 = vmatprep.subr.mxu0 0.0
        %6190 = vmatpush2.msra.mxu0 0.0
        %6191 = vmatprep.subr.mxu0 0.0
        %6192 = vmatpush2.msra.mxu0 0.0
        %6193 = vmatprep.subr.mxu0 0.0
        %6194 = vmatpush2.msra.mxu0 0.0
        %6195 = vmatprep.subr.mxu0 0.0
        %6196 = vmatpush2.msra.mxu0 0.0
        %6197 = vmatprep.mubr.f32.mxu0 0.0
        %6198 = vmatmul.mubr.f32.gmra.mxu0 %v6128
        %v6199 = vpop.f32.mrf.mxu0
        %v6200 = vadd.f32 0.0, %v6199
        %v6201 = vpop.f32.mrf.mxu0
        %6202 = vdwg.mxu0
        %v6203 = vadd.f32 %v6118, %v6200
        %s6204 = scalar_lea.vmem %s5, 1064
        %v6205 = vld [vmem:[%s6204] sm:$0xff]
        %v6206 = vld [vmem:[%s6204 + $0x8] sm:$0xff]
        %v6207 = vld [vmem:[%s6204 + $0x10] sm:$0xff]
        %v6208 = vld [vmem:[%s6204 + $0x18] sm:$0xff]
        %v6209 = vld [vmem:[%s6204 + $0x20] sm:$0xff]
        %v6210 = vld [vmem:[%s6204 + $0x28] sm:$0xff]
        %v6211 = vld [vmem:[%s6204 + $0x30] sm:$0x1]
        %v6212 = vrot.slane %v4585, 3
        %v6213 = vsel %vm4595, %v6212, 0
        %v6216 = vsel %vm4599, %v6211, 0
        %6218 = vmatprep.subr.mxu0 0.0
        %6219 = vmatpush1.msra.mxu0 0.0
        %6220 = vmatprep.subr.mxu0 0.0
        %6221 = vmatpush1.msra.mxu0 0.0
        %6222 = vmatprep.subr.mxu0 0.0
        %6223 = vmatpush1.msra.mxu0 0.0
        %6224 = vmatprep.subr.mxu0 0.0
        %6225 = vmatpush1.msra.mxu0 0.0
        %6226 = vmatprep.subr.mxu0 0.0
        %6227 = vmatpush1.msra.mxu0 0.0
        %6228 = vmatprep.subr.mxu0 0.0
        %6229 = vmatpush1.msra.mxu0 0.0
        %6230 = vmatprep.subr.mxu0 0.0
        %6231 = vmatpush1.msra.mxu0 0.0
        %6232 = vmatprep.subr.mxu0 0.0
        %6233 = vmatpush1.msra.mxu0 0.0
        %6234 = vmatprep.subr.mxu0 0.0
        %6235 = vmatpush1.msra.mxu0 0.0
        %6236 = vmatprep.subr.mxu0 0.0
        %6237 = vmatpush1.msra.mxu0 %v6216
        %6238 = vmatprep.subr.mxu0 0.0
        %6239 = vmatpush1.msra.mxu0 %v6210
        %6240 = vmatprep.subr.mxu0 0.0
        %6241 = vmatpush1.msra.mxu0 %v6209
        %6242 = vmatprep.subr.mxu0 0.0
        %6243 = vmatpush1.msra.mxu0 %v6208
        %6244 = vmatprep.subr.mxu0 0.0
        %6245 = vmatpush1.msra.mxu0 %v6207
        %6246 = vmatprep.subr.mxu0 0.0
        %6247 = vmatpush1.msra.mxu0 %v6206
        %6248 = vmatprep.subr.mxu0 0.0
        %6249 = vmatpush1.msra.mxu0 %v6205
        %6250 = vmatprep.subr.mxu0 0.0
        %6251 = vmatpush2.msra.mxu0 0.0
        %6252 = vmatprep.subr.mxu0 0.0
        %6253 = vmatpush2.msra.mxu0 0.0
        %6254 = vmatprep.subr.mxu0 0.0
        %6255 = vmatpush2.msra.mxu0 0.0
        %6256 = vmatprep.subr.mxu0 0.0
        %6257 = vmatpush2.msra.mxu0 0.0
        %6258 = vmatprep.subr.mxu0 0.0
        %6259 = vmatpush2.msra.mxu0 0.0
        %6260 = vmatprep.subr.mxu0 0.0
        %6261 = vmatpush2.msra.mxu0 0.0
        %6262 = vmatprep.subr.mxu0 0.0
        %6263 = vmatpush2.msra.mxu0 0.0
        %6264 = vmatprep.subr.mxu0 0.0
        %6265 = vmatpush2.msra.mxu0 0.0
        %6266 = vmatprep.subr.mxu0 0.0
        %6267 = vmatpush2.msra.mxu0 0.0
        %6268 = vmatprep.subr.mxu0 0.0
        %6269 = vmatpush2.msra.mxu0 0.0
        %6270 = vmatprep.subr.mxu0 0.0
        %6271 = vmatpush2.msra.mxu0 0.0
        %6272 = vmatprep.subr.mxu0 0.0
        %6273 = vmatpush2.msra.mxu0 0.0
        %6274 = vmatprep.subr.mxu0 0.0
        %6275 = vmatpush2.msra.mxu0 0.0
        %6276 = vmatprep.subr.mxu0 0.0
        %6277 = vmatpush2.msra.mxu0 0.0
        %6278 = vmatprep.subr.mxu0 0.0
        %6279 = vmatpush2.msra.mxu0 0.0
        %6280 = vmatprep.subr.mxu0 0.0
        %6281 = vmatpush2.msra.mxu0 0.0
        %6282 = vmatprep.mubr.f32.mxu0 0.0
        %6283 = vmatmul.mubr.f32.gmra.mxu0 %v6213
        %v6284 = vpop.f32.mrf.mxu0
        %v6285 = vadd.f32 0.0, %v6284
        %v6286 = vpop.f32.mrf.mxu0
        %6287 = vdwg.mxu0
        %v6288 = vadd.f32 %v6203, %v6285
        %s6289 = scalar_lea.vmem %s5, 1120
        %v6290 = vld [vmem:[%s6289] sm:$0xff]
        %v6291 = vld [vmem:[%s6289 + $0x8] sm:$0xff]
        %v6292 = vld [vmem:[%s6289 + $0x10] sm:$0xff]
        %v6293 = vld [vmem:[%s6289 + $0x18] sm:$0xff]
        %v6294 = vld [vmem:[%s6289 + $0x20] sm:$0xff]
        %v6295 = vld [vmem:[%s6289 + $0x28] sm:$0xff]
        %v6296 = vld [vmem:[%s6289 + $0x30] sm:$0x1]
        %v6297 = vrot.slane %v4585, 4
        %v6298 = vsel %vm4595, %v6297, 0
        %v6301 = vsel %vm4599, %v6296, 0
        %6303 = vmatprep.subr.mxu0 0.0
        %6304 = vmatpush1.msra.mxu0 0.0
        %6305 = vmatprep.subr.mxu0 0.0
        %6306 = vmatpush1.msra.mxu0 0.0
        %6307 = vmatprep.subr.mxu0 0.0
        %6308 = vmatpush1.msra.mxu0 0.0
        %6309 = vmatprep.subr.mxu0 0.0
        %6310 = vmatpush1.msra.mxu0 0.0
        %6311 = vmatprep.subr.mxu0 0.0
        %6312 = vmatpush1.msra.mxu0 0.0
        %6313 = vmatprep.subr.mxu0 0.0
        %6314 = vmatpush1.msra.mxu0 0.0
        %6315 = vmatprep.subr.mxu0 0.0
        %6316 = vmatpush1.msra.mxu0 0.0
        %6317 = vmatprep.subr.mxu0 0.0
        %6318 = vmatpush1.msra.mxu0 0.0
        %6319 = vmatprep.subr.mxu0 0.0
        %6320 = vmatpush1.msra.mxu0 0.0
        %6321 = vmatprep.subr.mxu0 0.0
        %6322 = vmatpush1.msra.mxu0 %v6301
        %6323 = vmatprep.subr.mxu0 0.0
        %6324 = vmatpush1.msra.mxu0 %v6295
        %6325 = vmatprep.subr.mxu0 0.0
        %6326 = vmatpush1.msra.mxu0 %v6294
        %6327 = vmatprep.subr.mxu0 0.0
        %6328 = vmatpush1.msra.mxu0 %v6293
        %6329 = vmatprep.subr.mxu0 0.0
        %6330 = vmatpush1.msra.mxu0 %v6292
        %6331 = vmatprep.subr.mxu0 0.0
        %6332 = vmatpush1.msra.mxu0 %v6291
        %6333 = vmatprep.subr.mxu0 0.0
        %6334 = vmatpush1.msra.mxu0 %v6290
        %6335 = vmatprep.subr.mxu0 0.0
        %6336 = vmatpush2.msra.mxu0 0.0
        %6337 = vmatprep.subr.mxu0 0.0
        %6338 = vmatpush2.msra.mxu0 0.0
        %6339 = vmatprep.subr.mxu0 0.0
        %6340 = vmatpush2.msra.mxu0 0.0
        %6341 = vmatprep.subr.mxu0 0.0
        %6342 = vmatpush2.msra.mxu0 0.0
        %6343 = vmatprep.subr.mxu0 0.0
        %6344 = vmatpush2.msra.mxu0 0.0
        %6345 = vmatprep.subr.mxu0 0.0
        %6346 = vmatpush2.msra.mxu0 0.0
        %6347 = vmatprep.subr.mxu0 0.0
        %6348 = vmatpush2.msra.mxu0 0.0
        %6349 = vmatprep.subr.mxu0 0.0
        %6350 = vmatpush2.msra.mxu0 0.0
        %6351 = vmatprep.subr.mxu0 0.0
        %6352 = vmatpush2.msra.mxu0 0.0
        %6353 = vmatprep.subr.mxu0 0.0
        %6354 = vmatpush2.msra.mxu0 0.0
        %6355 = vmatprep.subr.mxu0 0.0
        %6356 = vmatpush2.msra.mxu0 0.0
        %6357 = vmatprep.subr.mxu0 0.0
        %6358 = vmatpush2.msra.mxu0 0.0
        %6359 = vmatprep.subr.mxu0 0.0
        %6360 = vmatpush2.msra.mxu0 0.0
        %6361 = vmatprep.subr.mxu0 0.0
        %6362 = vmatpush2.msra.mxu0 0.0
        %6363 = vmatprep.subr.mxu0 0.0
        %6364 = vmatpush2.msra.mxu0 0.0
        %6365 = vmatprep.subr.mxu0 0.0
        %6366 = vmatpush2.msra.mxu0 0.0
        %6367 = vmatprep.mubr.f32.mxu0 0.0
        %6368 = vmatmul.mubr.f32.gmra.mxu0 %v6298
        %v6369 = vpop.f32.mrf.mxu0
        %v6370 = vadd.f32 0.0, %v6369
        %v6371 = vpop.f32.mrf.mxu0
        %6372 = vdwg.mxu0
        %v6373 = vadd.f32 %v6288, %v6370
        %s6374 = scalar_lea.vmem %s5, 1176
        %v6375 = vld [vmem:[%s6374] sm:$0xff]
        %v6376 = vld [vmem:[%s6374 + $0x8] sm:$0xff]
        %v6377 = vld [vmem:[%s6374 + $0x10] sm:$0xff]
        %v6378 = vld [vmem:[%s6374 + $0x18] sm:$0xff]
        %v6379 = vld [vmem:[%s6374 + $0x20] sm:$0xff]
        %v6380 = vld [vmem:[%s6374 + $0x28] sm:$0xff]
        %v6381 = vld [vmem:[%s6374 + $0x30] sm:$0x1]
        %v6382 = vrot.slane %v4585, 5
        %v6383 = vsel %vm4595, %v6382, 0
        %v6386 = vsel %vm4599, %v6381, 0
        %6388 = vmatprep.subr.mxu0 0.0
        %6389 = vmatpush1.msra.mxu0 0.0
        %6390 = vmatprep.subr.mxu0 0.0
        %6391 = vmatpush1.msra.mxu0 0.0
        %6392 = vmatprep.subr.mxu0 0.0
        %6393 = vmatpush1.msra.mxu0 0.0
        %6394 = vmatprep.subr.mxu0 0.0
        %6395 = vmatpush1.msra.mxu0 0.0
        %6396 = vmatprep.subr.mxu0 0.0
        %6397 = vmatpush1.msra.mxu0 0.0
        %6398 = vmatprep.subr.mxu0 0.0
        %6399 = vmatpush1.msra.mxu0 0.0
        %6400 = vmatprep.subr.mxu0 0.0
        %6401 = vmatpush1.msra.mxu0 0.0
        %6402 = vmatprep.subr.mxu0 0.0
        %6403 = vmatpush1.msra.mxu0 0.0
        %6404 = vmatprep.subr.mxu0 0.0
        %6405 = vmatpush1.msra.mxu0 0.0
        %6406 = vmatprep.subr.mxu0 0.0
        %6407 = vmatpush1.msra.mxu0 %v6386
        %6408 = vmatprep.subr.mxu0 0.0
        %6409 = vmatpush1.msra.mxu0 %v6380
        %6410 = vmatprep.subr.mxu0 0.0
        %6411 = vmatpush1.msra.mxu0 %v6379
        %6412 = vmatprep.subr.mxu0 0.0
        %6413 = vmatpush1.msra.mxu0 %v6378
        %6414 = vmatprep.subr.mxu0 0.0
        %6415 = vmatpush1.msra.mxu0 %v6377
        %6416 = vmatprep.subr.mxu0 0.0
        %6417 = vmatpush1.msra.mxu0 %v6376
        %6418 = vmatprep.subr.mxu0 0.0
        %6419 = vmatpush1.msra.mxu0 %v6375
        %6420 = vmatprep.subr.mxu0 0.0
        %6421 = vmatpush2.msra.mxu0 0.0
        %6422 = vmatprep.subr.mxu0 0.0
        %6423 = vmatpush2.msra.mxu0 0.0
        %6424 = vmatprep.subr.mxu0 0.0
        %6425 = vmatpush2.msra.mxu0 0.0
        %6426 = vmatprep.subr.mxu0 0.0
        %6427 = vmatpush2.msra.mxu0 0.0
        %6428 = vmatprep.subr.mxu0 0.0
        %6429 = vmatpush2.msra.mxu0 0.0
        %6430 = vmatprep.subr.mxu0 0.0
        %6431 = vmatpush2.msra.mxu0 0.0
        %6432 = vmatprep.subr.mxu0 0.0
        %6433 = vmatpush2.msra.mxu0 0.0
        %6434 = vmatprep.subr.mxu0 0.0
        %6435 = vmatpush2.msra.mxu0 0.0
        %6436 = vmatprep.subr.mxu0 0.0
        %6437 = vmatpush2.msra.mxu0 0.0
        %6438 = vmatprep.subr.mxu0 0.0
        %6439 = vmatpush2.msra.mxu0 0.0
        %6440 = vmatprep.subr.mxu0 0.0
        %6441 = vmatpush2.msra.mxu0 0.0
        %6442 = vmatprep.subr.mxu0 0.0
        %6443 = vmatpush2.msra.mxu0 0.0
        %6444 = vmatprep.subr.mxu0 0.0
        %6445 = vmatpush2.msra.mxu0 0.0
        %6446 = vmatprep.subr.mxu0 0.0
        %6447 = vmatpush2.msra.mxu0 0.0
        %6448 = vmatprep.subr.mxu0 0.0
        %6449 = vmatpush2.msra.mxu0 0.0
        %6450 = vmatprep.subr.mxu0 0.0
        %6451 = vmatpush2.msra.mxu0 0.0
        %6452 = vmatprep.mubr.f32.mxu0 0.0
        %6453 = vmatmul.mubr.f32.gmra.mxu0 %v6383
        %v6454 = vpop.f32.mrf.mxu0
        %v6455 = vadd.f32 0.0, %v6454
        %v6456 = vpop.f32.mrf.mxu0
        %6457 = vdwg.mxu0
        %v6458 = vadd.f32 %v6373, %v6455
        %s6459 = scalar_lea.vmem %s5, 1232
        %v6460 = vld [vmem:[%s6459] sm:$0xff]
        %v6461 = vld [vmem:[%s6459 + $0x8] sm:$0xff]
        %v6462 = vld [vmem:[%s6459 + $0x10] sm:$0xff]
        %v6463 = vld [vmem:[%s6459 + $0x18] sm:$0xff]
        %v6464 = vld [vmem:[%s6459 + $0x20] sm:$0xff]
        %v6465 = vld [vmem:[%s6459 + $0x28] sm:$0xff]
        %v6466 = vld [vmem:[%s6459 + $0x30] sm:$0x1]
        %v6467 = vrot.slane %v4585, 6
        %v6468 = vsel %vm4595, %v6467, 0
        %v6471 = vsel %vm4599, %v6466, 0
        %6473 = vmatprep.subr.mxu0 0.0
        %6474 = vmatpush1.msra.mxu0 0.0
        %6475 = vmatprep.subr.mxu0 0.0
        %6476 = vmatpush1.msra.mxu0 0.0
        %6477 = vmatprep.subr.mxu0 0.0
        %6478 = vmatpush1.msra.mxu0 0.0
        %6479 = vmatprep.subr.mxu0 0.0
        %6480 = vmatpush1.msra.mxu0 0.0
        %6481 = vmatprep.subr.mxu0 0.0
        %6482 = vmatpush1.msra.mxu0 0.0
        %6483 = vmatprep.subr.mxu0 0.0
        %6484 = vmatpush1.msra.mxu0 0.0
        %6485 = vmatprep.subr.mxu0 0.0
        %6486 = vmatpush1.msra.mxu0 0.0
        %6487 = vmatprep.subr.mxu0 0.0
        %6488 = vmatpush1.msra.mxu0 0.0
        %6489 = vmatprep.subr.mxu0 0.0
        %6490 = vmatpush1.msra.mxu0 0.0
        %6491 = vmatprep.subr.mxu0 0.0
        %6492 = vmatpush1.msra.mxu0 %v6471
        %6493 = vmatprep.subr.mxu0 0.0
        %6494 = vmatpush1.msra.mxu0 %v6465
        %6495 = vmatprep.subr.mxu0 0.0
        %6496 = vmatpush1.msra.mxu0 %v6464
        %6497 = vmatprep.subr.mxu0 0.0
        %6498 = vmatpush1.msra.mxu0 %v6463
        %6499 = vmatprep.subr.mxu0 0.0
        %6500 = vmatpush1.msra.mxu0 %v6462
        %6501 = vmatprep.subr.mxu0 0.0
        %6502 = vmatpush1.msra.mxu0 %v6461
        %6503 = vmatprep.subr.mxu0 0.0
        %6504 = vmatpush1.msra.mxu0 %v6460
        %6505 = vmatprep.subr.mxu0 0.0
        %6506 = vmatpush2.msra.mxu0 0.0
        %6507 = vmatprep.subr.mxu0 0.0
        %6508 = vmatpush2.msra.mxu0 0.0
        %6509 = vmatprep.subr.mxu0 0.0
        %6510 = vmatpush2.msra.mxu0 0.0
        %6511 = vmatprep.subr.mxu0 0.0
        %6512 = vmatpush2.msra.mxu0 0.0
        %6513 = vmatprep.subr.mxu0 0.0
        %6514 = vmatpush2.msra.mxu0 0.0
        %6515 = vmatprep.subr.mxu0 0.0
        %6516 = vmatpush2.msra.mxu0 0.0
        %6517 = vmatprep.subr.mxu0 0.0
        %6518 = vmatpush2.msra.mxu0 0.0
        %6519 = vmatprep.subr.mxu0 0.0
        %6520 = vmatpush2.msra.mxu0 0.0
        %6521 = vmatprep.subr.mxu0 0.0
        %6522 = vmatpush2.msra.mxu0 0.0
        %6523 = vmatprep.subr.mxu0 0.0
        %6524 = vmatpush2.msra.mxu0 0.0
        %6525 = vmatprep.subr.mxu0 0.0
        %6526 = vmatpush2.msra.mxu0 0.0
        %6527 = vmatprep.subr.mxu0 0.0
        %6528 = vmatpush2.msra.mxu0 0.0
        %6529 = vmatprep.subr.mxu0 0.0
        %6530 = vmatpush2.msra.mxu0 0.0
        %6531 = vmatprep.subr.mxu0 0.0
        %6532 = vmatpush2.msra.mxu0 0.0
        %6533 = vmatprep.subr.mxu0 0.0
        %6534 = vmatpush2.msra.mxu0 0.0
        %6535 = vmatprep.subr.mxu0 0.0
        %6536 = vmatpush2.msra.mxu0 0.0
        %6537 = vmatprep.mubr.f32.mxu0 0.0
        %6538 = vmatmul.mubr.f32.gmra.mxu0 %v6468
        %v6539 = vpop.f32.mrf.mxu0
        %v6540 = vadd.f32 0.0, %v6539
        %v6541 = vpop.f32.mrf.mxu0
        %6542 = vdwg.mxu0
        %v6543 = vadd.f32 %v6458, %v6540
        %s6544 = scalar_lea.vmem %s5, 1288
        %v6545 = vld [vmem:[%s6544] sm:$0xff]
        %v6546 = vld [vmem:[%s6544 + $0x8] sm:$0xff]
        %v6547 = vld [vmem:[%s6544 + $0x10] sm:$0xff]
        %v6548 = vld [vmem:[%s6544 + $0x18] sm:$0xff]
        %v6549 = vld [vmem:[%s6544 + $0x20] sm:$0xff]
        %v6550 = vld [vmem:[%s6544 + $0x28] sm:$0xff]
        %v6551 = vld [vmem:[%s6544 + $0x30] sm:$0x1]
        %v6552 = vrot.slane %v4585, 7
        %v6553 = vsel %vm4595, %v6552, 0
        %v6556 = vsel %vm4599, %v6551, 0
        %6558 = vmatprep.subr.mxu0 0.0
        %6559 = vmatpush1.msra.mxu0 0.0
        %6560 = vmatprep.subr.mxu0 0.0
        %6561 = vmatpush1.msra.mxu0 0.0
        %6562 = vmatprep.subr.mxu0 0.0
        %6563 = vmatpush1.msra.mxu0 0.0
        %6564 = vmatprep.subr.mxu0 0.0
        %6565 = vmatpush1.msra.mxu0 0.0
        %6566 = vmatprep.subr.mxu0 0.0
        %6567 = vmatpush1.msra.mxu0 0.0
        %6568 = vmatprep.subr.mxu0 0.0
        %6569 = vmatpush1.msra.mxu0 0.0
        %6570 = vmatprep.subr.mxu0 0.0
        %6571 = vmatpush1.msra.mxu0 0.0
        %6572 = vmatprep.subr.mxu0 0.0
        %6573 = vmatpush1.msra.mxu0 0.0
        %6574 = vmatprep.subr.mxu0 0.0
        %6575 = vmatpush1.msra.mxu0 0.0
        %6576 = vmatprep.subr.mxu0 0.0
        %6577 = vmatpush1.msra.mxu0 %v6556
        %6578 = vmatprep.subr.mxu0 0.0
        %6579 = vmatpush1.msra.mxu0 %v6550
        %6580 = vmatprep.subr.mxu0 0.0
        %6581 = vmatpush1.msra.mxu0 %v6549
        %6582 = vmatprep.subr.mxu0 0.0
        %6583 = vmatpush1.msra.mxu0 %v6548
        %6584 = vmatprep.subr.mxu0 0.0
        %6585 = vmatpush1.msra.mxu0 %v6547
        %6586 = vmatprep.subr.mxu0 0.0
        %6587 = vmatpush1.msra.mxu0 %v6546
        %6588 = vmatprep.subr.mxu0 0.0
        %6589 = vmatpush1.msra.mxu0 %v6545
        %6590 = vmatprep.subr.mxu0 0.0
        %6591 = vmatpush2.msra.mxu0 0.0
        %6592 = vmatprep.subr.mxu0 0.0
        %6593 = vmatpush2.msra.mxu0 0.0
        %6594 = vmatprep.subr.mxu0 0.0
        %6595 = vmatpush2.msra.mxu0 0.0
        %6596 = vmatprep.subr.mxu0 0.0
        %6597 = vmatpush2.msra.mxu0 0.0
        %6598 = vmatprep.subr.mxu0 0.0
        %6599 = vmatpush2.msra.mxu0 0.0
        %6600 = vmatprep.subr.mxu0 0.0
        %6601 = vmatpush2.msra.mxu0 0.0
        %6602 = vmatprep.subr.mxu0 0.0
        %6603 = vmatpush2.msra.mxu0 0.0
        %6604 = vmatprep.subr.mxu0 0.0
        %6605 = vmatpush2.msra.mxu0 0.0
        %6606 = vmatprep.subr.mxu0 0.0
        %6607 = vmatpush2.msra.mxu0 0.0
        %6608 = vmatprep.subr.mxu0 0.0
        %6609 = vmatpush2.msra.mxu0 0.0
        %6610 = vmatprep.subr.mxu0 0.0
        %6611 = vmatpush2.msra.mxu0 0.0
        %6612 = vmatprep.subr.mxu0 0.0
        %6613 = vmatpush2.msra.mxu0 0.0
        %6614 = vmatprep.subr.mxu0 0.0
        %6615 = vmatpush2.msra.mxu0 0.0
        %6616 = vmatprep.subr.mxu0 0.0
        %6617 = vmatpush2.msra.mxu0 0.0
        %6618 = vmatprep.subr.mxu0 0.0
        %6619 = vmatpush2.msra.mxu0 0.0
        %6620 = vmatprep.subr.mxu0 0.0
        %6621 = vmatpush2.msra.mxu0 0.0
        %6622 = vmatprep.mubr.f32.mxu0 0.0
        %6623 = vmatmul.mubr.f32.gmra.mxu0 %v6553
        %v6624 = vpop.f32.mrf.mxu0
        %v6625 = vadd.f32 0.0, %v6624
        %v6626 = vpop.f32.mrf.mxu0
        %6627 = vdwg.mxu0
        %v6628 = vadd.f32 %v6543, %v6625
        %s6629 = scalar_lea.vmem %s5, 1344
        %v6630 = vld [vmem:[%s6629] sm:$0xff]
        %v6631 = vld [vmem:[%s6629 + $0x8] sm:$0xff]
        %v6632 = vld [vmem:[%s6629 + $0x10] sm:$0xff]
        %v6633 = vld [vmem:[%s6629 + $0x18] sm:$0xff]
        %v6634 = vld [vmem:[%s6629 + $0x20] sm:$0xff]
        %v6635 = vld [vmem:[%s6629 + $0x28] sm:$0xff]
        %v6636 = vld [vmem:[%s6629 + $0x30] sm:$0x1]
        %v6638 = vsel %vm4595, %v4586, 0
        %v6641 = vsel %vm4599, %v6636, 0
        %6643 = vmatprep.subr.mxu0 0.0
        %6644 = vmatpush1.msra.mxu0 0.0
        %6645 = vmatprep.subr.mxu0 0.0
        %6646 = vmatpush1.msra.mxu0 0.0
        %6647 = vmatprep.subr.mxu0 0.0
        %6648 = vmatpush1.msra.mxu0 0.0
        %6649 = vmatprep.subr.mxu0 0.0
        %6650 = vmatpush1.msra.mxu0 0.0
        %6651 = vmatprep.subr.mxu0 0.0
        %6652 = vmatpush1.msra.mxu0 0.0
        %6653 = vmatprep.subr.mxu0 0.0
        %6654 = vmatpush1.msra.mxu0 0.0
        %6655 = vmatprep.subr.mxu0 0.0
        %6656 = vmatpush1.msra.mxu0 0.0
        %6657 = vmatprep.subr.mxu0 0.0
        %6658 = vmatpush1.msra.mxu0 0.0
        %6659 = vmatprep.subr.mxu0 0.0
        %6660 = vmatpush1.msra.mxu0 0.0
        %6661 = vmatprep.subr.mxu0 0.0
        %6662 = vmatpush1.msra.mxu0 %v6641
        %6663 = vmatprep.subr.mxu0 0.0
        %6664 = vmatpush1.msra.mxu0 %v6635
        %6665 = vmatprep.subr.mxu0 0.0
        %6666 = vmatpush1.msra.mxu0 %v6634
        %6667 = vmatprep.subr.mxu0 0.0
        %6668 = vmatpush1.msra.mxu0 %v6633
        %6669 = vmatprep.subr.mxu0 0.0
        %6670 = vmatpush1.msra.mxu0 %v6632
        %6671 = vmatprep.subr.mxu0 0.0
        %6672 = vmatpush1.msra.mxu0 %v6631
        %6673 = vmatprep.subr.mxu0 0.0
        %6674 = vmatpush1.msra.mxu0 %v6630
        %6675 = vmatprep.subr.mxu0 0.0
        %6676 = vmatpush2.msra.mxu0 0.0
        %6677 = vmatprep.subr.mxu0 0.0
        %6678 = vmatpush2.msra.mxu0 0.0
        %6679 = vmatprep.subr.mxu0 0.0
        %6680 = vmatpush2.msra.mxu0 0.0
        %6681 = vmatprep.subr.mxu0 0.0
        %6682 = vmatpush2.msra.mxu0 0.0
        %6683 = vmatprep.subr.mxu0 0.0
        %6684 = vmatpush2.msra.mxu0 0.0
        %6685 = vmatprep.subr.mxu0 0.0
        %6686 = vmatpush2.msra.mxu0 0.0
        %6687 = vmatprep.subr.mxu0 0.0
        %6688 = vmatpush2.msra.mxu0 0.0
        %6689 = vmatprep.subr.mxu0 0.0
        %6690 = vmatpush2.msra.mxu0 0.0
        %6691 = vmatprep.subr.mxu0 0.0
        %6692 = vmatpush2.msra.mxu0 0.0
        %6693 = vmatprep.subr.mxu0 0.0
        %6694 = vmatpush2.msra.mxu0 0.0
        %6695 = vmatprep.subr.mxu0 0.0
        %6696 = vmatpush2.msra.mxu0 0.0
        %6697 = vmatprep.subr.mxu0 0.0
        %6698 = vmatpush2.msra.mxu0 0.0
        %6699 = vmatprep.subr.mxu0 0.0
        %6700 = vmatpush2.msra.mxu0 0.0
        %6701 = vmatprep.subr.mxu0 0.0
        %6702 = vmatpush2.msra.mxu0 0.0
        %6703 = vmatprep.subr.mxu0 0.0
        %6704 = vmatpush2.msra.mxu0 0.0
        %6705 = vmatprep.subr.mxu0 0.0
        %6706 = vmatpush2.msra.mxu0 0.0
        %6707 = vmatprep.mubr.f32.mxu0 0.0
        %6708 = vmatmul.mubr.f32.gmra.mxu0 %v6638
        %v6709 = vpop.f32.mrf.mxu0
        %v6710 = vadd.f32 0.0, %v6709
        %v6711 = vpop.f32.mrf.mxu0
        %6712 = vdwg.mxu0
        %v6713 = vadd.f32 %v6628, %v6710
        %s6714 = scalar_lea.vmem %s5, 1400
        %v6715 = vld [vmem:[%s6714] sm:$0xff]
        %v6716 = vld [vmem:[%s6714 + $0x8] sm:$0xff]
        %v6717 = vld [vmem:[%s6714 + $0x10] sm:$0xff]
        %v6718 = vld [vmem:[%s6714 + $0x18] sm:$0xff]
        %v6719 = vld [vmem:[%s6714 + $0x20] sm:$0xff]
        %v6720 = vld [vmem:[%s6714 + $0x28] sm:$0xff]
        %v6721 = vld [vmem:[%s6714 + $0x30] sm:$0x1]
        %v6722 = vrot.slane %v4586, 1
        %v6723 = vsel %vm4595, %v6722, 0
        %v6726 = vsel %vm4599, %v6721, 0
        %6728 = vmatprep.subr.mxu0 0.0
        %6729 = vmatpush1.msra.mxu0 0.0
        %6730 = vmatprep.subr.mxu0 0.0
        %6731 = vmatpush1.msra.mxu0 0.0
        %6732 = vmatprep.subr.mxu0 0.0
        %6733 = vmatpush1.msra.mxu0 0.0
        %6734 = vmatprep.subr.mxu0 0.0
        %6735 = vmatpush1.msra.mxu0 0.0
        %6736 = vmatprep.subr.mxu0 0.0
        %6737 = vmatpush1.msra.mxu0 0.0
        %6738 = vmatprep.subr.mxu0 0.0
        %6739 = vmatpush1.msra.mxu0 0.0
        %6740 = vmatprep.subr.mxu0 0.0
        %6741 = vmatpush1.msra.mxu0 0.0
        %6742 = vmatprep.subr.mxu0 0.0
        %6743 = vmatpush1.msra.mxu0 0.0
        %6744 = vmatprep.subr.mxu0 0.0
        %6745 = vmatpush1.msra.mxu0 0.0
        %6746 = vmatprep.subr.mxu0 0.0
        %6747 = vmatpush1.msra.mxu0 %v6726
        %6748 = vmatprep.subr.mxu0 0.0
        %6749 = vmatpush1.msra.mxu0 %v6720
        %6750 = vmatprep.subr.mxu0 0.0
        %6751 = vmatpush1.msra.mxu0 %v6719
        %6752 = vmatprep.subr.mxu0 0.0
        %6753 = vmatpush1.msra.mxu0 %v6718
        %6754 = vmatprep.subr.mxu0 0.0
        %6755 = vmatpush1.msra.mxu0 %v6717
        %6756 = vmatprep.subr.mxu0 0.0
        %6757 = vmatpush1.msra.mxu0 %v6716
        %6758 = vmatprep.subr.mxu0 0.0
        %6759 = vmatpush1.msra.mxu0 %v6715
        %6760 = vmatprep.subr.mxu0 0.0
        %6761 = vmatpush2.msra.mxu0 0.0
        %6762 = vmatprep.subr.mxu0 0.0
        %6763 = vmatpush2.msra.mxu0 0.0
        %6764 = vmatprep.subr.mxu0 0.0
        %6765 = vmatpush2.msra.mxu0 0.0
        %6766 = vmatprep.subr.mxu0 0.0
        %6767 = vmatpush2.msra.mxu0 0.0
        %6768 = vmatprep.subr.mxu0 0.0
        %6769 = vmatpush2.msra.mxu0 0.0
        %6770 = vmatprep.subr.mxu0 0.0
        %6771 = vmatpush2.msra.mxu0 0.0
        %6772 = vmatprep.subr.mxu0 0.0
        %6773 = vmatpush2.msra.mxu0 0.0
        %6774 = vmatprep.subr.mxu0 0.0
        %6775 = vmatpush2.msra.mxu0 0.0
        %6776 = vmatprep.subr.mxu0 0.0
        %6777 = vmatpush2.msra.mxu0 0.0
        %6778 = vmatprep.subr.mxu0 0.0
        %6779 = vmatpush2.msra.mxu0 0.0
        %6780 = vmatprep.subr.mxu0 0.0
        %6781 = vmatpush2.msra.mxu0 0.0
        %6782 = vmatprep.subr.mxu0 0.0
        %6783 = vmatpush2.msra.mxu0 0.0
        %6784 = vmatprep.subr.mxu0 0.0
        %6785 = vmatpush2.msra.mxu0 0.0
        %6786 = vmatprep.subr.mxu0 0.0
        %6787 = vmatpush2.msra.mxu0 0.0
        %6788 = vmatprep.subr.mxu0 0.0
        %6789 = vmatpush2.msra.mxu0 0.0
        %6790 = vmatprep.subr.mxu0 0.0
        %6791 = vmatpush2.msra.mxu0 0.0
        %6792 = vmatprep.mubr.f32.mxu0 0.0
        %6793 = vmatmul.mubr.f32.gmra.mxu0 %v6723
        %v6794 = vpop.f32.mrf.mxu0
        %v6795 = vadd.f32 0.0, %v6794
        %v6796 = vpop.f32.mrf.mxu0
        %6797 = vdwg.mxu0
        %v6798 = vadd.f32 %v6713, %v6795
        %s6799 = scalar_lea.vmem %s5, 1456
        %v6800 = vld [vmem:[%s6799] sm:$0xff]
        %v6801 = vld [vmem:[%s6799 + $0x8] sm:$0xff]
        %v6802 = vld [vmem:[%s6799 + $0x10] sm:$0xff]
        %v6803 = vld [vmem:[%s6799 + $0x18] sm:$0xff]
        %v6804 = vld [vmem:[%s6799 + $0x20] sm:$0xff]
        %v6805 = vld [vmem:[%s6799 + $0x28] sm:$0xff]
        %v6806 = vld [vmem:[%s6799 + $0x30] sm:$0x1]
        %v6807 = vrot.slane %v4586, 2
        %v6808 = vsel %vm4595, %v6807, 0
        %v6811 = vsel %vm4599, %v6806, 0
        %6813 = vmatprep.subr.mxu0 0.0
        %6814 = vmatpush1.msra.mxu0 0.0
        %6815 = vmatprep.subr.mxu0 0.0
        %6816 = vmatpush1.msra.mxu0 0.0
        %6817 = vmatprep.subr.mxu0 0.0
        %6818 = vmatpush1.msra.mxu0 0.0
        %6819 = vmatprep.subr.mxu0 0.0
        %6820 = vmatpush1.msra.mxu0 0.0
        %6821 = vmatprep.subr.mxu0 0.0
        %6822 = vmatpush1.msra.mxu0 0.0
        %6823 = vmatprep.subr.mxu0 0.0
        %6824 = vmatpush1.msra.mxu0 0.0
        %6825 = vmatprep.subr.mxu0 0.0
        %6826 = vmatpush1.msra.mxu0 0.0
        %6827 = vmatprep.subr.mxu0 0.0
        %6828 = vmatpush1.msra.mxu0 0.0
        %6829 = vmatprep.subr.mxu0 0.0
        %6830 = vmatpush1.msra.mxu0 0.0
        %6831 = vmatprep.subr.mxu0 0.0
        %6832 = vmatpush1.msra.mxu0 %v6811
        %6833 = vmatprep.subr.mxu0 0.0
        %6834 = vmatpush1.msra.mxu0 %v6805
        %6835 = vmatprep.subr.mxu0 0.0
        %6836 = vmatpush1.msra.mxu0 %v6804
        %6837 = vmatprep.subr.mxu0 0.0
        %6838 = vmatpush1.msra.mxu0 %v6803
        %6839 = vmatprep.subr.mxu0 0.0
        %6840 = vmatpush1.msra.mxu0 %v6802
        %6841 = vmatprep.subr.mxu0 0.0
        %6842 = vmatpush1.msra.mxu0 %v6801
        %6843 = vmatprep.subr.mxu0 0.0
        %6844 = vmatpush1.msra.mxu0 %v6800
        %6845 = vmatprep.subr.mxu0 0.0
        %6846 = vmatpush2.msra.mxu0 0.0
        %6847 = vmatprep.subr.mxu0 0.0
        %6848 = vmatpush2.msra.mxu0 0.0
        %6849 = vmatprep.subr.mxu0 0.0
        %6850 = vmatpush2.msra.mxu0 0.0
        %6851 = vmatprep.subr.mxu0 0.0
        %6852 = vmatpush2.msra.mxu0 0.0
        %6853 = vmatprep.subr.mxu0 0.0
        %6854 = vmatpush2.msra.mxu0 0.0
        %6855 = vmatprep.subr.mxu0 0.0
        %6856 = vmatpush2.msra.mxu0 0.0
        %6857 = vmatprep.subr.mxu0 0.0
        %6858 = vmatpush2.msra.mxu0 0.0
        %6859 = vmatprep.subr.mxu0 0.0
        %6860 = vmatpush2.msra.mxu0 0.0
        %6861 = vmatprep.subr.mxu0 0.0
        %6862 = vmatpush2.msra.mxu0 0.0
        %6863 = vmatprep.subr.mxu0 0.0
        %6864 = vmatpush2.msra.mxu0 0.0
        %6865 = vmatprep.subr.mxu0 0.0
        %6866 = vmatpush2.msra.mxu0 0.0
        %6867 = vmatprep.subr.mxu0 0.0
        %6868 = vmatpush2.msra.mxu0 0.0
        %6869 = vmatprep.subr.mxu0 0.0
        %6870 = vmatpush2.msra.mxu0 0.0
        %6871 = vmatprep.subr.mxu0 0.0
        %6872 = vmatpush2.msra.mxu0 0.0
        %6873 = vmatprep.subr.mxu0 0.0
        %6874 = vmatpush2.msra.mxu0 0.0
        %6875 = vmatprep.subr.mxu0 0.0
        %6876 = vmatpush2.msra.mxu0 0.0
        %6877 = vmatprep.mubr.f32.mxu0 0.0
        %6878 = vmatmul.mubr.f32.gmra.mxu0 %v6808
        %v6879 = vpop.f32.mrf.mxu0
        %v6880 = vadd.f32 0.0, %v6879
        %v6881 = vpop.f32.mrf.mxu0
        %6882 = vdwg.mxu0
        %v6883 = vadd.f32 %v6798, %v6880
        %s6884 = scalar_lea.vmem %s5, 1512
        %v6885 = vld [vmem:[%s6884] sm:$0xff]
        %v6886 = vld [vmem:[%s6884 + $0x8] sm:$0xff]
        %v6887 = vld [vmem:[%s6884 + $0x10] sm:$0xff]
        %v6888 = vld [vmem:[%s6884 + $0x18] sm:$0xff]
        %v6889 = vld [vmem:[%s6884 + $0x20] sm:$0xff]
        %v6890 = vld [vmem:[%s6884 + $0x28] sm:$0xff]
        %v6891 = vld [vmem:[%s6884 + $0x30] sm:$0x1]
        %v6892 = vrot.slane %v4586, 3
        %v6893 = vsel %vm4595, %v6892, 0
        %v6896 = vsel %vm4599, %v6891, 0
        %6898 = vmatprep.subr.mxu0 0.0
        %6899 = vmatpush1.msra.mxu0 0.0
        %6900 = vmatprep.subr.mxu0 0.0
        %6901 = vmatpush1.msra.mxu0 0.0
        %6902 = vmatprep.subr.mxu0 0.0
        %6903 = vmatpush1.msra.mxu0 0.0
        %6904 = vmatprep.subr.mxu0 0.0
        %6905 = vmatpush1.msra.mxu0 0.0
        %6906 = vmatprep.subr.mxu0 0.0
        %6907 = vmatpush1.msra.mxu0 0.0
        %6908 = vmatprep.subr.mxu0 0.0
        %6909 = vmatpush1.msra.mxu0 0.0
        %6910 = vmatprep.subr.mxu0 0.0
        %6911 = vmatpush1.msra.mxu0 0.0
        %6912 = vmatprep.subr.mxu0 0.0
        %6913 = vmatpush1.msra.mxu0 0.0
        %6914 = vmatprep.subr.mxu0 0.0
        %6915 = vmatpush1.msra.mxu0 0.0
        %6916 = vmatprep.subr.mxu0 0.0
        %6917 = vmatpush1.msra.mxu0 %v6896
        %6918 = vmatprep.subr.mxu0 0.0
        %6919 = vmatpush1.msra.mxu0 %v6890
        %6920 = vmatprep.subr.mxu0 0.0
        %6921 = vmatpush1.msra.mxu0 %v6889
        %6922 = vmatprep.subr.mxu0 0.0
        %6923 = vmatpush1.msra.mxu0 %v6888
        %6924 = vmatprep.subr.mxu0 0.0
        %6925 = vmatpush1.msra.mxu0 %v6887
        %6926 = vmatprep.subr.mxu0 0.0
        %6927 = vmatpush1.msra.mxu0 %v6886
        %6928 = vmatprep.subr.mxu0 0.0
        %6929 = vmatpush1.msra.mxu0 %v6885
        %6930 = vmatprep.subr.mxu0 0.0
        %6931 = vmatpush2.msra.mxu0 0.0
        %6932 = vmatprep.subr.mxu0 0.0
        %6933 = vmatpush2.msra.mxu0 0.0
        %6934 = vmatprep.subr.mxu0 0.0
        %6935 = vmatpush2.msra.mxu0 0.0
        %6936 = vmatprep.subr.mxu0 0.0
        %6937 = vmatpush2.msra.mxu0 0.0
        %6938 = vmatprep.subr.mxu0 0.0
        %6939 = vmatpush2.msra.mxu0 0.0
        %6940 = vmatprep.subr.mxu0 0.0
        %6941 = vmatpush2.msra.mxu0 0.0
        %6942 = vmatprep.subr.mxu0 0.0
        %6943 = vmatpush2.msra.mxu0 0.0
        %6944 = vmatprep.subr.mxu0 0.0
        %6945 = vmatpush2.msra.mxu0 0.0
        %6946 = vmatprep.subr.mxu0 0.0
        %6947 = vmatpush2.msra.mxu0 0.0
        %6948 = vmatprep.subr.mxu0 0.0
        %6949 = vmatpush2.msra.mxu0 0.0
        %6950 = vmatprep.subr.mxu0 0.0
        %6951 = vmatpush2.msra.mxu0 0.0
        %6952 = vmatprep.subr.mxu0 0.0
        %6953 = vmatpush2.msra.mxu0 0.0
        %6954 = vmatprep.subr.mxu0 0.0
        %6955 = vmatpush2.msra.mxu0 0.0
        %6956 = vmatprep.subr.mxu0 0.0
        %6957 = vmatpush2.msra.mxu0 0.0
        %6958 = vmatprep.subr.mxu0 0.0
        %6959 = vmatpush2.msra.mxu0 0.0
        %6960 = vmatprep.subr.mxu0 0.0
        %6961 = vmatpush2.msra.mxu0 0.0
        %6962 = vmatprep.mubr.f32.mxu0 0.0
        %6963 = vmatmul.mubr.f32.gmra.mxu0 %v6893
        %v6964 = vpop.f32.mrf.mxu0
        %v6965 = vadd.f32 0.0, %v6964
        %v6966 = vpop.f32.mrf.mxu0
        %6967 = vdwg.mxu0
        %v6968 = vadd.f32 %v6883, %v6965
        %s6969 = scalar_lea.vmem %s5, 1568
        %v6970 = vld [vmem:[%s6969] sm:$0xff]
        %v6971 = vld [vmem:[%s6969 + $0x8] sm:$0xff]
        %v6972 = vld [vmem:[%s6969 + $0x10] sm:$0xff]
        %v6973 = vld [vmem:[%s6969 + $0x18] sm:$0xff]
        %v6974 = vld [vmem:[%s6969 + $0x20] sm:$0xff]
        %v6975 = vld [vmem:[%s6969 + $0x28] sm:$0xff]
        %v6976 = vld [vmem:[%s6969 + $0x30] sm:$0x1]
        %v6977 = vrot.slane %v4586, 4
        %v6978 = vsel %vm4595, %v6977, 0
        %v6981 = vsel %vm4599, %v6976, 0
        %6983 = vmatprep.subr.mxu0 0.0
        %6984 = vmatpush1.msra.mxu0 0.0
        %6985 = vmatprep.subr.mxu0 0.0
        %6986 = vmatpush1.msra.mxu0 0.0
        %6987 = vmatprep.subr.mxu0 0.0
        %6988 = vmatpush1.msra.mxu0 0.0
        %6989 = vmatprep.subr.mxu0 0.0
        %6990 = vmatpush1.msra.mxu0 0.0
        %6991 = vmatprep.subr.mxu0 0.0
        %6992 = vmatpush1.msra.mxu0 0.0
        %6993 = vmatprep.subr.mxu0 0.0
        %6994 = vmatpush1.msra.mxu0 0.0
        %6995 = vmatprep.subr.mxu0 0.0
        %6996 = vmatpush1.msra.mxu0 0.0
        %6997 = vmatprep.subr.mxu0 0.0
        %6998 = vmatpush1.msra.mxu0 0.0
        %6999 = vmatprep.subr.mxu0 0.0
        %7000 = vmatpush1.msra.mxu0 0.0
        %7001 = vmatprep.subr.mxu0 0.0
        %7002 = vmatpush1.msra.mxu0 %v6981
        %7003 = vmatprep.subr.mxu0 0.0
        %7004 = vmatpush1.msra.mxu0 %v6975
        %7005 = vmatprep.subr.mxu0 0.0
        %7006 = vmatpush1.msra.mxu0 %v6974
        %7007 = vmatprep.subr.mxu0 0.0
        %7008 = vmatpush1.msra.mxu0 %v6973
        %7009 = vmatprep.subr.mxu0 0.0
        %7010 = vmatpush1.msra.mxu0 %v6972
        %7011 = vmatprep.subr.mxu0 0.0
        %7012 = vmatpush1.msra.mxu0 %v6971
        %7013 = vmatprep.subr.mxu0 0.0
        %7014 = vmatpush1.msra.mxu0 %v6970
        %7015 = vmatprep.subr.mxu0 0.0
        %7016 = vmatpush2.msra.mxu0 0.0
        %7017 = vmatprep.subr.mxu0 0.0
        %7018 = vmatpush2.msra.mxu0 0.0
        %7019 = vmatprep.subr.mxu0 0.0
        %7020 = vmatpush2.msra.mxu0 0.0
        %7021 = vmatprep.subr.mxu0 0.0
        %7022 = vmatpush2.msra.mxu0 0.0
        %7023 = vmatprep.subr.mxu0 0.0
        %7024 = vmatpush2.msra.mxu0 0.0
        %7025 = vmatprep.subr.mxu0 0.0
        %7026 = vmatpush2.msra.mxu0 0.0
        %7027 = vmatprep.subr.mxu0 0.0
        %7028 = vmatpush2.msra.mxu0 0.0
        %7029 = vmatprep.subr.mxu0 0.0
        %7030 = vmatpush2.msra.mxu0 0.0
        %7031 = vmatprep.subr.mxu0 0.0
        %7032 = vmatpush2.msra.mxu0 0.0
        %7033 = vmatprep.subr.mxu0 0.0
        %7034 = vmatpush2.msra.mxu0 0.0
        %7035 = vmatprep.subr.mxu0 0.0
        %7036 = vmatpush2.msra.mxu0 0.0
        %7037 = vmatprep.subr.mxu0 0.0
        %7038 = vmatpush2.msra.mxu0 0.0
        %7039 = vmatprep.subr.mxu0 0.0
        %7040 = vmatpush2.msra.mxu0 0.0
        %7041 = vmatprep.subr.mxu0 0.0
        %7042 = vmatpush2.msra.mxu0 0.0
        %7043 = vmatprep.subr.mxu0 0.0
        %7044 = vmatpush2.msra.mxu0 0.0
        %7045 = vmatprep.subr.mxu0 0.0
        %7046 = vmatpush2.msra.mxu0 0.0
        %7047 = vmatprep.mubr.f32.mxu0 0.0
        %7048 = vmatmul.mubr.f32.gmra.mxu0 %v6978
        %v7049 = vpop.f32.mrf.mxu0
        %v7050 = vadd.f32 0.0, %v7049
        %v7051 = vpop.f32.mrf.mxu0
        %7052 = vdwg.mxu0
        %v7053 = vadd.f32 %v6968, %v7050
        %s7054 = scalar_lea.vmem %s5, 1624
        %v7055 = vld [vmem:[%s7054] sm:$0xff]
        %v7056 = vld [vmem:[%s7054 + $0x8] sm:$0xff]
        %v7057 = vld [vmem:[%s7054 + $0x10] sm:$0xff]
        %v7058 = vld [vmem:[%s7054 + $0x18] sm:$0xff]
        %v7059 = vld [vmem:[%s7054 + $0x20] sm:$0xff]
        %v7060 = vld [vmem:[%s7054 + $0x28] sm:$0xff]
        %v7061 = vld [vmem:[%s7054 + $0x30] sm:$0x1]
        %v7062 = vrot.slane %v4586, 5
        %v7063 = vsel %vm4595, %v7062, 0
        %v7066 = vsel %vm4599, %v7061, 0
        %7068 = vmatprep.subr.mxu0 0.0
        %7069 = vmatpush1.msra.mxu0 0.0
        %7070 = vmatprep.subr.mxu0 0.0
        %7071 = vmatpush1.msra.mxu0 0.0
        %7072 = vmatprep.subr.mxu0 0.0
        %7073 = vmatpush1.msra.mxu0 0.0
        %7074 = vmatprep.subr.mxu0 0.0
        %7075 = vmatpush1.msra.mxu0 0.0
        %7076 = vmatprep.subr.mxu0 0.0
        %7077 = vmatpush1.msra.mxu0 0.0
        %7078 = vmatprep.subr.mxu0 0.0
        %7079 = vmatpush1.msra.mxu0 0.0
        %7080 = vmatprep.subr.mxu0 0.0
        %7081 = vmatpush1.msra.mxu0 0.0
        %7082 = vmatprep.subr.mxu0 0.0
        %7083 = vmatpush1.msra.mxu0 0.0
        %7084 = vmatprep.subr.mxu0 0.0
        %7085 = vmatpush1.msra.mxu0 0.0
        %7086 = vmatprep.subr.mxu0 0.0
        %7087 = vmatpush1.msra.mxu0 %v7066
        %7088 = vmatprep.subr.mxu0 0.0
        %7089 = vmatpush1.msra.mxu0 %v7060
        %7090 = vmatprep.subr.mxu0 0.0
        %7091 = vmatpush1.msra.mxu0 %v7059
        %7092 = vmatprep.subr.mxu0 0.0
        %7093 = vmatpush1.msra.mxu0 %v7058
        %7094 = vmatprep.subr.mxu0 0.0
        %7095 = vmatpush1.msra.mxu0 %v7057
        %7096 = vmatprep.subr.mxu0 0.0
        %7097 = vmatpush1.msra.mxu0 %v7056
        %7098 = vmatprep.subr.mxu0 0.0
        %7099 = vmatpush1.msra.mxu0 %v7055
        %7100 = vmatprep.subr.mxu0 0.0
        %7101 = vmatpush2.msra.mxu0 0.0
        %7102 = vmatprep.subr.mxu0 0.0
        %7103 = vmatpush2.msra.mxu0 0.0
        %7104 = vmatprep.subr.mxu0 0.0
        %7105 = vmatpush2.msra.mxu0 0.0
        %7106 = vmatprep.subr.mxu0 0.0
        %7107 = vmatpush2.msra.mxu0 0.0
        %7108 = vmatprep.subr.mxu0 0.0
        %7109 = vmatpush2.msra.mxu0 0.0
        %7110 = vmatprep.subr.mxu0 0.0
        %7111 = vmatpush2.msra.mxu0 0.0
        %7112 = vmatprep.subr.mxu0 0.0
        %7113 = vmatpush2.msra.mxu0 0.0
        %7114 = vmatprep.subr.mxu0 0.0
        %7115 = vmatpush2.msra.mxu0 0.0
        %7116 = vmatprep.subr.mxu0 0.0
        %7117 = vmatpush2.msra.mxu0 0.0
        %7118 = vmatprep.subr.mxu0 0.0
        %7119 = vmatpush2.msra.mxu0 0.0
        %7120 = vmatprep.subr.mxu0 0.0
        %7121 = vmatpush2.msra.mxu0 0.0
        %7122 = vmatprep.subr.mxu0 0.0
        %7123 = vmatpush2.msra.mxu0 0.0
        %7124 = vmatprep.subr.mxu0 0.0
        %7125 = vmatpush2.msra.mxu0 0.0
        %7126 = vmatprep.subr.mxu0 0.0
        %7127 = vmatpush2.msra.mxu0 0.0
        %7128 = vmatprep.subr.mxu0 0.0
        %7129 = vmatpush2.msra.mxu0 0.0
        %7130 = vmatprep.subr.mxu0 0.0
        %7131 = vmatpush2.msra.mxu0 0.0
        %7132 = vmatprep.mubr.f32.mxu0 0.0
        %7133 = vmatmul.mubr.f32.gmra.mxu0 %v7063
        %v7134 = vpop.f32.mrf.mxu0
        %v7135 = vadd.f32 0.0, %v7134
        %v7136 = vpop.f32.mrf.mxu0
        %7137 = vdwg.mxu0
        %v7138 = vadd.f32 %v7053, %v7135
        %s7139 = scalar_lea.vmem %s5, 1680
        %v7140 = vld [vmem:[%s7139] sm:$0xff]
        %v7141 = vld [vmem:[%s7139 + $0x8] sm:$0xff]
        %v7142 = vld [vmem:[%s7139 + $0x10] sm:$0xff]
        %v7143 = vld [vmem:[%s7139 + $0x18] sm:$0xff]
        %v7144 = vld [vmem:[%s7139 + $0x20] sm:$0xff]
        %v7145 = vld [vmem:[%s7139 + $0x28] sm:$0xff]
        %v7146 = vld [vmem:[%s7139 + $0x30] sm:$0x1]
        %v7147 = vrot.slane %v4586, 6
        %v7148 = vsel %vm4595, %v7147, 0
        %v7151 = vsel %vm4599, %v7146, 0
        %7153 = vmatprep.subr.mxu0 0.0
        %7154 = vmatpush1.msra.mxu0 0.0
        %7155 = vmatprep.subr.mxu0 0.0
        %7156 = vmatpush1.msra.mxu0 0.0
        %7157 = vmatprep.subr.mxu0 0.0
        %7158 = vmatpush1.msra.mxu0 0.0
        %7159 = vmatprep.subr.mxu0 0.0
        %7160 = vmatpush1.msra.mxu0 0.0
        %7161 = vmatprep.subr.mxu0 0.0
        %7162 = vmatpush1.msra.mxu0 0.0
        %7163 = vmatprep.subr.mxu0 0.0
        %7164 = vmatpush1.msra.mxu0 0.0
        %7165 = vmatprep.subr.mxu0 0.0
        %7166 = vmatpush1.msra.mxu0 0.0
        %7167 = vmatprep.subr.mxu0 0.0
        %7168 = vmatpush1.msra.mxu0 0.0
        %7169 = vmatprep.subr.mxu0 0.0
        %7170 = vmatpush1.msra.mxu0 0.0
        %7171 = vmatprep.subr.mxu0 0.0
        %7172 = vmatpush1.msra.mxu0 %v7151
        %7173 = vmatprep.subr.mxu0 0.0
        %7174 = vmatpush1.msra.mxu0 %v7145
        %7175 = vmatprep.subr.mxu0 0.0
        %7176 = vmatpush1.msra.mxu0 %v7144
        %7177 = vmatprep.subr.mxu0 0.0
        %7178 = vmatpush1.msra.mxu0 %v7143
        %7179 = vmatprep.subr.mxu0 0.0
        %7180 = vmatpush1.msra.mxu0 %v7142
        %7181 = vmatprep.subr.mxu0 0.0
        %7182 = vmatpush1.msra.mxu0 %v7141
        %7183 = vmatprep.subr.mxu0 0.0
        %7184 = vmatpush1.msra.mxu0 %v7140
        %7185 = vmatprep.subr.mxu0 0.0
        %7186 = vmatpush2.msra.mxu0 0.0
        %7187 = vmatprep.subr.mxu0 0.0
        %7188 = vmatpush2.msra.mxu0 0.0
        %7189 = vmatprep.subr.mxu0 0.0
        %7190 = vmatpush2.msra.mxu0 0.0
        %7191 = vmatprep.subr.mxu0 0.0
        %7192 = vmatpush2.msra.mxu0 0.0
        %7193 = vmatprep.subr.mxu0 0.0
        %7194 = vmatpush2.msra.mxu0 0.0
        %7195 = vmatprep.subr.mxu0 0.0
        %7196 = vmatpush2.msra.mxu0 0.0
        %7197 = vmatprep.subr.mxu0 0.0
        %7198 = vmatpush2.msra.mxu0 0.0
        %7199 = vmatprep.subr.mxu0 0.0
        %7200 = vmatpush2.msra.mxu0 0.0
        %7201 = vmatprep.subr.mxu0 0.0
        %7202 = vmatpush2.msra.mxu0 0.0
        %7203 = vmatprep.subr.mxu0 0.0
        %7204 = vmatpush2.msra.mxu0 0.0
        %7205 = vmatprep.subr.mxu0 0.0
        %7206 = vmatpush2.msra.mxu0 0.0
        %7207 = vmatprep.subr.mxu0 0.0
        %7208 = vmatpush2.msra.mxu0 0.0
        %7209 = vmatprep.subr.mxu0 0.0
        %7210 = vmatpush2.msra.mxu0 0.0
        %7211 = vmatprep.subr.mxu0 0.0
        %7212 = vmatpush2.msra.mxu0 0.0
        %7213 = vmatprep.subr.mxu0 0.0
        %7214 = vmatpush2.msra.mxu0 0.0
        %7215 = vmatprep.subr.mxu0 0.0
        %7216 = vmatpush2.msra.mxu0 0.0
        %7217 = vmatprep.mubr.f32.mxu0 0.0
        %7218 = vmatmul.mubr.f32.gmra.mxu0 %v7148
        %v7219 = vpop.f32.mrf.mxu0
        %v7220 = vadd.f32 0.0, %v7219
        %v7221 = vpop.f32.mrf.mxu0
        %7222 = vdwg.mxu0
        %v7223 = vadd.f32 %v7138, %v7220
        %s7224 = scalar_lea.vmem %s5, 1736
        %v7225 = vld [vmem:[%s7224] sm:$0xff]
        %v7226 = vld [vmem:[%s7224 + $0x8] sm:$0xff]
        %v7227 = vld [vmem:[%s7224 + $0x10] sm:$0xff]
        %v7228 = vld [vmem:[%s7224 + $0x18] sm:$0xff]
        %v7229 = vld [vmem:[%s7224 + $0x20] sm:$0xff]
        %v7230 = vld [vmem:[%s7224 + $0x28] sm:$0xff]
        %v7231 = vld [vmem:[%s7224 + $0x30] sm:$0x1]
        %v7232 = vrot.slane %v4586, 7
        %v7233 = vsel %vm4595, %v7232, 0
        %v7236 = vsel %vm4599, %v7231, 0
        %7238 = vmatprep.subr.mxu0 0.0
        %7239 = vmatpush1.msra.mxu0 0.0
        %7240 = vmatprep.subr.mxu0 0.0
        %7241 = vmatpush1.msra.mxu0 0.0
        %7242 = vmatprep.subr.mxu0 0.0
        %7243 = vmatpush1.msra.mxu0 0.0
        %7244 = vmatprep.subr.mxu0 0.0
        %7245 = vmatpush1.msra.mxu0 0.0
        %7246 = vmatprep.subr.mxu0 0.0
        %7247 = vmatpush1.msra.mxu0 0.0
        %7248 = vmatprep.subr.mxu0 0.0
        %7249 = vmatpush1.msra.mxu0 0.0
        %7250 = vmatprep.subr.mxu0 0.0
        %7251 = vmatpush1.msra.mxu0 0.0
        %7252 = vmatprep.subr.mxu0 0.0
        %7253 = vmatpush1.msra.mxu0 0.0
        %7254 = vmatprep.subr.mxu0 0.0
        %7255 = vmatpush1.msra.mxu0 0.0
        %7256 = vmatprep.subr.mxu0 0.0
        %7257 = vmatpush1.msra.mxu0 %v7236
        %7258 = vmatprep.subr.mxu0 0.0
        %7259 = vmatpush1.msra.mxu0 %v7230
        %7260 = vmatprep.subr.mxu0 0.0
        %7261 = vmatpush1.msra.mxu0 %v7229
        %7262 = vmatprep.subr.mxu0 0.0
        %7263 = vmatpush1.msra.mxu0 %v7228
        %7264 = vmatprep.subr.mxu0 0.0
        %7265 = vmatpush1.msra.mxu0 %v7227
        %7266 = vmatprep.subr.mxu0 0.0
        %7267 = vmatpush1.msra.mxu0 %v7226
        %7268 = vmatprep.subr.mxu0 0.0
        %7269 = vmatpush1.msra.mxu0 %v7225
        %7270 = vmatprep.subr.mxu0 0.0
        %7271 = vmatpush2.msra.mxu0 0.0
        %7272 = vmatprep.subr.mxu0 0.0
        %7273 = vmatpush2.msra.mxu0 0.0
        %7274 = vmatprep.subr.mxu0 0.0
        %7275 = vmatpush2.msra.mxu0 0.0
        %7276 = vmatprep.subr.mxu0 0.0
        %7277 = vmatpush2.msra.mxu0 0.0
        %7278 = vmatprep.subr.mxu0 0.0
        %7279 = vmatpush2.msra.mxu0 0.0
        %7280 = vmatprep.subr.mxu0 0.0
        %7281 = vmatpush2.msra.mxu0 0.0
        %7282 = vmatprep.subr.mxu0 0.0
        %7283 = vmatpush2.msra.mxu0 0.0
        %7284 = vmatprep.subr.mxu0 0.0
        %7285 = vmatpush2.msra.mxu0 0.0
        %7286 = vmatprep.subr.mxu0 0.0
        %7287 = vmatpush2.msra.mxu0 0.0
        %7288 = vmatprep.subr.mxu0 0.0
        %7289 = vmatpush2.msra.mxu0 0.0
        %7290 = vmatprep.subr.mxu0 0.0
        %7291 = vmatpush2.msra.mxu0 0.0
        %7292 = vmatprep.subr.mxu0 0.0
        %7293 = vmatpush2.msra.mxu0 0.0
        %7294 = vmatprep.subr.mxu0 0.0
        %7295 = vmatpush2.msra.mxu0 0.0
        %7296 = vmatprep.subr.mxu0 0.0
        %7297 = vmatpush2.msra.mxu0 0.0
        %7298 = vmatprep.subr.mxu0 0.0
        %7299 = vmatpush2.msra.mxu0 0.0
        %7300 = vmatprep.subr.mxu0 0.0
        %7301 = vmatpush2.msra.mxu0 0.0
        %7302 = vmatprep.mubr.f32.mxu0 0.0
        %7303 = vmatmul.mubr.f32.gmra.mxu0 %v7233
        %v7304 = vpop.f32.mrf.mxu0
        %v7305 = vadd.f32 0.0, %v7304
        %v7306 = vpop.f32.mrf.mxu0
        %7307 = vdwg.mxu0
        %v7308 = vadd.f32 %v7223, %v7305
        %v7309 = vmax.f32 %v7308, 0.0
        %v7310 = vld [vmem:[%s7] sm:$0xff]
        %v7311 = vld [vmem:[%s8] sm:$0x1]
        %v7313 = vsel %vm384, %v7309, 0
        %7315 = vmatprep.subr.mxu0 0.0
        %7316 = vmatpush1.msra.mxu0 0.0
        %7317 = vmatprep.subr.mxu0 0.0
        %7318 = vmatpush1.msra.mxu0 0.0
        %7319 = vmatprep.subr.mxu0 0.0
        %7320 = vmatpush1.msra.mxu0 0.0
        %7321 = vmatprep.subr.mxu0 0.0
        %7322 = vmatpush1.msra.mxu0 0.0
        %7323 = vmatprep.subr.mxu0 0.0
        %7324 = vmatpush1.msra.mxu0 0.0
        %7325 = vmatprep.subr.mxu0 0.0
        %7326 = vmatpush1.msra.mxu0 0.0
        %7327 = vmatprep.subr.mxu0 0.0
        %7328 = vmatpush1.msra.mxu0 0.0
        %7329 = vmatprep.subr.mxu0 0.0
        %7330 = vmatpush1.msra.mxu0 0.0
        %7331 = vmatprep.subr.mxu0 0.0
        %7332 = vmatpush1.msra.mxu0 0.0
        %7333 = vmatprep.subr.mxu0 0.0
        %7334 = vmatpush1.msra.mxu0 0.0
        %7335 = vmatprep.subr.mxu0 0.0
        %7336 = vmatpush1.msra.mxu0 0.0
        %7337 = vmatprep.subr.mxu0 0.0
        %7338 = vmatpush1.msra.mxu0 0.0
        %7339 = vmatprep.subr.mxu0 0.0
        %7340 = vmatpush1.msra.mxu0 0.0
        %7341 = vmatprep.subr.mxu0 0.0
        %7342 = vmatpush1.msra.mxu0 0.0
        %7343 = vmatprep.subr.mxu0 0.0
        %7344 = vmatpush1.msra.mxu0 0.0
        %7345 = vmatprep.subr.mxu0 0.0
        %7346 = vmatpush1.msra.mxu0 %v7310
        %7347 = vmatprep.subr.mxu0 0.0
        %7348 = vmatpush2.msra.mxu0 0.0
        %7349 = vmatprep.subr.mxu0 0.0
        %7350 = vmatpush2.msra.mxu0 0.0
        %7351 = vmatprep.subr.mxu0 0.0
        %7352 = vmatpush2.msra.mxu0 0.0
        %7353 = vmatprep.subr.mxu0 0.0
        %7354 = vmatpush2.msra.mxu0 0.0
        %7355 = vmatprep.subr.mxu0 0.0
        %7356 = vmatpush2.msra.mxu0 0.0
        %7357 = vmatprep.subr.mxu0 0.0
        %7358 = vmatpush2.msra.mxu0 0.0
        %7359 = vmatprep.subr.mxu0 0.0
        %7360 = vmatpush2.msra.mxu0 0.0
        %7361 = vmatprep.subr.mxu0 0.0
        %7362 = vmatpush2.msra.mxu0 0.0
        %7363 = vmatprep.subr.mxu0 0.0
        %7364 = vmatpush2.msra.mxu0 0.0
        %7365 = vmatprep.subr.mxu0 0.0
        %7366 = vmatpush2.msra.mxu0 0.0
        %7367 = vmatprep.subr.mxu0 0.0
        %7368 = vmatpush2.msra.mxu0 0.0
        %7369 = vmatprep.subr.mxu0 0.0
        %7370 = vmatpush2.msra.mxu0 0.0
        %7371 = vmatprep.subr.mxu0 0.0
        %7372 = vmatpush2.msra.mxu0 0.0
        %7373 = vmatprep.subr.mxu0 0.0
        %7374 = vmatpush2.msra.mxu0 0.0
        %7375 = vmatprep.subr.mxu0 0.0
        %7376 = vmatpush2.msra.mxu0 0.0
        %7377 = vmatprep.subr.mxu0 0.0
        %7378 = vmatpush2.msra.mxu0 0.0
        %7379 = vmatprep.mubr.f32.mxu0 0.0
        %7380 = vmatmul.mubr.f32.gmra.mxu0 %v7313
        %v7381 = vpop.f32.mrf.mxu0
        %v7382 = vadd.f32 %v7311, %v7381
        %v7383 = vpop.f32.mrf.mxu0
        %7384 = vdwg.mxu0
        %v7385 = vmax.f32 %v7382, 0.0
        %v7386 = vld [vmem:[%s9] sm:$0xff]
        %v7387 = vld [vmem:[%s10] sm:$0x1]
        %v7389 = vsel %vm384, %v7385, 0
        %7391 = vmatprep.subr.mxu0 0.0
        %7392 = vmatpush1.msra.mxu0 0.0
        %7393 = vmatprep.subr.mxu0 0.0
        %7394 = vmatpush1.msra.mxu0 0.0
        %7395 = vmatprep.subr.mxu0 0.0
        %7396 = vmatpush1.msra.mxu0 0.0
        %7397 = vmatprep.subr.mxu0 0.0
        %7398 = vmatpush1.msra.mxu0 0.0
        %7399 = vmatprep.subr.mxu0 0.0
        %7400 = vmatpush1.msra.mxu0 0.0
        %7401 = vmatprep.subr.mxu0 0.0
        %7402 = vmatpush1.msra.mxu0 0.0
        %7403 = vmatprep.subr.mxu0 0.0
        %7404 = vmatpush1.msra.mxu0 0.0
        %7405 = vmatprep.subr.mxu0 0.0
        %7406 = vmatpush1.msra.mxu0 0.0
        %7407 = vmatprep.subr.mxu0 0.0
        %7408 = vmatpush1.msra.mxu0 0.0
        %7409 = vmatprep.subr.mxu0 0.0
        %7410 = vmatpush1.msra.mxu0 0.0
        %7411 = vmatprep.subr.mxu0 0.0
        %7412 = vmatpush1.msra.mxu0 0.0
        %7413 = vmatprep.subr.mxu0 0.0
        %7414 = vmatpush1.msra.mxu0 0.0
        %7415 = vmatprep.subr.mxu0 0.0
        %7416 = vmatpush1.msra.mxu0 0.0
        %7417 = vmatprep.subr.mxu0 0.0
        %7418 = vmatpush1.msra.mxu0 0.0
        %7419 = vmatprep.subr.mxu0 0.0
        %7420 = vmatpush1.msra.mxu0 0.0
        %7421 = vmatprep.subr.mxu0 0.0
        %7422 = vmatpush1.msra.mxu0 %v7386
        %7423 = vmatprep.subr.mxu0 0.0
        %7424 = vmatpush2.msra.mxu0 0.0
        %7425 = vmatprep.subr.mxu0 0.0
        %7426 = vmatpush2.msra.mxu0 0.0
        %7427 = vmatprep.subr.mxu0 0.0
        %7428 = vmatpush2.msra.mxu0 0.0
        %7429 = vmatprep.subr.mxu0 0.0
        %7430 = vmatpush2.msra.mxu0 0.0
        %7431 = vmatprep.subr.mxu0 0.0
        %7432 = vmatpush2.msra.mxu0 0.0
        %7433 = vmatprep.subr.mxu0 0.0
        %7434 = vmatpush2.msra.mxu0 0.0
        %7435 = vmatprep.subr.mxu0 0.0
        %7436 = vmatpush2.msra.mxu0 0.0
        %7437 = vmatprep.subr.mxu0 0.0
        %7438 = vmatpush2.msra.mxu0 0.0
        %7439 = vmatprep.subr.mxu0 0.0
        %7440 = vmatpush2.msra.mxu0 0.0
        %7441 = vmatprep.subr.mxu0 0.0
        %7442 = vmatpush2.msra.mxu0 0.0
        %7443 = vmatprep.subr.mxu0 0.0
        %7444 = vmatpush2.msra.mxu0 0.0
        %7445 = vmatprep.subr.mxu0 0.0
        %7446 = vmatpush2.msra.mxu0 0.0
        %7447 = vmatprep.subr.mxu0 0.0
        %7448 = vmatpush2.msra.mxu0 0.0
        %7449 = vmatprep.subr.mxu0 0.0
        %7450 = vmatpush2.msra.mxu0 0.0
        %7451 = vmatprep.subr.mxu0 0.0
        %7452 = vmatpush2.msra.mxu0 0.0
        %7453 = vmatprep.subr.mxu0 0.0
        %7454 = vmatpush2.msra.mxu0 0.0
        %7455 = vmatprep.mubr.f32.mxu0 0.0
        %7456 = vmatmul.mubr.f32.gmra.mxu0 %v7389
        %v7457 = vpop.f32.mrf.mxu0
        %v7458 = vadd.f32 %v7387, %v7457
        %v7459 = vpop.f32.mrf.mxu0
        %7460 = vdwg.mxu0
        %vm7461 = vcmask 73728
        %v7462 = vsel %vm7461, %v7458, -inf
        %7463 = vmax.xlane.f32.xlu0 %v7462
        %v7464 = vpop.xlane.xlu0 %7463
        %v7465 = vsub.f32 %v7458, %v7464
        %v7466 = vmul.f32 %v7465, 1.442695
        %v7467 = vpow.pop %v7466
        %v7468 = vsel %vm7461, %v7467, 0.0
        %7469 = vadd.xlane.f32.xlu0 %v7468
        %v7470 = vpop.xlane.xlu0 %7469
        %v7471 = vlog2.pop %v7470
        %v7472 = vmul.f32 %v7471, 0.6931472
        %v7473 = vsub.f32 %v7465, %v7472
        %7474 = vst.msk [vmem:[%s378] sm:$0x1] %vm7461, %v7473
        %s7475 = sand.u32 %s269, 1
        %s7476 = scalar_lea.sflag [#allocation4], %s7475
        %s7477 = sand.u32 %s269, 1
        %s7478 = scalar_lea.vmem [#allocation3], %s7477
        // Predicated region
        $region65: #{cnn_dnn_forward.1} parent=63 // pred_check
          %p7479 = pneg %p279
        $region66: #{cnn_dnn_forward.1} parent=63 // pred_check_branch
          %7481 = sbr.rel (%p7479) target = $region68
        $region67: #{cnn_dnn_forward.1} parent=63 // pred_region
          %s7483 = ssub.s32 16, 16
          %7484 = vsyncadd %s7476, %s7483
          %s7485 = smul.addr %s25, 16
          %s7486 = scalar_lea.hbm %s11, %s7485
          %s7488 = sshll.u32 %s7478, 4
          %s7489 = int_to_ptr.vmem [resolvable:$true] %s7488
          %7491 = dma.vmem_to_hbm [thread:$0]  %s7489, 16, %s7486, %s7476
        $region68: #{cnn_dnn_forward.1} parent=63 // pred_fallthru
          _
      $region64: #{cnn_dnn_forward.1} parent=5 // pred_fallthru
        _
      %p7492 = scmp.le.s32.totalorder 2, %s20
      // Predicated region
      $region69: #{cnn_dnn_forward.1} parent=5 // pred_check
        %p7493 = pneg %p7492
      $region70: #{cnn_dnn_forward.1} parent=5 // pred_check_branch
        %7495 = sbr.rel (%p7493) target = $region72
      $region71: #{cnn_dnn_forward.1} parent=5 // pred_region
        %s7496 = ssub.s32 %s20, 2
        // Predicated region
        $region73: #{cnn_dnn_forward.1} parent=71 // pred_check
          %p7497 = pneg %p285
        $region74: #{cnn_dnn_forward.1} parent=71 // pred_check_branch
          %7499 = sbr.rel (%p7497) target = $region76
        $region75: #{cnn_dnn_forward.1} parent=71 // pred_region
          %s7500 = sand.u32 %s270, 1
          %s7501 = scalar_lea.sflag [#allocation4], %s7500
          %s7502 = sand.u32 %s270, 1
          %s7503 = scalar_lea.vmem [#allocation3], %s7502
          %7504 = dma.done %s7501, 16
        $region76: #{cnn_dnn_forward.1} parent=71 // pred_fallthru
          _
      $region72: #{cnn_dnn_forward.1} parent=5 // pred_fallthru
        _
    $region6: #{cnn_dnn_forward.1} parent=1 // loop_footer
      %s24 = sadd.s32 1, %s20
    $region7: #{cnn_dnn_forward.1} parent=1 // loop_footer_branch
      %19 = sbr.rel target = $region3
    $region8: #{cnn_dnn_forward.1} parent=1 // loop_exit
      _
    %7505 = vsyncpa [#allocation4], 1
    %s7506 = scalar_lea.sflag [#allocation4], 1
    %7507 = vsyncpa %s7506, 1

</llo_original>
